<compile_context>
chip_gen: v6e
topology: v6e:2x2x1
jax: 0.10.0
libtpu: 0.0.40
codegen_flags: <defaults>
</compile_context>

<pallas_src>
import functools

import jax
import jax.numpy as jnp
from jax.experimental import pallas as pl
from jax.experimental.pallas import tpu as pltpu

KH = KW = 4  # all ConvTranspose layers use 4x4 kernels

# Per-phase taps for stride=2, pad=1, k=4 conv-transpose (one spatial axis).
# phase p -> ((kernel_index, padded_input_offset), ...)
_TAPS = {
    0: ((1, 1), (3, 0)),   # even output rows: ky=1 @ off 1, ky=3 @ off 0
    1: ((0, 2), (2, 1)),   # odd  output rows: ky=0 @ off 2, ky=2 @ off 1
}


# --------------------------------------------------------------------------
# Pallas kernels
# --------------------------------------------------------------------------
def _phase_gemm_bn_relu_kernel(x_ref, w_ref, g_ref, b_ref, o_ref, *,
                               n_phases, channels, replicas, count, eps):
    # Fused: phase GEMMs (bf16 operands, f32 MXU accumulation) + train-mode
    # BatchNorm2d (batch stats, biased variance) + ReLU, in one VMEM pass.
    #   x_ref: (P, M, K)   bf16 phase slabs (P=1 for the 1x1-input layer)
    #   w_ref: (P, K, C)   bf16 phase weights
    #   g_ref/b_ref: (1, P*C) f32  gamma / beta tiled to the column layout
    #   o_ref: (M, P*C)    bf16   column j carries channel j % channels
    parts = [
        jnp.dot(x_ref[p], w_ref[p], preferred_element_type=jnp.float32)
        for p in range(n_phases)
    ]
    y = parts[0] if n_phases == 1 else jnp.concatenate(parts, axis=-1)

    # One-pass batch statistics in f32: fold the `replicas` column groups
    # carrying the same channel, then var = E[y^2] - mean^2.
    s1 = jnp.sum(y, axis=0, keepdims=True)            # (1, P*C)
    s2 = jnp.sum(y * y, axis=0, keepdims=True)        # (1, P*C)
    c1 = s1[:, :channels]
    c2 = s2[:, :channels]
    for r in range(1, replicas):
        c1 = c1 + s1[:, r * channels:(r + 1) * channels]
        c2 = c2 + s2[:, r * channels:(r + 1) * channels]
    inv_count = 1.0 / count
    mean_c = c1 * inv_count                            # (1, C)
    var_c = c2 * inv_count - mean_c * mean_c           # (1, C), biased
    inv_std_c = jax.lax.rsqrt(var_c + eps)             # (1, C)

    if replicas > 1:
        mean = jnp.concatenate([mean_c] * replicas, axis=1)
        inv_std = jnp.concatenate([inv_std_c] * replicas, axis=1)
    else:
        mean, inv_std = mean_c, inv_std_c

    scale = g_ref[...] * inv_std                       # (1, P*C)
    shift = b_ref[...] - mean * scale                  # (1, P*C)
    o_ref[...] = jnp.maximum(y * scale + shift, 0.0).astype(o_ref.dtype)


def _out_phase_gemm_tanh_kernel(x_ref, w_ref, b_ref, o_ref, *, n_phases):
    # Output layer: 4 phase GEMMs accumulate directly into (tm, 4) -- phase
    # p's single real output channel sits in column p of w_ref[p], so only
    # the 4 real columns are ever computed / stored (no Cout padding).
    #   x_ref: (P, tm, K) bf16;  w_ref: (P, K, P) bf16;  b_ref: (1, P) f32
    #   o_ref: (tm, P) f32
    y = jnp.dot(x_ref[0], w_ref[0], preferred_element_type=jnp.float32)
    for p in range(1, n_phases):
        y = y + jnp.dot(x_ref[p], w_ref[p],
                        preferred_element_type=jnp.float32)
    o_ref[...] = jnp.tanh(y + b_ref[...])


# --------------------------------------------------------------------------
# Pallas wrappers
# --------------------------------------------------------------------------
def _compiler_params(vmem_need_bytes, dims=None):
    # Only raise the scoped-VMEM limit when the resident slabs need it;
    # 48 MiB keeps headroom under v7x's 64 MiB physical VMEM and is far
    # below v5e/v6e's 128 MiB.
    vlim = (48 << 20) if vmem_need_bytes > (24 << 20) else None
    return pltpu.CompilerParams(dimension_semantics=dims,
                                vmem_limit_bytes=vlim)


def _fused_conv_bn_relu(x_phases, w_phases, gamma_t, beta_t, channels):
    """Phase GEMM + BatchNorm(batch stats) + ReLU, single kernel invocation.

    The whole M = N*H*W slab stays in one invocation so the batch statistics
    are exact; output is the bf16 activation slab (M, P*C).
    """
    P, M, K = x_phases.shape
    Wc = P * w_phases.shape[-1]
    replicas = Wc // channels
    kernel = functools.partial(
        _phase_gemm_bn_relu_kernel, n_phases=P, channels=channels,
        replicas=replicas, count=float(M * replicas), eps=1e-5)
    need = 2 * ((x_phases.size + w_phases.size) * 2 + M * Wc * (4 + 2))
    return pl.pallas_call(
        kernel,
        out_shape=jax.ShapeDtypeStruct((M, Wc), jnp.bfloat16),
        compiler_params=_compiler_params(need),
    )(x_phases, w_phases, gamma_t, beta_t)


def _out_conv_tanh(x_phases, w_phases, bias_row):
    """Output conv (+bias+tanh): gridded over M with a fixed row tile."""
    P, M, K = x_phases.shape
    if M <= 512:
        tm = M                               # never split small slabs
    else:
        tm = 512 if M % 512 == 0 else 256    # fixed tile: bounds VMEM,
    n_tiles = M // tm                        # amortizes per-step overhead
    kernel = functools.partial(_out_phase_gemm_tanh_kernel, n_phases=P)
    need = 2 * 2 * (P * tm * K * 2 + tm * P * 4) + P * K * P * 2
    return pl.pallas_call(
        kernel,
        out_shape=jax.ShapeDtypeStruct((M, P), jnp.float32),
        grid=(n_tiles,),
        in_specs=[pl.BlockSpec((P, tm, K), lambda i: (0, i, 0)),
                  pl.BlockSpec((P, K, P), lambda i: (0, 0, 0)),
                  pl.BlockSpec((1, P), lambda i: (0, 0))],
        out_specs=pl.BlockSpec((tm, P), lambda i: (i, 0)),
        compiler_params=_compiler_params(need, ("parallel",)),
    )(x_phases, w_phases, bias_row)


# --------------------------------------------------------------------------
# Plain-JAX glue: phase im2col, phase-weight packing, phase interleave
# --------------------------------------------------------------------------
def _phase_cols(x_nhwc):
    """(N, H, W, Cin) -> (4, N*H*W, 4*Cin) sub-pixel phase slabs."""
    N, H, W, Cin = x_nhwc.shape
    xp = jnp.pad(x_nhwc, ((0, 0), (1, 1), (1, 1), (0, 0)))
    phases = []
    for py in range(2):
        for px in range(2):
            taps = []
            for (_, oy) in _TAPS[py]:
                for (_, ox) in _TAPS[px]:
                    taps.append(xp[:, oy:oy + H, ox:ox + W, :])
            phases.append(
                jnp.concatenate(taps, axis=-1).reshape(N * H * W, 4 * Cin))
    return jnp.stack(phases, axis=0)


def _phase_weights(w_torch):
    """(Cin, Cout, 4, 4) PyTorch ConvTranspose weight -> (4, 4*Cin, Cout)."""
    phases = []
    for py in range(2):
        for px in range(2):
            blocks = []
            for (ky, _) in _TAPS[py]:
                for (kx, _) in _TAPS[px]:
                    blocks.append(w_torch[:, :, ky, kx])    # (Cin, Cout)
            phases.append(jnp.concatenate(blocks, axis=0))  # (4*Cin, Cout)
    return jnp.stack(phases, axis=0).astype(jnp.bfloat16)


def _phase_weights_out(w_torch):
    """Output-layer weights (Cin, 1, 4, 4) -> (4, 4*Cin, 4): phase p's single
    real channel sits in column p (zeros elsewhere), so the phase GEMMs
    accumulate straight into a (M, 4) real-channel layout."""
    wp = _phase_weights(w_torch)                            # (4, 4*Cin, 1)
    cols = []
    for p in range(4):
        z = jnp.zeros_like(wp[p])
        cols.append(jnp.concatenate(
            [wp[p] if q == p else z for q in range(4)], axis=-1))
    return jnp.stack(cols, axis=0)                          # (4, 4*Cin, 4)


def _interleave(y_slab, N, H, W, cout_real, cout_padded):
    """(N*H*W, 4*cout_padded) phase slab -> (N, 2H, 2W, cout_real) NHWC."""
    y = y_slab.reshape(N, H, W, 2, 2, cout_padded)[..., :cout_real]
    y = jnp.transpose(y, (0, 1, 3, 2, 4, 5))
    return y.reshape(N, 2 * H, 2 * W, cout_real)


# --------------------------------------------------------------------------
# Parameters
# --------------------------------------------------------------------------
def init_params(key, nz, filters=32):
    def kaiming_uniform(k, shape):
        fan_in = shape[1] * shape[2] * shape[3]
        bound = (6.0 / fan_in) ** 0.5  # gain=sqrt(2) (relu), uniform kaiming
        return jax.random.uniform(k, shape, jnp.float32, -bound, bound)

    def xavier_uniform(k, shape, gain):
        fan_in = shape[1] * shape[2] * shape[3]
        fan_out = shape[0] * shape[2] * shape[3]
        bound = gain * (6.0 / (fan_in + fan_out)) ** 0.5
        return jax.random.uniform(k, shape, jnp.float32, -bound, bound)

    ks = jax.random.split(key, 4)
    c1, c2, c3 = filters * 4, filters * 2, filters
    return {
        "w1": kaiming_uniform(ks[0], (nz, c1, KH, KW)),
        "b1": jnp.zeros((c1,), jnp.float32),
        "g1": jnp.ones((c1,), jnp.float32),
        "be1": jnp.zeros((c1,), jnp.float32),
        "w2": kaiming_uniform(ks[1], (c1, c2, KH, KW)),
        "b2": jnp.zeros((c2,), jnp.float32),
        "g2": jnp.ones((c2,), jnp.float32),
        "be2": jnp.zeros((c2,), jnp.float32),
        "w3": kaiming_uniform(ks[2], (c2, c3, KH, KW)),
        "b3": jnp.zeros((c3,), jnp.float32),
        "g3": jnp.ones((c3,), jnp.float32),
        "be3": jnp.zeros((c3,), jnp.float32),
        "w4": xavier_uniform(ks[3], (c3, 1, KH, KW), gain=5.0 / 3.0),  # tanh
        "b4": jnp.zeros((1,), jnp.float32),
    }


def preprocess_params(params):
    """One-time repack of weights into the GEMM layouts used by the kernels."""
    pp = {}
    # Layer 1 (1x1 spatial input): ConvTranspose == plain GEMM.
    # Column order (ky, kx, co) -> channel = column % 128 (16 replicas).
    nz = params["w1"].shape[0]
    pp["w1m"] = jnp.transpose(params["w1"], (0, 2, 3, 1)).reshape(
        nz, -1).astype(jnp.bfloat16)                       # (nz, 2048)

    pp["w2p"] = _phase_weights(params["w2"])               # (4, 512, 64)
    pp["w3p"] = _phase_weights(params["w3"])               # (4, 256, 32)
    pp["w4p"] = _phase_weights_out(params["w4"])           # (4, 128, 4)

    # Layer-4 bias replicated once per phase column.
    pp["b4t"] = jnp.tile(params["b4"].reshape(1, 1).astype(jnp.float32),
                         (1, 4))                           # (1, 4)

    # BN gamma/beta tiled to the replica layout of each conv-output slab.
    # Conv biases b1-b3 are dropped: batch-stat BatchNorm's mean subtraction
    # cancels them exactly, so they never affect the output.
    pp["g1t"] = jnp.tile(params["g1"].reshape(1, -1), (1, 16)).astype(jnp.float32)
    pp["be1t"] = jnp.tile(params["be1"].reshape(1, -1), (1, 16)).astype(jnp.float32)
    pp["g2t"] = jnp.tile(params["g2"].reshape(1, -1), (1, 4)).astype(jnp.float32)
    pp["be2t"] = jnp.tile(params["be2"].reshape(1, -1), (1, 4)).astype(jnp.float32)
    pp["g3t"] = jnp.tile(params["g3"].reshape(1, -1), (1, 4)).astype(jnp.float32)
    pp["be3t"] = jnp.tile(params["be3"].reshape(1, -1), (1, 4)).astype(jnp.float32)
    return pp


# --------------------------------------------------------------------------
# Generator forward (NCHW in / NCHW out, matching PyTorch)
# --------------------------------------------------------------------------
def generator_forward(z_nchw, pp):
    N, nz = z_nchw.shape[0], z_nchw.shape[1]
    z2 = z_nchw.reshape(N, nz).astype(jnp.bfloat16)

    # conv1 (1x1 input, k=4, s=1, p=0) == GEMM, fused with BN1 + ReLU.
    a1 = _fused_conv_bn_relu(z2[None], pp["w1m"][None],
                             pp["g1t"], pp["be1t"], channels=128)  # (N, 2048)
    x1 = a1.reshape(N, 4, 4, 128)                                  # bf16 NHWC

    # conv2 (s=2, p=1): phase GEMM fused with BN2 + ReLU -> interleave.
    a2 = _fused_conv_bn_relu(_phase_cols(x1), pp["w2p"],
                             pp["g2t"], pp["be2t"], channels=64)   # (N*16, 256)
    x2 = _interleave(a2, N, 4, 4, 64, 64)                          # (N, 8, 8, 64)

    # conv3 (s=2, p=1)
    a3 = _fused_conv_bn_relu(_phase_cols(x2), pp["w3p"],
                             pp["g3t"], pp["be3t"], channels=32)   # (N*64, 128)
    x3 = _interleave(a3, N, 8, 8, 32, 32)                          # (N, 16, 16, 32)

    # output conv (s=2, p=1, Cout=1) + bias + tanh; only real columns stored.
    y4 = _out_conv_tanh(_phase_cols(x3), pp["w4p"], pp["b4t"])     # (N*256, 4)
    out = _interleave(y4, N, 16, 16, 1, 1)                         # (N, 32, 32, 1)
    return jnp.transpose(out, (0, 3, 1, 2))                        # NHWC -> NCHW


if __name__ == "__main__":
    key = jax.random.PRNGKey(0)
    k_z, k_p = jax.random.split(key)

    batch, nz = 2, 16  # Generator(input_shape=16), latent z of shape (N,16,1,1)
    z = jax.random.normal(k_z, (batch, nz, 1, 1), jnp.float32)
    params = init_params(k_p, nz)
    pp = preprocess_params(params)

    fwd = jax.jit(generator_forward)
    out = jax.block_until_ready(fwd(z, pp))

    assert out.shape == (batch, 1, 32, 32), out.shape
    assert bool(jnp.all(jnp.isfinite(out)))
    assert bool(jnp.all(jnp.abs(out) <= 1.0))  # tanh range
    print("KERNEL_OK")
</pallas_src>

<mosaic_0001>
module attributes {stable_mosaic.version = 11 : i64} {
  func.func @_phase_gemm_bn_relu_kernel(%arg0: memref<1x2x16xbf16, #tpu.memory_space<vmem>>, %arg1: memref<1x16x2048xbf16, #tpu.memory_space<vmem>>, %arg2: memref<1x2048xf32, #tpu.memory_space<vmem>>, %arg3: memref<1x2048xf32, #tpu.memory_space<vmem>>, %arg4: memref<2x2048xbf16, #tpu.memory_space<vmem>>) attributes {dimension_semantics = [], scalar_prefetch = 0 : i64, scratch_operands = 0 : i64, tpu.core_type = #tpu.core_type<tc>} {
    %c0 = arith.constant 0 : index
    %c0_0 = arith.constant 0 : index
    %c0_1 = arith.constant 0 : index
    %0 = vector.load %arg0[%c0, %c0_0, %c0_1] : memref<1x2x16xbf16, #tpu.memory_space<vmem>>, vector<1x2x16xbf16>
    %1 = vector.shape_cast %0 : vector<1x2x16xbf16> to vector<2x16xbf16>
    %c0_2 = arith.constant 0 : index
    %c0_3 = arith.constant 0 : index
    %c0_4 = arith.constant 0 : index
    %2 = vector.load %arg1[%c0_2, %c0_3, %c0_4] : memref<1x16x2048xbf16, #tpu.memory_space<vmem>>, vector<1x16x2048xbf16>
    %3 = vector.shape_cast %2 : vector<1x16x2048xbf16> to vector<16x2048xbf16>
    %cst = arith.constant dense<0.000000e+00> : vector<2x2048xf32>
    %4 = tpu.matmul %1, %3, %cst {dimension_numbers = #tpu.dot_dimension_numbers<[1], [0], [0], [1], [0, 0, 1, 1], [], []>} : vector<2x16xbf16>, vector<16x2048xbf16>, vector<2x2048xf32> -> vector<2x2048xf32>
    %cst_5 = arith.constant dense<0.000000e+00> : vector<2048xf32>
    %5 = vector.multi_reduction <add>, %4, %cst_5 [0] : vector<2x2048xf32> to vector<2048xf32>
    %6 = vector.shape_cast %5 : vector<2048xf32> to vector<1x2048xf32>
    %7 = arith.mulf %4, %4 : vector<2x2048xf32>
    %cst_6 = arith.constant dense<0.000000e+00> : vector<2048xf32>
    %8 = vector.multi_reduction <add>, %7, %cst_6 [0] : vector<2x2048xf32> to vector<2048xf32>
    %9 = vector.shape_cast %8 : vector<2048xf32> to vector<1x2048xf32>
    %10 = vector.extract_strided_slice %6 {offsets = [0, 0], sizes = [1, 128], strides = [1, 1]} : vector<1x2048xf32> to vector<1x128xf32>
    %11 = vector.extract_strided_slice %9 {offsets = [0, 0], sizes = [1, 128], strides = [1, 1]} : vector<1x2048xf32> to vector<1x128xf32>
    %12 = vector.extract_strided_slice %6 {offsets = [0, 128], sizes = [1, 128], strides = [1, 1]} : vector<1x2048xf32> to vector<1x128xf32>
    %13 = arith.addf %10, %12 : vector<1x128xf32>
    %14 = vector.extract_strided_slice %9 {offsets = [0, 128], sizes = [1, 128], strides = [1, 1]} : vector<1x2048xf32> to vector<1x128xf32>
    %15 = arith.addf %11, %14 : vector<1x128xf32>
    %16 = vector.extract_strided_slice %6 {offsets = [0, 256], sizes = [1, 128], strides = [1, 1]} : vector<1x2048xf32> to vector<1x128xf32>
    %17 = arith.addf %13, %16 : vector<1x128xf32>
    %18 = vector.extract_strided_slice %9 {offsets = [0, 256], sizes = [1, 128], strides = [1, 1]} : vector<1x2048xf32> to vector<1x128xf32>
    %19 = arith.addf %15, %18 : vector<1x128xf32>
    %20 = vector.extract_strided_slice %6 {offsets = [0, 384], sizes = [1, 128], strides = [1, 1]} : vector<1x2048xf32> to vector<1x128xf32>
    %21 = arith.addf %17, %20 : vector<1x128xf32>
    %22 = vector.extract_strided_slice %9 {offsets = [0, 384], sizes = [1, 128], strides = [1, 1]} : vector<1x2048xf32> to vector<1x128xf32>
    %23 = arith.addf %19, %22 : vector<1x128xf32>
    %24 = vector.extract_strided_slice %6 {offsets = [0, 512], sizes = [1, 128], strides = [1, 1]} : vector<1x2048xf32> to vector<1x128xf32>
    %25 = arith.addf %21, %24 : vector<1x128xf32>
    %26 = vector.extract_strided_slice %9 {offsets = [0, 512], sizes = [1, 128], strides = [1, 1]} : vector<1x2048xf32> to vector<1x128xf32>
    %27 = arith.addf %23, %26 : vector<1x128xf32>
    %28 = vector.extract_strided_slice %6 {offsets = [0, 640], sizes = [1, 128], strides = [1, 1]} : vector<1x2048xf32> to vector<1x128xf32>
    %29 = arith.addf %25, %28 : vector<1x128xf32>
    %30 = vector.extract_strided_slice %9 {offsets = [0, 640], sizes = [1, 128], strides = [1, 1]} : vector<1x2048xf32> to vector<1x128xf32>
    %31 = arith.addf %27, %30 : vector<1x128xf32>
    %32 = vector.extract_strided_slice %6 {offsets = [0, 768], sizes = [1, 128], strides = [1, 1]} : vector<1x2048xf32> to vector<1x128xf32>
    %33 = arith.addf %29, %32 : vector<1x128xf32>
    %34 = vector.extract_strided_slice %9 {offsets = [0, 768], sizes = [1, 128], strides = [1, 1]} : vector<1x2048xf32> to vector<1x128xf32>
    %35 = arith.addf %31, %34 : vector<1x128xf32>
    %36 = vector.extract_strided_slice %6 {offsets = [0, 896], sizes = [1, 128], strides = [1, 1]} : vector<1x2048xf32> to vector<1x128xf32>
    %37 = arith.addf %33, %36 : vector<1x128xf32>
    %38 = vector.extract_strided_slice %9 {offsets = [0, 896], sizes = [1, 128], strides = [1, 1]} : vector<1x2048xf32> to vector<1x128xf32>
    %39 = arith.addf %35, %38 : vector<1x128xf32>
    %40 = vector.extract_strided_slice %6 {offsets = [0, 1024], sizes = [1, 128], strides = [1, 1]} : vector<1x2048xf32> to vector<1x128xf32>
    %41 = arith.addf %37, %40 : vector<1x128xf32>
    %42 = vector.extract_strided_slice %9 {offsets = [0, 1024], sizes = [1, 128], strides = [1, 1]} : vector<1x2048xf32> to vector<1x128xf32>
    %43 = arith.addf %39, %42 : vector<1x128xf32>
    %44 = vector.extract_strided_slice %6 {offsets = [0, 1152], sizes = [1, 128], strides = [1, 1]} : vector<1x2048xf32> to vector<1x128xf32>
    %45 = arith.addf %41, %44 : vector<1x128xf32>
    %46 = vector.extract_strided_slice %9 {offsets = [0, 1152], sizes = [1, 128], strides = [1, 1]} : vector<1x2048xf32> to vector<1x128xf32>
    %47 = arith.addf %43, %46 : vector<1x128xf32>
    %48 = vector.extract_strided_slice %6 {offsets = [0, 1280], sizes = [1, 128], strides = [1, 1]} : vector<1x2048xf32> to vector<1x128xf32>
    %49 = arith.addf %45, %48 : vector<1x128xf32>
    %50 = vector.extract_strided_slice %9 {offsets = [0, 1280], sizes = [1, 128], strides = [1, 1]} : vector<1x2048xf32> to vector<1x128xf32>
    %51 = arith.addf %47, %50 : vector<1x128xf32>
    %52 = vector.extract_strided_slice %6 {offsets = [0, 1408], sizes = [1, 128], strides = [1, 1]} : vector<1x2048xf32> to vector<1x128xf32>
    %53 = arith.addf %49, %52 : vector<1x128xf32>
    %54 = vector.extract_strided_slice %9 {offsets = [0, 1408], sizes = [1, 128], strides = [1, 1]} : vector<1x2048xf32> to vector<1x128xf32>
    %55 = arith.addf %51, %54 : vector<1x128xf32>
    %56 = vector.extract_strided_slice %6 {offsets = [0, 1536], sizes = [1, 128], strides = [1, 1]} : vector<1x2048xf32> to vector<1x128xf32>
    %57 = arith.addf %53, %56 : vector<1x128xf32>
    %58 = vector.extract_strided_slice %9 {offsets = [0, 1536], sizes = [1, 128], strides = [1, 1]} : vector<1x2048xf32> to vector<1x128xf32>
    %59 = arith.addf %55, %58 : vector<1x128xf32>
    %60 = vector.extract_strided_slice %6 {offsets = [0, 1664], sizes = [1, 128], strides = [1, 1]} : vector<1x2048xf32> to vector<1x128xf32>
    %61 = arith.addf %57, %60 : vector<1x128xf32>
    %62 = vector.extract_strided_slice %9 {offsets = [0, 1664], sizes = [1, 128], strides = [1, 1]} : vector<1x2048xf32> to vector<1x128xf32>
    %63 = arith.addf %59, %62 : vector<1x128xf32>
    %64 = vector.extract_strided_slice %6 {offsets = [0, 1792], sizes = [1, 128], strides = [1, 1]} : vector<1x2048xf32> to vector<1x128xf32>
    %65 = arith.addf %61, %64 : vector<1x128xf32>
    %66 = vector.extract_strided_slice %9 {offsets = [0, 1792], sizes = [1, 128], strides = [1, 1]} : vector<1x2048xf32> to vector<1x128xf32>
    %67 = arith.addf %63, %66 : vector<1x128xf32>
    %68 = vector.extract_strided_slice %6 {offsets = [0, 1920], sizes = [1, 128], strides = [1, 1]} : vector<1x2048xf32> to vector<1x128xf32>
    %69 = arith.addf %65, %68 : vector<1x128xf32>
    %70 = vector.extract_strided_slice %9 {offsets = [0, 1920], sizes = [1, 128], strides = [1, 1]} : vector<1x2048xf32> to vector<1x128xf32>
    %71 = arith.addf %67, %70 : vector<1x128xf32>
    %cst_7 = arith.constant 3.125000e-02 : f32
    %72 = vector.broadcast %cst_7 : f32 to vector<1x128xf32>
    %73 = arith.mulf %69, %72 : vector<1x128xf32>
    %cst_8 = arith.constant 3.125000e-02 : f32
    %74 = vector.broadcast %cst_8 : f32 to vector<1x128xf32>
    %75 = arith.mulf %71, %74 : vector<1x128xf32>
    %76 = arith.mulf %73, %73 : vector<1x128xf32>
    %77 = arith.subf %75, %76 : vector<1x128xf32>
    %cst_9 = arith.constant 9.99999974E-6 : f32
    %78 = vector.broadcast %cst_9 : f32 to vector<1x128xf32>
    %79 = arith.addf %77, %78 : vector<1x128xf32>
    %80 = math.rsqrt %79 : vector<1x128xf32>
    %81 = tpu.concatenate %73, %73, %73, %73, %73, %73, %73, %73, %73, %73, %73, %73, %73, %73, %73, %73 in 1 : vector<1x128xf32>, vector<1x128xf32>, vector<1x128xf32>, vector<1x128xf32>, vector<1x128xf32>, vector<1x128xf32>, vector<1x128xf32>, vector<1x128xf32>, vector<1x128xf32>, vector<1x128xf32>, vector<1x128xf32>, vector<1x128xf32>, vector<1x128xf32>, vector<1x128xf32>, vector<1x128xf32>, vector<1x128xf32> -> vector<1x2048xf32>
    %82 = tpu.concatenate %80, %80, %80, %80, %80, %80, %80, %80, %80, %80, %80, %80, %80, %80, %80, %80 in 1 : vector<1x128xf32>, vector<1x128xf32>, vector<1x128xf32>, vector<1x128xf32>, vector<1x128xf32>, vector<1x128xf32>, vector<1x128xf32>, vector<1x128xf32>, vector<1x128xf32>, vector<1x128xf32>, vector<1x128xf32>, vector<1x128xf32>, vector<1x128xf32>, vector<1x128xf32>, vector<1x128xf32>, vector<1x128xf32> -> vector<1x2048xf32>
    %c0_10 = arith.constant 0 : index
    %c0_11 = arith.constant 0 : index
    %83 = vector.load %arg2[%c0_10, %c0_11] : memref<1x2048xf32, #tpu.memory_space<vmem>>, vector<1x2048xf32>
    %84 = arith.mulf %83, %82 : vector<1x2048xf32>
    %c0_12 = arith.constant 0 : index
    %c0_13 = arith.constant 0 : index
    %85 = vector.load %arg3[%c0_12, %c0_13] : memref<1x2048xf32, #tpu.memory_space<vmem>>, vector<1x2048xf32>
    %86 = arith.mulf %81, %84 : vector<1x2048xf32>
    %87 = arith.subf %85, %86 : vector<1x2048xf32>
    %88 = vector.broadcast %84 : vector<1x2048xf32> to vector<2x2048xf32>
    %89 = arith.mulf %4, %88 : vector<2x2048xf32>
    %90 = vector.broadcast %87 : vector<1x2048xf32> to vector<2x2048xf32>
    %91 = arith.addf %89, %90 : vector<2x2048xf32>
    %cst_14 = arith.constant 0.000000e+00 : f32
    %92 = vector.broadcast %cst_14 : f32 to vector<2x2048xf32>
    %93 = arith.maximumf %91, %92 : vector<2x2048xf32>
    %94 = arith.truncf %93 : vector<2x2048xf32> to vector<2x2048xbf16>
    %c0_15 = arith.constant 0 : index
    %c0_16 = arith.constant 0 : index
    %95 = vector.load %arg4[%c0_15, %c0_16] : memref<2x2048xbf16, #tpu.memory_space<vmem>>, vector<2x2048xbf16>
    tpu.vector_store %arg4[%c0_15, %c0_16], %94 {strides = array<i32>} : memref<2x2048xbf16, #tpu.memory_space<vmem>>, vector<2x2048xbf16>,
    return
  }
}

module attributes {stable_mosaic.version = 11 : i64} {
  func.func @_phase_gemm_bn_relu_kernel(%arg0: memref<4x32x512xbf16, #tpu.memory_space<vmem>>, %arg1: memref<4x512x64xbf16, #tpu.memory_space<vmem>>, %arg2: memref<1x256xf32, #tpu.memory_space<vmem>>, %arg3: memref<1x256xf32, #tpu.memory_space<vmem>>, %arg4: memref<32x256xbf16, #tpu.memory_space<vmem>>) attributes {dimension_semantics = [], scalar_prefetch = 0 : i64, scratch_operands = 0 : i64, tpu.core_type = #tpu.core_type<tc>} {
    %c0 = arith.constant 0 : index
    %c0_0 = arith.constant 0 : index
    %c0_1 = arith.constant 0 : index
    %0 = vector.load %arg0[%c0, %c0_0, %c0_1] : memref<4x32x512xbf16, #tpu.memory_space<vmem>>, vector<1x32x512xbf16>
    %1 = vector.shape_cast %0 : vector<1x32x512xbf16> to vector<32x512xbf16>
    %c0_2 = arith.constant 0 : index
    %c0_3 = arith.constant 0 : index
    %c0_4 = arith.constant 0 : index
    %2 = vector.load %arg1[%c0_2, %c0_3, %c0_4] : memref<4x512x64xbf16, #tpu.memory_space<vmem>>, vector<1x512x64xbf16>
    %3 = vector.shape_cast %2 : vector<1x512x64xbf16> to vector<512x64xbf16>
    %cst = arith.constant dense<0.000000e+00> : vector<32x64xf32>
    %4 = tpu.matmul %1, %3, %cst {dimension_numbers = #tpu.dot_dimension_numbers<[1], [0], [0], [1], [0, 0, 1, 1], [], []>} : vector<32x512xbf16>, vector<512x64xbf16>, vector<32x64xf32> -> vector<32x64xf32>
    %c1 = arith.constant 1 : index
    %c0_5 = arith.constant 0 : index
    %c0_6 = arith.constant 0 : index
    %5 = vector.load %arg0[%c1, %c0_5, %c0_6] : memref<4x32x512xbf16, #tpu.memory_space<vmem>>, vector<1x32x512xbf16>
    %6 = vector.shape_cast %5 : vector<1x32x512xbf16> to vector<32x512xbf16>
    %c1_7 = arith.constant 1 : index
    %c0_8 = arith.constant 0 : index
    %c0_9 = arith.constant 0 : index
    %7 = vector.load %arg1[%c1_7, %c0_8, %c0_9] : memref<4x512x64xbf16, #tpu.memory_space<vmem>>, vector<1x512x64xbf16>
    %8 = vector.shape_cast %7 : vector<1x512x64xbf16> to vector<512x64xbf16>
    %cst_10 = arith.constant dense<0.000000e+00> : vector<32x64xf32>
    %9 = tpu.matmul %6, %8, %cst_10 {dimension_numbers = #tpu.dot_dimension_numbers<[1], [0], [0], [1], [0, 0, 1, 1], [], []>} : vector<32x512xbf16>, vector<512x64xbf16>, vector<32x64xf32> -> vector<32x64xf32>
    %c2 = arith.constant 2 : index
    %c0_11 = arith.constant 0 : index
    %c0_12 = arith.constant 0 : index
    %10 = vector.load %arg0[%c2, %c0_11, %c0_12] : memref<4x32x512xbf16, #tpu.memory_space<vmem>>, vector<1x32x512xbf16>
    %11 = vector.shape_cast %10 : vector<1x32x512xbf16> to vector<32x512xbf16>
    %c2_13 = arith.constant 2 : index
    %c0_14 = arith.constant 0 : index
    %c0_15 = arith.constant 0 : index
    %12 = vector.load %arg1[%c2_13, %c0_14, %c0_15] : memref<4x512x64xbf16, #tpu.memory_space<vmem>>, vector<1x512x64xbf16>
    %13 = vector.shape_cast %12 : vector<1x512x64xbf16> to vector<512x64xbf16>
    %cst_16 = arith.constant dense<0.000000e+00> : vector<32x64xf32>
    %14 = tpu.matmul %11, %13, %cst_16 {dimension_numbers = #tpu.dot_dimension_numbers<[1], [0], [0], [1], [0, 0, 1, 1], [], []>} : vector<32x512xbf16>, vector<512x64xbf16>, vector<32x64xf32> -> vector<32x64xf32>
    %c3 = arith.constant 3 : index
    %c0_17 = arith.constant 0 : index
    %c0_18 = arith.constant 0 : index
    %15 = vector.load %arg0[%c3, %c0_17, %c0_18] : memref<4x32x512xbf16, #tpu.memory_space<vmem>>, vector<1x32x512xbf16>
    %16 = vector.shape_cast %15 : vector<1x32x512xbf16> to vector<32x512xbf16>
    %c3_19 = arith.constant 3 : index
    %c0_20 = arith.constant 0 : index
    %c0_21 = arith.constant 0 : index
    %17 = vector.load %arg1[%c3_19, %c0_20, %c0_21] : memref<4x512x64xbf16, #tpu.memory_space<vmem>>, vector<1x512x64xbf16>
    %18 = vector.shape_cast %17 : vector<1x512x64xbf16> to vector<512x64xbf16>
    %cst_22 = arith.constant dense<0.000000e+00> : vector<32x64xf32>
    %19 = tpu.matmul %16, %18, %cst_22 {dimension_numbers = #tpu.dot_dimension_numbers<[1], [0], [0], [1], [0, 0, 1, 1], [], []>} : vector<32x512xbf16>, vector<512x64xbf16>, vector<32x64xf32> -> vector<32x64xf32>
    %20 = tpu.concatenate %4, %9, %14, %19 in 1 : vector<32x64xf32>, vector<32x64xf32>, vector<32x64xf32>, vector<32x64xf32> -> vector<32x256xf32>
    %cst_23 = arith.constant dense<0.000000e+00> : vector<256xf32>
    %21 = vector.multi_reduction <add>, %20, %cst_23 [0] : vector<32x256xf32> to vector<256xf32>
    %22 = vector.shape_cast %21 : vector<256xf32> to vector<1x256xf32>
    %23 = arith.mulf %20, %20 : vector<32x256xf32>
    %cst_24 = arith.constant dense<0.000000e+00> : vector<256xf32>
    %24 = vector.multi_reduction <add>, %23, %cst_24 [0] : vector<32x256xf32> to vector<256xf32>
    %25 = vector.shape_cast %24 : vector<256xf32> to vector<1x256xf32>
    %26 = vector.extract_strided_slice %22 {offsets = [0, 0], sizes = [1, 64], strides = [1, 1]} : vector<1x256xf32> to vector<1x64xf32>
    %27 = vector.extract_strided_slice %25 {offsets = [0, 0], sizes = [1, 64], strides = [1, 1]} : vector<1x256xf32> to vector<1x64xf32>
    %28 = vector.extract_strided_slice %22 {offsets = [0, 64], sizes = [1, 64], strides = [1, 1]} : vector<1x256xf32> to vector<1x64xf32>
    %29 = arith.addf %26, %28 : vector<1x64xf32>
    %30 = vector.extract_strided_slice %25 {offsets = [0, 64], sizes = [1, 64], strides = [1, 1]} : vector<1x256xf32> to vector<1x64xf32>
    %31 = arith.addf %27, %30 : vector<1x64xf32>
    %32 = vector.extract_strided_slice %22 {offsets = [0, 128], sizes = [1, 64], strides = [1, 1]} : vector<1x256xf32> to vector<1x64xf32>
    %33 = arith.addf %29, %32 : vector<1x64xf32>
    %34 = vector.extract_strided_slice %25 {offsets = [0, 128], sizes = [1, 64], strides = [1, 1]} : vector<1x256xf32> to vector<1x64xf32>
    %35 = arith.addf %31, %34 : vector<1x64xf32>
    %36 = vector.extract_strided_slice %22 {offsets = [0, 192], sizes = [1, 64], strides = [1, 1]} : vector<1x256xf32> to vector<1x64xf32>
    %37 = arith.addf %33, %36 : vector<1x64xf32>
    %38 = vector.extract_strided_slice %25 {offsets = [0, 192], sizes = [1, 64], strides = [1, 1]} : vector<1x256xf32> to vector<1x64xf32>
    %39 = arith.addf %35, %38 : vector<1x64xf32>
    %cst_25 = arith.constant 7.812500e-03 : f32
    %40 = vector.broadcast %cst_25 : f32 to vector<1x64xf32>
    %41 = arith.mulf %37, %40 : vector<1x64xf32>
    %cst_26 = arith.constant 7.812500e-03 : f32
    %42 = vector.broadcast %cst_26 : f32 to vector<1x64xf32>
    %43 = arith.mulf %39, %42 : vector<1x64xf32>
    %44 = arith.mulf %41, %41 : vector<1x64xf32>
    %45 = arith.subf %43, %44 : vector<1x64xf32>
    %cst_27 = arith.constant 9.99999974E-6 : f32
    %46 = vector.broadcast %cst_27 : f32 to vector<1x64xf32>
    %47 = arith.addf %45, %46 : vector<1x64xf32>
    %48 = math.rsqrt %47 : vector<1x64xf32>
    %49 = tpu.concatenate %41, %41, %41, %41 in 1 : vector<1x64xf32>, vector<1x64xf32>, vector<1x64xf32>, vector<1x64xf32> -> vector<1x256xf32>
    %50 = tpu.concatenate %48, %48, %48, %48 in 1 : vector<1x64xf32>, vector<1x64xf32>, vector<1x64xf32>, vector<1x64xf32> -> vector<1x256xf32>
    %c0_28 = arith.constant 0 : index
    %c0_29 = arith.constant 0 : index
    %51 = vector.load %arg2[%c0_28, %c0_29] : memref<1x256xf32, #tpu.memory_space<vmem>>, vector<1x256xf32>
    %52 = arith.mulf %51, %50 : vector<1x256xf32>
    %c0_30 = arith.constant 0 : index
    %c0_31 = arith.constant 0 : index
    %53 = vector.load %arg3[%c0_30, %c0_31] : memref<1x256xf32, #tpu.memory_space<vmem>>, vector<1x256xf32>
    %54 = arith.mulf %49, %52 : vector<1x256xf32>
    %55 = arith.subf %53, %54 : vector<1x256xf32>
    %56 = vector.broadcast %52 : vector<1x256xf32> to vector<32x256xf32>
    %57 = arith.mulf %20, %56 : vector<32x256xf32>
    %58 = vector.broadcast %55 : vector<1x256xf32> to vector<32x256xf32>
    %59 = arith.addf %57, %58 : vector<32x256xf32>
    %cst_32 = arith.constant 0.000000e+00 : f32
    %60 = vector.broadcast %cst_32 : f32 to vector<32x256xf32>
    %61 = arith.maximumf %59, %60 : vector<32x256xf32>
    %62 = arith.truncf %61 : vector<32x256xf32> to vector<32x256xbf16>
    %c0_33 = arith.constant 0 : index
    %c0_34 = arith.constant 0 : index
    %63 = vector.load %arg4[%c0_33, %c0_34] : memref<32x256xbf16, #tpu.memory_space<vmem>>, vector<32x256xbf16>
    tpu.vector_store %arg4[%c0_33, %c0_34], %62 {strides = array<i32>} : memref<32x256xbf16, #tpu.memory_space<vmem>>, vector<32x256xbf16>,
    return
  }
}

module attributes {stable_mosaic.version = 11 : i64} {
  func.func @_phase_gemm_bn_relu_kernel(%arg0: memref<4x128x256xbf16, #tpu.memory_space<vmem>>, %arg1: memref<4x256x32xbf16, #tpu.memory_space<vmem>>, %arg2: memref<1x128xf32, #tpu.memory_space<vmem>>, %arg3: memref<1x128xf32, #tpu.memory_space<vmem>>, %arg4: memref<128x128xbf16, #tpu.memory_space<vmem>>) attributes {dimension_semantics = [], scalar_prefetch = 0 : i64, scratch_operands = 0 : i64, tpu.core_type = #tpu.core_type<tc>} {
    %c0 = arith.constant 0 : index
    %c0_0 = arith.constant 0 : index
    %c0_1 = arith.constant 0 : index
    %0 = vector.load %arg0[%c0, %c0_0, %c0_1] : memref<4x128x256xbf16, #tpu.memory_space<vmem>>, vector<1x128x256xbf16>
    %1 = vector.shape_cast %0 : vector<1x128x256xbf16> to vector<128x256xbf16>
    %c0_2 = arith.constant 0 : index
    %c0_3 = arith.constant 0 : index
    %c0_4 = arith.constant 0 : index
    %2 = vector.load %arg1[%c0_2, %c0_3, %c0_4] : memref<4x256x32xbf16, #tpu.memory_space<vmem>>, vector<1x256x32xbf16>
    %3 = vector.shape_cast %2 : vector<1x256x32xbf16> to vector<256x32xbf16>
    %cst = arith.constant dense<0.000000e+00> : vector<128x32xf32>
    %4 = tpu.matmul %1, %3, %cst {dimension_numbers = #tpu.dot_dimension_numbers<[1], [0], [0], [1], [0, 0, 1, 1], [], []>} : vector<128x256xbf16>, vector<256x32xbf16>, vector<128x32xf32> -> vector<128x32xf32>
    %c1 = arith.constant 1 : index
    %c0_5 = arith.constant 0 : index
    %c0_6 = arith.constant 0 : index
    %5 = vector.load %arg0[%c1, %c0_5, %c0_6] : memref<4x128x256xbf16, #tpu.memory_space<vmem>>, vector<1x128x256xbf16>
    %6 = vector.shape_cast %5 : vector<1x128x256xbf16> to vector<128x256xbf16>
    %c1_7 = arith.constant 1 : index
    %c0_8 = arith.constant 0 : index
    %c0_9 = arith.constant 0 : index
    %7 = vector.load %arg1[%c1_7, %c0_8, %c0_9] : memref<4x256x32xbf16, #tpu.memory_space<vmem>>, vector<1x256x32xbf16>
    %8 = vector.shape_cast %7 : vector<1x256x32xbf16> to vector<256x32xbf16>
    %cst_10 = arith.constant dense<0.000000e+00> : vector<128x32xf32>
    %9 = tpu.matmul %6, %8, %cst_10 {dimension_numbers = #tpu.dot_dimension_numbers<[1], [0], [0], [1], [0, 0, 1, 1], [], []>} : vector<128x256xbf16>, vector<256x32xbf16>, vector<128x32xf32> -> vector<128x32xf32>
    %c2 = arith.constant 2 : index
    %c0_11 = arith.constant 0 : index
    %c0_12 = arith.constant 0 : index
    %10 = vector.load %arg0[%c2, %c0_11, %c0_12] : memref<4x128x256xbf16, #tpu.memory_space<vmem>>, vector<1x128x256xbf16>
    %11 = vector.shape_cast %10 : vector<1x128x256xbf16> to vector<128x256xbf16>
    %c2_13 = arith.constant 2 : index
    %c0_14 = arith.constant 0 : index
    %c0_15 = arith.constant 0 : index
    %12 = vector.load %arg1[%c2_13, %c0_14, %c0_15] : memref<4x256x32xbf16, #tpu.memory_space<vmem>>, vector<1x256x32xbf16>
    %13 = vector.shape_cast %12 : vector<1x256x32xbf16> to vector<256x32xbf16>
    %cst_16 = arith.constant dense<0.000000e+00> : vector<128x32xf32>
    %14 = tpu.matmul %11, %13, %cst_16 {dimension_numbers = #tpu.dot_dimension_numbers<[1], [0], [0], [1], [0, 0, 1, 1], [], []>} : vector<128x256xbf16>, vector<256x32xbf16>, vector<128x32xf32> -> vector<128x32xf32>
    %c3 = arith.constant 3 : index
    %c0_17 = arith.constant 0 : index
    %c0_18 = arith.constant 0 : index
    %15 = vector.load %arg0[%c3, %c0_17, %c0_18] : memref<4x128x256xbf16, #tpu.memory_space<vmem>>, vector<1x128x256xbf16>
    %16 = vector.shape_cast %15 : vector<1x128x256xbf16> to vector<128x256xbf16>
    %c3_19 = arith.constant 3 : index
    %c0_20 = arith.constant 0 : index
    %c0_21 = arith.constant 0 : index
    %17 = vector.load %arg1[%c3_19, %c0_20, %c0_21] : memref<4x256x32xbf16, #tpu.memory_space<vmem>>, vector<1x256x32xbf16>
    %18 = vector.shape_cast %17 : vector<1x256x32xbf16> to vector<256x32xbf16>
    %cst_22 = arith.constant dense<0.000000e+00> : vector<128x32xf32>
    %19 = tpu.matmul %16, %18, %cst_22 {dimension_numbers = #tpu.dot_dimension_numbers<[1], [0], [0], [1], [0, 0, 1, 1], [], []>} : vector<128x256xbf16>, vector<256x32xbf16>, vector<128x32xf32> -> vector<128x32xf32>
    %20 = tpu.concatenate %4, %9, %14, %19 in 1 : vector<128x32xf32>, vector<128x32xf32>, vector<128x32xf32>, vector<128x32xf32> -> vector<128x128xf32>
    %cst_23 = arith.constant dense<0.000000e+00> : vector<128xf32>
    %21 = vector.multi_reduction <add>, %20, %cst_23 [0] : vector<128x128xf32> to vector<128xf32>
    %22 = vector.shape_cast %21 : vector<128xf32> to vector<1x128xf32>
    %23 = arith.mulf %20, %20 : vector<128x128xf32>
    %cst_24 = arith.constant dense<0.000000e+00> : vector<128xf32>
    %24 = vector.multi_reduction <add>, %23, %cst_24 [0] : vector<128x128xf32> to vector<128xf32>
    %25 = vector.shape_cast %24 : vector<128xf32> to vector<1x128xf32>
    %26 = vector.extract_strided_slice %22 {offsets = [0, 0], sizes = [1, 32], strides = [1, 1]} : vector<1x128xf32> to vector<1x32xf32>
    %27 = vector.extract_strided_slice %25 {offsets = [0, 0], sizes = [1, 32], strides = [1, 1]} : vector<1x128xf32> to vector<1x32xf32>
    %28 = vector.extract_strided_slice %22 {offsets = [0, 32], sizes = [1, 32], strides = [1, 1]} : vector<1x128xf32> to vector<1x32xf32>
    %29 = arith.addf %26, %28 : vector<1x32xf32>
    %30 = vector.extract_strided_slice %25 {offsets = [0, 32], sizes = [1, 32], strides = [1, 1]} : vector<1x128xf32> to vector<1x32xf32>
    %31 = arith.addf %27, %30 : vector<1x32xf32>
    %32 = vector.extract_strided_slice %22 {offsets = [0, 64], sizes = [1, 32], strides = [1, 1]} : vector<1x128xf32> to vector<1x32xf32>
    %33 = arith.addf %29, %32 : vector<1x32xf32>
    %34 = vector.extract_strided_slice %25 {offsets = [0, 64], sizes = [1, 32], strides = [1, 1]} : vector<1x128xf32> to vector<1x32xf32>
    %35 = arith.addf %31, %34 : vector<1x32xf32>
    %36 = vector.extract_strided_slice %22 {offsets = [0, 96], sizes = [1, 32], strides = [1, 1]} : vector<1x128xf32> to vector<1x32xf32>
    %37 = arith.addf %33, %36 : vector<1x32xf32>
    %38 = vector.extract_strided_slice %25 {offsets = [0, 96], sizes = [1, 32], strides = [1, 1]} : vector<1x128xf32> to vector<1x32xf32>
    %39 = arith.addf %35, %38 : vector<1x32xf32>
    %cst_25 = arith.constant 0.001953125 : f32
    %40 = vector.broadcast %cst_25 : f32 to vector<1x32xf32>
    %41 = arith.mulf %37, %40 : vector<1x32xf32>
    %cst_26 = arith.constant 0.001953125 : f32
    %42 = vector.broadcast %cst_26 : f32 to vector<1x32xf32>
    %43 = arith.mulf %39, %42 : vector<1x32xf32>
    %44 = arith.mulf %41, %41 : vector<1x32xf32>
    %45 = arith.subf %43, %44 : vector<1x32xf32>
    %cst_27 = arith.constant 9.99999974E-6 : f32
    %46 = vector.broadcast %cst_27 : f32 to vector<1x32xf32>
    %47 = arith.addf %45, %46 : vector<1x32xf32>
    %48 = math.rsqrt %47 : vector<1x32xf32>
    %49 = tpu.concatenate %41, %41, %41, %41 in 1 : vector<1x32xf32>, vector<1x32xf32>, vector<1x32xf32>, vector<1x32xf32> -> vector<1x128xf32>
    %50 = tpu.concatenate %48, %48, %48, %48 in 1 : vector<1x32xf32>, vector<1x32xf32>, vector<1x32xf32>, vector<1x32xf32> -> vector<1x128xf32>
    %c0_28 = arith.constant 0 : index
    %c0_29 = arith.constant 0 : index
    %51 = vector.load %arg2[%c0_28, %c0_29] : memref<1x128xf32, #tpu.memory_space<vmem>>, vector<1x128xf32>
    %52 = arith.mulf %51, %50 : vector<1x128xf32>
    %c0_30 = arith.constant 0 : index
    %c0_31 = arith.constant 0 : index
    %53 = vector.load %arg3[%c0_30, %c0_31] : memref<1x128xf32, #tpu.memory_space<vmem>>, vector<1x128xf32>
    %54 = arith.mulf %49, %52 : vector<1x128xf32>
    %55 = arith.subf %53, %54 : vector<1x128xf32>
    %56 = vector.broadcast %52 : vector<1x128xf32> to vector<128x128xf32>
    %57 = arith.mulf %20, %56 : vector<128x128xf32>
    %58 = vector.broadcast %55 : vector<1x128xf32> to vector<128x128xf32>
    %59 = arith.addf %57, %58 : vector<128x128xf32>
    %cst_32 = arith.constant 0.000000e+00 : f32
    %60 = vector.broadcast %cst_32 : f32 to vector<128x128xf32>
    %61 = arith.maximumf %59, %60 : vector<128x128xf32>
    %62 = arith.truncf %61 : vector<128x128xf32> to vector<128x128xbf16>
    %c0_33 = arith.constant 0 : index
    %c0_34 = arith.constant 0 : index
    %63 = vector.load %arg4[%c0_33, %c0_34] : memref<128x128xbf16, #tpu.memory_space<vmem>>, vector<128x128xbf16>
    tpu.vector_store %arg4[%c0_33, %c0_34], %62 {strides = array<i32>} : memref<128x128xbf16, #tpu.memory_space<vmem>>, vector<128x128xbf16>,
    return
  }
}

module attributes {stable_mosaic.version = 11 : i64} {
  func.func @_out_phase_gemm_tanh_kernel(%arg0: i32, %arg1: memref<4x512x128xbf16, #tpu.memory_space<vmem>>, %arg2: memref<4x128x4xbf16, #tpu.memory_space<vmem>>, %arg3: memref<1x4xf32, #tpu.memory_space<vmem>>, %arg4: memref<512x4xf32, #tpu.memory_space<vmem>>) attributes {dimension_semantics = [#tpu.dimension_semantics<parallel>], iteration_bounds = array<i64: 1>, scalar_prefetch = 0 : i64, scratch_operands = 0 : i64, tpu.core_type = #tpu.core_type<tc>, window_params = [{transform_indices = @transform_0, window_bounds = array<i64: 4, 512, 128>}, {pipeline_mode = #tpu.pipeline_mode<synchronous>, transform_indices = @transform_1, window_bounds = array<i64: 4, 128, 4>}, {pipeline_mode = #tpu.pipeline_mode<synchronous>, transform_indices = @transform_2, window_bounds = array<i64: 1, 4>}, {transform_indices = @transform_3, window_bounds = array<i64: 512, 4>}]} {
    %c0 = arith.constant 0 : index
    %c0_0 = arith.constant 0 : index
    %c0_1 = arith.constant 0 : index
    %0 = vector.load %arg1[%c0, %c0_0, %c0_1] : memref<4x512x128xbf16, #tpu.memory_space<vmem>>, vector<1x512x128xbf16>
    %1 = vector.shape_cast %0 : vector<1x512x128xbf16> to vector<512x128xbf16>
    %c0_2 = arith.constant 0 : index
    %c0_3 = arith.constant 0 : index
    %c0_4 = arith.constant 0 : index
    %2 = vector.load %arg2[%c0_2, %c0_3, %c0_4] : memref<4x128x4xbf16, #tpu.memory_space<vmem>>, vector<1x128x4xbf16>
    %3 = vector.shape_cast %2 : vector<1x128x4xbf16> to vector<128x4xbf16>
    %cst = arith.constant dense<0.000000e+00> : vector<512x4xf32>
    %4 = tpu.matmul %1, %3, %cst {dimension_numbers = #tpu.dot_dimension_numbers<[1], [0], [0], [1], [0, 0, 1, 1], [], []>} : vector<512x128xbf16>, vector<128x4xbf16>, vector<512x4xf32> -> vector<512x4xf32>
    %c1 = arith.constant 1 : index
    %c0_5 = arith.constant 0 : index
    %c0_6 = arith.constant 0 : index
    %5 = vector.load %arg1[%c1, %c0_5, %c0_6] : memref<4x512x128xbf16, #tpu.memory_space<vmem>>, vector<1x512x128xbf16>
    %6 = vector.shape_cast %5 : vector<1x512x128xbf16> to vector<512x128xbf16>
    %c1_7 = arith.constant 1 : index
    %c0_8 = arith.constant 0 : index
    %c0_9 = arith.constant 0 : index
    %7 = vector.load %arg2[%c1_7, %c0_8, %c0_9] : memref<4x128x4xbf16, #tpu.memory_space<vmem>>, vector<1x128x4xbf16>
    %8 = vector.shape_cast %7 : vector<1x128x4xbf16> to vector<128x4xbf16>
    %cst_10 = arith.constant dense<0.000000e+00> : vector<512x4xf32>
    %9 = tpu.matmul %6, %8, %cst_10 {dimension_numbers = #tpu.dot_dimension_numbers<[1], [0], [0], [1], [0, 0, 1, 1], [], []>} : vector<512x128xbf16>, vector<128x4xbf16>, vector<512x4xf32> -> vector<512x4xf32>
    %10 = arith.addf %4, %9 : vector<512x4xf32>
    %c2 = arith.constant 2 : index
    %c0_11 = arith.constant 0 : index
    %c0_12 = arith.constant 0 : index
    %11 = vector.load %arg1[%c2, %c0_11, %c0_12] : memref<4x512x128xbf16, #tpu.memory_space<vmem>>, vector<1x512x128xbf16>
    %12 = vector.shape_cast %11 : vector<1x512x128xbf16> to vector<512x128xbf16>
    %c2_13 = arith.constant 2 : index
    %c0_14 = arith.constant 0 : index
    %c0_15 = arith.constant 0 : index
    %13 = vector.load %arg2[%c2_13, %c0_14, %c0_15] : memref<4x128x4xbf16, #tpu.memory_space<vmem>>, vector<1x128x4xbf16>
    %14 = vector.shape_cast %13 : vector<1x128x4xbf16> to vector<128x4xbf16>
    %cst_16 = arith.constant dense<0.000000e+00> : vector<512x4xf32>
    %15 = tpu.matmul %12, %14, %cst_16 {dimension_numbers = #tpu.dot_dimension_numbers<[1], [0], [0], [1], [0, 0, 1, 1], [], []>} : vector<512x128xbf16>, vector<128x4xbf16>, vector<512x4xf32> -> vector<512x4xf32>
    %16 = arith.addf %10, %15 : vector<512x4xf32>
    %c3 = arith.constant 3 : index
    %c0_17 = arith.constant 0 : index
    %c0_18 = arith.constant 0 : index
    %17 = vector.load %arg1[%c3, %c0_17, %c0_18] : memref<4x512x128xbf16, #tpu.memory_space<vmem>>, vector<1x512x128xbf16>
    %18 = vector.shape_cast %17 : vector<1x512x128xbf16> to vector<512x128xbf16>
    %c3_19 = arith.constant 3 : index
    %c0_20 = arith.constant 0 : index
    %c0_21 = arith.constant 0 : index
    %19 = vector.load %arg2[%c3_19, %c0_20, %c0_21] : memref<4x128x4xbf16, #tpu.memory_space<vmem>>, vector<1x128x4xbf16>
    %20 = vector.shape_cast %19 : vector<1x128x4xbf16> to vector<128x4xbf16>
    %cst_22 = arith.constant dense<0.000000e+00> : vector<512x4xf32>
    %21 = tpu.matmul %18, %20, %cst_22 {dimension_numbers = #tpu.dot_dimension_numbers<[1], [0], [0], [1], [0, 0, 1, 1], [], []>} : vector<512x128xbf16>, vector<128x4xbf16>, vector<512x4xf32> -> vector<512x4xf32>
    %22 = arith.addf %16, %21 : vector<512x4xf32>
    %c0_23 = arith.constant 0 : index
    %c0_24 = arith.constant 0 : index
    %23 = vector.load %arg3[%c0_23, %c0_24] : memref<1x4xf32, #tpu.memory_space<vmem>>, vector<1x4xf32>
    %24 = vector.broadcast %23 : vector<1x4xf32> to vector<512x4xf32>
    %25 = arith.addf %22, %24 : vector<512x4xf32>
    %26 = math.tanh %25 : vector<512x4xf32>
    %c0_25 = arith.constant 0 : index
    %c0_26 = arith.constant 0 : index
    %27 = vector.load %arg4[%c0_25, %c0_26] : memref<512x4xf32, #tpu.memory_space<vmem>>, vector<512x4xf32>
    tpu.vector_store %arg4[%c0_25, %c0_26], %26 {strides = array<i32>} : memref<512x4xf32, #tpu.memory_space<vmem>>, vector<512x4xf32>,
    return
  }
  func.func @transform_0(%arg0: i32) -> (i32, i32, i32) {
    %c0_i32 = arith.constant 0 : i32
    %c0_i32_0 = arith.constant 0 : i32
    %c0_i32_1 = arith.constant 0 : i32
    return %c0_i32, %arg0, %c0_i32_0 : i32, i32, i32
  }
  func.func @transform_1(%arg0: i32) -> (i32, i32, i32) {
    %c0_i32 = arith.constant 0 : i32
    %c0_i32_0 = arith.constant 0 : i32
    %c0_i32_1 = arith.constant 0 : i32
    %c0_i32_2 = arith.constant 0 : i32
    return %c0_i32, %c0_i32_0, %c0_i32_1 : i32, i32, i32
  }
  func.func @transform_2(%arg0: i32) -> (i32, i32) {
    %c0_i32 = arith.constant 0 : i32
    %c0_i32_0 = arith.constant 0 : i32
    %c0_i32_1 = arith.constant 0 : i32
    return %c0_i32, %c0_i32_0 : i32, i32
  }
  func.func @transform_3(%arg0: i32) -> (i32, i32) {
    %c0_i32 = arith.constant 0 : i32
    %c0_i32_0 = arith.constant 0 : i32
    return %arg0, %c0_i32 : i32, i32
  }
}

</mosaic_0001>

<llo_original>
// kernel: generator_forward.4
$region0: #{generator_forward.4}
  #allocation0 [shape = 'u32[]', space=smem, size = 0x4, offset = 0x4, fixed_abs, tag = 'smem constant byte address 0x4 - core index']
  #allocation1 [shape = 'u32[144,128]{1,0:T(1,128)}', space=vmem, size = 0x12000, scoped, tag = 'internal scratch']
  %s0 = inlined_call_operand.vmem [shape: bf16[1,2,16], index: 0, kind: input, shape index: {}]
  %s1 = inlined_call_operand.hbm [shape: bf16[1,16,2048], index: 1, kind: input, shape index: {}]
  %s2 = inlined_call_operand.vmem [shape: f32[1,2048], index: 2, kind: input, shape index: {}]
  %s3 = inlined_call_operand.hbm [shape: f32[1,2048], index: 3, kind: input, shape index: {}]
  %s4 = inlined_call_operand.vmem [shape: bf16[2,2048], index: 4, kind: output, shape index: {}]
  %s5 = sld [smem:[#allocation0]]
  $region34: #{generator_forward.4} parent=0
    _
  %s7 = ssub.s32 1, %s5
  %s8 = scalar_select 0, %s7, %s5
  $region1: #{generator_forward.4} parent=0
    #allocation2 [shape = 'u8[65536]{0}', space=vmem, size = 0x10000, scoped, tag = 'input window, operand 1, single buffered']
    #allocation3 [shape = 's32[1]{0}', space=sflag, size = 0x4, scoped, tag = 'scoped memory for generator_forward.4']
    #allocation4 [shape = 'u8[8192]{0}', space=vmem, size = 0x2000, scoped, tag = 'input window, operand 3, single buffered']
    #allocation5 [shape = 's32[1]{0}', space=sflag, size = 0x4, scoped, tag = 'scoped memory for generator_forward.4']
    %9 = vsyncpa [#allocation3], 0
    %10 = vsyncpa [#allocation5], 0
    // Predicated region
    $region2: #{generator_forward.4} parent=1 // pred_check
      _
    $region3: #{generator_forward.4} parent=1 // pred_check_branch
      %12 = sbr.rel (0) target = $region5
    $region4: #{generator_forward.4} parent=1 // pred_region
      _
    $region5: #{generator_forward.4} parent=1 // pred_fallthru
      _
    // Predicated region
    $region6: #{generator_forward.4} parent=1 // pred_check
      _
    $region7: #{generator_forward.4} parent=1 // pred_check_branch
      %14 = sbr.rel (0) target = $region9
    $region8: #{generator_forward.4} parent=1 // pred_region
      %s16 = ssub.s32 2048, 2048
      %17 = vsyncadd [#allocation3], %s16
      %s18 = sshll.u32 [#allocation2], 4
      %s19 = int_to_ptr.vmem [resolvable:$true] %s18
      %24 = dma.hbm_to_vmem [thread:$0]  %s1, 2048, %s19, [#allocation3], 1024, 1024, 64
    $region9: #{generator_forward.4} parent=1 // pred_fallthru
      _
    // Predicated region
    $region10: #{generator_forward.4} parent=1 // pred_check
      _
    $region11: #{generator_forward.4} parent=1 // pred_check_branch
      %26 = sbr.rel (0) target = $region13
    $region12: #{generator_forward.4} parent=1 // pred_region
      _
    $region13: #{generator_forward.4} parent=1 // pred_fallthru
      _
    // Predicated region
    $region14: #{generator_forward.4} parent=1 // pred_check
      _
    $region15: #{generator_forward.4} parent=1 // pred_check_branch
      %28 = sbr.rel (0) target = $region17
    $region16: #{generator_forward.4} parent=1 // pred_region
      %s30 = ssub.s32 256, 256
      %31 = vsyncadd [#allocation5], %s30
      %s33 = sshll.u32 [#allocation4], 4
      %s34 = int_to_ptr.vmem [resolvable:$true] %s33
      %36 = dma.hbm_to_vmem [thread:$0]  %s3, 256, %s34, [#allocation5]
    $region17: #{generator_forward.4} parent=1 // pred_fallthru
      _
    // Predicated region
    $region18: #{generator_forward.4} parent=1 // pred_check
      _
    $region19: #{generator_forward.4} parent=1 // pred_check_branch
      %38 = sbr.rel (0) target = $region21
    $region20: #{generator_forward.4} parent=1 // pred_region
      %39 = dma.done [#allocation3], 2048
    $region21: #{generator_forward.4} parent=1 // pred_fallthru
      _
    // Predicated region
    $region22: #{generator_forward.4} parent=1 // pred_check
      _
    $region23: #{generator_forward.4} parent=1 // pred_check_branch
      %41 = sbr.rel (0) target = $region25
    $region24: #{generator_forward.4} parent=1 // pred_region
      %42 = dma.done [#allocation5], 256
    $region25: #{generator_forward.4} parent=1 // pred_fallthru
      _
    %v44 = vld [vmem:[%s0] sm:$0x1]
    %v45 = vld [vmem:[#allocation2] sm:$0xff]
    %v46 = vld [vmem:[#allocation2 + $0x8] sm:$0xff]
    %v47 = vld [vmem:[#allocation2 + $0x10] sm:$0xff]
    %v48 = vld [vmem:[#allocation2 + $0x18] sm:$0xff]
    %v49 = vld [vmem:[#allocation2 + $0x20] sm:$0xff]
    %v50 = vld [vmem:[#allocation2 + $0x28] sm:$0xff]
    %v51 = vld [vmem:[#allocation2 + $0x30] sm:$0xff]
    %v52 = vld [vmem:[#allocation2 + $0x38] sm:$0xff]
    %v53 = vld [vmem:[#allocation2 + $0x40] sm:$0xff]
    %v54 = vld [vmem:[#allocation2 + $0x48] sm:$0xff]
    %v55 = vld [vmem:[#allocation2 + $0x50] sm:$0xff]
    %v56 = vld [vmem:[#allocation2 + $0x58] sm:$0xff]
    %v57 = vld [vmem:[#allocation2 + $0x60] sm:$0xff]
    %v58 = vld [vmem:[#allocation2 + $0x68] sm:$0xff]
    %v59 = vld [vmem:[#allocation2 + $0x70] sm:$0xff]
    %v60 = vld [vmem:[#allocation2 + $0x78] sm:$0xff]
    %v77 = vunpack.c.l.b16 %v45
    %v78 = vunpack.c.h.b16 %v45
    %v79 = vunpack.c.l.b16 %v46
    %v80 = vunpack.c.h.b16 %v46
    %v81 = vunpack.c.l.b16 %v47
    %v82 = vunpack.c.h.b16 %v47
    %v83 = vunpack.c.l.b16 %v48
    %v84 = vunpack.c.h.b16 %v48
    %v85 = vunpack.c.l.b16 %v49
    %v86 = vunpack.c.h.b16 %v49
    %v87 = vunpack.c.l.b16 %v50
    %v88 = vunpack.c.h.b16 %v50
    %v89 = vunpack.c.l.b16 %v51
    %v90 = vunpack.c.h.b16 %v51
    %v91 = vunpack.c.l.b16 %v52
    %v92 = vunpack.c.h.b16 %v52
    %v93 = vunpack.c.l.b16 %v53
    %v94 = vunpack.c.h.b16 %v53
    %v95 = vunpack.c.l.b16 %v54
    %v96 = vunpack.c.h.b16 %v54
    %v97 = vunpack.c.l.b16 %v55
    %v98 = vunpack.c.h.b16 %v55
    %v99 = vunpack.c.l.b16 %v56
    %v100 = vunpack.c.h.b16 %v56
    %v101 = vunpack.c.l.b16 %v57
    %v102 = vunpack.c.h.b16 %v57
    %v103 = vunpack.c.l.b16 %v58
    %v104 = vunpack.c.h.b16 %v58
    %v105 = vunpack.c.l.b16 %v59
    %v106 = vunpack.c.h.b16 %v59
    %v107 = vunpack.c.l.b16 %v60
    %v108 = vunpack.c.h.b16 %v60
    %v109 = vpack.c.b16 %v93, %v77
    %v110 = vpack.c.b16 %v94, %v78
    %v111 = vpack.c.b16 %v95, %v79
    %v112 = vpack.c.b16 %v96, %v80
    %v113 = vpack.c.b16 %v97, %v81
    %v114 = vpack.c.b16 %v98, %v82
    %v115 = vpack.c.b16 %v99, %v83
    %v116 = vpack.c.b16 %v100, %v84
    %v117 = vpack.c.b16 %v101, %v85
    %v118 = vpack.c.b16 %v102, %v86
    %v119 = vpack.c.b16 %v103, %v87
    %v120 = vpack.c.b16 %v104, %v88
    %v121 = vpack.c.b16 %v105, %v89
    %v122 = vpack.c.b16 %v106, %v90
    %v123 = vpack.c.b16 %v107, %v91
    %v124 = vpack.c.b16 %v108, %v92
    %vm141 = vcmask 130048
    %v143 = vsel %vm141, %v44, 0
    %145 = vmatprep.subr.bf16.mxu0 0
    %146 = vmatpush1.bf16.msra.mxu0 0
    %147 = vmatprep.subr.bf16.mxu0 0
    %148 = vmatpush1.bf16.msra.mxu0 0
    %149 = vmatprep.subr.bf16.mxu0 0
    %150 = vmatpush1.bf16.msra.mxu0 0
    %151 = vmatprep.subr.bf16.mxu0 0
    %152 = vmatpush1.bf16.msra.mxu0 0
    %153 = vmatprep.subr.bf16.mxu0 0
    %154 = vmatpush1.bf16.msra.mxu0 0
    %155 = vmatprep.subr.bf16.mxu0 0
    %156 = vmatpush1.bf16.msra.mxu0 0
    %157 = vmatprep.subr.bf16.mxu0 0
    %158 = vmatpush1.bf16.msra.mxu0 0
    %159 = vmatprep.subr.bf16.mxu0 %v110
    %160 = vmatpush1.bf16.msra.mxu0 %v109
    %161 = vmatprep.subr.bf16.mxu0 0
    %162 = vmatpush2.bf16.msra.mxu0 0
    %163 = vmatprep.subr.bf16.mxu0 0
    %164 = vmatpush2.bf16.msra.mxu0 0
    %165 = vmatprep.subr.bf16.mxu0 0
    %166 = vmatpush2.bf16.msra.mxu0 0
    %167 = vmatprep.subr.bf16.mxu0 0
    %168 = vmatpush2.bf16.msra.mxu0 0
    %169 = vmatprep.subr.bf16.mxu0 0
    %170 = vmatpush2.bf16.msra.mxu0 0
    %171 = vmatprep.subr.bf16.mxu0 0
    %172 = vmatpush2.bf16.msra.mxu0 0
    %173 = vmatprep.subr.bf16.mxu0 0
    %174 = vmatpush2.bf16.msra.mxu0 0
    %175 = vmatprep.subr.bf16.mxu0 0
    %176 = vmatpush2.bf16.msra.mxu0 0
    %177 = vmatprep.mubr.bf16.mxu0 0
    %178 = vmatmul.mubr.bf16.gmra.mxu0 %v143
    %v179 = vpop.f32.mrf.mxu0
    %v180 = vadd.f32 0.0, %v179
    %v181 = vpop.f32.mrf.mxu0
    %v182 = vadd.f32 0.0, %v181
    %v183 = vpop.f32.mrf.mxu0
    %v184 = vpop.f32.mrf.mxu0
    %185 = vdwg.mxu0
    %186 = vmatprep.subr.bf16.mxu0 0
    %187 = vmatpush1.bf16.msra.mxu0 0
    %188 = vmatprep.subr.bf16.mxu0 0
    %189 = vmatpush1.bf16.msra.mxu0 0
    %190 = vmatprep.subr.bf16.mxu0 0
    %191 = vmatpush1.bf16.msra.mxu0 0
    %192 = vmatprep.subr.bf16.mxu0 0
    %193 = vmatpush1.bf16.msra.mxu0 0
    %194 = vmatprep.subr.bf16.mxu0 0
    %195 = vmatpush1.bf16.msra.mxu0 0
    %196 = vmatprep.subr.bf16.mxu0 0
    %197 = vmatpush1.bf16.msra.mxu0 0
    %198 = vmatprep.subr.bf16.mxu0 0
    %199 = vmatpush1.bf16.msra.mxu0 0
    %200 = vmatprep.subr.bf16.mxu0 %v112
    %201 = vmatpush1.bf16.msra.mxu0 %v111
    %202 = vmatprep.subr.bf16.mxu0 0
    %203 = vmatpush2.bf16.msra.mxu0 0
    %204 = vmatprep.subr.bf16.mxu0 0
    %205 = vmatpush2.bf16.msra.mxu0 0
    %206 = vmatprep.subr.bf16.mxu0 0
    %207 = vmatpush2.bf16.msra.mxu0 0
    %208 = vmatprep.subr.bf16.mxu0 0
    %209 = vmatpush2.bf16.msra.mxu0 0
    %210 = vmatprep.subr.bf16.mxu0 0
    %211 = vmatpush2.bf16.msra.mxu0 0
    %212 = vmatprep.subr.bf16.mxu0 0
    %213 = vmatpush2.bf16.msra.mxu0 0
    %214 = vmatprep.subr.bf16.mxu0 0
    %215 = vmatpush2.bf16.msra.mxu0 0
    %216 = vmatprep.subr.bf16.mxu0 0
    %217 = vmatpush2.bf16.msra.mxu0 0
    %218 = vmatprep.mubr.bf16.mxu0 0
    %219 = vmatmul.mubr.bf16.gmra.mxu0 %v143
    %v220 = vpop.f32.mrf.mxu0
    %v221 = vadd.f32 0.0, %v220
    %v222 = vpop.f32.mrf.mxu0
    %v223 = vadd.f32 0.0, %v222
    %v224 = vpop.f32.mrf.mxu0
    %v225 = vpop.f32.mrf.mxu0
    %226 = vdwg.mxu0
    %227 = vmatprep.subr.bf16.mxu0 0
    %228 = vmatpush1.bf16.msra.mxu0 0
    %229 = vmatprep.subr.bf16.mxu0 0
    %230 = vmatpush1.bf16.msra.mxu0 0
    %231 = vmatprep.subr.bf16.mxu0 0
    %232 = vmatpush1.bf16.msra.mxu0 0
    %233 = vmatprep.subr.bf16.mxu0 0
    %234 = vmatpush1.bf16.msra.mxu0 0
    %235 = vmatprep.subr.bf16.mxu0 0
    %236 = vmatpush1.bf16.msra.mxu0 0
    %237 = vmatprep.subr.bf16.mxu0 0
    %238 = vmatpush1.bf16.msra.mxu0 0
    %239 = vmatprep.subr.bf16.mxu0 0
    %240 = vmatpush1.bf16.msra.mxu0 0
    %241 = vmatprep.subr.bf16.mxu0 %v114
    %242 = vmatpush1.bf16.msra.mxu0 %v113
    %243 = vmatprep.subr.bf16.mxu0 0
    %244 = vmatpush2.bf16.msra.mxu0 0
    %245 = vmatprep.subr.bf16.mxu0 0
    %246 = vmatpush2.bf16.msra.mxu0 0
    %247 = vmatprep.subr.bf16.mxu0 0
    %248 = vmatpush2.bf16.msra.mxu0 0
    %249 = vmatprep.subr.bf16.mxu0 0
    %250 = vmatpush2.bf16.msra.mxu0 0
    %251 = vmatprep.subr.bf16.mxu0 0
    %252 = vmatpush2.bf16.msra.mxu0 0
    %253 = vmatprep.subr.bf16.mxu0 0
    %254 = vmatpush2.bf16.msra.mxu0 0
    %255 = vmatprep.subr.bf16.mxu0 0
    %256 = vmatpush2.bf16.msra.mxu0 0
    %257 = vmatprep.subr.bf16.mxu0 0
    %258 = vmatpush2.bf16.msra.mxu0 0
    %259 = vmatprep.mubr.bf16.mxu0 0
    %260 = vmatmul.mubr.bf16.gmra.mxu0 %v143
    %v261 = vpop.f32.mrf.mxu0
    %v262 = vadd.f32 0.0, %v261
    %v263 = vpop.f32.mrf.mxu0
    %v264 = vadd.f32 0.0, %v263
    %v265 = vpop.f32.mrf.mxu0
    %v266 = vpop.f32.mrf.mxu0
    %267 = vdwg.mxu0
    %268 = vmatprep.subr.bf16.mxu0 0
    %269 = vmatpush1.bf16.msra.mxu0 0
    %270 = vmatprep.subr.bf16.mxu0 0
    %271 = vmatpush1.bf16.msra.mxu0 0
    %272 = vmatprep.subr.bf16.mxu0 0
    %273 = vmatpush1.bf16.msra.mxu0 0
    %274 = vmatprep.subr.bf16.mxu0 0
    %275 = vmatpush1.bf16.msra.mxu0 0
    %276 = vmatprep.subr.bf16.mxu0 0
    %277 = vmatpush1.bf16.msra.mxu0 0
    %278 = vmatprep.subr.bf16.mxu0 0
    %279 = vmatpush1.bf16.msra.mxu0 0
    %280 = vmatprep.subr.bf16.mxu0 0
    %281 = vmatpush1.bf16.msra.mxu0 0
    %282 = vmatprep.subr.bf16.mxu0 %v116
    %283 = vmatpush1.bf16.msra.mxu0 %v115
    %284 = vmatprep.subr.bf16.mxu0 0
    %285 = vmatpush2.bf16.msra.mxu0 0
    %286 = vmatprep.subr.bf16.mxu0 0
    %287 = vmatpush2.bf16.msra.mxu0 0
    %288 = vmatprep.subr.bf16.mxu0 0
    %289 = vmatpush2.bf16.msra.mxu0 0
    %290 = vmatprep.subr.bf16.mxu0 0
    %291 = vmatpush2.bf16.msra.mxu0 0
    %292 = vmatprep.subr.bf16.mxu0 0
    %293 = vmatpush2.bf16.msra.mxu0 0
    %294 = vmatprep.subr.bf16.mxu0 0
    %295 = vmatpush2.bf16.msra.mxu0 0
    %296 = vmatprep.subr.bf16.mxu0 0
    %297 = vmatpush2.bf16.msra.mxu0 0
    %298 = vmatprep.subr.bf16.mxu0 0
    %299 = vmatpush2.bf16.msra.mxu0 0
    %300 = vmatprep.mubr.bf16.mxu0 0
    %301 = vmatmul.mubr.bf16.gmra.mxu0 %v143
    %v302 = vpop.f32.mrf.mxu0
    %v303 = vadd.f32 0.0, %v302
    %v304 = vpop.f32.mrf.mxu0
    %v305 = vadd.f32 0.0, %v304
    %v306 = vpop.f32.mrf.mxu0
    %v307 = vpop.f32.mrf.mxu0
    %308 = vdwg.mxu0
    %309 = vmatprep.subr.bf16.mxu0 0
    %310 = vmatpush1.bf16.msra.mxu0 0
    %311 = vmatprep.subr.bf16.mxu0 0
    %312 = vmatpush1.bf16.msra.mxu0 0
    %313 = vmatprep.subr.bf16.mxu0 0
    %314 = vmatpush1.bf16.msra.mxu0 0
    %315 = vmatprep.subr.bf16.mxu0 0
    %316 = vmatpush1.bf16.msra.mxu0 0
    %317 = vmatprep.subr.bf16.mxu0 0
    %318 = vmatpush1.bf16.msra.mxu0 0
    %319 = vmatprep.subr.bf16.mxu0 0
    %320 = vmatpush1.bf16.msra.mxu0 0
    %321 = vmatprep.subr.bf16.mxu0 0
    %322 = vmatpush1.bf16.msra.mxu0 0
    %323 = vmatprep.subr.bf16.mxu0 %v118
    %324 = vmatpush1.bf16.msra.mxu0 %v117
    %325 = vmatprep.subr.bf16.mxu0 0
    %326 = vmatpush2.bf16.msra.mxu0 0
    %327 = vmatprep.subr.bf16.mxu0 0
    %328 = vmatpush2.bf16.msra.mxu0 0
    %329 = vmatprep.subr.bf16.mxu0 0
    %330 = vmatpush2.bf16.msra.mxu0 0
    %331 = vmatprep.subr.bf16.mxu0 0
    %332 = vmatpush2.bf16.msra.mxu0 0
    %333 = vmatprep.subr.bf16.mxu0 0
    %334 = vmatpush2.bf16.msra.mxu0 0
    %335 = vmatprep.subr.bf16.mxu0 0
    %336 = vmatpush2.bf16.msra.mxu0 0
    %337 = vmatprep.subr.bf16.mxu0 0
    %338 = vmatpush2.bf16.msra.mxu0 0
    %339 = vmatprep.subr.bf16.mxu0 0
    %340 = vmatpush2.bf16.msra.mxu0 0
    %341 = vmatprep.mubr.bf16.mxu0 0
    %342 = vmatmul.mubr.bf16.gmra.mxu0 %v143
    %v343 = vpop.f32.mrf.mxu0
    %v344 = vadd.f32 0.0, %v343
    %v345 = vpop.f32.mrf.mxu0
    %v346 = vadd.f32 0.0, %v345
    %v347 = vpop.f32.mrf.mxu0
    %v348 = vpop.f32.mrf.mxu0
    %349 = vdwg.mxu0
    %350 = vmatprep.subr.bf16.mxu0 0
    %351 = vmatpush1.bf16.msra.mxu0 0
    %352 = vmatprep.subr.bf16.mxu0 0
    %353 = vmatpush1.bf16.msra.mxu0 0
    %354 = vmatprep.subr.bf16.mxu0 0
    %355 = vmatpush1.bf16.msra.mxu0 0
    %356 = vmatprep.subr.bf16.mxu0 0
    %357 = vmatpush1.bf16.msra.mxu0 0
    %358 = vmatprep.subr.bf16.mxu0 0
    %359 = vmatpush1.bf16.msra.mxu0 0
    %360 = vmatprep.subr.bf16.mxu0 0
    %361 = vmatpush1.bf16.msra.mxu0 0
    %362 = vmatprep.subr.bf16.mxu0 0
    %363 = vmatpush1.bf16.msra.mxu0 0
    %364 = vmatprep.subr.bf16.mxu0 %v120
    %365 = vmatpush1.bf16.msra.mxu0 %v119
    %366 = vmatprep.subr.bf16.mxu0 0
    %367 = vmatpush2.bf16.msra.mxu0 0
    %368 = vmatprep.subr.bf16.mxu0 0
    %369 = vmatpush2.bf16.msra.mxu0 0
    %370 = vmatprep.subr.bf16.mxu0 0
    %371 = vmatpush2.bf16.msra.mxu0 0
    %372 = vmatprep.subr.bf16.mxu0 0
    %373 = vmatpush2.bf16.msra.mxu0 0
    %374 = vmatprep.subr.bf16.mxu0 0
    %375 = vmatpush2.bf16.msra.mxu0 0
    %376 = vmatprep.subr.bf16.mxu0 0
    %377 = vmatpush2.bf16.msra.mxu0 0
    %378 = vmatprep.subr.bf16.mxu0 0
    %379 = vmatpush2.bf16.msra.mxu0 0
    %380 = vmatprep.subr.bf16.mxu0 0
    %381 = vmatpush2.bf16.msra.mxu0 0
    %382 = vmatprep.mubr.bf16.mxu0 0
    %383 = vmatmul.mubr.bf16.gmra.mxu0 %v143
    %v384 = vpop.f32.mrf.mxu0
    %v385 = vadd.f32 0.0, %v384
    %v386 = vpop.f32.mrf.mxu0
    %v387 = vadd.f32 0.0, %v386
    %v388 = vpop.f32.mrf.mxu0
    %v389 = vpop.f32.mrf.mxu0
    %390 = vdwg.mxu0
    %391 = vmatprep.subr.bf16.mxu0 0
    %392 = vmatpush1.bf16.msra.mxu0 0
    %393 = vmatprep.subr.bf16.mxu0 0
    %394 = vmatpush1.bf16.msra.mxu0 0
    %395 = vmatprep.subr.bf16.mxu0 0
    %396 = vmatpush1.bf16.msra.mxu0 0
    %397 = vmatprep.subr.bf16.mxu0 0
    %398 = vmatpush1.bf16.msra.mxu0 0
    %399 = vmatprep.subr.bf16.mxu0 0
    %400 = vmatpush1.bf16.msra.mxu0 0
    %401 = vmatprep.subr.bf16.mxu0 0
    %402 = vmatpush1.bf16.msra.mxu0 0
    %403 = vmatprep.subr.bf16.mxu0 0
    %404 = vmatpush1.bf16.msra.mxu0 0
    %405 = vmatprep.subr.bf16.mxu0 %v122
    %406 = vmatpush1.bf16.msra.mxu0 %v121
    %407 = vmatprep.subr.bf16.mxu0 0
    %408 = vmatpush2.bf16.msra.mxu0 0
    %409 = vmatprep.subr.bf16.mxu0 0
    %410 = vmatpush2.bf16.msra.mxu0 0
    %411 = vmatprep.subr.bf16.mxu0 0
    %412 = vmatpush2.bf16.msra.mxu0 0
    %413 = vmatprep.subr.bf16.mxu0 0
    %414 = vmatpush2.bf16.msra.mxu0 0
    %415 = vmatprep.subr.bf16.mxu0 0
    %416 = vmatpush2.bf16.msra.mxu0 0
    %417 = vmatprep.subr.bf16.mxu0 0
    %418 = vmatpush2.bf16.msra.mxu0 0
    %419 = vmatprep.subr.bf16.mxu0 0
    %420 = vmatpush2.bf16.msra.mxu0 0
    %421 = vmatprep.subr.bf16.mxu0 0
    %422 = vmatpush2.bf16.msra.mxu0 0
    %423 = vmatprep.mubr.bf16.mxu0 0
    %424 = vmatmul.mubr.bf16.gmra.mxu0 %v143
    %v425 = vpop.f32.mrf.mxu0
    %v426 = vadd.f32 0.0, %v425
    %v427 = vpop.f32.mrf.mxu0
    %v428 = vadd.f32 0.0, %v427
    %v429 = vpop.f32.mrf.mxu0
    %v430 = vpop.f32.mrf.mxu0
    %431 = vdwg.mxu0
    %432 = vmatprep.subr.bf16.mxu0 0
    %433 = vmatpush1.bf16.msra.mxu0 0
    %434 = vmatprep.subr.bf16.mxu0 0
    %435 = vmatpush1.bf16.msra.mxu0 0
    %436 = vmatprep.subr.bf16.mxu0 0
    %437 = vmatpush1.bf16.msra.mxu0 0
    %438 = vmatprep.subr.bf16.mxu0 0
    %439 = vmatpush1.bf16.msra.mxu0 0
    %440 = vmatprep.subr.bf16.mxu0 0
    %441 = vmatpush1.bf16.msra.mxu0 0
    %442 = vmatprep.subr.bf16.mxu0 0
    %443 = vmatpush1.bf16.msra.mxu0 0
    %444 = vmatprep.subr.bf16.mxu0 0
    %445 = vmatpush1.bf16.msra.mxu0 0
    %446 = vmatprep.subr.bf16.mxu0 %v124
    %447 = vmatpush1.bf16.msra.mxu0 %v123
    %448 = vmatprep.subr.bf16.mxu0 0
    %449 = vmatpush2.bf16.msra.mxu0 0
    %450 = vmatprep.subr.bf16.mxu0 0
    %451 = vmatpush2.bf16.msra.mxu0 0
    %452 = vmatprep.subr.bf16.mxu0 0
    %453 = vmatpush2.bf16.msra.mxu0 0
    %454 = vmatprep.subr.bf16.mxu0 0
    %455 = vmatpush2.bf16.msra.mxu0 0
    %456 = vmatprep.subr.bf16.mxu0 0
    %457 = vmatpush2.bf16.msra.mxu0 0
    %458 = vmatprep.subr.bf16.mxu0 0
    %459 = vmatpush2.bf16.msra.mxu0 0
    %460 = vmatprep.subr.bf16.mxu0 0
    %461 = vmatpush2.bf16.msra.mxu0 0
    %462 = vmatprep.subr.bf16.mxu0 0
    %463 = vmatpush2.bf16.msra.mxu0 0
    %464 = vmatprep.mubr.bf16.mxu0 0
    %465 = vmatmul.mubr.bf16.gmra.mxu0 %v143
    %v466 = vpop.f32.mrf.mxu0
    %v467 = vadd.f32 0.0, %v466
    %v468 = vpop.f32.mrf.mxu0
    %v469 = vadd.f32 0.0, %v468
    %v470 = vpop.f32.mrf.mxu0
    %v471 = vpop.f32.mrf.mxu0
    %472 = vdwg.mxu0
    %vm473 = vcmask 1041408
    %v474 = vsel %vm473, %v180, 0.0
    %v475 = vrot.slane %v474, 4
    %v476 = vadd.f32 %v474, %v475
    %v477 = vrot.slane %v476, 2
    %v478 = vadd.f32 %v476, %v477
    %v479 = vrot.slane %v478, 1
    %v480 = vadd.f32 %v478, %v479
    %v481 = vsel %vm473, %v182, 0.0
    %v482 = vrot.slane %v481, 4
    %v483 = vadd.f32 %v481, %v482
    %v484 = vrot.slane %v483, 2
    %v485 = vadd.f32 %v483, %v484
    %v486 = vrot.slane %v485, 1
    %v487 = vadd.f32 %v485, %v486
    %v488 = vsel %vm473, %v221, 0.0
    %v489 = vrot.slane %v488, 4
    %v490 = vadd.f32 %v488, %v489
    %v491 = vrot.slane %v490, 2
    %v492 = vadd.f32 %v490, %v491
    %v493 = vrot.slane %v492, 1
    %v494 = vadd.f32 %v492, %v493
    %v495 = vsel %vm473, %v223, 0.0
    %v496 = vrot.slane %v495, 4
    %v497 = vadd.f32 %v495, %v496
    %v498 = vrot.slane %v497, 2
    %v499 = vadd.f32 %v497, %v498
    %v500 = vrot.slane %v499, 1
    %v501 = vadd.f32 %v499, %v500
    %v502 = vsel %vm473, %v262, 0.0
    %v503 = vrot.slane %v502, 4
    %v504 = vadd.f32 %v502, %v503
    %v505 = vrot.slane %v504, 2
    %v506 = vadd.f32 %v504, %v505
    %v507 = vrot.slane %v506, 1
    %v508 = vadd.f32 %v506, %v507
    %v509 = vsel %vm473, %v264, 0.0
    %v510 = vrot.slane %v509, 4
    %v511 = vadd.f32 %v509, %v510
    %v512 = vrot.slane %v511, 2
    %v513 = vadd.f32 %v511, %v512
    %v514 = vrot.slane %v513, 1
    %v515 = vadd.f32 %v513, %v514
    %v516 = vsel %vm473, %v303, 0.0
    %v517 = vrot.slane %v516, 4
    %v518 = vadd.f32 %v516, %v517
    %v519 = vrot.slane %v518, 2
    %v520 = vadd.f32 %v518, %v519
    %v521 = vrot.slane %v520, 1
    %v522 = vadd.f32 %v520, %v521
    %v523 = vsel %vm473, %v305, 0.0
    %v524 = vrot.slane %v523, 4
    %v525 = vadd.f32 %v523, %v524
    %v526 = vrot.slane %v525, 2
    %v527 = vadd.f32 %v525, %v526
    %v528 = vrot.slane %v527, 1
    %v529 = vadd.f32 %v527, %v528
    %v530 = vsel %vm473, %v344, 0.0
    %v531 = vrot.slane %v530, 4
    %v532 = vadd.f32 %v530, %v531
    %v533 = vrot.slane %v532, 2
    %v534 = vadd.f32 %v532, %v533
    %v535 = vrot.slane %v534, 1
    %v536 = vadd.f32 %v534, %v535
    %v537 = vsel %vm473, %v346, 0.0
    %v538 = vrot.slane %v537, 4
    %v539 = vadd.f32 %v537, %v538
    %v540 = vrot.slane %v539, 2
    %v541 = vadd.f32 %v539, %v540
    %v542 = vrot.slane %v541, 1
    %v543 = vadd.f32 %v541, %v542
    %v544 = vsel %vm473, %v385, 0.0
    %v545 = vrot.slane %v544, 4
    %v546 = vadd.f32 %v544, %v545
    %v547 = vrot.slane %v546, 2
    %v548 = vadd.f32 %v546, %v547
    %v549 = vrot.slane %v548, 1
    %v550 = vadd.f32 %v548, %v549
    %v551 = vsel %vm473, %v387, 0.0
    %v552 = vrot.slane %v551, 4
    %v553 = vadd.f32 %v551, %v552
    %v554 = vrot.slane %v553, 2
    %v555 = vadd.f32 %v553, %v554
    %v556 = vrot.slane %v555, 1
    %v557 = vadd.f32 %v555, %v556
    %v558 = vsel %vm473, %v426, 0.0
    %v559 = vrot.slane %v558, 4
    %v560 = vadd.f32 %v558, %v559
    %v561 = vrot.slane %v560, 2
    %v562 = vadd.f32 %v560, %v561
    %v563 = vrot.slane %v562, 1
    %v564 = vadd.f32 %v562, %v563
    %v565 = vsel %vm473, %v428, 0.0
    %v566 = vrot.slane %v565, 4
    %v567 = vadd.f32 %v565, %v566
    %v568 = vrot.slane %v567, 2
    %v569 = vadd.f32 %v567, %v568
    %v570 = vrot.slane %v569, 1
    %v571 = vadd.f32 %v569, %v570
    %v572 = vsel %vm473, %v467, 0.0
    %v573 = vrot.slane %v572, 4
    %v574 = vadd.f32 %v572, %v573
    %v575 = vrot.slane %v574, 2
    %v576 = vadd.f32 %v574, %v575
    %v577 = vrot.slane %v576, 1
    %v578 = vadd.f32 %v576, %v577
    %v579 = vsel %vm473, %v469, 0.0
    %v580 = vrot.slane %v579, 4
    %v581 = vadd.f32 %v579, %v580
    %v582 = vrot.slane %v581, 2
    %v583 = vadd.f32 %v581, %v582
    %v584 = vrot.slane %v583, 1
    %v585 = vadd.f32 %v583, %v584
    %v586 = vmul.f32 %v180, %v180
    %v587 = vmul.f32 %v182, %v182
    %v588 = vmul.f32 %v221, %v221
    %v589 = vmul.f32 %v223, %v223
    %v590 = vmul.f32 %v262, %v262
    %v591 = vmul.f32 %v264, %v264
    %v592 = vmul.f32 %v303, %v303
    %v593 = vmul.f32 %v305, %v305
    %v594 = vmul.f32 %v344, %v344
    %v595 = vmul.f32 %v346, %v346
    %v596 = vmul.f32 %v385, %v385
    %v597 = vmul.f32 %v387, %v387
    %v598 = vmul.f32 %v426, %v426
    %v599 = vmul.f32 %v428, %v428
    %v600 = vmul.f32 %v467, %v467
    %v601 = vmul.f32 %v469, %v469
    %v602 = vsel %vm473, %v586, 0.0
    %v603 = vrot.slane %v602, 4
    %v604 = vadd.f32 %v602, %v603
    %v605 = vrot.slane %v604, 2
    %v606 = vadd.f32 %v604, %v605
    %v607 = vrot.slane %v606, 1
    %v608 = vadd.f32 %v606, %v607
    %v609 = vsel %vm473, %v587, 0.0
    %v610 = vrot.slane %v609, 4
    %v611 = vadd.f32 %v609, %v610
    %v612 = vrot.slane %v611, 2
    %v613 = vadd.f32 %v611, %v612
    %v614 = vrot.slane %v613, 1
    %v615 = vadd.f32 %v613, %v614
    %v616 = vsel %vm473, %v588, 0.0
    %v617 = vrot.slane %v616, 4
    %v618 = vadd.f32 %v616, %v617
    %v619 = vrot.slane %v618, 2
    %v620 = vadd.f32 %v618, %v619
    %v621 = vrot.slane %v620, 1
    %v622 = vadd.f32 %v620, %v621
    %v623 = vsel %vm473, %v589, 0.0
    %v624 = vrot.slane %v623, 4
    %v625 = vadd.f32 %v623, %v624
    %v626 = vrot.slane %v625, 2
    %v627 = vadd.f32 %v625, %v626
    %v628 = vrot.slane %v627, 1
    %v629 = vadd.f32 %v627, %v628
    %v630 = vsel %vm473, %v590, 0.0
    %v631 = vrot.slane %v630, 4
    %v632 = vadd.f32 %v630, %v631
    %v633 = vrot.slane %v632, 2
    %v634 = vadd.f32 %v632, %v633
    %v635 = vrot.slane %v634, 1
    %v636 = vadd.f32 %v634, %v635
    %v637 = vsel %vm473, %v591, 0.0
    %v638 = vrot.slane %v637, 4
    %v639 = vadd.f32 %v637, %v638
    %v640 = vrot.slane %v639, 2
    %v641 = vadd.f32 %v639, %v640
    %v642 = vrot.slane %v641, 1
    %v643 = vadd.f32 %v641, %v642
    %v644 = vsel %vm473, %v592, 0.0
    %v645 = vrot.slane %v644, 4
    %v646 = vadd.f32 %v644, %v645
    %v647 = vrot.slane %v646, 2
    %v648 = vadd.f32 %v646, %v647
    %v649 = vrot.slane %v648, 1
    %v650 = vadd.f32 %v648, %v649
    %v651 = vsel %vm473, %v593, 0.0
    %v652 = vrot.slane %v651, 4
    %v653 = vadd.f32 %v651, %v652
    %v654 = vrot.slane %v653, 2
    %v655 = vadd.f32 %v653, %v654
    %v656 = vrot.slane %v655, 1
    %v657 = vadd.f32 %v655, %v656
    %v658 = vsel %vm473, %v594, 0.0
    %v659 = vrot.slane %v658, 4
    %v660 = vadd.f32 %v658, %v659
    %v661 = vrot.slane %v660, 2
    %v662 = vadd.f32 %v660, %v661
    %v663 = vrot.slane %v662, 1
    %v664 = vadd.f32 %v662, %v663
    %v665 = vsel %vm473, %v595, 0.0
    %v666 = vrot.slane %v665, 4
    %v667 = vadd.f32 %v665, %v666
    %v668 = vrot.slane %v667, 2
    %v669 = vadd.f32 %v667, %v668
    %v670 = vrot.slane %v669, 1
    %v671 = vadd.f32 %v669, %v670
    %v672 = vsel %vm473, %v596, 0.0
    %v673 = vrot.slane %v672, 4
    %v674 = vadd.f32 %v672, %v673
    %v675 = vrot.slane %v674, 2
    %v676 = vadd.f32 %v674, %v675
    %v677 = vrot.slane %v676, 1
    %v678 = vadd.f32 %v676, %v677
    %v679 = vsel %vm473, %v597, 0.0
    %v680 = vrot.slane %v679, 4
    %v681 = vadd.f32 %v679, %v680
    %v682 = vrot.slane %v681, 2
    %v683 = vadd.f32 %v681, %v682
    %v684 = vrot.slane %v683, 1
    %v685 = vadd.f32 %v683, %v684
    %v686 = vsel %vm473, %v598, 0.0
    %v687 = vrot.slane %v686, 4
    %v688 = vadd.f32 %v686, %v687
    %v689 = vrot.slane %v688, 2
    %v690 = vadd.f32 %v688, %v689
    %v691 = vrot.slane %v690, 1
    %v692 = vadd.f32 %v690, %v691
    %v693 = vsel %vm473, %v599, 0.0
    %v694 = vrot.slane %v693, 4
    %v695 = vadd.f32 %v693, %v694
    %v696 = vrot.slane %v695, 2
    %v697 = vadd.f32 %v695, %v696
    %v698 = vrot.slane %v697, 1
    %v699 = vadd.f32 %v697, %v698
    %v700 = vsel %vm473, %v600, 0.0
    %v701 = vrot.slane %v700, 4
    %v702 = vadd.f32 %v700, %v701
    %v703 = vrot.slane %v702, 2
    %v704 = vadd.f32 %v702, %v703
    %v705 = vrot.slane %v704, 1
    %v706 = vadd.f32 %v704, %v705
    %v707 = vsel %vm473, %v601, 0.0
    %v708 = vrot.slane %v707, 4
    %v709 = vadd.f32 %v707, %v708
    %v710 = vrot.slane %v709, 2
    %v711 = vadd.f32 %v709, %v710
    %v712 = vrot.slane %v711, 1
    %v713 = vadd.f32 %v711, %v712
    %v714 = vadd.f32 %v480, %v487
    %v715 = vadd.f32 %v608, %v615
    %v716 = vadd.f32 %v714, %v494
    %v717 = vadd.f32 %v715, %v622
    %v718 = vadd.f32 %v716, %v501
    %v719 = vadd.f32 %v717, %v629
    %v720 = vadd.f32 %v718, %v508
    %v721 = vadd.f32 %v719, %v636
    %v722 = vadd.f32 %v720, %v515
    %v723 = vadd.f32 %v721, %v643
    %v724 = vadd.f32 %v722, %v522
    %v725 = vadd.f32 %v723, %v650
    %v726 = vadd.f32 %v724, %v529
    %v727 = vadd.f32 %v725, %v657
    %v728 = vadd.f32 %v726, %v536
    %v729 = vadd.f32 %v727, %v664
    %v730 = vadd.f32 %v728, %v543
    %v731 = vadd.f32 %v729, %v671
    %v732 = vadd.f32 %v730, %v550
    %v733 = vadd.f32 %v731, %v678
    %v734 = vadd.f32 %v732, %v557
    %v735 = vadd.f32 %v733, %v685
    %v736 = vadd.f32 %v734, %v564
    %v737 = vadd.f32 %v735, %v692
    %v738 = vadd.f32 %v736, %v571
    %v739 = vadd.f32 %v737, %v699
    %v740 = vadd.f32 %v738, %v578
    %v741 = vadd.f32 %v739, %v706
    %v742 = vadd.f32 %v740, %v585
    %v743 = vadd.f32 %v741, %v713
    %v744 = vmul.f32 %v742, 0.03125
    %v745 = vmul.f32 %v743, 0.03125
    %v746 = vmul.f32 %v744, %v744
    %v747 = vsub.f32 %v745, %v746
    %v748 = vadd.f32 %v747, 1e-05
    %v749 = vrsqrt.pop %v748
    %v750 = vld [vmem:[%s2] sm:$0xff]
    %v751 = vld [vmem:[%s2 + $0x8] sm:$0xff]
    %v753 = vcombine.low %v749, %v749
    %v755 = vunpack.c.l.s4 1966171168
    %v756 = vunpack.c.0.s8 %v755
    %v757 = vlaneseq
    %v758 = vshrl.u32 %v757, 7
    %v759 = vsub.s32 %v756, %v758
    %v760 = vrot.slane %v753, %v759
    %v761 = vcombine.low %v760, %v760
    %v763 = vunpack.c.l.s4 1966171168
    %v764 = vunpack.c.0.s8 %v763
    %v765 = vlaneseq
    %v766 = vshrl.u32 %v765, 7
    %v767 = vsub.s32 %v764, %v766
    %v768 = vrot.slane %v761, %v767
    %v769 = vcombine.low %v768, %v768
    %v771 = vmul.f32 %v750, %v769
    %v772 = vmul.f32 %v751, %v769
    %v773 = vld [vmem:[#allocation4] sm:$0xff]
    %v774 = vld [vmem:[#allocation4 + $0x8] sm:$0xff]
    %v777 = vlaneseq
    %v778 = vshrl.u32 %v777, 7
    %v779 = vsub.s32 0, %v778
    %v780 = vrot.slane %v771, %v779
    %v781 = vlaneseq
    %v782 = vshrl.u32 %v781, 7
    %v783 = vsub.s32 1, %v782
    %v784 = vrot.slane %v771, %v783
    %v785 = vlaneseq
    %v786 = vshrl.u32 %v785, 7
    %v787 = vsub.s32 2, %v786
    %v788 = vrot.slane %v771, %v787
    %v789 = vlaneseq
    %v790 = vshrl.u32 %v789, 7
    %v791 = vsub.s32 3, %v790
    %v792 = vrot.slane %v771, %v791
    %v793 = vlaneseq
    %v794 = vshrl.u32 %v793, 7
    %v795 = vsub.s32 4, %v794
    %v796 = vrot.slane %v771, %v795
    %v797 = vlaneseq
    %v798 = vshrl.u32 %v797, 7
    %v799 = vsub.s32 5, %v798
    %v800 = vrot.slane %v771, %v799
    %v801 = vlaneseq
    %v802 = vshrl.u32 %v801, 7
    %v803 = vsub.s32 6, %v802
    %v804 = vrot.slane %v771, %v803
    %v805 = vlaneseq
    %v806 = vshrl.u32 %v805, 7
    %v807 = vsub.s32 7, %v806
    %v808 = vrot.slane %v771, %v807
    %v809 = vlaneseq
    %v810 = vshrl.u32 %v809, 7
    %v811 = vsub.s32 0, %v810
    %v812 = vrot.slane %v772, %v811
    %v813 = vlaneseq
    %v814 = vshrl.u32 %v813, 7
    %v815 = vsub.s32 1, %v814
    %v816 = vrot.slane %v772, %v815
    %v817 = vlaneseq
    %v818 = vshrl.u32 %v817, 7
    %v819 = vsub.s32 2, %v818
    %v820 = vrot.slane %v772, %v819
    %v821 = vlaneseq
    %v822 = vshrl.u32 %v821, 7
    %v823 = vsub.s32 3, %v822
    %v824 = vrot.slane %v772, %v823
    %v825 = vlaneseq
    %v826 = vshrl.u32 %v825, 7
    %v827 = vsub.s32 4, %v826
    %v828 = vrot.slane %v772, %v827
    %v829 = vlaneseq
    %v830 = vshrl.u32 %v829, 7
    %v831 = vsub.s32 5, %v830
    %v832 = vrot.slane %v772, %v831
    %v833 = vlaneseq
    %v834 = vshrl.u32 %v833, 7
    %v835 = vsub.s32 6, %v834
    %v836 = vrot.slane %v772, %v835
    %v837 = vlaneseq
    %v838 = vshrl.u32 %v837, 7
    %v839 = vsub.s32 7, %v838
    %v840 = vrot.slane %v772, %v839
    %v857 = vmul.f32 %v744, %v780
    %v858 = vmul.f32 %v744, %v784
    %v859 = vmul.f32 %v744, %v788
    %v860 = vmul.f32 %v744, %v792
    %v861 = vmul.f32 %v744, %v796
    %v862 = vmul.f32 %v744, %v800
    %v863 = vmul.f32 %v744, %v804
    %v864 = vmul.f32 %v744, %v808
    %v865 = vmul.f32 %v744, %v812
    %v866 = vmul.f32 %v744, %v816
    %v867 = vmul.f32 %v744, %v820
    %v868 = vmul.f32 %v744, %v824
    %v869 = vmul.f32 %v744, %v828
    %v870 = vmul.f32 %v744, %v832
    %v871 = vmul.f32 %v744, %v836
    %v872 = vmul.f32 %v744, %v840
    %v889 = vcombine.low %v857, %v858
    %v890 = vcombine.low %v859, %v860
    %v891 = vcombine.low %v861, %v862
    %v892 = vcombine.low %v863, %v864
    %v894 = vunpack.c.l.s4 1966171168
    %v895 = vunpack.c.0.s8 %v894
    %v896 = vlaneseq
    %v897 = vshrl.u32 %v896, 7
    %v898 = vsub.s32 %v895, %v897
    %v899 = vrot.slane %v889, %v898
    %v901 = vunpack.c.l.s4 1966171168
    %v902 = vunpack.c.0.s8 %v901
    %v903 = vlaneseq
    %v904 = vshrl.u32 %v903, 7
    %v905 = vsub.s32 %v902, %v904
    %v906 = vrot.slane %v890, %v905
    %v908 = vunpack.c.l.s4 1966171168
    %v909 = vunpack.c.0.s8 %v908
    %v910 = vlaneseq
    %v911 = vshrl.u32 %v910, 7
    %v912 = vsub.s32 %v909, %v911
    %v913 = vrot.slane %v891, %v912
    %v915 = vunpack.c.l.s4 1966171168
    %v916 = vunpack.c.0.s8 %v915
    %v917 = vlaneseq
    %v918 = vshrl.u32 %v917, 7
    %v919 = vsub.s32 %v916, %v918
    %v920 = vrot.slane %v892, %v919
    %v921 = vcombine.low %v899, %v906
    %v922 = vcombine.low %v913, %v920
    %v924 = vunpack.c.l.s4 1966171168
    %v925 = vunpack.c.0.s8 %v924
    %v926 = vlaneseq
    %v927 = vshrl.u32 %v926, 7
    %v928 = vsub.s32 %v925, %v927
    %v929 = vrot.slane %v921, %v928
    %v931 = vunpack.c.l.s4 1966171168
    %v932 = vunpack.c.0.s8 %v931
    %v933 = vlaneseq
    %v934 = vshrl.u32 %v933, 7
    %v935 = vsub.s32 %v932, %v934
    %v936 = vrot.slane %v922, %v935
    %v937 = vcombine.low %v929, %v936
    %v938 = vcombine.low %v865, %v866
    %v939 = vcombine.low %v867, %v868
    %v940 = vcombine.low %v869, %v870
    %v941 = vcombine.low %v871, %v872
    %v943 = vunpack.c.l.s4 1966171168
    %v944 = vunpack.c.0.s8 %v943
    %v945 = vlaneseq
    %v946 = vshrl.u32 %v945, 7
    %v947 = vsub.s32 %v944, %v946
    %v948 = vrot.slane %v938, %v947
    %v950 = vunpack.c.l.s4 1966171168
    %v951 = vunpack.c.0.s8 %v950
    %v952 = vlaneseq
    %v953 = vshrl.u32 %v952, 7
    %v954 = vsub.s32 %v951, %v953
    %v955 = vrot.slane %v939, %v954
    %v957 = vunpack.c.l.s4 1966171168
    %v958 = vunpack.c.0.s8 %v957
    %v959 = vlaneseq
    %v960 = vshrl.u32 %v959, 7
    %v961 = vsub.s32 %v958, %v960
    %v962 = vrot.slane %v940, %v961
    %v964 = vunpack.c.l.s4 1966171168
    %v965 = vunpack.c.0.s8 %v964
    %v966 = vlaneseq
    %v967 = vshrl.u32 %v966, 7
    %v968 = vsub.s32 %v965, %v967
    %v969 = vrot.slane %v941, %v968
    %v970 = vcombine.low %v948, %v955
    %v971 = vcombine.low %v962, %v969
    %v973 = vunpack.c.l.s4 1966171168
    %v974 = vunpack.c.0.s8 %v973
    %v975 = vlaneseq
    %v976 = vshrl.u32 %v975, 7
    %v977 = vsub.s32 %v974, %v976
    %v978 = vrot.slane %v970, %v977
    %v980 = vunpack.c.l.s4 1966171168
    %v981 = vunpack.c.0.s8 %v980
    %v982 = vlaneseq
    %v983 = vshrl.u32 %v982, 7
    %v984 = vsub.s32 %v981, %v983
    %v985 = vrot.slane %v971, %v984
    %v986 = vcombine.low %v978, %v985
    %v989 = vsub.f32 %v773, %v937
    %v990 = vsub.f32 %v774, %v986
    %v991 = vmul.f32 %v180, %v780
    %v992 = vmul.f32 %v182, %v784
    %v993 = vmul.f32 %v221, %v788
    %v994 = vmul.f32 %v223, %v792
    %v995 = vmul.f32 %v262, %v796
    %v996 = vmul.f32 %v264, %v800
    %v997 = vmul.f32 %v303, %v804
    %v998 = vmul.f32 %v305, %v808
    %v999 = vmul.f32 %v344, %v812
    %v1000 = vmul.f32 %v346, %v816
    %v1001 = vmul.f32 %v385, %v820
    %v1002 = vmul.f32 %v387, %v824
    %v1003 = vmul.f32 %v426, %v828
    %v1004 = vmul.f32 %v428, %v832
    %v1005 = vmul.f32 %v467, %v836
    %v1006 = vmul.f32 %v469, %v840
    %v1009 = vlaneseq
    %v1010 = vshrl.u32 %v1009, 7
    %v1011 = vsub.s32 0, %v1010
    %v1012 = vrot.slane %v989, %v1011
    %v1013 = vlaneseq
    %v1014 = vshrl.u32 %v1013, 7
    %v1015 = vsub.s32 1, %v1014
    %v1016 = vrot.slane %v989, %v1015
    %v1017 = vlaneseq
    %v1018 = vshrl.u32 %v1017, 7
    %v1019 = vsub.s32 2, %v1018
    %v1020 = vrot.slane %v989, %v1019
    %v1021 = vlaneseq
    %v1022 = vshrl.u32 %v1021, 7
    %v1023 = vsub.s32 3, %v1022
    %v1024 = vrot.slane %v989, %v1023
    %v1025 = vlaneseq
    %v1026 = vshrl.u32 %v1025, 7
    %v1027 = vsub.s32 4, %v1026
    %v1028 = vrot.slane %v989, %v1027
    %v1029 = vlaneseq
    %v1030 = vshrl.u32 %v1029, 7
    %v1031 = vsub.s32 5, %v1030
    %v1032 = vrot.slane %v989, %v1031
    %v1033 = vlaneseq
    %v1034 = vshrl.u32 %v1033, 7
    %v1035 = vsub.s32 6, %v1034
    %v1036 = vrot.slane %v989, %v1035
    %v1037 = vlaneseq
    %v1038 = vshrl.u32 %v1037, 7
    %v1039 = vsub.s32 7, %v1038
    %v1040 = vrot.slane %v989, %v1039
    %v1041 = vlaneseq
    %v1042 = vshrl.u32 %v1041, 7
    %v1043 = vsub.s32 0, %v1042
    %v1044 = vrot.slane %v990, %v1043
    %v1045 = vlaneseq
    %v1046 = vshrl.u32 %v1045, 7
    %v1047 = vsub.s32 1, %v1046
    %v1048 = vrot.slane %v990, %v1047
    %v1049 = vlaneseq
    %v1050 = vshrl.u32 %v1049, 7
    %v1051 = vsub.s32 2, %v1050
    %v1052 = vrot.slane %v990, %v1051
    %v1053 = vlaneseq
    %v1054 = vshrl.u32 %v1053, 7
    %v1055 = vsub.s32 3, %v1054
    %v1056 = vrot.slane %v990, %v1055
    %v1057 = vlaneseq
    %v1058 = vshrl.u32 %v1057, 7
    %v1059 = vsub.s32 4, %v1058
    %v1060 = vrot.slane %v990, %v1059
    %v1061 = vlaneseq
    %v1062 = vshrl.u32 %v1061, 7
    %v1063 = vsub.s32 5, %v1062
    %v1064 = vrot.slane %v990, %v1063
    %v1065 = vlaneseq
    %v1066 = vshrl.u32 %v1065, 7
    %v1067 = vsub.s32 6, %v1066
    %v1068 = vrot.slane %v990, %v1067
    %v1069 = vlaneseq
    %v1070 = vshrl.u32 %v1069, 7
    %v1071 = vsub.s32 7, %v1070
    %v1072 = vrot.slane %v990, %v1071
    %v1089 = vadd.f32 %v991, %v1012
    %v1090 = vadd.f32 %v992, %v1016
    %v1091 = vadd.f32 %v993, %v1020
    %v1092 = vadd.f32 %v994, %v1024
    %v1093 = vadd.f32 %v995, %v1028
    %v1094 = vadd.f32 %v996, %v1032
    %v1095 = vadd.f32 %v997, %v1036
    %v1096 = vadd.f32 %v998, %v1040
    %v1097 = vadd.f32 %v999, %v1044
    %v1098 = vadd.f32 %v1000, %v1048
    %v1099 = vadd.f32 %v1001, %v1052
    %v1100 = vadd.f32 %v1002, %v1056
    %v1101 = vadd.f32 %v1003, %v1060
    %v1102 = vadd.f32 %v1004, %v1064
    %v1103 = vadd.f32 %v1005, %v1068
    %v1104 = vadd.f32 %v1006, %v1072
    %v1105 = vmax.f32 %v1089, 0.0
    %v1106 = vmax.f32 %v1090, 0.0
    %v1107 = vmax.f32 %v1091, 0.0
    %v1108 = vmax.f32 %v1092, 0.0
    %v1109 = vmax.f32 %v1093, 0.0
    %v1110 = vmax.f32 %v1094, 0.0
    %v1111 = vmax.f32 %v1095, 0.0
    %v1112 = vmax.f32 %v1096, 0.0
    %v1113 = vmax.f32 %v1097, 0.0
    %v1114 = vmax.f32 %v1098, 0.0
    %v1115 = vmax.f32 %v1099, 0.0
    %v1116 = vmax.f32 %v1100, 0.0
    %v1117 = vmax.f32 %v1101, 0.0
    %v1118 = vmax.f32 %v1102, 0.0
    %v1119 = vmax.f32 %v1103, 0.0
    %v1120 = vmax.f32 %v1104, 0.0
    %v1121 = vpack.c.bf16 %v1105, %v1105
    %v1122 = vpack.c.bf16 %v1106, %v1106
    %v1123 = vpack.c.bf16 %v1107, %v1107
    %v1124 = vpack.c.bf16 %v1108, %v1108
    %v1125 = vpack.c.bf16 %v1109, %v1109
    %v1126 = vpack.c.bf16 %v1110, %v1110
    %v1127 = vpack.c.bf16 %v1111, %v1111
    %v1128 = vpack.c.bf16 %v1112, %v1112
    %v1129 = vpack.c.bf16 %v1113, %v1113
    %v1130 = vpack.c.bf16 %v1114, %v1114
    %v1131 = vpack.c.bf16 %v1115, %v1115
    %v1132 = vpack.c.bf16 %v1116, %v1116
    %v1133 = vpack.c.bf16 %v1117, %v1117
    %v1134 = vpack.c.bf16 %v1118, %v1118
    %v1135 = vpack.c.bf16 %v1119, %v1119
    %v1136 = vpack.c.bf16 %v1120, %v1120
    %v1153 = vcombine.low %v1121, %v1122
    %v1154 = vcombine.low %v1123, %v1124
    %v1155 = vcombine.low %v1125, %v1126
    %v1156 = vcombine.low %v1127, %v1128
    %v1158 = vunpack.c.l.s4 1966171168
    %v1159 = vunpack.c.0.s8 %v1158
    %v1160 = vlaneseq
    %v1161 = vshrl.u32 %v1160, 7
    %v1162 = vsub.s32 %v1159, %v1161
    %v1163 = vrot.slane %v1153, %v1162
    %v1165 = vunpack.c.l.s4 1966171168
    %v1166 = vunpack.c.0.s8 %v1165
    %v1167 = vlaneseq
    %v1168 = vshrl.u32 %v1167, 7
    %v1169 = vsub.s32 %v1166, %v1168
    %v1170 = vrot.slane %v1154, %v1169
    %v1172 = vunpack.c.l.s4 1966171168
    %v1173 = vunpack.c.0.s8 %v1172
    %v1174 = vlaneseq
    %v1175 = vshrl.u32 %v1174, 7
    %v1176 = vsub.s32 %v1173, %v1175
    %v1177 = vrot.slane %v1155, %v1176
    %v1179 = vunpack.c.l.s4 1966171168
    %v1180 = vunpack.c.0.s8 %v1179
    %v1181 = vlaneseq
    %v1182 = vshrl.u32 %v1181, 7
    %v1183 = vsub.s32 %v1180, %v1182
    %v1184 = vrot.slane %v1156, %v1183
    %v1185 = vcombine.low %v1163, %v1170
    %v1186 = vcombine.low %v1177, %v1184
    %v1188 = vunpack.c.l.s4 1966171168
    %v1189 = vunpack.c.0.s8 %v1188
    %v1190 = vlaneseq
    %v1191 = vshrl.u32 %v1190, 7
    %v1192 = vsub.s32 %v1189, %v1191
    %v1193 = vrot.slane %v1185, %v1192
    %v1195 = vunpack.c.l.s4 1966171168
    %v1196 = vunpack.c.0.s8 %v1195
    %v1197 = vlaneseq
    %v1198 = vshrl.u32 %v1197, 7
    %v1199 = vsub.s32 %v1196, %v1198
    %v1200 = vrot.slane %v1186, %v1199
    %v1201 = vcombine.low %v1193, %v1200
    %v1202 = vcombine.low %v1129, %v1130
    %v1203 = vcombine.low %v1131, %v1132
    %v1204 = vcombine.low %v1133, %v1134
    %v1205 = vcombine.low %v1135, %v1136
    %v1207 = vunpack.c.l.s4 1966171168
    %v1208 = vunpack.c.0.s8 %v1207
    %v1209 = vlaneseq
    %v1210 = vshrl.u32 %v1209, 7
    %v1211 = vsub.s32 %v1208, %v1210
    %v1212 = vrot.slane %v1202, %v1211
    %v1214 = vunpack.c.l.s4 1966171168
    %v1215 = vunpack.c.0.s8 %v1214
    %v1216 = vlaneseq
    %v1217 = vshrl.u32 %v1216, 7
    %v1218 = vsub.s32 %v1215, %v1217
    %v1219 = vrot.slane %v1203, %v1218
    %v1221 = vunpack.c.l.s4 1966171168
    %v1222 = vunpack.c.0.s8 %v1221
    %v1223 = vlaneseq
    %v1224 = vshrl.u32 %v1223, 7
    %v1225 = vsub.s32 %v1222, %v1224
    %v1226 = vrot.slane %v1204, %v1225
    %v1228 = vunpack.c.l.s4 1966171168
    %v1229 = vunpack.c.0.s8 %v1228
    %v1230 = vlaneseq
    %v1231 = vshrl.u32 %v1230, 7
    %v1232 = vsub.s32 %v1229, %v1231
    %v1233 = vrot.slane %v1205, %v1232
    %v1234 = vcombine.low %v1212, %v1219
    %v1235 = vcombine.low %v1226, %v1233
    %v1237 = vunpack.c.l.s4 1966171168
    %v1238 = vunpack.c.0.s8 %v1237
    %v1239 = vlaneseq
    %v1240 = vshrl.u32 %v1239, 7
    %v1241 = vsub.s32 %v1238, %v1240
    %v1242 = vrot.slane %v1234, %v1241
    %v1244 = vunpack.c.l.s4 1966171168
    %v1245 = vunpack.c.0.s8 %v1244
    %v1246 = vlaneseq
    %v1247 = vshrl.u32 %v1246, 7
    %v1248 = vsub.s32 %v1245, %v1247
    %v1249 = vrot.slane %v1235, %v1248
    %v1250 = vcombine.low %v1242, %v1249
    %1253 = vst [vmem:[%s4] sm:$0xff] %v1201
    %1254 = vst [vmem:[%s4 + $0x8] sm:$0xff] %v1250
    // Predicated region
    $region26: #{generator_forward.4} parent=1 // pred_check
      _
    $region27: #{generator_forward.4} parent=1 // pred_check_branch
      %1256 = sbr.rel (0) target = $region29
    $region28: #{generator_forward.4} parent=1 // pred_region
      _
    $region29: #{generator_forward.4} parent=1 // pred_fallthru
      _
    // Predicated region
    $region30: #{generator_forward.4} parent=1 // pred_check
      _
    $region31: #{generator_forward.4} parent=1 // pred_check_branch
      %1258 = sbr.rel (0) target = $region33
    $region32: #{generator_forward.4} parent=1 // pred_region
      _
    $region33: #{generator_forward.4} parent=1 // pred_fallthru
      _
    %1259 = vsyncpa [#allocation3], 1
    %1260 = vsyncpa [#allocation5], 1

// kernel: generator_forward.5
$region0: #{generator_forward.5}
  #allocation0 [shape = 'u32[]', space=smem, size = 0x4, offset = 0x4, fixed_abs, tag = 'smem constant byte address 0x4 - core index']
  #allocation1 [shape = 'u32[144,128]{1,0:T(1,128)}', space=vmem, size = 0x12000, scoped, tag = 'internal scratch']
  %s0 = inlined_call_operand.vmem [shape: bf16[4,32,512], index: 0, kind: input, shape index: {}]
  %s1 = inlined_call_operand.vmem [shape: bf16[4,512,64], index: 1, kind: input, shape index: {}]
  %s2 = inlined_call_operand.vmem [shape: f32[1,256], index: 2, kind: input, shape index: {}]
  %s3 = inlined_call_operand.vmem [shape: f32[1,256], index: 3, kind: input, shape index: {}]
  %s4 = inlined_call_operand.vmem [shape: bf16[32,256], index: 4, kind: output, shape index: {}]
  %s5 = sld [smem:[#allocation0]]
  $region26: #{generator_forward.5} parent=0
    _
  %s7 = ssub.s32 1, %s5
  %s8 = scalar_select 0, %s7, %s5
  // Predicated region
  $region2: #{generator_forward.5} parent=0 // pred_check
    _
  $region3: #{generator_forward.5} parent=0 // pred_check_branch
    %10 = sbr.rel (0) target = $region5
  $region4: #{generator_forward.5} parent=0 // pred_region
    _
  $region5: #{generator_forward.5} parent=0 // pred_fallthru
    _
  // Predicated region
  $region6: #{generator_forward.5} parent=0 // pred_check
    _
  $region7: #{generator_forward.5} parent=0 // pred_check_branch
    %12 = sbr.rel (0) target = $region9
  $region8: #{generator_forward.5} parent=0 // pred_region
    _
  $region9: #{generator_forward.5} parent=0 // pred_fallthru
    _
  // Predicated region
  $region10: #{generator_forward.5} parent=0 // pred_check
    _
  $region11: #{generator_forward.5} parent=0 // pred_check_branch
    %14 = sbr.rel (0) target = $region13
  $region12: #{generator_forward.5} parent=0 // pred_region
    _
  $region13: #{generator_forward.5} parent=0 // pred_fallthru
    _
  // Predicated region
  $region14: #{generator_forward.5} parent=0 // pred_check
    _
  $region15: #{generator_forward.5} parent=0 // pred_check_branch
    %16 = sbr.rel (0) target = $region17
  $region16: #{generator_forward.5} parent=0 // pred_region
    _
  $region17: #{generator_forward.5} parent=0 // pred_fallthru
    _
  %v18 = vld [vmem:[%s0] sm:$0xff]
  %v19 = vld [vmem:[%s0 + $0x8] sm:$0xff]
  %v20 = vld [vmem:[%s0 + $0x10] sm:$0xff]
  %v21 = vld [vmem:[%s0 + $0x18] sm:$0xff]
  %v22 = vld [vmem:[%s0 + $0x20] sm:$0xff]
  %v23 = vld [vmem:[%s0 + $0x28] sm:$0xff]
  %v24 = vld [vmem:[%s0 + $0x30] sm:$0xff]
  %v25 = vld [vmem:[%s0 + $0x38] sm:$0xff]
  %v26 = vld [vmem:[%s1] sm:$0xf]
  %v27 = vld [vmem:[%s1 + $0x4] sm:$0xf]
  %v28 = vld [vmem:[%s1 + $0x8] sm:$0xf]
  %v29 = vld [vmem:[%s1 + $0xc] sm:$0xf]
  %v30 = vld [vmem:[%s1 + $0x10] sm:$0xf]
  %v31 = vld [vmem:[%s1 + $0x14] sm:$0xf]
  %v32 = vld [vmem:[%s1 + $0x18] sm:$0xf]
  %v33 = vld [vmem:[%s1 + $0x1c] sm:$0xf]
  %v34 = vld [vmem:[%s1 + $0x20] sm:$0xf]
  %v35 = vld [vmem:[%s1 + $0x24] sm:$0xf]
  %v36 = vld [vmem:[%s1 + $0x28] sm:$0xf]
  %v37 = vld [vmem:[%s1 + $0x2c] sm:$0xf]
  %v38 = vld [vmem:[%s1 + $0x30] sm:$0xf]
  %v39 = vld [vmem:[%s1 + $0x34] sm:$0xf]
  %v40 = vld [vmem:[%s1 + $0x38] sm:$0xf]
  %v41 = vld [vmem:[%s1 + $0x3c] sm:$0xf]
  %v42 = vld [vmem:[%s1 + $0x40] sm:$0xf]
  %v43 = vld [vmem:[%s1 + $0x44] sm:$0xf]
  %v44 = vld [vmem:[%s1 + $0x48] sm:$0xf]
  %v45 = vld [vmem:[%s1 + $0x4c] sm:$0xf]
  %v46 = vld [vmem:[%s1 + $0x50] sm:$0xf]
  %v47 = vld [vmem:[%s1 + $0x54] sm:$0xf]
  %v48 = vld [vmem:[%s1 + $0x58] sm:$0xf]
  %v49 = vld [vmem:[%s1 + $0x5c] sm:$0xf]
  %v50 = vld [vmem:[%s1 + $0x60] sm:$0xf]
  %v51 = vld [vmem:[%s1 + $0x64] sm:$0xf]
  %v52 = vld [vmem:[%s1 + $0x68] sm:$0xf]
  %v53 = vld [vmem:[%s1 + $0x6c] sm:$0xf]
  %v54 = vld [vmem:[%s1 + $0x70] sm:$0xf]
  %v55 = vld [vmem:[%s1 + $0x74] sm:$0xf]
  %v56 = vld [vmem:[%s1 + $0x78] sm:$0xf]
  %v57 = vld [vmem:[%s1 + $0x7c] sm:$0xf]
  %v58 = vld [vmem:[%s1 + $0x80] sm:$0xf]
  %v59 = vld [vmem:[%s1 + $0x84] sm:$0xf]
  %v60 = vld [vmem:[%s1 + $0x88] sm:$0xf]
  %v61 = vld [vmem:[%s1 + $0x8c] sm:$0xf]
  %v62 = vld [vmem:[%s1 + $0x90] sm:$0xf]
  %v63 = vld [vmem:[%s1 + $0x94] sm:$0xf]
  %v64 = vld [vmem:[%s1 + $0x98] sm:$0xf]
  %v65 = vld [vmem:[%s1 + $0x9c] sm:$0xf]
  %v66 = vld [vmem:[%s1 + $0xa0] sm:$0xf]
  %v67 = vld [vmem:[%s1 + $0xa4] sm:$0xf]
  %v68 = vld [vmem:[%s1 + $0xa8] sm:$0xf]
  %v69 = vld [vmem:[%s1 + $0xac] sm:$0xf]
  %v70 = vld [vmem:[%s1 + $0xb0] sm:$0xf]
  %v71 = vld [vmem:[%s1 + $0xb4] sm:$0xf]
  %v72 = vld [vmem:[%s1 + $0xb8] sm:$0xf]
  %v73 = vld [vmem:[%s1 + $0xbc] sm:$0xf]
  %v74 = vld [vmem:[%s1 + $0xc0] sm:$0xf]
  %v75 = vld [vmem:[%s1 + $0xc4] sm:$0xf]
  %v76 = vld [vmem:[%s1 + $0xc8] sm:$0xf]
  %v77 = vld [vmem:[%s1 + $0xcc] sm:$0xf]
  %v78 = vld [vmem:[%s1 + $0xd0] sm:$0xf]
  %v79 = vld [vmem:[%s1 + $0xd4] sm:$0xf]
  %v80 = vld [vmem:[%s1 + $0xd8] sm:$0xf]
  %v81 = vld [vmem:[%s1 + $0xdc] sm:$0xf]
  %v82 = vld [vmem:[%s1 + $0xe0] sm:$0xf]
  %v83 = vld [vmem:[%s1 + $0xe4] sm:$0xf]
  %v84 = vld [vmem:[%s1 + $0xe8] sm:$0xf]
  %v85 = vld [vmem:[%s1 + $0xec] sm:$0xf]
  %v86 = vld [vmem:[%s1 + $0xf0] sm:$0xf]
  %v87 = vld [vmem:[%s1 + $0xf4] sm:$0xf]
  %v88 = vld [vmem:[%s1 + $0xf8] sm:$0xf]
  %v89 = vld [vmem:[%s1 + $0xfc] sm:$0xf]
  %v98 = vunpack.c.l.b16 %v18
  %v99 = vunpack.c.h.b16 %v18
  %v100 = vunpack.c.l.b16 %v19
  %v101 = vunpack.c.h.b16 %v19
  %v102 = vunpack.c.l.b16 %v20
  %v103 = vunpack.c.h.b16 %v20
  %v104 = vunpack.c.l.b16 %v21
  %v105 = vunpack.c.h.b16 %v21
  %v106 = vunpack.c.l.b16 %v22
  %v107 = vunpack.c.h.b16 %v22
  %v108 = vunpack.c.l.b16 %v23
  %v109 = vunpack.c.h.b16 %v23
  %v110 = vunpack.c.l.b16 %v24
  %v111 = vunpack.c.h.b16 %v24
  %v112 = vunpack.c.l.b16 %v25
  %v113 = vunpack.c.h.b16 %v25
  %v114 = vpack.c.b16 %v102, %v98
  %v115 = vpack.c.b16 %v103, %v99
  %v116 = vpack.c.b16 %v104, %v100
  %v117 = vpack.c.b16 %v105, %v101
  %v118 = vpack.c.b16 %v110, %v106
  %v119 = vpack.c.b16 %v111, %v107
  %v120 = vpack.c.b16 %v112, %v108
  %v121 = vpack.c.b16 %v113, %v109
  %v194 = vunpack.c.l.b16 %v26
  %v195 = vunpack.c.l.b16 %v27
  %v196 = vunpack.c.l.b16 %v28
  %v197 = vunpack.c.l.b16 %v29
  %v198 = vunpack.c.l.b16 %v30
  %v199 = vunpack.c.l.b16 %v31
  %v200 = vunpack.c.l.b16 %v32
  %v201 = vunpack.c.l.b16 %v33
  %v202 = vunpack.c.l.b16 %v34
  %v203 = vunpack.c.l.b16 %v35
  %v204 = vunpack.c.l.b16 %v36
  %v205 = vunpack.c.l.b16 %v37
  %v206 = vunpack.c.l.b16 %v38
  %v207 = vunpack.c.l.b16 %v39
  %v208 = vunpack.c.l.b16 %v40
  %v209 = vunpack.c.l.b16 %v41
  %v210 = vunpack.c.l.b16 %v42
  %v211 = vunpack.c.l.b16 %v43
  %v212 = vunpack.c.l.b16 %v44
  %v213 = vunpack.c.l.b16 %v45
  %v214 = vunpack.c.l.b16 %v46
  %v215 = vunpack.c.l.b16 %v47
  %v216 = vunpack.c.l.b16 %v48
  %v217 = vunpack.c.l.b16 %v49
  %v218 = vunpack.c.l.b16 %v50
  %v219 = vunpack.c.l.b16 %v51
  %v220 = vunpack.c.l.b16 %v52
  %v221 = vunpack.c.l.b16 %v53
  %v222 = vunpack.c.l.b16 %v54
  %v223 = vunpack.c.l.b16 %v55
  %v224 = vunpack.c.l.b16 %v56
  %v225 = vunpack.c.l.b16 %v57
  %v226 = vunpack.c.l.b16 %v58
  %v227 = vunpack.c.l.b16 %v59
  %v228 = vunpack.c.l.b16 %v60
  %v229 = vunpack.c.l.b16 %v61
  %v230 = vunpack.c.l.b16 %v62
  %v231 = vunpack.c.l.b16 %v63
  %v232 = vunpack.c.l.b16 %v64
  %v233 = vunpack.c.l.b16 %v65
  %v234 = vunpack.c.l.b16 %v66
  %v235 = vunpack.c.l.b16 %v67
  %v236 = vunpack.c.l.b16 %v68
  %v237 = vunpack.c.l.b16 %v69
  %v238 = vunpack.c.l.b16 %v70
  %v239 = vunpack.c.l.b16 %v71
  %v240 = vunpack.c.l.b16 %v72
  %v241 = vunpack.c.l.b16 %v73
  %v242 = vunpack.c.l.b16 %v74
  %v243 = vunpack.c.l.b16 %v75
  %v244 = vunpack.c.l.b16 %v76
  %v245 = vunpack.c.l.b16 %v77
  %v246 = vunpack.c.l.b16 %v78
  %v247 = vunpack.c.l.b16 %v79
  %v248 = vunpack.c.l.b16 %v80
  %v249 = vunpack.c.l.b16 %v81
  %v250 = vunpack.c.l.b16 %v82
  %v251 = vunpack.c.l.b16 %v83
  %v252 = vunpack.c.l.b16 %v84
  %v253 = vunpack.c.l.b16 %v85
  %v254 = vunpack.c.l.b16 %v86
  %v255 = vunpack.c.l.b16 %v87
  %v256 = vunpack.c.l.b16 %v88
  %v257 = vunpack.c.l.b16 %v89
  %v258 = vpack.c.b16 %v195, %v194
  %v259 = vpack.c.b16 %v197, %v196
  %v260 = vpack.c.b16 %v199, %v198
  %v261 = vpack.c.b16 %v201, %v200
  %v262 = vpack.c.b16 %v203, %v202
  %v263 = vpack.c.b16 %v205, %v204
  %v264 = vpack.c.b16 %v207, %v206
  %v265 = vpack.c.b16 %v209, %v208
  %v266 = vpack.c.b16 %v211, %v210
  %v267 = vpack.c.b16 %v213, %v212
  %v268 = vpack.c.b16 %v215, %v214
  %v269 = vpack.c.b16 %v217, %v216
  %v270 = vpack.c.b16 %v219, %v218
  %v271 = vpack.c.b16 %v221, %v220
  %v272 = vpack.c.b16 %v223, %v222
  %v273 = vpack.c.b16 %v225, %v224
  %v274 = vpack.c.b16 %v227, %v226
  %v275 = vpack.c.b16 %v229, %v228
  %v276 = vpack.c.b16 %v231, %v230
  %v277 = vpack.c.b16 %v233, %v232
  %v278 = vpack.c.b16 %v235, %v234
  %v279 = vpack.c.b16 %v237, %v236
  %v280 = vpack.c.b16 %v239, %v238
  %v281 = vpack.c.b16 %v241, %v240
  %v282 = vpack.c.b16 %v243, %v242
  %v283 = vpack.c.b16 %v245, %v244
  %v284 = vpack.c.b16 %v247, %v246
  %v285 = vpack.c.b16 %v249, %v248
  %v286 = vpack.c.b16 %v251, %v250
  %v287 = vpack.c.b16 %v253, %v252
  %v288 = vpack.c.b16 %v255, %v254
  %v289 = vpack.c.b16 %v257, %v256
  %322 = vmatprep.subr.bf16.mxu0 0
  %323 = vmatpush1.bf16.msra.mxu0 %v265
  %324 = vmatprep.subr.bf16.mxu0 0
  %325 = vmatpush1.bf16.msra.mxu0 %v264
  %326 = vmatprep.subr.bf16.mxu0 0
  %327 = vmatpush1.bf16.msra.mxu0 %v263
  %328 = vmatprep.subr.bf16.mxu0 0
  %329 = vmatpush1.bf16.msra.mxu0 %v262
  %330 = vmatprep.subr.bf16.mxu0 0
  %331 = vmatpush1.bf16.msra.mxu0 %v261
  %332 = vmatprep.subr.bf16.mxu0 0
  %333 = vmatpush1.bf16.msra.mxu0 %v260
  %334 = vmatprep.subr.bf16.mxu0 0
  %335 = vmatpush1.bf16.msra.mxu0 %v259
  %336 = vmatprep.subr.bf16.mxu0 0
  %337 = vmatpush1.bf16.msra.mxu0 %v258
  %338 = vmatprep.subr.bf16.mxu0 0
  %339 = vmatpush2.bf16.msra.mxu0 %v273
  %340 = vmatprep.subr.bf16.mxu0 0
  %341 = vmatpush2.bf16.msra.mxu0 %v272
  %342 = vmatprep.subr.bf16.mxu0 0
  %343 = vmatpush2.bf16.msra.mxu0 %v271
  %344 = vmatprep.subr.bf16.mxu0 0
  %345 = vmatpush2.bf16.msra.mxu0 %v270
  %346 = vmatprep.subr.bf16.mxu0 0
  %347 = vmatpush2.bf16.msra.mxu0 %v269
  %348 = vmatprep.subr.bf16.mxu0 0
  %349 = vmatpush2.bf16.msra.mxu0 %v268
  %350 = vmatprep.subr.bf16.mxu0 0
  %351 = vmatpush2.bf16.msra.mxu0 %v267
  %352 = vmatprep.subr.bf16.mxu0 0
  %353 = vmatpush2.bf16.msra.mxu0 %v266
  %354 = vmatprep.mubr.bf16.mxu0 %v115
  %355 = vmatmul.mubr.bf16.gmra.mxu0 %v114
  %v356 = vpop.f32.mrf.mxu0
  %v357 = vadd.f32 0.0, %v356
  %v358 = vpop.f32.mrf.mxu0
  %v359 = vpop.f32.mrf.mxu0
  %v360 = vadd.f32 0.0, %v359
  %v361 = vpop.f32.mrf.mxu0
  %362 = vmatprep.mubr.bf16.mxu0 %v119
  %363 = vmatmul.mubr.bf16.gmra.mxu0 %v118
  %v364 = vpop.f32.mrf.mxu0
  %v365 = vadd.f32 0.0, %v364
  %v366 = vpop.f32.mrf.mxu0
  %v367 = vpop.f32.mrf.mxu0
  %v368 = vadd.f32 0.0, %v367
  %v369 = vpop.f32.mrf.mxu0
  %370 = vdwg.mxu0
  %371 = vmatprep.subr.bf16.mxu0 0
  %372 = vmatpush1.bf16.msra.mxu0 %v281
  %373 = vmatprep.subr.bf16.mxu0 0
  %374 = vmatpush1.bf16.msra.mxu0 %v280
  %375 = vmatprep.subr.bf16.mxu0 0
  %376 = vmatpush1.bf16.msra.mxu0 %v279
  %377 = vmatprep.subr.bf16.mxu0 0
  %378 = vmatpush1.bf16.msra.mxu0 %v278
  %379 = vmatprep.subr.bf16.mxu0 0
  %380 = vmatpush1.bf16.msra.mxu0 %v277
  %381 = vmatprep.subr.bf16.mxu0 0
  %382 = vmatpush1.bf16.msra.mxu0 %v276
  %383 = vmatprep.subr.bf16.mxu0 0
  %384 = vmatpush1.bf16.msra.mxu0 %v275
  %385 = vmatprep.subr.bf16.mxu0 0
  %386 = vmatpush1.bf16.msra.mxu0 %v274
  %387 = vmatprep.subr.bf16.mxu0 0
  %388 = vmatpush2.bf16.msra.mxu0 %v289
  %389 = vmatprep.subr.bf16.mxu0 0
  %390 = vmatpush2.bf16.msra.mxu0 %v288
  %391 = vmatprep.subr.bf16.mxu0 0
  %392 = vmatpush2.bf16.msra.mxu0 %v287
  %393 = vmatprep.subr.bf16.mxu0 0
  %394 = vmatpush2.bf16.msra.mxu0 %v286
  %395 = vmatprep.subr.bf16.mxu0 0
  %396 = vmatpush2.bf16.msra.mxu0 %v285
  %397 = vmatprep.subr.bf16.mxu0 0
  %398 = vmatpush2.bf16.msra.mxu0 %v284
  %399 = vmatprep.subr.bf16.mxu0 0
  %400 = vmatpush2.bf16.msra.mxu0 %v283
  %401 = vmatprep.subr.bf16.mxu0 0
  %402 = vmatpush2.bf16.msra.mxu0 %v282
  %403 = vmatprep.mubr.bf16.mxu0 %v117
  %404 = vmatmul.mubr.bf16.gmra.mxu0 %v116
  %v405 = vpop.f32.mrf.mxu0
  %v406 = vadd.f32 %v357, %v405
  %v407 = vpop.f32.mrf.mxu0
  %v408 = vpop.f32.mrf.mxu0
  %v409 = vadd.f32 %v360, %v408
  %v410 = vpop.f32.mrf.mxu0
  %411 = vmatprep.mubr.bf16.mxu0 %v121
  %412 = vmatmul.mubr.bf16.gmra.mxu0 %v120
  %v413 = vpop.f32.mrf.mxu0
  %v414 = vadd.f32 %v365, %v413
  %v415 = vpop.f32.mrf.mxu0
  %v416 = vpop.f32.mrf.mxu0
  %v417 = vadd.f32 %v368, %v416
  %v418 = vpop.f32.mrf.mxu0
  %419 = vdwg.mxu0
  %s420 = scalar_lea.vmem %s0, 64
  %v421 = vld [vmem:[%s420] sm:$0xff]
  %v422 = vld [vmem:[%s420 + $0x8] sm:$0xff]
  %v423 = vld [vmem:[%s420 + $0x10] sm:$0xff]
  %v424 = vld [vmem:[%s420 + $0x18] sm:$0xff]
  %v425 = vld [vmem:[%s420 + $0x20] sm:$0xff]
  %v426 = vld [vmem:[%s420 + $0x28] sm:$0xff]
  %v427 = vld [vmem:[%s420 + $0x30] sm:$0xff]
  %v428 = vld [vmem:[%s420 + $0x38] sm:$0xff]
  %s429 = scalar_lea.vmem %s1, 256
  %v430 = vld [vmem:[%s429] sm:$0xf]
  %v431 = vld [vmem:[%s429 + $0x4] sm:$0xf]
  %v432 = vld [vmem:[%s429 + $0x8] sm:$0xf]
  %v433 = vld [vmem:[%s429 + $0xc] sm:$0xf]
  %v434 = vld [vmem:[%s429 + $0x10] sm:$0xf]
  %v435 = vld [vmem:[%s429 + $0x14] sm:$0xf]
  %v436 = vld [vmem:[%s429 + $0x18] sm:$0xf]
  %v437 = vld [vmem:[%s429 + $0x1c] sm:$0xf]
  %v438 = vld [vmem:[%s429 + $0x20] sm:$0xf]
  %v439 = vld [vmem:[%s429 + $0x24] sm:$0xf]
  %v440 = vld [vmem:[%s429 + $0x28] sm:$0xf]
  %v441 = vld [vmem:[%s429 + $0x2c] sm:$0xf]
  %v442 = vld [vmem:[%s429 + $0x30] sm:$0xf]
  %v443 = vld [vmem:[%s429 + $0x34] sm:$0xf]
  %v444 = vld [vmem:[%s429 + $0x38] sm:$0xf]
  %v445 = vld [vmem:[%s429 + $0x3c] sm:$0xf]
  %v446 = vld [vmem:[%s429 + $0x40] sm:$0xf]
  %v447 = vld [vmem:[%s429 + $0x44] sm:$0xf]
  %v448 = vld [vmem:[%s429 + $0x48] sm:$0xf]
  %v449 = vld [vmem:[%s429 + $0x4c] sm:$0xf]
  %v450 = vld [vmem:[%s429 + $0x50] sm:$0xf]
  %v451 = vld [vmem:[%s429 + $0x54] sm:$0xf]
  %v452 = vld [vmem:[%s429 + $0x58] sm:$0xf]
  %v453 = vld [vmem:[%s429 + $0x5c] sm:$0xf]
  %v454 = vld [vmem:[%s429 + $0x60] sm:$0xf]
  %v455 = vld [vmem:[%s429 + $0x64] sm:$0xf]
  %v456 = vld [vmem:[%s429 + $0x68] sm:$0xf]
  %v457 = vld [vmem:[%s429 + $0x6c] sm:$0xf]
  %v458 = vld [vmem:[%s429 + $0x70] sm:$0xf]
  %v459 = vld [vmem:[%s429 + $0x74] sm:$0xf]
  %v460 = vld [vmem:[%s429 + $0x78] sm:$0xf]
  %v461 = vld [vmem:[%s429 + $0x7c] sm:$0xf]
  %v462 = vld [vmem:[%s429 + $0x80] sm:$0xf]
  %v463 = vld [vmem:[%s429 + $0x84] sm:$0xf]
  %v464 = vld [vmem:[%s429 + $0x88] sm:$0xf]
  %v465 = vld [vmem:[%s429 + $0x8c] sm:$0xf]
  %v466 = vld [vmem:[%s429 + $0x90] sm:$0xf]
  %v467 = vld [vmem:[%s429 + $0x94] sm:$0xf]
  %v468 = vld [vmem:[%s429 + $0x98] sm:$0xf]
  %v469 = vld [vmem:[%s429 + $0x9c] sm:$0xf]
  %v470 = vld [vmem:[%s429 + $0xa0] sm:$0xf]
  %v471 = vld [vmem:[%s429 + $0xa4] sm:$0xf]
  %v472 = vld [vmem:[%s429 + $0xa8] sm:$0xf]
  %v473 = vld [vmem:[%s429 + $0xac] sm:$0xf]
  %v474 = vld [vmem:[%s429 + $0xb0] sm:$0xf]
  %v475 = vld [vmem:[%s429 + $0xb4] sm:$0xf]
  %v476 = vld [vmem:[%s429 + $0xb8] sm:$0xf]
  %v477 = vld [vmem:[%s429 + $0xbc] sm:$0xf]
  %v478 = vld [vmem:[%s429 + $0xc0] sm:$0xf]
  %v479 = vld [vmem:[%s429 + $0xc4] sm:$0xf]
  %v480 = vld [vmem:[%s429 + $0xc8] sm:$0xf]
  %v481 = vld [vmem:[%s429 + $0xcc] sm:$0xf]
  %v482 = vld [vmem:[%s429 + $0xd0] sm:$0xf]
  %v483 = vld [vmem:[%s429 + $0xd4] sm:$0xf]
  %v484 = vld [vmem:[%s429 + $0xd8] sm:$0xf]
  %v485 = vld [vmem:[%s429 + $0xdc] sm:$0xf]
  %v486 = vld [vmem:[%s429 + $0xe0] sm:$0xf]
  %v487 = vld [vmem:[%s429 + $0xe4] sm:$0xf]
  %v488 = vld [vmem:[%s429 + $0xe8] sm:$0xf]
  %v489 = vld [vmem:[%s429 + $0xec] sm:$0xf]
  %v490 = vld [vmem:[%s429 + $0xf0] sm:$0xf]
  %v491 = vld [vmem:[%s429 + $0xf4] sm:$0xf]
  %v492 = vld [vmem:[%s429 + $0xf8] sm:$0xf]
  %v493 = vld [vmem:[%s429 + $0xfc] sm:$0xf]
  %v502 = vunpack.c.l.b16 %v421
  %v503 = vunpack.c.h.b16 %v421
  %v504 = vunpack.c.l.b16 %v422
  %v505 = vunpack.c.h.b16 %v422
  %v506 = vunpack.c.l.b16 %v423
  %v507 = vunpack.c.h.b16 %v423
  %v508 = vunpack.c.l.b16 %v424
  %v509 = vunpack.c.h.b16 %v424
  %v510 = vunpack.c.l.b16 %v425
  %v511 = vunpack.c.h.b16 %v425
  %v512 = vunpack.c.l.b16 %v426
  %v513 = vunpack.c.h.b16 %v426
  %v514 = vunpack.c.l.b16 %v427
  %v515 = vunpack.c.h.b16 %v427
  %v516 = vunpack.c.l.b16 %v428
  %v517 = vunpack.c.h.b16 %v428
  %v518 = vpack.c.b16 %v506, %v502
  %v519 = vpack.c.b16 %v507, %v503
  %v520 = vpack.c.b16 %v508, %v504
  %v521 = vpack.c.b16 %v509, %v505
  %v522 = vpack.c.b16 %v514, %v510
  %v523 = vpack.c.b16 %v515, %v511
  %v524 = vpack.c.b16 %v516, %v512
  %v525 = vpack.c.b16 %v517, %v513
  %v598 = vunpack.c.l.b16 %v430
  %v599 = vunpack.c.l.b16 %v431
  %v600 = vunpack.c.l.b16 %v432
  %v601 = vunpack.c.l.b16 %v433
  %v602 = vunpack.c.l.b16 %v434
  %v603 = vunpack.c.l.b16 %v435
  %v604 = vunpack.c.l.b16 %v436
  %v605 = vunpack.c.l.b16 %v437
  %v606 = vunpack.c.l.b16 %v438
  %v607 = vunpack.c.l.b16 %v439
  %v608 = vunpack.c.l.b16 %v440
  %v609 = vunpack.c.l.b16 %v441
  %v610 = vunpack.c.l.b16 %v442
  %v611 = vunpack.c.l.b16 %v443
  %v612 = vunpack.c.l.b16 %v444
  %v613 = vunpack.c.l.b16 %v445
  %v614 = vunpack.c.l.b16 %v446
  %v615 = vunpack.c.l.b16 %v447
  %v616 = vunpack.c.l.b16 %v448
  %v617 = vunpack.c.l.b16 %v449
  %v618 = vunpack.c.l.b16 %v450
  %v619 = vunpack.c.l.b16 %v451
  %v620 = vunpack.c.l.b16 %v452
  %v621 = vunpack.c.l.b16 %v453
  %v622 = vunpack.c.l.b16 %v454
  %v623 = vunpack.c.l.b16 %v455
  %v624 = vunpack.c.l.b16 %v456
  %v625 = vunpack.c.l.b16 %v457
  %v626 = vunpack.c.l.b16 %v458
  %v627 = vunpack.c.l.b16 %v459
  %v628 = vunpack.c.l.b16 %v460
  %v629 = vunpack.c.l.b16 %v461
  %v630 = vunpack.c.l.b16 %v462
  %v631 = vunpack.c.l.b16 %v463
  %v632 = vunpack.c.l.b16 %v464
  %v633 = vunpack.c.l.b16 %v465
  %v634 = vunpack.c.l.b16 %v466
  %v635 = vunpack.c.l.b16 %v467
  %v636 = vunpack.c.l.b16 %v468
  %v637 = vunpack.c.l.b16 %v469
  %v638 = vunpack.c.l.b16 %v470
  %v639 = vunpack.c.l.b16 %v471
  %v640 = vunpack.c.l.b16 %v472
  %v641 = vunpack.c.l.b16 %v473
  %v642 = vunpack.c.l.b16 %v474
  %v643 = vunpack.c.l.b16 %v475
  %v644 = vunpack.c.l.b16 %v476
  %v645 = vunpack.c.l.b16 %v477
  %v646 = vunpack.c.l.b16 %v478
  %v647 = vunpack.c.l.b16 %v479
  %v648 = vunpack.c.l.b16 %v480
  %v649 = vunpack.c.l.b16 %v481
  %v650 = vunpack.c.l.b16 %v482
  %v651 = vunpack.c.l.b16 %v483
  %v652 = vunpack.c.l.b16 %v484
  %v653 = vunpack.c.l.b16 %v485
  %v654 = vunpack.c.l.b16 %v486
  %v655 = vunpack.c.l.b16 %v487
  %v656 = vunpack.c.l.b16 %v488
  %v657 = vunpack.c.l.b16 %v489
  %v658 = vunpack.c.l.b16 %v490
  %v659 = vunpack.c.l.b16 %v491
  %v660 = vunpack.c.l.b16 %v492
  %v661 = vunpack.c.l.b16 %v493
  %v662 = vpack.c.b16 %v599, %v598
  %v663 = vpack.c.b16 %v601, %v600
  %v664 = vpack.c.b16 %v603, %v602
  %v665 = vpack.c.b16 %v605, %v604
  %v666 = vpack.c.b16 %v607, %v606
  %v667 = vpack.c.b16 %v609, %v608
  %v668 = vpack.c.b16 %v611, %v610
  %v669 = vpack.c.b16 %v613, %v612
  %v670 = vpack.c.b16 %v615, %v614
  %v671 = vpack.c.b16 %v617, %v616
  %v672 = vpack.c.b16 %v619, %v618
  %v673 = vpack.c.b16 %v621, %v620
  %v674 = vpack.c.b16 %v623, %v622
  %v675 = vpack.c.b16 %v625, %v624
  %v676 = vpack.c.b16 %v627, %v626
  %v677 = vpack.c.b16 %v629, %v628
  %v678 = vpack.c.b16 %v631, %v630
  %v679 = vpack.c.b16 %v633, %v632
  %v680 = vpack.c.b16 %v635, %v634
  %v681 = vpack.c.b16 %v637, %v636
  %v682 = vpack.c.b16 %v639, %v638
  %v683 = vpack.c.b16 %v641, %v640
  %v684 = vpack.c.b16 %v643, %v642
  %v685 = vpack.c.b16 %v645, %v644
  %v686 = vpack.c.b16 %v647, %v646
  %v687 = vpack.c.b16 %v649, %v648
  %v688 = vpack.c.b16 %v651, %v650
  %v689 = vpack.c.b16 %v653, %v652
  %v690 = vpack.c.b16 %v655, %v654
  %v691 = vpack.c.b16 %v657, %v656
  %v692 = vpack.c.b16 %v659, %v658
  %v693 = vpack.c.b16 %v661, %v660
  %726 = vmatprep.subr.bf16.mxu0 0
  %727 = vmatpush1.bf16.msra.mxu0 %v669
  %728 = vmatprep.subr.bf16.mxu0 0
  %729 = vmatpush1.bf16.msra.mxu0 %v668
  %730 = vmatprep.subr.bf16.mxu0 0
  %731 = vmatpush1.bf16.msra.mxu0 %v667
  %732 = vmatprep.subr.bf16.mxu0 0
  %733 = vmatpush1.bf16.msra.mxu0 %v666
  %734 = vmatprep.subr.bf16.mxu0 0
  %735 = vmatpush1.bf16.msra.mxu0 %v665
  %736 = vmatprep.subr.bf16.mxu0 0
  %737 = vmatpush1.bf16.msra.mxu0 %v664
  %738 = vmatprep.subr.bf16.mxu0 0
  %739 = vmatpush1.bf16.msra.mxu0 %v663
  %740 = vmatprep.subr.bf16.mxu0 0
  %741 = vmatpush1.bf16.msra.mxu0 %v662
  %742 = vmatprep.subr.bf16.mxu0 0
  %743 = vmatpush2.bf16.msra.mxu0 %v677
  %744 = vmatprep.subr.bf16.mxu0 0
  %745 = vmatpush2.bf16.msra.mxu0 %v676
  %746 = vmatprep.subr.bf16.mxu0 0
  %747 = vmatpush2.bf16.msra.mxu0 %v675
  %748 = vmatprep.subr.bf16.mxu0 0
  %749 = vmatpush2.bf16.msra.mxu0 %v674
  %750 = vmatprep.subr.bf16.mxu0 0
  %751 = vmatpush2.bf16.msra.mxu0 %v673
  %752 = vmatprep.subr.bf16.mxu0 0
  %753 = vmatpush2.bf16.msra.mxu0 %v672
  %754 = vmatprep.subr.bf16.mxu0 0
  %755 = vmatpush2.bf16.msra.mxu0 %v671
  %756 = vmatprep.subr.bf16.mxu0 0
  %757 = vmatpush2.bf16.msra.mxu0 %v670
  %758 = vmatprep.mubr.bf16.mxu0 %v519
  %759 = vmatmul.mubr.bf16.gmra.mxu0 %v518
  %v760 = vpop.f32.mrf.mxu0
  %v761 = vadd.f32 0.0, %v760
  %v762 = vpop.f32.mrf.mxu0
  %v763 = vpop.f32.mrf.mxu0
  %v764 = vadd.f32 0.0, %v763
  %v765 = vpop.f32.mrf.mxu0
  %766 = vmatprep.mubr.bf16.mxu0 %v523
  %767 = vmatmul.mubr.bf16.gmra.mxu0 %v522
  %v768 = vpop.f32.mrf.mxu0
  %v769 = vadd.f32 0.0, %v768
  %v770 = vpop.f32.mrf.mxu0
  %v771 = vpop.f32.mrf.mxu0
  %v772 = vadd.f32 0.0, %v771
  %v773 = vpop.f32.mrf.mxu0
  %774 = vdwg.mxu0
  %775 = vmatprep.subr.bf16.mxu0 0
  %776 = vmatpush1.bf16.msra.mxu0 %v685
  %777 = vmatprep.subr.bf16.mxu0 0
  %778 = vmatpush1.bf16.msra.mxu0 %v684
  %779 = vmatprep.subr.bf16.mxu0 0
  %780 = vmatpush1.bf16.msra.mxu0 %v683
  %781 = vmatprep.subr.bf16.mxu0 0
  %782 = vmatpush1.bf16.msra.mxu0 %v682
  %783 = vmatprep.subr.bf16.mxu0 0
  %784 = vmatpush1.bf16.msra.mxu0 %v681
  %785 = vmatprep.subr.bf16.mxu0 0
  %786 = vmatpush1.bf16.msra.mxu0 %v680
  %787 = vmatprep.subr.bf16.mxu0 0
  %788 = vmatpush1.bf16.msra.mxu0 %v679
  %789 = vmatprep.subr.bf16.mxu0 0
  %790 = vmatpush1.bf16.msra.mxu0 %v678
  %791 = vmatprep.subr.bf16.mxu0 0
  %792 = vmatpush2.bf16.msra.mxu0 %v693
  %793 = vmatprep.subr.bf16.mxu0 0
  %794 = vmatpush2.bf16.msra.mxu0 %v692
  %795 = vmatprep.subr.bf16.mxu0 0
  %796 = vmatpush2.bf16.msra.mxu0 %v691
  %797 = vmatprep.subr.bf16.mxu0 0
  %798 = vmatpush2.bf16.msra.mxu0 %v690
  %799 = vmatprep.subr.bf16.mxu0 0
  %800 = vmatpush2.bf16.msra.mxu0 %v689
  %801 = vmatprep.subr.bf16.mxu0 0
  %802 = vmatpush2.bf16.msra.mxu0 %v688
  %803 = vmatprep.subr.bf16.mxu0 0
  %804 = vmatpush2.bf16.msra.mxu0 %v687
  %805 = vmatprep.subr.bf16.mxu0 0
  %806 = vmatpush2.bf16.msra.mxu0 %v686
  %807 = vmatprep.mubr.bf16.mxu0 %v521
  %808 = vmatmul.mubr.bf16.gmra.mxu0 %v520
  %v809 = vpop.f32.mrf.mxu0
  %v810 = vadd.f32 %v761, %v809
  %v811 = vpop.f32.mrf.mxu0
  %v812 = vpop.f32.mrf.mxu0
  %v813 = vadd.f32 %v764, %v812
  %v814 = vpop.f32.mrf.mxu0
  %815 = vmatprep.mubr.bf16.mxu0 %v525
  %816 = vmatmul.mubr.bf16.gmra.mxu0 %v524
  %v817 = vpop.f32.mrf.mxu0
  %v818 = vadd.f32 %v769, %v817
  %v819 = vpop.f32.mrf.mxu0
  %v820 = vpop.f32.mrf.mxu0
  %v821 = vadd.f32 %v772, %v820
  %v822 = vpop.f32.mrf.mxu0
  %823 = vdwg.mxu0
  %s824 = scalar_lea.vmem %s0, 128
  %v825 = vld [vmem:[%s824] sm:$0xff]
  %v826 = vld [vmem:[%s824 + $0x8] sm:$0xff]
  %v827 = vld [vmem:[%s824 + $0x10] sm:$0xff]
  %v828 = vld [vmem:[%s824 + $0x18] sm:$0xff]
  %v829 = vld [vmem:[%s824 + $0x20] sm:$0xff]
  %v830 = vld [vmem:[%s824 + $0x28] sm:$0xff]
  %v831 = vld [vmem:[%s824 + $0x30] sm:$0xff]
  %v832 = vld [vmem:[%s824 + $0x38] sm:$0xff]
  %s833 = scalar_lea.vmem %s1, 512
  %v834 = vld [vmem:[%s833] sm:$0xf]
  %v835 = vld [vmem:[%s833 + $0x4] sm:$0xf]
  %v836 = vld [vmem:[%s833 + $0x8] sm:$0xf]
  %v837 = vld [vmem:[%s833 + $0xc] sm:$0xf]
  %v838 = vld [vmem:[%s833 + $0x10] sm:$0xf]
  %v839 = vld [vmem:[%s833 + $0x14] sm:$0xf]
  %v840 = vld [vmem:[%s833 + $0x18] sm:$0xf]
  %v841 = vld [vmem:[%s833 + $0x1c] sm:$0xf]
  %v842 = vld [vmem:[%s833 + $0x20] sm:$0xf]
  %v843 = vld [vmem:[%s833 + $0x24] sm:$0xf]
  %v844 = vld [vmem:[%s833 + $0x28] sm:$0xf]
  %v845 = vld [vmem:[%s833 + $0x2c] sm:$0xf]
  %v846 = vld [vmem:[%s833 + $0x30] sm:$0xf]
  %v847 = vld [vmem:[%s833 + $0x34] sm:$0xf]
  %v848 = vld [vmem:[%s833 + $0x38] sm:$0xf]
  %v849 = vld [vmem:[%s833 + $0x3c] sm:$0xf]
  %v850 = vld [vmem:[%s833 + $0x40] sm:$0xf]
  %v851 = vld [vmem:[%s833 + $0x44] sm:$0xf]
  %v852 = vld [vmem:[%s833 + $0x48] sm:$0xf]
  %v853 = vld [vmem:[%s833 + $0x4c] sm:$0xf]
  %v854 = vld [vmem:[%s833 + $0x50] sm:$0xf]
  %v855 = vld [vmem:[%s833 + $0x54] sm:$0xf]
  %v856 = vld [vmem:[%s833 + $0x58] sm:$0xf]
  %v857 = vld [vmem:[%s833 + $0x5c] sm:$0xf]
  %v858 = vld [vmem:[%s833 + $0x60] sm:$0xf]
  %v859 = vld [vmem:[%s833 + $0x64] sm:$0xf]
  %v860 = vld [vmem:[%s833 + $0x68] sm:$0xf]
  %v861 = vld [vmem:[%s833 + $0x6c] sm:$0xf]
  %v862 = vld [vmem:[%s833 + $0x70] sm:$0xf]
  %v863 = vld [vmem:[%s833 + $0x74] sm:$0xf]
  %v864 = vld [vmem:[%s833 + $0x78] sm:$0xf]
  %v865 = vld [vmem:[%s833 + $0x7c] sm:$0xf]
  %v866 = vld [vmem:[%s833 + $0x80] sm:$0xf]
  %v867 = vld [vmem:[%s833 + $0x84] sm:$0xf]
  %v868 = vld [vmem:[%s833 + $0x88] sm:$0xf]
  %v869 = vld [vmem:[%s833 + $0x8c] sm:$0xf]
  %v870 = vld [vmem:[%s833 + $0x90] sm:$0xf]
  %v871 = vld [vmem:[%s833 + $0x94] sm:$0xf]
  %v872 = vld [vmem:[%s833 + $0x98] sm:$0xf]
  %v873 = vld [vmem:[%s833 + $0x9c] sm:$0xf]
  %v874 = vld [vmem:[%s833 + $0xa0] sm:$0xf]
  %v875 = vld [vmem:[%s833 + $0xa4] sm:$0xf]
  %v876 = vld [vmem:[%s833 + $0xa8] sm:$0xf]
  %v877 = vld [vmem:[%s833 + $0xac] sm:$0xf]
  %v878 = vld [vmem:[%s833 + $0xb0] sm:$0xf]
  %v879 = vld [vmem:[%s833 + $0xb4] sm:$0xf]
  %v880 = vld [vmem:[%s833 + $0xb8] sm:$0xf]
  %v881 = vld [vmem:[%s833 + $0xbc] sm:$0xf]
  %v882 = vld [vmem:[%s833 + $0xc0] sm:$0xf]
  %v883 = vld [vmem:[%s833 + $0xc4] sm:$0xf]
  %v884 = vld [vmem:[%s833 + $0xc8] sm:$0xf]
  %v885 = vld [vmem:[%s833 + $0xcc] sm:$0xf]
  %v886 = vld [vmem:[%s833 + $0xd0] sm:$0xf]
  %v887 = vld [vmem:[%s833 + $0xd4] sm:$0xf]
  %v888 = vld [vmem:[%s833 + $0xd8] sm:$0xf]
  %v889 = vld [vmem:[%s833 + $0xdc] sm:$0xf]
  %v890 = vld [vmem:[%s833 + $0xe0] sm:$0xf]
  %v891 = vld [vmem:[%s833 + $0xe4] sm:$0xf]
  %v892 = vld [vmem:[%s833 + $0xe8] sm:$0xf]
  %v893 = vld [vmem:[%s833 + $0xec] sm:$0xf]
  %v894 = vld [vmem:[%s833 + $0xf0] sm:$0xf]
  %v895 = vld [vmem:[%s833 + $0xf4] sm:$0xf]
  %v896 = vld [vmem:[%s833 + $0xf8] sm:$0xf]
  %v897 = vld [vmem:[%s833 + $0xfc] sm:$0xf]
  %v906 = vunpack.c.l.b16 %v825
  %v907 = vunpack.c.h.b16 %v825
  %v908 = vunpack.c.l.b16 %v826
  %v909 = vunpack.c.h.b16 %v826
  %v910 = vunpack.c.l.b16 %v827
  %v911 = vunpack.c.h.b16 %v827
  %v912 = vunpack.c.l.b16 %v828
  %v913 = vunpack.c.h.b16 %v828
  %v914 = vunpack.c.l.b16 %v829
  %v915 = vunpack.c.h.b16 %v829
  %v916 = vunpack.c.l.b16 %v830
  %v917 = vunpack.c.h.b16 %v830
  %v918 = vunpack.c.l.b16 %v831
  %v919 = vunpack.c.h.b16 %v831
  %v920 = vunpack.c.l.b16 %v832
  %v921 = vunpack.c.h.b16 %v832
  %v922 = vpack.c.b16 %v910, %v906
  %v923 = vpack.c.b16 %v911, %v907
  %v924 = vpack.c.b16 %v912, %v908
  %v925 = vpack.c.b16 %v913, %v909
  %v926 = vpack.c.b16 %v918, %v914
  %v927 = vpack.c.b16 %v919, %v915
  %v928 = vpack.c.b16 %v920, %v916
  %v929 = vpack.c.b16 %v921, %v917
  %v1002 = vunpack.c.l.b16 %v834
  %v1003 = vunpack.c.l.b16 %v835
  %v1004 = vunpack.c.l.b16 %v836
  %v1005 = vunpack.c.l.b16 %v837
  %v1006 = vunpack.c.l.b16 %v838
  %v1007 = vunpack.c.l.b16 %v839
  %v1008 = vunpack.c.l.b16 %v840
  %v1009 = vunpack.c.l.b16 %v841
  %v1010 = vunpack.c.l.b16 %v842
  %v1011 = vunpack.c.l.b16 %v843
  %v1012 = vunpack.c.l.b16 %v844
  %v1013 = vunpack.c.l.b16 %v845
  %v1014 = vunpack.c.l.b16 %v846
  %v1015 = vunpack.c.l.b16 %v847
  %v1016 = vunpack.c.l.b16 %v848
  %v1017 = vunpack.c.l.b16 %v849
  %v1018 = vunpack.c.l.b16 %v850
  %v1019 = vunpack.c.l.b16 %v851
  %v1020 = vunpack.c.l.b16 %v852
  %v1021 = vunpack.c.l.b16 %v853
  %v1022 = vunpack.c.l.b16 %v854
  %v1023 = vunpack.c.l.b16 %v855
  %v1024 = vunpack.c.l.b16 %v856
  %v1025 = vunpack.c.l.b16 %v857
  %v1026 = vunpack.c.l.b16 %v858
  %v1027 = vunpack.c.l.b16 %v859
  %v1028 = vunpack.c.l.b16 %v860
  %v1029 = vunpack.c.l.b16 %v861
  %v1030 = vunpack.c.l.b16 %v862
  %v1031 = vunpack.c.l.b16 %v863
  %v1032 = vunpack.c.l.b16 %v864
  %v1033 = vunpack.c.l.b16 %v865
  %v1034 = vunpack.c.l.b16 %v866
  %v1035 = vunpack.c.l.b16 %v867
  %v1036 = vunpack.c.l.b16 %v868
  %v1037 = vunpack.c.l.b16 %v869
  %v1038 = vunpack.c.l.b16 %v870
  %v1039 = vunpack.c.l.b16 %v871
  %v1040 = vunpack.c.l.b16 %v872
  %v1041 = vunpack.c.l.b16 %v873
  %v1042 = vunpack.c.l.b16 %v874
  %v1043 = vunpack.c.l.b16 %v875
  %v1044 = vunpack.c.l.b16 %v876
  %v1045 = vunpack.c.l.b16 %v877
  %v1046 = vunpack.c.l.b16 %v878
  %v1047 = vunpack.c.l.b16 %v879
  %v1048 = vunpack.c.l.b16 %v880
  %v1049 = vunpack.c.l.b16 %v881
  %v1050 = vunpack.c.l.b16 %v882
  %v1051 = vunpack.c.l.b16 %v883
  %v1052 = vunpack.c.l.b16 %v884
  %v1053 = vunpack.c.l.b16 %v885
  %v1054 = vunpack.c.l.b16 %v886
  %v1055 = vunpack.c.l.b16 %v887
  %v1056 = vunpack.c.l.b16 %v888
  %v1057 = vunpack.c.l.b16 %v889
  %v1058 = vunpack.c.l.b16 %v890
  %v1059 = vunpack.c.l.b16 %v891
  %v1060 = vunpack.c.l.b16 %v892
  %v1061 = vunpack.c.l.b16 %v893
  %v1062 = vunpack.c.l.b16 %v894
  %v1063 = vunpack.c.l.b16 %v895
  %v1064 = vunpack.c.l.b16 %v896
  %v1065 = vunpack.c.l.b16 %v897
  %v1066 = vpack.c.b16 %v1003, %v1002
  %v1067 = vpack.c.b16 %v1005, %v1004
  %v1068 = vpack.c.b16 %v1007, %v1006
  %v1069 = vpack.c.b16 %v1009, %v1008
  %v1070 = vpack.c.b16 %v1011, %v1010
  %v1071 = vpack.c.b16 %v1013, %v1012
  %v1072 = vpack.c.b16 %v1015, %v1014
  %v1073 = vpack.c.b16 %v1017, %v1016
  %v1074 = vpack.c.b16 %v1019, %v1018
  %v1075 = vpack.c.b16 %v1021, %v1020
  %v1076 = vpack.c.b16 %v1023, %v1022
  %v1077 = vpack.c.b16 %v1025, %v1024
  %v1078 = vpack.c.b16 %v1027, %v1026
  %v1079 = vpack.c.b16 %v1029, %v1028
  %v1080 = vpack.c.b16 %v1031, %v1030
  %v1081 = vpack.c.b16 %v1033, %v1032
  %v1082 = vpack.c.b16 %v1035, %v1034
  %v1083 = vpack.c.b16 %v1037, %v1036
  %v1084 = vpack.c.b16 %v1039, %v1038
  %v1085 = vpack.c.b16 %v1041, %v1040
  %v1086 = vpack.c.b16 %v1043, %v1042
  %v1087 = vpack.c.b16 %v1045, %v1044
  %v1088 = vpack.c.b16 %v1047, %v1046
  %v1089 = vpack.c.b16 %v1049, %v1048
  %v1090 = vpack.c.b16 %v1051, %v1050
  %v1091 = vpack.c.b16 %v1053, %v1052
  %v1092 = vpack.c.b16 %v1055, %v1054
  %v1093 = vpack.c.b16 %v1057, %v1056
  %v1094 = vpack.c.b16 %v1059, %v1058
  %v1095 = vpack.c.b16 %v1061, %v1060
  %v1096 = vpack.c.b16 %v1063, %v1062
  %v1097 = vpack.c.b16 %v1065, %v1064
  %1130 = vmatprep.subr.bf16.mxu0 0
  %1131 = vmatpush1.bf16.msra.mxu0 %v1073
  %1132 = vmatprep.subr.bf16.mxu0 0
  %1133 = vmatpush1.bf16.msra.mxu0 %v1072
  %1134 = vmatprep.subr.bf16.mxu0 0
  %1135 = vmatpush1.bf16.msra.mxu0 %v1071
  %1136 = vmatprep.subr.bf16.mxu0 0
  %1137 = vmatpush1.bf16.msra.mxu0 %v1070
  %1138 = vmatprep.subr.bf16.mxu0 0
  %1139 = vmatpush1.bf16.msra.mxu0 %v1069
  %1140 = vmatprep.subr.bf16.mxu0 0
  %1141 = vmatpush1.bf16.msra.mxu0 %v1068
  %1142 = vmatprep.subr.bf16.mxu0 0
  %1143 = vmatpush1.bf16.msra.mxu0 %v1067
  %1144 = vmatprep.subr.bf16.mxu0 0
  %1145 = vmatpush1.bf16.msra.mxu0 %v1066
  %1146 = vmatprep.subr.bf16.mxu0 0
  %1147 = vmatpush2.bf16.msra.mxu0 %v1081
  %1148 = vmatprep.subr.bf16.mxu0 0
  %1149 = vmatpush2.bf16.msra.mxu0 %v1080
  %1150 = vmatprep.subr.bf16.mxu0 0
  %1151 = vmatpush2.bf16.msra.mxu0 %v1079
  %1152 = vmatprep.subr.bf16.mxu0 0
  %1153 = vmatpush2.bf16.msra.mxu0 %v1078
  %1154 = vmatprep.subr.bf16.mxu0 0
  %1155 = vmatpush2.bf16.msra.mxu0 %v1077
  %1156 = vmatprep.subr.bf16.mxu0 0
  %1157 = vmatpush2.bf16.msra.mxu0 %v1076
  %1158 = vmatprep.subr.bf16.mxu0 0
  %1159 = vmatpush2.bf16.msra.mxu0 %v1075
  %1160 = vmatprep.subr.bf16.mxu0 0
  %1161 = vmatpush2.bf16.msra.mxu0 %v1074
  %1162 = vmatprep.mubr.bf16.mxu0 %v923
  %1163 = vmatmul.mubr.bf16.gmra.mxu0 %v922
  %v1164 = vpop.f32.mrf.mxu0
  %v1165 = vadd.f32 0.0, %v1164
  %v1166 = vpop.f32.mrf.mxu0
  %v1167 = vpop.f32.mrf.mxu0
  %v1168 = vadd.f32 0.0, %v1167
  %v1169 = vpop.f32.mrf.mxu0
  %1170 = vmatprep.mubr.bf16.mxu0 %v927
  %1171 = vmatmul.mubr.bf16.gmra.mxu0 %v926
  %v1172 = vpop.f32.mrf.mxu0
  %v1173 = vadd.f32 0.0, %v1172
  %v1174 = vpop.f32.mrf.mxu0
  %v1175 = vpop.f32.mrf.mxu0
  %v1176 = vadd.f32 0.0, %v1175
  %v1177 = vpop.f32.mrf.mxu0
  %1178 = vdwg.mxu0
  %1179 = vmatprep.subr.bf16.mxu0 0
  %1180 = vmatpush1.bf16.msra.mxu0 %v1089
  %1181 = vmatprep.subr.bf16.mxu0 0
  %1182 = vmatpush1.bf16.msra.mxu0 %v1088
  %1183 = vmatprep.subr.bf16.mxu0 0
  %1184 = vmatpush1.bf16.msra.mxu0 %v1087
  %1185 = vmatprep.subr.bf16.mxu0 0
  %1186 = vmatpush1.bf16.msra.mxu0 %v1086
  %1187 = vmatprep.subr.bf16.mxu0 0
  %1188 = vmatpush1.bf16.msra.mxu0 %v1085
  %1189 = vmatprep.subr.bf16.mxu0 0
  %1190 = vmatpush1.bf16.msra.mxu0 %v1084
  %1191 = vmatprep.subr.bf16.mxu0 0
  %1192 = vmatpush1.bf16.msra.mxu0 %v1083
  %1193 = vmatprep.subr.bf16.mxu0 0
  %1194 = vmatpush1.bf16.msra.mxu0 %v1082
  %1195 = vmatprep.subr.bf16.mxu0 0
  %1196 = vmatpush2.bf16.msra.mxu0 %v1097
  %1197 = vmatprep.subr.bf16.mxu0 0
  %1198 = vmatpush2.bf16.msra.mxu0 %v1096
  %1199 = vmatprep.subr.bf16.mxu0 0
  %1200 = vmatpush2.bf16.msra.mxu0 %v1095
  %1201 = vmatprep.subr.bf16.mxu0 0
  %1202 = vmatpush2.bf16.msra.mxu0 %v1094
  %1203 = vmatprep.subr.bf16.mxu0 0
  %1204 = vmatpush2.bf16.msra.mxu0 %v1093
  %1205 = vmatprep.subr.bf16.mxu0 0
  %1206 = vmatpush2.bf16.msra.mxu0 %v1092
  %1207 = vmatprep.subr.bf16.mxu0 0
  %1208 = vmatpush2.bf16.msra.mxu0 %v1091
  %1209 = vmatprep.subr.bf16.mxu0 0
  %1210 = vmatpush2.bf16.msra.mxu0 %v1090
  %1211 = vmatprep.mubr.bf16.mxu0 %v925
  %1212 = vmatmul.mubr.bf16.gmra.mxu0 %v924
  %v1213 = vpop.f32.mrf.mxu0
  %v1214 = vadd.f32 %v1165, %v1213
  %v1215 = vpop.f32.mrf.mxu0
  %v1216 = vpop.f32.mrf.mxu0
  %v1217 = vadd.f32 %v1168, %v1216
  %v1218 = vpop.f32.mrf.mxu0
  %1219 = vmatprep.mubr.bf16.mxu0 %v929
  %1220 = vmatmul.mubr.bf16.gmra.mxu0 %v928
  %v1221 = vpop.f32.mrf.mxu0
  %v1222 = vadd.f32 %v1173, %v1221
  %v1223 = vpop.f32.mrf.mxu0
  %v1224 = vpop.f32.mrf.mxu0
  %v1225 = vadd.f32 %v1176, %v1224
  %v1226 = vpop.f32.mrf.mxu0
  %1227 = vdwg.mxu0
  %s1228 = scalar_lea.vmem %s0, 192
  %v1229 = vld [vmem:[%s1228] sm:$0xff]
  %v1230 = vld [vmem:[%s1228 + $0x8] sm:$0xff]
  %v1231 = vld [vmem:[%s1228 + $0x10] sm:$0xff]
  %v1232 = vld [vmem:[%s1228 + $0x18] sm:$0xff]
  %v1233 = vld [vmem:[%s1228 + $0x20] sm:$0xff]
  %v1234 = vld [vmem:[%s1228 + $0x28] sm:$0xff]
  %v1235 = vld [vmem:[%s1228 + $0x30] sm:$0xff]
  %v1236 = vld [vmem:[%s1228 + $0x38] sm:$0xff]
  %s1237 = scalar_lea.vmem %s1, 768
  %v1238 = vld [vmem:[%s1237] sm:$0xf]
  %v1239 = vld [vmem:[%s1237 + $0x4] sm:$0xf]
  %v1240 = vld [vmem:[%s1237 + $0x8] sm:$0xf]
  %v1241 = vld [vmem:[%s1237 + $0xc] sm:$0xf]
  %v1242 = vld [vmem:[%s1237 + $0x10] sm:$0xf]
  %v1243 = vld [vmem:[%s1237 + $0x14] sm:$0xf]
  %v1244 = vld [vmem:[%s1237 + $0x18] sm:$0xf]
  %v1245 = vld [vmem:[%s1237 + $0x1c] sm:$0xf]
  %v1246 = vld [vmem:[%s1237 + $0x20] sm:$0xf]
  %v1247 = vld [vmem:[%s1237 + $0x24] sm:$0xf]
  %v1248 = vld [vmem:[%s1237 + $0x28] sm:$0xf]
  %v1249 = vld [vmem:[%s1237 + $0x2c] sm:$0xf]
  %v1250 = vld [vmem:[%s1237 + $0x30] sm:$0xf]
  %v1251 = vld [vmem:[%s1237 + $0x34] sm:$0xf]
  %v1252 = vld [vmem:[%s1237 + $0x38] sm:$0xf]
  %v1253 = vld [vmem:[%s1237 + $0x3c] sm:$0xf]
  %v1254 = vld [vmem:[%s1237 + $0x40] sm:$0xf]
  %v1255 = vld [vmem:[%s1237 + $0x44] sm:$0xf]
  %v1256 = vld [vmem:[%s1237 + $0x48] sm:$0xf]
  %v1257 = vld [vmem:[%s1237 + $0x4c] sm:$0xf]
  %v1258 = vld [vmem:[%s1237 + $0x50] sm:$0xf]
  %v1259 = vld [vmem:[%s1237 + $0x54] sm:$0xf]
  %v1260 = vld [vmem:[%s1237 + $0x58] sm:$0xf]
  %v1261 = vld [vmem:[%s1237 + $0x5c] sm:$0xf]
  %v1262 = vld [vmem:[%s1237 + $0x60] sm:$0xf]
  %v1263 = vld [vmem:[%s1237 + $0x64] sm:$0xf]
  %v1264 = vld [vmem:[%s1237 + $0x68] sm:$0xf]
  %v1265 = vld [vmem:[%s1237 + $0x6c] sm:$0xf]
  %v1266 = vld [vmem:[%s1237 + $0x70] sm:$0xf]
  %v1267 = vld [vmem:[%s1237 + $0x74] sm:$0xf]
  %v1268 = vld [vmem:[%s1237 + $0x78] sm:$0xf]
  %v1269 = vld [vmem:[%s1237 + $0x7c] sm:$0xf]
  %v1270 = vld [vmem:[%s1237 + $0x80] sm:$0xf]
  %v1271 = vld [vmem:[%s1237 + $0x84] sm:$0xf]
  %v1272 = vld [vmem:[%s1237 + $0x88] sm:$0xf]
  %v1273 = vld [vmem:[%s1237 + $0x8c] sm:$0xf]
  %v1274 = vld [vmem:[%s1237 + $0x90] sm:$0xf]
  %v1275 = vld [vmem:[%s1237 + $0x94] sm:$0xf]
  %v1276 = vld [vmem:[%s1237 + $0x98] sm:$0xf]
  %v1277 = vld [vmem:[%s1237 + $0x9c] sm:$0xf]
  %v1278 = vld [vmem:[%s1237 + $0xa0] sm:$0xf]
  %v1279 = vld [vmem:[%s1237 + $0xa4] sm:$0xf]
  %v1280 = vld [vmem:[%s1237 + $0xa8] sm:$0xf]
  %v1281 = vld [vmem:[%s1237 + $0xac] sm:$0xf]
  %v1282 = vld [vmem:[%s1237 + $0xb0] sm:$0xf]
  %v1283 = vld [vmem:[%s1237 + $0xb4] sm:$0xf]
  %v1284 = vld [vmem:[%s1237 + $0xb8] sm:$0xf]
  %v1285 = vld [vmem:[%s1237 + $0xbc] sm:$0xf]
  %v1286 = vld [vmem:[%s1237 + $0xc0] sm:$0xf]
  %v1287 = vld [vmem:[%s1237 + $0xc4] sm:$0xf]
  %v1288 = vld [vmem:[%s1237 + $0xc8] sm:$0xf]
  %v1289 = vld [vmem:[%s1237 + $0xcc] sm:$0xf]
  %v1290 = vld [vmem:[%s1237 + $0xd0] sm:$0xf]
  %v1291 = vld [vmem:[%s1237 + $0xd4] sm:$0xf]
  %v1292 = vld [vmem:[%s1237 + $0xd8] sm:$0xf]
  %v1293 = vld [vmem:[%s1237 + $0xdc] sm:$0xf]
  %v1294 = vld [vmem:[%s1237 + $0xe0] sm:$0xf]
  %v1295 = vld [vmem:[%s1237 + $0xe4] sm:$0xf]
  %v1296 = vld [vmem:[%s1237 + $0xe8] sm:$0xf]
  %v1297 = vld [vmem:[%s1237 + $0xec] sm:$0xf]
  %v1298 = vld [vmem:[%s1237 + $0xf0] sm:$0xf]
  %v1299 = vld [vmem:[%s1237 + $0xf4] sm:$0xf]
  %v1300 = vld [vmem:[%s1237 + $0xf8] sm:$0xf]
  %v1301 = vld [vmem:[%s1237 + $0xfc] sm:$0xf]
  %v1310 = vunpack.c.l.b16 %v1229
  %v1311 = vunpack.c.h.b16 %v1229
  %v1312 = vunpack.c.l.b16 %v1230
  %v1313 = vunpack.c.h.b16 %v1230
  %v1314 = vunpack.c.l.b16 %v1231
  %v1315 = vunpack.c.h.b16 %v1231
  %v1316 = vunpack.c.l.b16 %v1232
  %v1317 = vunpack.c.h.b16 %v1232
  %v1318 = vunpack.c.l.b16 %v1233
  %v1319 = vunpack.c.h.b16 %v1233
  %v1320 = vunpack.c.l.b16 %v1234
  %v1321 = vunpack.c.h.b16 %v1234
  %v1322 = vunpack.c.l.b16 %v1235
  %v1323 = vunpack.c.h.b16 %v1235
  %v1324 = vunpack.c.l.b16 %v1236
  %v1325 = vunpack.c.h.b16 %v1236
  %v1326 = vpack.c.b16 %v1314, %v1310
  %v1327 = vpack.c.b16 %v1315, %v1311
  %v1328 = vpack.c.b16 %v1316, %v1312
  %v1329 = vpack.c.b16 %v1317, %v1313
  %v1330 = vpack.c.b16 %v1322, %v1318
  %v1331 = vpack.c.b16 %v1323, %v1319
  %v1332 = vpack.c.b16 %v1324, %v1320
  %v1333 = vpack.c.b16 %v1325, %v1321
  %v1406 = vunpack.c.l.b16 %v1238
  %v1407 = vunpack.c.l.b16 %v1239
  %v1408 = vunpack.c.l.b16 %v1240
  %v1409 = vunpack.c.l.b16 %v1241
  %v1410 = vunpack.c.l.b16 %v1242
  %v1411 = vunpack.c.l.b16 %v1243
  %v1412 = vunpack.c.l.b16 %v1244
  %v1413 = vunpack.c.l.b16 %v1245
  %v1414 = vunpack.c.l.b16 %v1246
  %v1415 = vunpack.c.l.b16 %v1247
  %v1416 = vunpack.c.l.b16 %v1248
  %v1417 = vunpack.c.l.b16 %v1249
  %v1418 = vunpack.c.l.b16 %v1250
  %v1419 = vunpack.c.l.b16 %v1251
  %v1420 = vunpack.c.l.b16 %v1252
  %v1421 = vunpack.c.l.b16 %v1253
  %v1422 = vunpack.c.l.b16 %v1254
  %v1423 = vunpack.c.l.b16 %v1255
  %v1424 = vunpack.c.l.b16 %v1256
  %v1425 = vunpack.c.l.b16 %v1257
  %v1426 = vunpack.c.l.b16 %v1258
  %v1427 = vunpack.c.l.b16 %v1259
  %v1428 = vunpack.c.l.b16 %v1260
  %v1429 = vunpack.c.l.b16 %v1261
  %v1430 = vunpack.c.l.b16 %v1262
  %v1431 = vunpack.c.l.b16 %v1263
  %v1432 = vunpack.c.l.b16 %v1264
  %v1433 = vunpack.c.l.b16 %v1265
  %v1434 = vunpack.c.l.b16 %v1266
  %v1435 = vunpack.c.l.b16 %v1267
  %v1436 = vunpack.c.l.b16 %v1268
  %v1437 = vunpack.c.l.b16 %v1269
  %v1438 = vunpack.c.l.b16 %v1270
  %v1439 = vunpack.c.l.b16 %v1271
  %v1440 = vunpack.c.l.b16 %v1272
  %v1441 = vunpack.c.l.b16 %v1273
  %v1442 = vunpack.c.l.b16 %v1274
  %v1443 = vunpack.c.l.b16 %v1275
  %v1444 = vunpack.c.l.b16 %v1276
  %v1445 = vunpack.c.l.b16 %v1277
  %v1446 = vunpack.c.l.b16 %v1278
  %v1447 = vunpack.c.l.b16 %v1279
  %v1448 = vunpack.c.l.b16 %v1280
  %v1449 = vunpack.c.l.b16 %v1281
  %v1450 = vunpack.c.l.b16 %v1282
  %v1451 = vunpack.c.l.b16 %v1283
  %v1452 = vunpack.c.l.b16 %v1284
  %v1453 = vunpack.c.l.b16 %v1285
  %v1454 = vunpack.c.l.b16 %v1286
  %v1455 = vunpack.c.l.b16 %v1287
  %v1456 = vunpack.c.l.b16 %v1288
  %v1457 = vunpack.c.l.b16 %v1289
  %v1458 = vunpack.c.l.b16 %v1290
  %v1459 = vunpack.c.l.b16 %v1291
  %v1460 = vunpack.c.l.b16 %v1292
  %v1461 = vunpack.c.l.b16 %v1293
  %v1462 = vunpack.c.l.b16 %v1294
  %v1463 = vunpack.c.l.b16 %v1295
  %v1464 = vunpack.c.l.b16 %v1296
  %v1465 = vunpack.c.l.b16 %v1297
  %v1466 = vunpack.c.l.b16 %v1298
  %v1467 = vunpack.c.l.b16 %v1299
  %v1468 = vunpack.c.l.b16 %v1300
  %v1469 = vunpack.c.l.b16 %v1301
  %v1470 = vpack.c.b16 %v1407, %v1406
  %v1471 = vpack.c.b16 %v1409, %v1408
  %v1472 = vpack.c.b16 %v1411, %v1410
  %v1473 = vpack.c.b16 %v1413, %v1412
  %v1474 = vpack.c.b16 %v1415, %v1414
  %v1475 = vpack.c.b16 %v1417, %v1416
  %v1476 = vpack.c.b16 %v1419, %v1418
  %v1477 = vpack.c.b16 %v1421, %v1420
  %v1478 = vpack.c.b16 %v1423, %v1422
  %v1479 = vpack.c.b16 %v1425, %v1424
  %v1480 = vpack.c.b16 %v1427, %v1426
  %v1481 = vpack.c.b16 %v1429, %v1428
  %v1482 = vpack.c.b16 %v1431, %v1430
  %v1483 = vpack.c.b16 %v1433, %v1432
  %v1484 = vpack.c.b16 %v1435, %v1434
  %v1485 = vpack.c.b16 %v1437, %v1436
  %v1486 = vpack.c.b16 %v1439, %v1438
  %v1487 = vpack.c.b16 %v1441, %v1440
  %v1488 = vpack.c.b16 %v1443, %v1442
  %v1489 = vpack.c.b16 %v1445, %v1444
  %v1490 = vpack.c.b16 %v1447, %v1446
  %v1491 = vpack.c.b16 %v1449, %v1448
  %v1492 = vpack.c.b16 %v1451, %v1450
  %v1493 = vpack.c.b16 %v1453, %v1452
  %v1494 = vpack.c.b16 %v1455, %v1454
  %v1495 = vpack.c.b16 %v1457, %v1456
  %v1496 = vpack.c.b16 %v1459, %v1458
  %v1497 = vpack.c.b16 %v1461, %v1460
  %v1498 = vpack.c.b16 %v1463, %v1462
  %v1499 = vpack.c.b16 %v1465, %v1464
  %v1500 = vpack.c.b16 %v1467, %v1466
  %v1501 = vpack.c.b16 %v1469, %v1468
  %1534 = vmatprep.subr.bf16.mxu0 0
  %1535 = vmatpush1.bf16.msra.mxu0 %v1477
  %1536 = vmatprep.subr.bf16.mxu0 0
  %1537 = vmatpush1.bf16.msra.mxu0 %v1476
  %1538 = vmatprep.subr.bf16.mxu0 0
  %1539 = vmatpush1.bf16.msra.mxu0 %v1475
  %1540 = vmatprep.subr.bf16.mxu0 0
  %1541 = vmatpush1.bf16.msra.mxu0 %v1474
  %1542 = vmatprep.subr.bf16.mxu0 0
  %1543 = vmatpush1.bf16.msra.mxu0 %v1473
  %1544 = vmatprep.subr.bf16.mxu0 0
  %1545 = vmatpush1.bf16.msra.mxu0 %v1472
  %1546 = vmatprep.subr.bf16.mxu0 0
  %1547 = vmatpush1.bf16.msra.mxu0 %v1471
  %1548 = vmatprep.subr.bf16.mxu0 0
  %1549 = vmatpush1.bf16.msra.mxu0 %v1470
  %1550 = vmatprep.subr.bf16.mxu0 0
  %1551 = vmatpush2.bf16.msra.mxu0 %v1485
  %1552 = vmatprep.subr.bf16.mxu0 0
  %1553 = vmatpush2.bf16.msra.mxu0 %v1484
  %1554 = vmatprep.subr.bf16.mxu0 0
  %1555 = vmatpush2.bf16.msra.mxu0 %v1483
  %1556 = vmatprep.subr.bf16.mxu0 0
  %1557 = vmatpush2.bf16.msra.mxu0 %v1482
  %1558 = vmatprep.subr.bf16.mxu0 0
  %1559 = vmatpush2.bf16.msra.mxu0 %v1481
  %1560 = vmatprep.subr.bf16.mxu0 0
  %1561 = vmatpush2.bf16.msra.mxu0 %v1480
  %1562 = vmatprep.subr.bf16.mxu0 0
  %1563 = vmatpush2.bf16.msra.mxu0 %v1479
  %1564 = vmatprep.subr.bf16.mxu0 0
  %1565 = vmatpush2.bf16.msra.mxu0 %v1478
  %1566 = vmatprep.mubr.bf16.mxu0 %v1327
  %1567 = vmatmul.mubr.bf16.gmra.mxu0 %v1326
  %v1568 = vpop.f32.mrf.mxu0
  %v1569 = vadd.f32 0.0, %v1568
  %v1570 = vpop.f32.mrf.mxu0
  %v1571 = vpop.f32.mrf.mxu0
  %v1572 = vadd.f32 0.0, %v1571
  %v1573 = vpop.f32.mrf.mxu0
  %1574 = vmatprep.mubr.bf16.mxu0 %v1331
  %1575 = vmatmul.mubr.bf16.gmra.mxu0 %v1330
  %v1576 = vpop.f32.mrf.mxu0
  %v1577 = vadd.f32 0.0, %v1576
  %v1578 = vpop.f32.mrf.mxu0
  %v1579 = vpop.f32.mrf.mxu0
  %v1580 = vadd.f32 0.0, %v1579
  %v1581 = vpop.f32.mrf.mxu0
  %1582 = vdwg.mxu0
  %1583 = vmatprep.subr.bf16.mxu0 0
  %1584 = vmatpush1.bf16.msra.mxu0 %v1493
  %1585 = vmatprep.subr.bf16.mxu0 0
  %1586 = vmatpush1.bf16.msra.mxu0 %v1492
  %1587 = vmatprep.subr.bf16.mxu0 0
  %1588 = vmatpush1.bf16.msra.mxu0 %v1491
  %1589 = vmatprep.subr.bf16.mxu0 0
  %1590 = vmatpush1.bf16.msra.mxu0 %v1490
  %1591 = vmatprep.subr.bf16.mxu0 0
  %1592 = vmatpush1.bf16.msra.mxu0 %v1489
  %1593 = vmatprep.subr.bf16.mxu0 0
  %1594 = vmatpush1.bf16.msra.mxu0 %v1488
  %1595 = vmatprep.subr.bf16.mxu0 0
  %1596 = vmatpush1.bf16.msra.mxu0 %v1487
  %1597 = vmatprep.subr.bf16.mxu0 0
  %1598 = vmatpush1.bf16.msra.mxu0 %v1486
  %1599 = vmatprep.subr.bf16.mxu0 0
  %1600 = vmatpush2.bf16.msra.mxu0 %v1501
  %1601 = vmatprep.subr.bf16.mxu0 0
  %1602 = vmatpush2.bf16.msra.mxu0 %v1500
  %1603 = vmatprep.subr.bf16.mxu0 0
  %1604 = vmatpush2.bf16.msra.mxu0 %v1499
  %1605 = vmatprep.subr.bf16.mxu0 0
  %1606 = vmatpush2.bf16.msra.mxu0 %v1498
  %1607 = vmatprep.subr.bf16.mxu0 0
  %1608 = vmatpush2.bf16.msra.mxu0 %v1497
  %1609 = vmatprep.subr.bf16.mxu0 0
  %1610 = vmatpush2.bf16.msra.mxu0 %v1496
  %1611 = vmatprep.subr.bf16.mxu0 0
  %1612 = vmatpush2.bf16.msra.mxu0 %v1495
  %1613 = vmatprep.subr.bf16.mxu0 0
  %1614 = vmatpush2.bf16.msra.mxu0 %v1494
  %1615 = vmatprep.mubr.bf16.mxu0 %v1329
  %1616 = vmatmul.mubr.bf16.gmra.mxu0 %v1328
  %v1617 = vpop.f32.mrf.mxu0
  %v1618 = vadd.f32 %v1569, %v1617
  %v1619 = vpop.f32.mrf.mxu0
  %v1620 = vpop.f32.mrf.mxu0
  %v1621 = vadd.f32 %v1572, %v1620
  %v1622 = vpop.f32.mrf.mxu0
  %1623 = vmatprep.mubr.bf16.mxu0 %v1333
  %1624 = vmatmul.mubr.bf16.gmra.mxu0 %v1332
  %v1625 = vpop.f32.mrf.mxu0
  %v1626 = vadd.f32 %v1577, %v1625
  %v1627 = vpop.f32.mrf.mxu0
  %v1628 = vpop.f32.mrf.mxu0
  %v1629 = vadd.f32 %v1580, %v1628
  %v1630 = vpop.f32.mrf.mxu0
  %1631 = vdwg.mxu0
  %1636 = vrot.lane.b32.xlu0 %v810, 64
  %v1637 = vpop.permute.xlu0 %1636
  %1638 = vrot.lane.b32.xlu0 %v813, 64
  %v1639 = vpop.permute.xlu0 %1638
  %1640 = vrot.lane.b32.xlu0 %v818, 64
  %v1641 = vpop.permute.xlu0 %1640
  %1642 = vrot.lane.b32.xlu0 %v821, 64
  %v1643 = vpop.permute.xlu0 %1642
  %1652 = vrot.lane.b32.xlu0 %v1618, 64
  %v1653 = vpop.permute.xlu0 %1652
  %1654 = vrot.lane.b32.xlu0 %v1621, 64
  %v1655 = vpop.permute.xlu0 %1654
  %1656 = vrot.lane.b32.xlu0 %v1626, 64
  %v1657 = vpop.permute.xlu0 %1656
  %1658 = vrot.lane.b32.xlu0 %v1629, 64
  %v1659 = vpop.permute.xlu0 %1658
  %vm1664 = vcmask 523264
  %v1665 = vsel %vm1664, %v406, %v1637
  %v1666 = vsel %vm1664, %v409, %v1639
  %v1667 = vsel %vm1664, %v414, %v1641
  %v1668 = vsel %vm1664, %v417, %v1643
  %v1669 = vsel %vm1664, %v1214, %v1653
  %v1670 = vsel %vm1664, %v1217, %v1655
  %v1671 = vsel %vm1664, %v1222, %v1657
  %v1672 = vsel %vm1664, %v1225, %v1659
  %v1673 = vadd.f32 %v1665, %v1666
  %v1674 = vadd.f32 %v1673, %v1667
  %v1675 = vadd.f32 %v1674, %v1668
  %v1676 = vrot.slane %v1675, 4
  %v1677 = vadd.f32 %v1675, %v1676
  %v1678 = vrot.slane %v1677, 2
  %v1679 = vadd.f32 %v1677, %v1678
  %v1680 = vrot.slane %v1679, 1
  %v1681 = vadd.f32 %v1679, %v1680
  %v1682 = vadd.f32 %v1669, %v1670
  %v1683 = vadd.f32 %v1682, %v1671
  %v1684 = vadd.f32 %v1683, %v1672
  %v1685 = vrot.slane %v1684, 4
  %v1686 = vadd.f32 %v1684, %v1685
  %v1687 = vrot.slane %v1686, 2
  %v1688 = vadd.f32 %v1686, %v1687
  %v1689 = vrot.slane %v1688, 1
  %v1690 = vadd.f32 %v1688, %v1689
  %v1691 = vmul.f32 %v1665, %v1665
  %v1692 = vmul.f32 %v1669, %v1669
  %v1693 = vmul.f32 %v1666, %v1666
  %v1694 = vmul.f32 %v1670, %v1670
  %v1695 = vmul.f32 %v1667, %v1667
  %v1696 = vmul.f32 %v1671, %v1671
  %v1697 = vmul.f32 %v1668, %v1668
  %v1698 = vmul.f32 %v1672, %v1672
  %v1699 = vadd.f32 %v1691, %v1693
  %v1700 = vadd.f32 %v1699, %v1695
  %v1701 = vadd.f32 %v1700, %v1697
  %v1702 = vrot.slane %v1701, 4
  %v1703 = vadd.f32 %v1701, %v1702
  %v1704 = vrot.slane %v1703, 2
  %v1705 = vadd.f32 %v1703, %v1704
  %v1706 = vrot.slane %v1705, 1
  %v1707 = vadd.f32 %v1705, %v1706
  %v1708 = vadd.f32 %v1692, %v1694
  %v1709 = vadd.f32 %v1708, %v1696
  %v1710 = vadd.f32 %v1709, %v1698
  %v1711 = vrot.slane %v1710, 4
  %v1712 = vadd.f32 %v1710, %v1711
  %v1713 = vrot.slane %v1712, 2
  %v1714 = vadd.f32 %v1712, %v1713
  %v1715 = vrot.slane %v1714, 1
  %v1716 = vadd.f32 %v1714, %v1715
  %1718 = vrot.lane.b32.xlu0 %v1681, 64
  %v1719 = vpop.permute.xlu0 %1718
  %v1721 = vadd.f32 %v1681, %v1719
  %1723 = vrot.lane.b32.xlu0 %v1707, 64
  %v1724 = vpop.permute.xlu0 %1723
  %v1726 = vadd.f32 %v1707, %v1724
  %v1727 = vadd.f32 %v1721, %v1690
  %v1728 = vadd.f32 %v1726, %v1716
  %1730 = vrot.lane.b32.xlu0 %v1690, 64
  %v1731 = vpop.permute.xlu0 %1730
  %v1733 = vadd.f32 %v1727, %v1731
  %1735 = vrot.lane.b32.xlu0 %v1716, 64
  %v1736 = vpop.permute.xlu0 %1735
  %v1738 = vadd.f32 %v1728, %v1736
  %v1739 = vmul.f32 %v1733, 0.0078125
  %v1740 = vmul.f32 %v1738, 0.0078125
  %v1741 = vmul.f32 %v1739, %v1739
  %v1742 = vsub.f32 %v1740, %v1741
  %v1743 = vadd.f32 %v1742, 1e-05
  %v1744 = vrsqrt.pop %v1743
  %1746 = vrot.lane.b32.xlu0 %v1739, 64
  %v1747 = vpop.permute.xlu0 %1746
  %v1749 = vsel %vm1664, %v1739, %v1747
  %1751 = vrot.lane.b32.xlu0 %v1744, 64
  %v1752 = vpop.permute.xlu0 %1751
  %v1754 = vsel %vm1664, %v1744, %v1752
  %v1755 = vld [vmem:[%s2] sm:$0x3]
  %v1757 = vcombine.low %v1754, %v1754
  %v1759 = vunpack.c.l.s4 1966171168
  %v1760 = vunpack.c.0.s8 %v1759
  %v1761 = vlaneseq
  %v1762 = vshrl.u32 %v1761, 7
  %v1763 = vsub.s32 %v1760, %v1762
  %v1764 = vrot.slane %v1757, %v1763
  %v1766 = vunpack.c.l.s4 1966171168
  %v1767 = vunpack.c.0.s8 %v1766
  %v1768 = vlaneseq
  %v1769 = vshrl.u32 %v1768, 7
  %v1770 = vsub.s32 %v1767, %v1769
  %v1771 = vrot.slane %v1764, %v1770
  %v1773 = vmul.f32 %v1755, %v1771
  %v1774 = vld [vmem:[%s3] sm:$0x3]
  %v1776 = vlaneseq
  %v1777 = vshrl.u32 %v1776, 7
  %v1778 = vsub.s32 0, %v1777
  %v1779 = vrot.slane %v1773, %v1778
  %v1780 = vlaneseq
  %v1781 = vshrl.u32 %v1780, 7
  %v1782 = vsub.s32 1, %v1781
  %v1783 = vrot.slane %v1773, %v1782
  %v1786 = vmul.f32 %v1749, %v1779
  %v1787 = vmul.f32 %v1749, %v1783
  %v1790 = vcombine.low %v1786, %v1787
  %v1792 = vunpack.c.l.s4 1966171168
  %v1793 = vunpack.c.0.s8 %v1792
  %v1794 = vlaneseq
  %v1795 = vshrl.u32 %v1794, 7
  %v1796 = vsub.s32 %v1793, %v1795
  %v1797 = vrot.slane %v1790, %v1796
  %v1799 = vunpack.c.l.s4 1966171168
  %v1800 = vunpack.c.0.s8 %v1799
  %v1801 = vlaneseq
  %v1802 = vshrl.u32 %v1801, 7
  %v1803 = vsub.s32 %v1800, %v1802
  %v1804 = vrot.slane %v1797, %v1803
  %v1806 = vsub.f32 %v1774, %v1804
  %v1807 = vmul.f32 %v1665, %v1779
  %v1808 = vmul.f32 %v1669, %v1783
  %v1809 = vmul.f32 %v1666, %v1779
  %v1810 = vmul.f32 %v1670, %v1783
  %v1811 = vmul.f32 %v1667, %v1779
  %v1812 = vmul.f32 %v1671, %v1783
  %v1813 = vmul.f32 %v1668, %v1779
  %v1814 = vmul.f32 %v1672, %v1783
  %v1816 = vlaneseq
  %v1817 = vshrl.u32 %v1816, 7
  %v1818 = vsub.s32 0, %v1817
  %v1819 = vrot.slane %v1806, %v1818
  %v1820 = vlaneseq
  %v1821 = vshrl.u32 %v1820, 7
  %v1822 = vsub.s32 1, %v1821
  %v1823 = vrot.slane %v1806, %v1822
  %v1826 = vadd.f32 %v1807, %v1819
  %v1827 = vadd.f32 %v1808, %v1823
  %v1828 = vadd.f32 %v1809, %v1819
  %v1829 = vadd.f32 %v1810, %v1823
  %v1830 = vadd.f32 %v1811, %v1819
  %v1831 = vadd.f32 %v1812, %v1823
  %v1832 = vadd.f32 %v1813, %v1819
  %v1833 = vadd.f32 %v1814, %v1823
  %v1834 = vmax.f32 %v1826, 0.0
  %v1835 = vmax.f32 %v1827, 0.0
  %v1836 = vmax.f32 %v1828, 0.0
  %v1837 = vmax.f32 %v1829, 0.0
  %v1838 = vmax.f32 %v1830, 0.0
  %v1839 = vmax.f32 %v1831, 0.0
  %v1840 = vmax.f32 %v1832, 0.0
  %v1841 = vmax.f32 %v1833, 0.0
  %v1842 = vpack.c.bf16 %v1836, %v1834
  %v1843 = vpack.c.bf16 %v1837, %v1835
  %v1844 = vpack.c.bf16 %v1840, %v1838
  %v1845 = vpack.c.bf16 %v1841, %v1839
  %v1850 = vunpack.c.l.b16 %v1842
  %v1851 = vunpack.c.l.b16 %v1843
  %v1852 = vunpack.c.h.b16 %v1842
  %v1853 = vunpack.c.h.b16 %v1843
  %v1854 = vunpack.c.l.b16 %v1844
  %v1855 = vunpack.c.l.b16 %v1845
  %v1856 = vunpack.c.h.b16 %v1844
  %v1857 = vunpack.c.h.b16 %v1845
  %v1858 = vpack.c.b16 %v1851, %v1850
  %v1859 = vpack.c.b16 %v1853, %v1852
  %v1860 = vpack.c.b16 %v1855, %v1854
  %v1861 = vpack.c.b16 %v1857, %v1856
  %1866 = vst [vmem:[%s4] sm:$0xff] %v1858
  %1867 = vst [vmem:[%s4 + $0x8] sm:$0xff] %v1859
  %1868 = vst [vmem:[%s4 + $0x10] sm:$0xff] %v1860
  %1869 = vst [vmem:[%s4 + $0x18] sm:$0xff] %v1861
  // Predicated region
  $region18: #{generator_forward.5} parent=0 // pred_check
    _
  $region19: #{generator_forward.5} parent=0 // pred_check_branch
    %1871 = sbr.rel (0) target = $region21
  $region20: #{generator_forward.5} parent=0 // pred_region
    _
  $region21: #{generator_forward.5} parent=0 // pred_fallthru
    _
  // Predicated region
  $region22: #{generator_forward.5} parent=0 // pred_check
    _
  $region23: #{generator_forward.5} parent=0 // pred_check_branch
    %1873 = sbr.rel (0) target = $region25
  $region24: #{generator_forward.5} parent=0 // pred_region
    _
  $region25: #{generator_forward.5} parent=0 // pred_fallthru
    _

// kernel: generator_forward.6
$region0: #{generator_forward.6}
  #allocation0 [shape = 'u32[]', space=smem, size = 0x4, offset = 0x4, fixed_abs, tag = 'smem constant byte address 0x4 - core index']
  #allocation1 [shape = 'u32[144,128]{1,0:T(1,128)}', space=vmem, size = 0x12000, scoped, tag = 'internal scratch']
  %s0 = inlined_call_operand.vmem [shape: bf16[4,128,256], index: 0, kind: input, shape index: {}]
  %s1 = inlined_call_operand.vmem [shape: bf16[4,256,32], index: 1, kind: input, shape index: {}]
  %s2 = inlined_call_operand.vmem [shape: f32[1,128], index: 2, kind: input, shape index: {}]
  %s3 = inlined_call_operand.vmem [shape: f32[1,128], index: 3, kind: input, shape index: {}]
  %s4 = inlined_call_operand.vmem [shape: bf16[128,128], index: 4, kind: output, shape index: {}]
  %s5 = sld [smem:[#allocation0]]
  $region26: #{generator_forward.6} parent=0
    _
  %s7 = ssub.s32 1, %s5
  %s8 = scalar_select 0, %s7, %s5
  // Predicated region
  $region2: #{generator_forward.6} parent=0 // pred_check
    _
  $region3: #{generator_forward.6} parent=0 // pred_check_branch
    %10 = sbr.rel (0) target = $region5
  $region4: #{generator_forward.6} parent=0 // pred_region
    _
  $region5: #{generator_forward.6} parent=0 // pred_fallthru
    _
  // Predicated region
  $region6: #{generator_forward.6} parent=0 // pred_check
    _
  $region7: #{generator_forward.6} parent=0 // pred_check_branch
    %12 = sbr.rel (0) target = $region9
  $region8: #{generator_forward.6} parent=0 // pred_region
    _
  $region9: #{generator_forward.6} parent=0 // pred_fallthru
    _
  // Predicated region
  $region10: #{generator_forward.6} parent=0 // pred_check
    _
  $region11: #{generator_forward.6} parent=0 // pred_check_branch
    %14 = sbr.rel (0) target = $region13
  $region12: #{generator_forward.6} parent=0 // pred_region
    _
  $region13: #{generator_forward.6} parent=0 // pred_fallthru
    _
  // Predicated region
  $region14: #{generator_forward.6} parent=0 // pred_check
    _
  $region15: #{generator_forward.6} parent=0 // pred_check_branch
    %16 = sbr.rel (0) target = $region17
  $region16: #{generator_forward.6} parent=0 // pred_region
    _
  $region17: #{generator_forward.6} parent=0 // pred_fallthru
    _
  %v18 = vld [vmem:[%s0] sm:$0xff]
  %v19 = vld [vmem:[%s0 + $0x8] sm:$0xff]
  %v20 = vld [vmem:[%s0 + $0x10] sm:$0xff]
  %v21 = vld [vmem:[%s0 + $0x18] sm:$0xff]
  %v22 = vld [vmem:[%s0 + $0x20] sm:$0xff]
  %v23 = vld [vmem:[%s0 + $0x28] sm:$0xff]
  %v24 = vld [vmem:[%s0 + $0x30] sm:$0xff]
  %v25 = vld [vmem:[%s0 + $0x38] sm:$0xff]
  %v26 = vld [vmem:[%s0 + $0x40] sm:$0xff]
  %v27 = vld [vmem:[%s0 + $0x48] sm:$0xff]
  %v28 = vld [vmem:[%s0 + $0x50] sm:$0xff]
  %v29 = vld [vmem:[%s0 + $0x58] sm:$0xff]
  %v30 = vld [vmem:[%s0 + $0x60] sm:$0xff]
  %v31 = vld [vmem:[%s0 + $0x68] sm:$0xff]
  %v32 = vld [vmem:[%s0 + $0x70] sm:$0xff]
  %v33 = vld [vmem:[%s0 + $0x78] sm:$0xff]
  %v34 = vld [vmem:[%s1] sm:$0xf]
  %v35 = vld [vmem:[%s1 + $0x4] sm:$0xf]
  %v36 = vld [vmem:[%s1 + $0x8] sm:$0xf]
  %v37 = vld [vmem:[%s1 + $0xc] sm:$0xf]
  %v38 = vld [vmem:[%s1 + $0x10] sm:$0xf]
  %v39 = vld [vmem:[%s1 + $0x14] sm:$0xf]
  %v40 = vld [vmem:[%s1 + $0x18] sm:$0xf]
  %v41 = vld [vmem:[%s1 + $0x1c] sm:$0xf]
  %v42 = vld [vmem:[%s1 + $0x20] sm:$0xf]
  %v43 = vld [vmem:[%s1 + $0x24] sm:$0xf]
  %v44 = vld [vmem:[%s1 + $0x28] sm:$0xf]
  %v45 = vld [vmem:[%s1 + $0x2c] sm:$0xf]
  %v46 = vld [vmem:[%s1 + $0x30] sm:$0xf]
  %v47 = vld [vmem:[%s1 + $0x34] sm:$0xf]
  %v48 = vld [vmem:[%s1 + $0x38] sm:$0xf]
  %v49 = vld [vmem:[%s1 + $0x3c] sm:$0xf]
  %v50 = vld [vmem:[%s1 + $0x40] sm:$0xf]
  %v51 = vld [vmem:[%s1 + $0x44] sm:$0xf]
  %v52 = vld [vmem:[%s1 + $0x48] sm:$0xf]
  %v53 = vld [vmem:[%s1 + $0x4c] sm:$0xf]
  %v54 = vld [vmem:[%s1 + $0x50] sm:$0xf]
  %v55 = vld [vmem:[%s1 + $0x54] sm:$0xf]
  %v56 = vld [vmem:[%s1 + $0x58] sm:$0xf]
  %v57 = vld [vmem:[%s1 + $0x5c] sm:$0xf]
  %v58 = vld [vmem:[%s1 + $0x60] sm:$0xf]
  %v59 = vld [vmem:[%s1 + $0x64] sm:$0xf]
  %v60 = vld [vmem:[%s1 + $0x68] sm:$0xf]
  %v61 = vld [vmem:[%s1 + $0x6c] sm:$0xf]
  %v62 = vld [vmem:[%s1 + $0x70] sm:$0xf]
  %v63 = vld [vmem:[%s1 + $0x74] sm:$0xf]
  %v64 = vld [vmem:[%s1 + $0x78] sm:$0xf]
  %v65 = vld [vmem:[%s1 + $0x7c] sm:$0xf]
  %v82 = vunpack.c.l.b16 %v18
  %v83 = vunpack.c.h.b16 %v18
  %v84 = vunpack.c.l.b16 %v19
  %v85 = vunpack.c.h.b16 %v19
  %v86 = vunpack.c.l.b16 %v20
  %v87 = vunpack.c.h.b16 %v20
  %v88 = vunpack.c.l.b16 %v21
  %v89 = vunpack.c.h.b16 %v21
  %v90 = vunpack.c.l.b16 %v22
  %v91 = vunpack.c.h.b16 %v22
  %v92 = vunpack.c.l.b16 %v23
  %v93 = vunpack.c.h.b16 %v23
  %v94 = vunpack.c.l.b16 %v24
  %v95 = vunpack.c.h.b16 %v24
  %v96 = vunpack.c.l.b16 %v25
  %v97 = vunpack.c.h.b16 %v25
  %v98 = vunpack.c.l.b16 %v26
  %v99 = vunpack.c.h.b16 %v26
  %v100 = vunpack.c.l.b16 %v27
  %v101 = vunpack.c.h.b16 %v27
  %v102 = vunpack.c.l.b16 %v28
  %v103 = vunpack.c.h.b16 %v28
  %v104 = vunpack.c.l.b16 %v29
  %v105 = vunpack.c.h.b16 %v29
  %v106 = vunpack.c.l.b16 %v30
  %v107 = vunpack.c.h.b16 %v30
  %v108 = vunpack.c.l.b16 %v31
  %v109 = vunpack.c.h.b16 %v31
  %v110 = vunpack.c.l.b16 %v32
  %v111 = vunpack.c.h.b16 %v32
  %v112 = vunpack.c.l.b16 %v33
  %v113 = vunpack.c.h.b16 %v33
  %v114 = vpack.c.b16 %v84, %v82
  %v115 = vpack.c.b16 %v85, %v83
  %v116 = vpack.c.b16 %v88, %v86
  %v117 = vpack.c.b16 %v89, %v87
  %v118 = vpack.c.b16 %v92, %v90
  %v119 = vpack.c.b16 %v93, %v91
  %v120 = vpack.c.b16 %v96, %v94
  %v121 = vpack.c.b16 %v97, %v95
  %v122 = vpack.c.b16 %v100, %v98
  %v123 = vpack.c.b16 %v101, %v99
  %v124 = vpack.c.b16 %v104, %v102
  %v125 = vpack.c.b16 %v105, %v103
  %v126 = vpack.c.b16 %v108, %v106
  %v127 = vpack.c.b16 %v109, %v107
  %v128 = vpack.c.b16 %v112, %v110
  %v129 = vpack.c.b16 %v113, %v111
  %v178 = vunpack.c.l.b16 %v34
  %v179 = vunpack.c.l.b16 %v35
  %v180 = vunpack.c.l.b16 %v36
  %v181 = vunpack.c.l.b16 %v37
  %v182 = vunpack.c.l.b16 %v38
  %v183 = vunpack.c.l.b16 %v39
  %v184 = vunpack.c.l.b16 %v40
  %v185 = vunpack.c.l.b16 %v41
  %v186 = vunpack.c.l.b16 %v42
  %v187 = vunpack.c.l.b16 %v43
  %v188 = vunpack.c.l.b16 %v44
  %v189 = vunpack.c.l.b16 %v45
  %v190 = vunpack.c.l.b16 %v46
  %v191 = vunpack.c.l.b16 %v47
  %v192 = vunpack.c.l.b16 %v48
  %v193 = vunpack.c.l.b16 %v49
  %v194 = vunpack.c.l.b16 %v50
  %v195 = vunpack.c.l.b16 %v51
  %v196 = vunpack.c.l.b16 %v52
  %v197 = vunpack.c.l.b16 %v53
  %v198 = vunpack.c.l.b16 %v54
  %v199 = vunpack.c.l.b16 %v55
  %v200 = vunpack.c.l.b16 %v56
  %v201 = vunpack.c.l.b16 %v57
  %v202 = vunpack.c.l.b16 %v58
  %v203 = vunpack.c.l.b16 %v59
  %v204 = vunpack.c.l.b16 %v60
  %v205 = vunpack.c.l.b16 %v61
  %v206 = vunpack.c.l.b16 %v62
  %v207 = vunpack.c.l.b16 %v63
  %v208 = vunpack.c.l.b16 %v64
  %v209 = vunpack.c.l.b16 %v65
  %v210 = vpack.c.b16 %v179, %v178
  %v211 = vpack.c.b16 %v181, %v180
  %v212 = vpack.c.b16 %v183, %v182
  %v213 = vpack.c.b16 %v185, %v184
  %v214 = vpack.c.b16 %v187, %v186
  %v215 = vpack.c.b16 %v189, %v188
  %v216 = vpack.c.b16 %v191, %v190
  %v217 = vpack.c.b16 %v193, %v192
  %v218 = vpack.c.b16 %v195, %v194
  %v219 = vpack.c.b16 %v197, %v196
  %v220 = vpack.c.b16 %v199, %v198
  %v221 = vpack.c.b16 %v201, %v200
  %v222 = vpack.c.b16 %v203, %v202
  %v223 = vpack.c.b16 %v205, %v204
  %v224 = vpack.c.b16 %v207, %v206
  %v225 = vpack.c.b16 %v209, %v208
  %242 = vmatprep.subr.bf16.mxu0 0
  %243 = vmatpush1.bf16.msra.mxu0 %v217
  %244 = vmatprep.subr.bf16.mxu0 0
  %245 = vmatpush1.bf16.msra.mxu0 %v216
  %246 = vmatprep.subr.bf16.mxu0 0
  %247 = vmatpush1.bf16.msra.mxu0 %v215
  %248 = vmatprep.subr.bf16.mxu0 0
  %249 = vmatpush1.bf16.msra.mxu0 %v214
  %250 = vmatprep.subr.bf16.mxu0 0
  %251 = vmatpush1.bf16.msra.mxu0 %v213
  %252 = vmatprep.subr.bf16.mxu0 0
  %253 = vmatpush1.bf16.msra.mxu0 %v212
  %254 = vmatprep.subr.bf16.mxu0 0
  %255 = vmatpush1.bf16.msra.mxu0 %v211
  %256 = vmatprep.subr.bf16.mxu0 0
  %257 = vmatpush1.bf16.msra.mxu0 %v210
  %258 = vmatprep.subr.bf16.mxu0 0
  %259 = vmatpush2.bf16.msra.mxu0 %v225
  %260 = vmatprep.subr.bf16.mxu0 0
  %261 = vmatpush2.bf16.msra.mxu0 %v224
  %262 = vmatprep.subr.bf16.mxu0 0
  %263 = vmatpush2.bf16.msra.mxu0 %v223
  %264 = vmatprep.subr.bf16.mxu0 0
  %265 = vmatpush2.bf16.msra.mxu0 %v222
  %266 = vmatprep.subr.bf16.mxu0 0
  %267 = vmatpush2.bf16.msra.mxu0 %v221
  %268 = vmatprep.subr.bf16.mxu0 0
  %269 = vmatpush2.bf16.msra.mxu0 %v220
  %270 = vmatprep.subr.bf16.mxu0 0
  %271 = vmatpush2.bf16.msra.mxu0 %v219
  %272 = vmatprep.subr.bf16.mxu0 0
  %273 = vmatpush2.bf16.msra.mxu0 %v218
  %274 = vmatprep.mubr.bf16.mxu0 %v115
  %275 = vmatmul.mubr.bf16.gmra.mxu0 %v114
  %v276 = vpop.f32.mrf.mxu0
  %v277 = vadd.f32 0.0, %v276
  %v278 = vpop.f32.mrf.mxu0
  %v279 = vpop.f32.mrf.mxu0
  %v280 = vadd.f32 0.0, %v279
  %v281 = vpop.f32.mrf.mxu0
  %282 = vmatprep.mubr.bf16.mxu0 %v117
  %283 = vmatmul.mubr.bf16.gmra.mxu0 %v116
  %v284 = vpop.f32.mrf.mxu0
  %v285 = vadd.f32 0.0, %v284
  %v286 = vpop.f32.mrf.mxu0
  %v287 = vpop.f32.mrf.mxu0
  %v288 = vadd.f32 0.0, %v287
  %v289 = vpop.f32.mrf.mxu0
  %290 = vmatprep.mubr.bf16.mxu0 %v119
  %291 = vmatmul.mubr.bf16.gmra.mxu0 %v118
  %v292 = vpop.f32.mrf.mxu0
  %v293 = vadd.f32 0.0, %v292
  %v294 = vpop.f32.mrf.mxu0
  %v295 = vpop.f32.mrf.mxu0
  %v296 = vadd.f32 0.0, %v295
  %v297 = vpop.f32.mrf.mxu0
  %298 = vmatprep.mubr.bf16.mxu0 %v121
  %299 = vmatmul.mubr.bf16.gmra.mxu0 %v120
  %v300 = vpop.f32.mrf.mxu0
  %v301 = vadd.f32 0.0, %v300
  %v302 = vpop.f32.mrf.mxu0
  %v303 = vpop.f32.mrf.mxu0
  %v304 = vadd.f32 0.0, %v303
  %v305 = vpop.f32.mrf.mxu0
  %306 = vmatprep.mubr.bf16.mxu0 %v123
  %307 = vmatmul.mubr.bf16.gmra.mxu0 %v122
  %v308 = vpop.f32.mrf.mxu0
  %v309 = vadd.f32 0.0, %v308
  %v310 = vpop.f32.mrf.mxu0
  %v311 = vpop.f32.mrf.mxu0
  %v312 = vadd.f32 0.0, %v311
  %v313 = vpop.f32.mrf.mxu0
  %314 = vmatprep.mubr.bf16.mxu0 %v125
  %315 = vmatmul.mubr.bf16.gmra.mxu0 %v124
  %v316 = vpop.f32.mrf.mxu0
  %v317 = vadd.f32 0.0, %v316
  %v318 = vpop.f32.mrf.mxu0
  %v319 = vpop.f32.mrf.mxu0
  %v320 = vadd.f32 0.0, %v319
  %v321 = vpop.f32.mrf.mxu0
  %322 = vmatprep.mubr.bf16.mxu0 %v127
  %323 = vmatmul.mubr.bf16.gmra.mxu0 %v126
  %v324 = vpop.f32.mrf.mxu0
  %v325 = vadd.f32 0.0, %v324
  %v326 = vpop.f32.mrf.mxu0
  %v327 = vpop.f32.mrf.mxu0
  %v328 = vadd.f32 0.0, %v327
  %v329 = vpop.f32.mrf.mxu0
  %330 = vmatprep.mubr.bf16.mxu0 %v129
  %331 = vmatmul.mubr.bf16.gmra.mxu0 %v128
  %v332 = vpop.f32.mrf.mxu0
  %v333 = vadd.f32 0.0, %v332
  %v334 = vpop.f32.mrf.mxu0
  %v335 = vpop.f32.mrf.mxu0
  %v336 = vadd.f32 0.0, %v335
  %v337 = vpop.f32.mrf.mxu0
  %338 = vdwg.mxu0
  %s339 = scalar_lea.vmem %s0, 128
  %v340 = vld [vmem:[%s339] sm:$0xff]
  %v341 = vld [vmem:[%s339 + $0x8] sm:$0xff]
  %v342 = vld [vmem:[%s339 + $0x10] sm:$0xff]
  %v343 = vld [vmem:[%s339 + $0x18] sm:$0xff]
  %v344 = vld [vmem:[%s339 + $0x20] sm:$0xff]
  %v345 = vld [vmem:[%s339 + $0x28] sm:$0xff]
  %v346 = vld [vmem:[%s339 + $0x30] sm:$0xff]
  %v347 = vld [vmem:[%s339 + $0x38] sm:$0xff]
  %v348 = vld [vmem:[%s339 + $0x40] sm:$0xff]
  %v349 = vld [vmem:[%s339 + $0x48] sm:$0xff]
  %v350 = vld [vmem:[%s339 + $0x50] sm:$0xff]
  %v351 = vld [vmem:[%s339 + $0x58] sm:$0xff]
  %v352 = vld [vmem:[%s339 + $0x60] sm:$0xff]
  %v353 = vld [vmem:[%s339 + $0x68] sm:$0xff]
  %v354 = vld [vmem:[%s339 + $0x70] sm:$0xff]
  %v355 = vld [vmem:[%s339 + $0x78] sm:$0xff]
  %s356 = scalar_lea.vmem %s1, 128
  %v357 = vld [vmem:[%s356] sm:$0xf]
  %v358 = vld [vmem:[%s356 + $0x4] sm:$0xf]
  %v359 = vld [vmem:[%s356 + $0x8] sm:$0xf]
  %v360 = vld [vmem:[%s356 + $0xc] sm:$0xf]
  %v361 = vld [vmem:[%s356 + $0x10] sm:$0xf]
  %v362 = vld [vmem:[%s356 + $0x14] sm:$0xf]
  %v363 = vld [vmem:[%s356 + $0x18] sm:$0xf]
  %v364 = vld [vmem:[%s356 + $0x1c] sm:$0xf]
  %v365 = vld [vmem:[%s356 + $0x20] sm:$0xf]
  %v366 = vld [vmem:[%s356 + $0x24] sm:$0xf]
  %v367 = vld [vmem:[%s356 + $0x28] sm:$0xf]
  %v368 = vld [vmem:[%s356 + $0x2c] sm:$0xf]
  %v369 = vld [vmem:[%s356 + $0x30] sm:$0xf]
  %v370 = vld [vmem:[%s356 + $0x34] sm:$0xf]
  %v371 = vld [vmem:[%s356 + $0x38] sm:$0xf]
  %v372 = vld [vmem:[%s356 + $0x3c] sm:$0xf]
  %v373 = vld [vmem:[%s356 + $0x40] sm:$0xf]
  %v374 = vld [vmem:[%s356 + $0x44] sm:$0xf]
  %v375 = vld [vmem:[%s356 + $0x48] sm:$0xf]
  %v376 = vld [vmem:[%s356 + $0x4c] sm:$0xf]
  %v377 = vld [vmem:[%s356 + $0x50] sm:$0xf]
  %v378 = vld [vmem:[%s356 + $0x54] sm:$0xf]
  %v379 = vld [vmem:[%s356 + $0x58] sm:$0xf]
  %v380 = vld [vmem:[%s356 + $0x5c] sm:$0xf]
  %v381 = vld [vmem:[%s356 + $0x60] sm:$0xf]
  %v382 = vld [vmem:[%s356 + $0x64] sm:$0xf]
  %v383 = vld [vmem:[%s356 + $0x68] sm:$0xf]
  %v384 = vld [vmem:[%s356 + $0x6c] sm:$0xf]
  %v385 = vld [vmem:[%s356 + $0x70] sm:$0xf]
  %v386 = vld [vmem:[%s356 + $0x74] sm:$0xf]
  %v387 = vld [vmem:[%s356 + $0x78] sm:$0xf]
  %v388 = vld [vmem:[%s356 + $0x7c] sm:$0xf]
  %v405 = vunpack.c.l.b16 %v340
  %v406 = vunpack.c.h.b16 %v340
  %v407 = vunpack.c.l.b16 %v341
  %v408 = vunpack.c.h.b16 %v341
  %v409 = vunpack.c.l.b16 %v342
  %v410 = vunpack.c.h.b16 %v342
  %v411 = vunpack.c.l.b16 %v343
  %v412 = vunpack.c.h.b16 %v343
  %v413 = vunpack.c.l.b16 %v344
  %v414 = vunpack.c.h.b16 %v344
  %v415 = vunpack.c.l.b16 %v345
  %v416 = vunpack.c.h.b16 %v345
  %v417 = vunpack.c.l.b16 %v346
  %v418 = vunpack.c.h.b16 %v346
  %v419 = vunpack.c.l.b16 %v347
  %v420 = vunpack.c.h.b16 %v347
  %v421 = vunpack.c.l.b16 %v348
  %v422 = vunpack.c.h.b16 %v348
  %v423 = vunpack.c.l.b16 %v349
  %v424 = vunpack.c.h.b16 %v349
  %v425 = vunpack.c.l.b16 %v350
  %v426 = vunpack.c.h.b16 %v350
  %v427 = vunpack.c.l.b16 %v351
  %v428 = vunpack.c.h.b16 %v351
  %v429 = vunpack.c.l.b16 %v352
  %v430 = vunpack.c.h.b16 %v352
  %v431 = vunpack.c.l.b16 %v353
  %v432 = vunpack.c.h.b16 %v353
  %v433 = vunpack.c.l.b16 %v354
  %v434 = vunpack.c.h.b16 %v354
  %v435 = vunpack.c.l.b16 %v355
  %v436 = vunpack.c.h.b16 %v355
  %v437 = vpack.c.b16 %v407, %v405
  %v438 = vpack.c.b16 %v408, %v406
  %v439 = vpack.c.b16 %v411, %v409
  %v440 = vpack.c.b16 %v412, %v410
  %v441 = vpack.c.b16 %v415, %v413
  %v442 = vpack.c.b16 %v416, %v414
  %v443 = vpack.c.b16 %v419, %v417
  %v444 = vpack.c.b16 %v420, %v418
  %v445 = vpack.c.b16 %v423, %v421
  %v446 = vpack.c.b16 %v424, %v422
  %v447 = vpack.c.b16 %v427, %v425
  %v448 = vpack.c.b16 %v428, %v426
  %v449 = vpack.c.b16 %v431, %v429
  %v450 = vpack.c.b16 %v432, %v430
  %v451 = vpack.c.b16 %v435, %v433
  %v452 = vpack.c.b16 %v436, %v434
  %v501 = vunpack.c.l.b16 %v357
  %v502 = vunpack.c.l.b16 %v358
  %v503 = vunpack.c.l.b16 %v359
  %v504 = vunpack.c.l.b16 %v360
  %v505 = vunpack.c.l.b16 %v361
  %v506 = vunpack.c.l.b16 %v362
  %v507 = vunpack.c.l.b16 %v363
  %v508 = vunpack.c.l.b16 %v364
  %v509 = vunpack.c.l.b16 %v365
  %v510 = vunpack.c.l.b16 %v366
  %v511 = vunpack.c.l.b16 %v367
  %v512 = vunpack.c.l.b16 %v368
  %v513 = vunpack.c.l.b16 %v369
  %v514 = vunpack.c.l.b16 %v370
  %v515 = vunpack.c.l.b16 %v371
  %v516 = vunpack.c.l.b16 %v372
  %v517 = vunpack.c.l.b16 %v373
  %v518 = vunpack.c.l.b16 %v374
  %v519 = vunpack.c.l.b16 %v375
  %v520 = vunpack.c.l.b16 %v376
  %v521 = vunpack.c.l.b16 %v377
  %v522 = vunpack.c.l.b16 %v378
  %v523 = vunpack.c.l.b16 %v379
  %v524 = vunpack.c.l.b16 %v380
  %v525 = vunpack.c.l.b16 %v381
  %v526 = vunpack.c.l.b16 %v382
  %v527 = vunpack.c.l.b16 %v383
  %v528 = vunpack.c.l.b16 %v384
  %v529 = vunpack.c.l.b16 %v385
  %v530 = vunpack.c.l.b16 %v386
  %v531 = vunpack.c.l.b16 %v387
  %v532 = vunpack.c.l.b16 %v388
  %v533 = vpack.c.b16 %v502, %v501
  %v534 = vpack.c.b16 %v504, %v503
  %v535 = vpack.c.b16 %v506, %v505
  %v536 = vpack.c.b16 %v508, %v507
  %v537 = vpack.c.b16 %v510, %v509
  %v538 = vpack.c.b16 %v512, %v511
  %v539 = vpack.c.b16 %v514, %v513
  %v540 = vpack.c.b16 %v516, %v515
  %v541 = vpack.c.b16 %v518, %v517
  %v542 = vpack.c.b16 %v520, %v519
  %v543 = vpack.c.b16 %v522, %v521
  %v544 = vpack.c.b16 %v524, %v523
  %v545 = vpack.c.b16 %v526, %v525
  %v546 = vpack.c.b16 %v528, %v527
  %v547 = vpack.c.b16 %v530, %v529
  %v548 = vpack.c.b16 %v532, %v531
  %565 = vmatprep.subr.bf16.mxu0 0
  %566 = vmatpush1.bf16.msra.mxu0 %v540
  %567 = vmatprep.subr.bf16.mxu0 0
  %568 = vmatpush1.bf16.msra.mxu0 %v539
  %569 = vmatprep.subr.bf16.mxu0 0
  %570 = vmatpush1.bf16.msra.mxu0 %v538
  %571 = vmatprep.subr.bf16.mxu0 0
  %572 = vmatpush1.bf16.msra.mxu0 %v537
  %573 = vmatprep.subr.bf16.mxu0 0
  %574 = vmatpush1.bf16.msra.mxu0 %v536
  %575 = vmatprep.subr.bf16.mxu0 0
  %576 = vmatpush1.bf16.msra.mxu0 %v535
  %577 = vmatprep.subr.bf16.mxu0 0
  %578 = vmatpush1.bf16.msra.mxu0 %v534
  %579 = vmatprep.subr.bf16.mxu0 0
  %580 = vmatpush1.bf16.msra.mxu0 %v533
  %581 = vmatprep.subr.bf16.mxu0 0
  %582 = vmatpush2.bf16.msra.mxu0 %v548
  %583 = vmatprep.subr.bf16.mxu0 0
  %584 = vmatpush2.bf16.msra.mxu0 %v547
  %585 = vmatprep.subr.bf16.mxu0 0
  %586 = vmatpush2.bf16.msra.mxu0 %v546
  %587 = vmatprep.subr.bf16.mxu0 0
  %588 = vmatpush2.bf16.msra.mxu0 %v545
  %589 = vmatprep.subr.bf16.mxu0 0
  %590 = vmatpush2.bf16.msra.mxu0 %v544
  %591 = vmatprep.subr.bf16.mxu0 0
  %592 = vmatpush2.bf16.msra.mxu0 %v543
  %593 = vmatprep.subr.bf16.mxu0 0
  %594 = vmatpush2.bf16.msra.mxu0 %v542
  %595 = vmatprep.subr.bf16.mxu0 0
  %596 = vmatpush2.bf16.msra.mxu0 %v541
  %597 = vmatprep.mubr.bf16.mxu0 %v438
  %598 = vmatmul.mubr.bf16.gmra.mxu0 %v437
  %v599 = vpop.f32.mrf.mxu0
  %v600 = vadd.f32 0.0, %v599
  %v601 = vpop.f32.mrf.mxu0
  %v602 = vpop.f32.mrf.mxu0
  %v603 = vadd.f32 0.0, %v602
  %v604 = vpop.f32.mrf.mxu0
  %605 = vmatprep.mubr.bf16.mxu0 %v440
  %606 = vmatmul.mubr.bf16.gmra.mxu0 %v439
  %v607 = vpop.f32.mrf.mxu0
  %v608 = vadd.f32 0.0, %v607
  %v609 = vpop.f32.mrf.mxu0
  %v610 = vpop.f32.mrf.mxu0
  %v611 = vadd.f32 0.0, %v610
  %v612 = vpop.f32.mrf.mxu0
  %613 = vmatprep.mubr.bf16.mxu0 %v442
  %614 = vmatmul.mubr.bf16.gmra.mxu0 %v441
  %v615 = vpop.f32.mrf.mxu0
  %v616 = vadd.f32 0.0, %v615
  %v617 = vpop.f32.mrf.mxu0
  %v618 = vpop.f32.mrf.mxu0
  %v619 = vadd.f32 0.0, %v618
  %v620 = vpop.f32.mrf.mxu0
  %621 = vmatprep.mubr.bf16.mxu0 %v444
  %622 = vmatmul.mubr.bf16.gmra.mxu0 %v443
  %v623 = vpop.f32.mrf.mxu0
  %v624 = vadd.f32 0.0, %v623
  %v625 = vpop.f32.mrf.mxu0
  %v626 = vpop.f32.mrf.mxu0
  %v627 = vadd.f32 0.0, %v626
  %v628 = vpop.f32.mrf.mxu0
  %629 = vmatprep.mubr.bf16.mxu0 %v446
  %630 = vmatmul.mubr.bf16.gmra.mxu0 %v445
  %v631 = vpop.f32.mrf.mxu0
  %v632 = vadd.f32 0.0, %v631
  %v633 = vpop.f32.mrf.mxu0
  %v634 = vpop.f32.mrf.mxu0
  %v635 = vadd.f32 0.0, %v634
  %v636 = vpop.f32.mrf.mxu0
  %637 = vmatprep.mubr.bf16.mxu0 %v448
  %638 = vmatmul.mubr.bf16.gmra.mxu0 %v447
  %v639 = vpop.f32.mrf.mxu0
  %v640 = vadd.f32 0.0, %v639
  %v641 = vpop.f32.mrf.mxu0
  %v642 = vpop.f32.mrf.mxu0
  %v643 = vadd.f32 0.0, %v642
  %v644 = vpop.f32.mrf.mxu0
  %645 = vmatprep.mubr.bf16.mxu0 %v450
  %646 = vmatmul.mubr.bf16.gmra.mxu0 %v449
  %v647 = vpop.f32.mrf.mxu0
  %v648 = vadd.f32 0.0, %v647
  %v649 = vpop.f32.mrf.mxu0
  %v650 = vpop.f32.mrf.mxu0
  %v651 = vadd.f32 0.0, %v650
  %v652 = vpop.f32.mrf.mxu0
  %653 = vmatprep.mubr.bf16.mxu0 %v452
  %654 = vmatmul.mubr.bf16.gmra.mxu0 %v451
  %v655 = vpop.f32.mrf.mxu0
  %v656 = vadd.f32 0.0, %v655
  %v657 = vpop.f32.mrf.mxu0
  %v658 = vpop.f32.mrf.mxu0
  %v659 = vadd.f32 0.0, %v658
  %v660 = vpop.f32.mrf.mxu0
  %661 = vdwg.mxu0
  %s662 = scalar_lea.vmem %s0, 256
  %v663 = vld [vmem:[%s662] sm:$0xff]
  %v664 = vld [vmem:[%s662 + $0x8] sm:$0xff]
  %v665 = vld [vmem:[%s662 + $0x10] sm:$0xff]
  %v666 = vld [vmem:[%s662 + $0x18] sm:$0xff]
  %v667 = vld [vmem:[%s662 + $0x20] sm:$0xff]
  %v668 = vld [vmem:[%s662 + $0x28] sm:$0xff]
  %v669 = vld [vmem:[%s662 + $0x30] sm:$0xff]
  %v670 = vld [vmem:[%s662 + $0x38] sm:$0xff]
  %v671 = vld [vmem:[%s662 + $0x40] sm:$0xff]
  %v672 = vld [vmem:[%s662 + $0x48] sm:$0xff]
  %v673 = vld [vmem:[%s662 + $0x50] sm:$0xff]
  %v674 = vld [vmem:[%s662 + $0x58] sm:$0xff]
  %v675 = vld [vmem:[%s662 + $0x60] sm:$0xff]
  %v676 = vld [vmem:[%s662 + $0x68] sm:$0xff]
  %v677 = vld [vmem:[%s662 + $0x70] sm:$0xff]
  %v678 = vld [vmem:[%s662 + $0x78] sm:$0xff]
  %s679 = scalar_lea.vmem %s1, 256
  %v680 = vld [vmem:[%s679] sm:$0xf]
  %v681 = vld [vmem:[%s679 + $0x4] sm:$0xf]
  %v682 = vld [vmem:[%s679 + $0x8] sm:$0xf]
  %v683 = vld [vmem:[%s679 + $0xc] sm:$0xf]
  %v684 = vld [vmem:[%s679 + $0x10] sm:$0xf]
  %v685 = vld [vmem:[%s679 + $0x14] sm:$0xf]
  %v686 = vld [vmem:[%s679 + $0x18] sm:$0xf]
  %v687 = vld [vmem:[%s679 + $0x1c] sm:$0xf]
  %v688 = vld [vmem:[%s679 + $0x20] sm:$0xf]
  %v689 = vld [vmem:[%s679 + $0x24] sm:$0xf]
  %v690 = vld [vmem:[%s679 + $0x28] sm:$0xf]
  %v691 = vld [vmem:[%s679 + $0x2c] sm:$0xf]
  %v692 = vld [vmem:[%s679 + $0x30] sm:$0xf]
  %v693 = vld [vmem:[%s679 + $0x34] sm:$0xf]
  %v694 = vld [vmem:[%s679 + $0x38] sm:$0xf]
  %v695 = vld [vmem:[%s679 + $0x3c] sm:$0xf]
  %v696 = vld [vmem:[%s679 + $0x40] sm:$0xf]
  %v697 = vld [vmem:[%s679 + $0x44] sm:$0xf]
  %v698 = vld [vmem:[%s679 + $0x48] sm:$0xf]
  %v699 = vld [vmem:[%s679 + $0x4c] sm:$0xf]
  %v700 = vld [vmem:[%s679 + $0x50] sm:$0xf]
  %v701 = vld [vmem:[%s679 + $0x54] sm:$0xf]
  %v702 = vld [vmem:[%s679 + $0x58] sm:$0xf]
  %v703 = vld [vmem:[%s679 + $0x5c] sm:$0xf]
  %v704 = vld [vmem:[%s679 + $0x60] sm:$0xf]
  %v705 = vld [vmem:[%s679 + $0x64] sm:$0xf]
  %v706 = vld [vmem:[%s679 + $0x68] sm:$0xf]
  %v707 = vld [vmem:[%s679 + $0x6c] sm:$0xf]
  %v708 = vld [vmem:[%s679 + $0x70] sm:$0xf]
  %v709 = vld [vmem:[%s679 + $0x74] sm:$0xf]
  %v710 = vld [vmem:[%s679 + $0x78] sm:$0xf]
  %v711 = vld [vmem:[%s679 + $0x7c] sm:$0xf]
  %v728 = vunpack.c.l.b16 %v663
  %v729 = vunpack.c.h.b16 %v663
  %v730 = vunpack.c.l.b16 %v664
  %v731 = vunpack.c.h.b16 %v664
  %v732 = vunpack.c.l.b16 %v665
  %v733 = vunpack.c.h.b16 %v665
  %v734 = vunpack.c.l.b16 %v666
  %v735 = vunpack.c.h.b16 %v666
  %v736 = vunpack.c.l.b16 %v667
  %v737 = vunpack.c.h.b16 %v667
  %v738 = vunpack.c.l.b16 %v668
  %v739 = vunpack.c.h.b16 %v668
  %v740 = vunpack.c.l.b16 %v669
  %v741 = vunpack.c.h.b16 %v669
  %v742 = vunpack.c.l.b16 %v670
  %v743 = vunpack.c.h.b16 %v670
  %v744 = vunpack.c.l.b16 %v671
  %v745 = vunpack.c.h.b16 %v671
  %v746 = vunpack.c.l.b16 %v672
  %v747 = vunpack.c.h.b16 %v672
  %v748 = vunpack.c.l.b16 %v673
  %v749 = vunpack.c.h.b16 %v673
  %v750 = vunpack.c.l.b16 %v674
  %v751 = vunpack.c.h.b16 %v674
  %v752 = vunpack.c.l.b16 %v675
  %v753 = vunpack.c.h.b16 %v675
  %v754 = vunpack.c.l.b16 %v676
  %v755 = vunpack.c.h.b16 %v676
  %v756 = vunpack.c.l.b16 %v677
  %v757 = vunpack.c.h.b16 %v677
  %v758 = vunpack.c.l.b16 %v678
  %v759 = vunpack.c.h.b16 %v678
  %v760 = vpack.c.b16 %v730, %v728
  %v761 = vpack.c.b16 %v731, %v729
  %v762 = vpack.c.b16 %v734, %v732
  %v763 = vpack.c.b16 %v735, %v733
  %v764 = vpack.c.b16 %v738, %v736
  %v765 = vpack.c.b16 %v739, %v737
  %v766 = vpack.c.b16 %v742, %v740
  %v767 = vpack.c.b16 %v743, %v741
  %v768 = vpack.c.b16 %v746, %v744
  %v769 = vpack.c.b16 %v747, %v745
  %v770 = vpack.c.b16 %v750, %v748
  %v771 = vpack.c.b16 %v751, %v749
  %v772 = vpack.c.b16 %v754, %v752
  %v773 = vpack.c.b16 %v755, %v753
  %v774 = vpack.c.b16 %v758, %v756
  %v775 = vpack.c.b16 %v759, %v757
  %v824 = vunpack.c.l.b16 %v680
  %v825 = vunpack.c.l.b16 %v681
  %v826 = vunpack.c.l.b16 %v682
  %v827 = vunpack.c.l.b16 %v683
  %v828 = vunpack.c.l.b16 %v684
  %v829 = vunpack.c.l.b16 %v685
  %v830 = vunpack.c.l.b16 %v686
  %v831 = vunpack.c.l.b16 %v687
  %v832 = vunpack.c.l.b16 %v688
  %v833 = vunpack.c.l.b16 %v689
  %v834 = vunpack.c.l.b16 %v690
  %v835 = vunpack.c.l.b16 %v691
  %v836 = vunpack.c.l.b16 %v692
  %v837 = vunpack.c.l.b16 %v693
  %v838 = vunpack.c.l.b16 %v694
  %v839 = vunpack.c.l.b16 %v695
  %v840 = vunpack.c.l.b16 %v696
  %v841 = vunpack.c.l.b16 %v697
  %v842 = vunpack.c.l.b16 %v698
  %v843 = vunpack.c.l.b16 %v699
  %v844 = vunpack.c.l.b16 %v700
  %v845 = vunpack.c.l.b16 %v701
  %v846 = vunpack.c.l.b16 %v702
  %v847 = vunpack.c.l.b16 %v703
  %v848 = vunpack.c.l.b16 %v704
  %v849 = vunpack.c.l.b16 %v705
  %v850 = vunpack.c.l.b16 %v706
  %v851 = vunpack.c.l.b16 %v707
  %v852 = vunpack.c.l.b16 %v708
  %v853 = vunpack.c.l.b16 %v709
  %v854 = vunpack.c.l.b16 %v710
  %v855 = vunpack.c.l.b16 %v711
  %v856 = vpack.c.b16 %v825, %v824
  %v857 = vpack.c.b16 %v827, %v826
  %v858 = vpack.c.b16 %v829, %v828
  %v859 = vpack.c.b16 %v831, %v830
  %v860 = vpack.c.b16 %v833, %v832
  %v861 = vpack.c.b16 %v835, %v834
  %v862 = vpack.c.b16 %v837, %v836
  %v863 = vpack.c.b16 %v839, %v838
  %v864 = vpack.c.b16 %v841, %v840
  %v865 = vpack.c.b16 %v843, %v842
  %v866 = vpack.c.b16 %v845, %v844
  %v867 = vpack.c.b16 %v847, %v846
  %v868 = vpack.c.b16 %v849, %v848
  %v869 = vpack.c.b16 %v851, %v850
  %v870 = vpack.c.b16 %v853, %v852
  %v871 = vpack.c.b16 %v855, %v854
  %888 = vmatprep.subr.bf16.mxu0 0
  %889 = vmatpush1.bf16.msra.mxu0 %v863
  %890 = vmatprep.subr.bf16.mxu0 0
  %891 = vmatpush1.bf16.msra.mxu0 %v862
  %892 = vmatprep.subr.bf16.mxu0 0
  %893 = vmatpush1.bf16.msra.mxu0 %v861
  %894 = vmatprep.subr.bf16.mxu0 0
  %895 = vmatpush1.bf16.msra.mxu0 %v860
  %896 = vmatprep.subr.bf16.mxu0 0
  %897 = vmatpush1.bf16.msra.mxu0 %v859
  %898 = vmatprep.subr.bf16.mxu0 0
  %899 = vmatpush1.bf16.msra.mxu0 %v858
  %900 = vmatprep.subr.bf16.mxu0 0
  %901 = vmatpush1.bf16.msra.mxu0 %v857
  %902 = vmatprep.subr.bf16.mxu0 0
  %903 = vmatpush1.bf16.msra.mxu0 %v856
  %904 = vmatprep.subr.bf16.mxu0 0
  %905 = vmatpush2.bf16.msra.mxu0 %v871
  %906 = vmatprep.subr.bf16.mxu0 0
  %907 = vmatpush2.bf16.msra.mxu0 %v870
  %908 = vmatprep.subr.bf16.mxu0 0
  %909 = vmatpush2.bf16.msra.mxu0 %v869
  %910 = vmatprep.subr.bf16.mxu0 0
  %911 = vmatpush2.bf16.msra.mxu0 %v868
  %912 = vmatprep.subr.bf16.mxu0 0
  %913 = vmatpush2.bf16.msra.mxu0 %v867
  %914 = vmatprep.subr.bf16.mxu0 0
  %915 = vmatpush2.bf16.msra.mxu0 %v866
  %916 = vmatprep.subr.bf16.mxu0 0
  %917 = vmatpush2.bf16.msra.mxu0 %v865
  %918 = vmatprep.subr.bf16.mxu0 0
  %919 = vmatpush2.bf16.msra.mxu0 %v864
  %920 = vmatprep.mubr.bf16.mxu0 %v761
  %921 = vmatmul.mubr.bf16.gmra.mxu0 %v760
  %v922 = vpop.f32.mrf.mxu0
  %v923 = vadd.f32 0.0, %v922
  %v924 = vpop.f32.mrf.mxu0
  %v925 = vpop.f32.mrf.mxu0
  %v926 = vadd.f32 0.0, %v925
  %v927 = vpop.f32.mrf.mxu0
  %928 = vmatprep.mubr.bf16.mxu0 %v763
  %929 = vmatmul.mubr.bf16.gmra.mxu0 %v762
  %v930 = vpop.f32.mrf.mxu0
  %v931 = vadd.f32 0.0, %v930
  %v932 = vpop.f32.mrf.mxu0
  %v933 = vpop.f32.mrf.mxu0
  %v934 = vadd.f32 0.0, %v933
  %v935 = vpop.f32.mrf.mxu0
  %936 = vmatprep.mubr.bf16.mxu0 %v765
  %937 = vmatmul.mubr.bf16.gmra.mxu0 %v764
  %v938 = vpop.f32.mrf.mxu0
  %v939 = vadd.f32 0.0, %v938
  %v940 = vpop.f32.mrf.mxu0
  %v941 = vpop.f32.mrf.mxu0
  %v942 = vadd.f32 0.0, %v941
  %v943 = vpop.f32.mrf.mxu0
  %944 = vmatprep.mubr.bf16.mxu0 %v767
  %945 = vmatmul.mubr.bf16.gmra.mxu0 %v766
  %v946 = vpop.f32.mrf.mxu0
  %v947 = vadd.f32 0.0, %v946
  %v948 = vpop.f32.mrf.mxu0
  %v949 = vpop.f32.mrf.mxu0
  %v950 = vadd.f32 0.0, %v949
  %v951 = vpop.f32.mrf.mxu0
  %952 = vmatprep.mubr.bf16.mxu0 %v769
  %953 = vmatmul.mubr.bf16.gmra.mxu0 %v768
  %v954 = vpop.f32.mrf.mxu0
  %v955 = vadd.f32 0.0, %v954
  %v956 = vpop.f32.mrf.mxu0
  %v957 = vpop.f32.mrf.mxu0
  %v958 = vadd.f32 0.0, %v957
  %v959 = vpop.f32.mrf.mxu0
  %960 = vmatprep.mubr.bf16.mxu0 %v771
  %961 = vmatmul.mubr.bf16.gmra.mxu0 %v770
  %v962 = vpop.f32.mrf.mxu0
  %v963 = vadd.f32 0.0, %v962
  %v964 = vpop.f32.mrf.mxu0
  %v965 = vpop.f32.mrf.mxu0
  %v966 = vadd.f32 0.0, %v965
  %v967 = vpop.f32.mrf.mxu0
  %968 = vmatprep.mubr.bf16.mxu0 %v773
  %969 = vmatmul.mubr.bf16.gmra.mxu0 %v772
  %v970 = vpop.f32.mrf.mxu0
  %v971 = vadd.f32 0.0, %v970
  %v972 = vpop.f32.mrf.mxu0
  %v973 = vpop.f32.mrf.mxu0
  %v974 = vadd.f32 0.0, %v973
  %v975 = vpop.f32.mrf.mxu0
  %976 = vmatprep.mubr.bf16.mxu0 %v775
  %977 = vmatmul.mubr.bf16.gmra.mxu0 %v774
  %v978 = vpop.f32.mrf.mxu0
  %v979 = vadd.f32 0.0, %v978
  %v980 = vpop.f32.mrf.mxu0
  %v981 = vpop.f32.mrf.mxu0
  %v982 = vadd.f32 0.0, %v981
  %v983 = vpop.f32.mrf.mxu0
  %984 = vdwg.mxu0
  %s985 = scalar_lea.vmem %s0, 384
  %v986 = vld [vmem:[%s985] sm:$0xff]
  %v987 = vld [vmem:[%s985 + $0x8] sm:$0xff]
  %v988 = vld [vmem:[%s985 + $0x10] sm:$0xff]
  %v989 = vld [vmem:[%s985 + $0x18] sm:$0xff]
  %v990 = vld [vmem:[%s985 + $0x20] sm:$0xff]
  %v991 = vld [vmem:[%s985 + $0x28] sm:$0xff]
  %v992 = vld [vmem:[%s985 + $0x30] sm:$0xff]
  %v993 = vld [vmem:[%s985 + $0x38] sm:$0xff]
  %v994 = vld [vmem:[%s985 + $0x40] sm:$0xff]
  %v995 = vld [vmem:[%s985 + $0x48] sm:$0xff]
  %v996 = vld [vmem:[%s985 + $0x50] sm:$0xff]
  %v997 = vld [vmem:[%s985 + $0x58] sm:$0xff]
  %v998 = vld [vmem:[%s985 + $0x60] sm:$0xff]
  %v999 = vld [vmem:[%s985 + $0x68] sm:$0xff]
  %v1000 = vld [vmem:[%s985 + $0x70] sm:$0xff]
  %v1001 = vld [vmem:[%s985 + $0x78] sm:$0xff]
  %s1002 = scalar_lea.vmem %s1, 384
  %v1003 = vld [vmem:[%s1002] sm:$0xf]
  %v1004 = vld [vmem:[%s1002 + $0x4] sm:$0xf]
  %v1005 = vld [vmem:[%s1002 + $0x8] sm:$0xf]
  %v1006 = vld [vmem:[%s1002 + $0xc] sm:$0xf]
  %v1007 = vld [vmem:[%s1002 + $0x10] sm:$0xf]
  %v1008 = vld [vmem:[%s1002 + $0x14] sm:$0xf]
  %v1009 = vld [vmem:[%s1002 + $0x18] sm:$0xf]
  %v1010 = vld [vmem:[%s1002 + $0x1c] sm:$0xf]
  %v1011 = vld [vmem:[%s1002 + $0x20] sm:$0xf]
  %v1012 = vld [vmem:[%s1002 + $0x24] sm:$0xf]
  %v1013 = vld [vmem:[%s1002 + $0x28] sm:$0xf]
  %v1014 = vld [vmem:[%s1002 + $0x2c] sm:$0xf]
  %v1015 = vld [vmem:[%s1002 + $0x30] sm:$0xf]
  %v1016 = vld [vmem:[%s1002 + $0x34] sm:$0xf]
  %v1017 = vld [vmem:[%s1002 + $0x38] sm:$0xf]
  %v1018 = vld [vmem:[%s1002 + $0x3c] sm:$0xf]
  %v1019 = vld [vmem:[%s1002 + $0x40] sm:$0xf]
  %v1020 = vld [vmem:[%s1002 + $0x44] sm:$0xf]
  %v1021 = vld [vmem:[%s1002 + $0x48] sm:$0xf]
  %v1022 = vld [vmem:[%s1002 + $0x4c] sm:$0xf]
  %v1023 = vld [vmem:[%s1002 + $0x50] sm:$0xf]
  %v1024 = vld [vmem:[%s1002 + $0x54] sm:$0xf]
  %v1025 = vld [vmem:[%s1002 + $0x58] sm:$0xf]
  %v1026 = vld [vmem:[%s1002 + $0x5c] sm:$0xf]
  %v1027 = vld [vmem:[%s1002 + $0x60] sm:$0xf]
  %v1028 = vld [vmem:[%s1002 + $0x64] sm:$0xf]
  %v1029 = vld [vmem:[%s1002 + $0x68] sm:$0xf]
  %v1030 = vld [vmem:[%s1002 + $0x6c] sm:$0xf]
  %v1031 = vld [vmem:[%s1002 + $0x70] sm:$0xf]
  %v1032 = vld [vmem:[%s1002 + $0x74] sm:$0xf]
  %v1033 = vld [vmem:[%s1002 + $0x78] sm:$0xf]
  %v1034 = vld [vmem:[%s1002 + $0x7c] sm:$0xf]
  %v1051 = vunpack.c.l.b16 %v986
  %v1052 = vunpack.c.h.b16 %v986
  %v1053 = vunpack.c.l.b16 %v987
  %v1054 = vunpack.c.h.b16 %v987
  %v1055 = vunpack.c.l.b16 %v988
  %v1056 = vunpack.c.h.b16 %v988
  %v1057 = vunpack.c.l.b16 %v989
  %v1058 = vunpack.c.h.b16 %v989
  %v1059 = vunpack.c.l.b16 %v990
  %v1060 = vunpack.c.h.b16 %v990
  %v1061 = vunpack.c.l.b16 %v991
  %v1062 = vunpack.c.h.b16 %v991
  %v1063 = vunpack.c.l.b16 %v992
  %v1064 = vunpack.c.h.b16 %v992
  %v1065 = vunpack.c.l.b16 %v993
  %v1066 = vunpack.c.h.b16 %v993
  %v1067 = vunpack.c.l.b16 %v994
  %v1068 = vunpack.c.h.b16 %v994
  %v1069 = vunpack.c.l.b16 %v995
  %v1070 = vunpack.c.h.b16 %v995
  %v1071 = vunpack.c.l.b16 %v996
  %v1072 = vunpack.c.h.b16 %v996
  %v1073 = vunpack.c.l.b16 %v997
  %v1074 = vunpack.c.h.b16 %v997
  %v1075 = vunpack.c.l.b16 %v998
  %v1076 = vunpack.c.h.b16 %v998
  %v1077 = vunpack.c.l.b16 %v999
  %v1078 = vunpack.c.h.b16 %v999
  %v1079 = vunpack.c.l.b16 %v1000
  %v1080 = vunpack.c.h.b16 %v1000
  %v1081 = vunpack.c.l.b16 %v1001
  %v1082 = vunpack.c.h.b16 %v1001
  %v1083 = vpack.c.b16 %v1053, %v1051
  %v1084 = vpack.c.b16 %v1054, %v1052
  %v1085 = vpack.c.b16 %v1057, %v1055
  %v1086 = vpack.c.b16 %v1058, %v1056
  %v1087 = vpack.c.b16 %v1061, %v1059
  %v1088 = vpack.c.b16 %v1062, %v1060
  %v1089 = vpack.c.b16 %v1065, %v1063
  %v1090 = vpack.c.b16 %v1066, %v1064
  %v1091 = vpack.c.b16 %v1069, %v1067
  %v1092 = vpack.c.b16 %v1070, %v1068
  %v1093 = vpack.c.b16 %v1073, %v1071
  %v1094 = vpack.c.b16 %v1074, %v1072
  %v1095 = vpack.c.b16 %v1077, %v1075
  %v1096 = vpack.c.b16 %v1078, %v1076
  %v1097 = vpack.c.b16 %v1081, %v1079
  %v1098 = vpack.c.b16 %v1082, %v1080
  %v1147 = vunpack.c.l.b16 %v1003
  %v1148 = vunpack.c.l.b16 %v1004
  %v1149 = vunpack.c.l.b16 %v1005
  %v1150 = vunpack.c.l.b16 %v1006
  %v1151 = vunpack.c.l.b16 %v1007
  %v1152 = vunpack.c.l.b16 %v1008
  %v1153 = vunpack.c.l.b16 %v1009
  %v1154 = vunpack.c.l.b16 %v1010
  %v1155 = vunpack.c.l.b16 %v1011
  %v1156 = vunpack.c.l.b16 %v1012
  %v1157 = vunpack.c.l.b16 %v1013
  %v1158 = vunpack.c.l.b16 %v1014
  %v1159 = vunpack.c.l.b16 %v1015
  %v1160 = vunpack.c.l.b16 %v1016
  %v1161 = vunpack.c.l.b16 %v1017
  %v1162 = vunpack.c.l.b16 %v1018
  %v1163 = vunpack.c.l.b16 %v1019
  %v1164 = vunpack.c.l.b16 %v1020
  %v1165 = vunpack.c.l.b16 %v1021
  %v1166 = vunpack.c.l.b16 %v1022
  %v1167 = vunpack.c.l.b16 %v1023
  %v1168 = vunpack.c.l.b16 %v1024
  %v1169 = vunpack.c.l.b16 %v1025
  %v1170 = vunpack.c.l.b16 %v1026
  %v1171 = vunpack.c.l.b16 %v1027
  %v1172 = vunpack.c.l.b16 %v1028
  %v1173 = vunpack.c.l.b16 %v1029
  %v1174 = vunpack.c.l.b16 %v1030
  %v1175 = vunpack.c.l.b16 %v1031
  %v1176 = vunpack.c.l.b16 %v1032
  %v1177 = vunpack.c.l.b16 %v1033
  %v1178 = vunpack.c.l.b16 %v1034
  %v1179 = vpack.c.b16 %v1148, %v1147
  %v1180 = vpack.c.b16 %v1150, %v1149
  %v1181 = vpack.c.b16 %v1152, %v1151
  %v1182 = vpack.c.b16 %v1154, %v1153
  %v1183 = vpack.c.b16 %v1156, %v1155
  %v1184 = vpack.c.b16 %v1158, %v1157
  %v1185 = vpack.c.b16 %v1160, %v1159
  %v1186 = vpack.c.b16 %v1162, %v1161
  %v1187 = vpack.c.b16 %v1164, %v1163
  %v1188 = vpack.c.b16 %v1166, %v1165
  %v1189 = vpack.c.b16 %v1168, %v1167
  %v1190 = vpack.c.b16 %v1170, %v1169
  %v1191 = vpack.c.b16 %v1172, %v1171
  %v1192 = vpack.c.b16 %v1174, %v1173
  %v1193 = vpack.c.b16 %v1176, %v1175
  %v1194 = vpack.c.b16 %v1178, %v1177
  %1211 = vmatprep.subr.bf16.mxu0 0
  %1212 = vmatpush1.bf16.msra.mxu0 %v1186
  %1213 = vmatprep.subr.bf16.mxu0 0
  %1214 = vmatpush1.bf16.msra.mxu0 %v1185
  %1215 = vmatprep.subr.bf16.mxu0 0
  %1216 = vmatpush1.bf16.msra.mxu0 %v1184
  %1217 = vmatprep.subr.bf16.mxu0 0
  %1218 = vmatpush1.bf16.msra.mxu0 %v1183
  %1219 = vmatprep.subr.bf16.mxu0 0
  %1220 = vmatpush1.bf16.msra.mxu0 %v1182
  %1221 = vmatprep.subr.bf16.mxu0 0
  %1222 = vmatpush1.bf16.msra.mxu0 %v1181
  %1223 = vmatprep.subr.bf16.mxu0 0
  %1224 = vmatpush1.bf16.msra.mxu0 %v1180
  %1225 = vmatprep.subr.bf16.mxu0 0
  %1226 = vmatpush1.bf16.msra.mxu0 %v1179
  %1227 = vmatprep.subr.bf16.mxu0 0
  %1228 = vmatpush2.bf16.msra.mxu0 %v1194
  %1229 = vmatprep.subr.bf16.mxu0 0
  %1230 = vmatpush2.bf16.msra.mxu0 %v1193
  %1231 = vmatprep.subr.bf16.mxu0 0
  %1232 = vmatpush2.bf16.msra.mxu0 %v1192
  %1233 = vmatprep.subr.bf16.mxu0 0
  %1234 = vmatpush2.bf16.msra.mxu0 %v1191
  %1235 = vmatprep.subr.bf16.mxu0 0
  %1236 = vmatpush2.bf16.msra.mxu0 %v1190
  %1237 = vmatprep.subr.bf16.mxu0 0
  %1238 = vmatpush2.bf16.msra.mxu0 %v1189
  %1239 = vmatprep.subr.bf16.mxu0 0
  %1240 = vmatpush2.bf16.msra.mxu0 %v1188
  %1241 = vmatprep.subr.bf16.mxu0 0
  %1242 = vmatpush2.bf16.msra.mxu0 %v1187
  %1243 = vmatprep.mubr.bf16.mxu0 %v1084
  %1244 = vmatmul.mubr.bf16.gmra.mxu0 %v1083
  %v1245 = vpop.f32.mrf.mxu0
  %v1246 = vadd.f32 0.0, %v1245
  %v1247 = vpop.f32.mrf.mxu0
  %v1248 = vpop.f32.mrf.mxu0
  %v1249 = vadd.f32 0.0, %v1248
  %v1250 = vpop.f32.mrf.mxu0
  %1251 = vmatprep.mubr.bf16.mxu0 %v1086
  %1252 = vmatmul.mubr.bf16.gmra.mxu0 %v1085
  %v1253 = vpop.f32.mrf.mxu0
  %v1254 = vadd.f32 0.0, %v1253
  %v1255 = vpop.f32.mrf.mxu0
  %v1256 = vpop.f32.mrf.mxu0
  %v1257 = vadd.f32 0.0, %v1256
  %v1258 = vpop.f32.mrf.mxu0
  %1259 = vmatprep.mubr.bf16.mxu0 %v1088
  %1260 = vmatmul.mubr.bf16.gmra.mxu0 %v1087
  %v1261 = vpop.f32.mrf.mxu0
  %v1262 = vadd.f32 0.0, %v1261
  %v1263 = vpop.f32.mrf.mxu0
  %v1264 = vpop.f32.mrf.mxu0
  %v1265 = vadd.f32 0.0, %v1264
  %v1266 = vpop.f32.mrf.mxu0
  %1267 = vmatprep.mubr.bf16.mxu0 %v1090
  %1268 = vmatmul.mubr.bf16.gmra.mxu0 %v1089
  %v1269 = vpop.f32.mrf.mxu0
  %v1270 = vadd.f32 0.0, %v1269
  %v1271 = vpop.f32.mrf.mxu0
  %v1272 = vpop.f32.mrf.mxu0
  %v1273 = vadd.f32 0.0, %v1272
  %v1274 = vpop.f32.mrf.mxu0
  %1275 = vmatprep.mubr.bf16.mxu0 %v1092
  %1276 = vmatmul.mubr.bf16.gmra.mxu0 %v1091
  %v1277 = vpop.f32.mrf.mxu0
  %v1278 = vadd.f32 0.0, %v1277
  %v1279 = vpop.f32.mrf.mxu0
  %v1280 = vpop.f32.mrf.mxu0
  %v1281 = vadd.f32 0.0, %v1280
  %v1282 = vpop.f32.mrf.mxu0
  %1283 = vmatprep.mubr.bf16.mxu0 %v1094
  %1284 = vmatmul.mubr.bf16.gmra.mxu0 %v1093
  %v1285 = vpop.f32.mrf.mxu0
  %v1286 = vadd.f32 0.0, %v1285
  %v1287 = vpop.f32.mrf.mxu0
  %v1288 = vpop.f32.mrf.mxu0
  %v1289 = vadd.f32 0.0, %v1288
  %v1290 = vpop.f32.mrf.mxu0
  %1291 = vmatprep.mubr.bf16.mxu0 %v1096
  %1292 = vmatmul.mubr.bf16.gmra.mxu0 %v1095
  %v1293 = vpop.f32.mrf.mxu0
  %v1294 = vadd.f32 0.0, %v1293
  %v1295 = vpop.f32.mrf.mxu0
  %v1296 = vpop.f32.mrf.mxu0
  %v1297 = vadd.f32 0.0, %v1296
  %v1298 = vpop.f32.mrf.mxu0
  %1299 = vmatprep.mubr.bf16.mxu0 %v1098
  %1300 = vmatmul.mubr.bf16.gmra.mxu0 %v1097
  %v1301 = vpop.f32.mrf.mxu0
  %v1302 = vadd.f32 0.0, %v1301
  %v1303 = vpop.f32.mrf.mxu0
  %v1304 = vpop.f32.mrf.mxu0
  %v1305 = vadd.f32 0.0, %v1304
  %v1306 = vpop.f32.mrf.mxu0
  %1307 = vdwg.mxu0
  %1324 = vrot.lane.b32.xlu0 %v600, 32
  %v1325 = vpop.permute.xlu0 %1324
  %1326 = vrot.lane.b32.xlu0 %v603, 32
  %v1327 = vpop.permute.xlu0 %1326
  %1328 = vrot.lane.b32.xlu0 %v608, 32
  %v1329 = vpop.permute.xlu0 %1328
  %1330 = vrot.lane.b32.xlu0 %v611, 32
  %v1331 = vpop.permute.xlu0 %1330
  %1332 = vrot.lane.b32.xlu0 %v616, 32
  %v1333 = vpop.permute.xlu0 %1332
  %1334 = vrot.lane.b32.xlu0 %v619, 32
  %v1335 = vpop.permute.xlu0 %1334
  %1336 = vrot.lane.b32.xlu0 %v624, 32
  %v1337 = vpop.permute.xlu0 %1336
  %1338 = vrot.lane.b32.xlu0 %v627, 32
  %v1339 = vpop.permute.xlu0 %1338
  %1340 = vrot.lane.b32.xlu0 %v632, 32
  %v1341 = vpop.permute.xlu0 %1340
  %1342 = vrot.lane.b32.xlu0 %v635, 32
  %v1343 = vpop.permute.xlu0 %1342
  %1344 = vrot.lane.b32.xlu0 %v640, 32
  %v1345 = vpop.permute.xlu0 %1344
  %1346 = vrot.lane.b32.xlu0 %v643, 32
  %v1347 = vpop.permute.xlu0 %1346
  %1348 = vrot.lane.b32.xlu0 %v648, 32
  %v1349 = vpop.permute.xlu0 %1348
  %1350 = vrot.lane.b32.xlu0 %v651, 32
  %v1351 = vpop.permute.xlu0 %1350
  %1352 = vrot.lane.b32.xlu0 %v656, 32
  %v1353 = vpop.permute.xlu0 %1352
  %1354 = vrot.lane.b32.xlu0 %v659, 32
  %v1355 = vpop.permute.xlu0 %1354
  %1388 = vrot.lane.b32.xlu0 %v923, 64
  %v1389 = vpop.permute.xlu0 %1388
  %1390 = vrot.lane.b32.xlu0 %v926, 64
  %v1391 = vpop.permute.xlu0 %1390
  %1392 = vrot.lane.b32.xlu0 %v931, 64
  %v1393 = vpop.permute.xlu0 %1392
  %1394 = vrot.lane.b32.xlu0 %v934, 64
  %v1395 = vpop.permute.xlu0 %1394
  %1396 = vrot.lane.b32.xlu0 %v939, 64
  %v1397 = vpop.permute.xlu0 %1396
  %1398 = vrot.lane.b32.xlu0 %v942, 64
  %v1399 = vpop.permute.xlu0 %1398
  %1400 = vrot.lane.b32.xlu0 %v947, 64
  %v1401 = vpop.permute.xlu0 %1400
  %1402 = vrot.lane.b32.xlu0 %v950, 64
  %v1403 = vpop.permute.xlu0 %1402
  %1404 = vrot.lane.b32.xlu0 %v955, 64
  %v1405 = vpop.permute.xlu0 %1404
  %1406 = vrot.lane.b32.xlu0 %v958, 64
  %v1407 = vpop.permute.xlu0 %1406
  %1408 = vrot.lane.b32.xlu0 %v963, 64
  %v1409 = vpop.permute.xlu0 %1408
  %1410 = vrot.lane.b32.xlu0 %v966, 64
  %v1411 = vpop.permute.xlu0 %1410
  %1412 = vrot.lane.b32.xlu0 %v971, 64
  %v1413 = vpop.permute.xlu0 %1412
  %1414 = vrot.lane.b32.xlu0 %v974, 64
  %v1415 = vpop.permute.xlu0 %1414
  %1416 = vrot.lane.b32.xlu0 %v979, 64
  %v1417 = vpop.permute.xlu0 %1416
  %1418 = vrot.lane.b32.xlu0 %v982, 64
  %v1419 = vpop.permute.xlu0 %1418
  %1452 = vrot.lane.b32.xlu0 %v1246, 96
  %v1453 = vpop.permute.xlu0 %1452
  %1454 = vrot.lane.b32.xlu0 %v1249, 96
  %v1455 = vpop.permute.xlu0 %1454
  %1456 = vrot.lane.b32.xlu0 %v1254, 96
  %v1457 = vpop.permute.xlu0 %1456
  %1458 = vrot.lane.b32.xlu0 %v1257, 96
  %v1459 = vpop.permute.xlu0 %1458
  %1460 = vrot.lane.b32.xlu0 %v1262, 96
  %v1461 = vpop.permute.xlu0 %1460
  %1462 = vrot.lane.b32.xlu0 %v1265, 96
  %v1463 = vpop.permute.xlu0 %1462
  %1464 = vrot.lane.b32.xlu0 %v1270, 96
  %v1465 = vpop.permute.xlu0 %1464
  %1466 = vrot.lane.b32.xlu0 %v1273, 96
  %v1467 = vpop.permute.xlu0 %1466
  %1468 = vrot.lane.b32.xlu0 %v1278, 96
  %v1469 = vpop.permute.xlu0 %1468
  %1470 = vrot.lane.b32.xlu0 %v1281, 96
  %v1471 = vpop.permute.xlu0 %1470
  %1472 = vrot.lane.b32.xlu0 %v1286, 96
  %v1473 = vpop.permute.xlu0 %1472
  %1474 = vrot.lane.b32.xlu0 %v1289, 96
  %v1475 = vpop.permute.xlu0 %1474
  %1476 = vrot.lane.b32.xlu0 %v1294, 96
  %v1477 = vpop.permute.xlu0 %1476
  %1478 = vrot.lane.b32.xlu0 %v1297, 96
  %v1479 = vpop.permute.xlu0 %1478
  %1480 = vrot.lane.b32.xlu0 %v1302, 96
  %v1481 = vpop.permute.xlu0 %1480
  %1482 = vrot.lane.b32.xlu0 %v1305, 96
  %v1483 = vpop.permute.xlu0 %1482
  %vm1500 = vcmask 261120
  %v1501 = vsel %vm1500, %v277, %v1325
  %v1502 = vsel %vm1500, %v280, %v1327
  %v1503 = vsel %vm1500, %v285, %v1329
  %v1504 = vsel %vm1500, %v288, %v1331
  %v1505 = vsel %vm1500, %v293, %v1333
  %v1506 = vsel %vm1500, %v296, %v1335
  %v1507 = vsel %vm1500, %v301, %v1337
  %v1508 = vsel %vm1500, %v304, %v1339
  %v1509 = vsel %vm1500, %v309, %v1341
  %v1510 = vsel %vm1500, %v312, %v1343
  %v1511 = vsel %vm1500, %v317, %v1345
  %v1512 = vsel %vm1500, %v320, %v1347
  %v1513 = vsel %vm1500, %v325, %v1349
  %v1514 = vsel %vm1500, %v328, %v1351
  %v1515 = vsel %vm1500, %v333, %v1353
  %v1516 = vsel %vm1500, %v336, %v1355
  %vm1517 = vcmask 523264
  %v1518 = vsel %vm1517, %v1501, %v1389
  %v1519 = vsel %vm1517, %v1502, %v1391
  %v1520 = vsel %vm1517, %v1503, %v1393
  %v1521 = vsel %vm1517, %v1504, %v1395
  %v1522 = vsel %vm1517, %v1505, %v1397
  %v1523 = vsel %vm1517, %v1506, %v1399
  %v1524 = vsel %vm1517, %v1507, %v1401
  %v1525 = vsel %vm1517, %v1508, %v1403
  %v1526 = vsel %vm1517, %v1509, %v1405
  %v1527 = vsel %vm1517, %v1510, %v1407
  %v1528 = vsel %vm1517, %v1511, %v1409
  %v1529 = vsel %vm1517, %v1512, %v1411
  %v1530 = vsel %vm1517, %v1513, %v1413
  %v1531 = vsel %vm1517, %v1514, %v1415
  %v1532 = vsel %vm1517, %v1515, %v1417
  %v1533 = vsel %vm1517, %v1516, %v1419
  %vm1534 = vcmask 785408
  %v1535 = vsel %vm1534, %v1518, %v1453
  %v1536 = vsel %vm1534, %v1519, %v1455
  %v1537 = vsel %vm1534, %v1520, %v1457
  %v1538 = vsel %vm1534, %v1521, %v1459
  %v1539 = vsel %vm1534, %v1522, %v1461
  %v1540 = vsel %vm1534, %v1523, %v1463
  %v1541 = vsel %vm1534, %v1524, %v1465
  %v1542 = vsel %vm1534, %v1525, %v1467
  %v1543 = vsel %vm1534, %v1526, %v1469
  %v1544 = vsel %vm1534, %v1527, %v1471
  %v1545 = vsel %vm1534, %v1528, %v1473
  %v1546 = vsel %vm1534, %v1529, %v1475
  %v1547 = vsel %vm1534, %v1530, %v1477
  %v1548 = vsel %vm1534, %v1531, %v1479
  %v1549 = vsel %vm1534, %v1532, %v1481
  %v1550 = vsel %vm1534, %v1533, %v1483
  %v1551 = vadd.f32 %v1535, %v1536
  %v1552 = vadd.f32 %v1551, %v1537
  %v1553 = vadd.f32 %v1552, %v1538
  %v1554 = vadd.f32 %v1553, %v1539
  %v1555 = vadd.f32 %v1554, %v1540
  %v1556 = vadd.f32 %v1555, %v1541
  %v1557 = vadd.f32 %v1556, %v1542
  %v1558 = vadd.f32 %v1557, %v1543
  %v1559 = vadd.f32 %v1558, %v1544
  %v1560 = vadd.f32 %v1559, %v1545
  %v1561 = vadd.f32 %v1560, %v1546
  %v1562 = vadd.f32 %v1561, %v1547
  %v1563 = vadd.f32 %v1562, %v1548
  %v1564 = vadd.f32 %v1563, %v1549
  %v1565 = vadd.f32 %v1564, %v1550
  %v1566 = vrot.slane %v1565, 4
  %v1567 = vadd.f32 %v1565, %v1566
  %v1568 = vrot.slane %v1567, 2
  %v1569 = vadd.f32 %v1567, %v1568
  %v1570 = vrot.slane %v1569, 1
  %v1571 = vadd.f32 %v1569, %v1570
  %v1572 = vmul.f32 %v1535, %v1535
  %v1573 = vmul.f32 %v1536, %v1536
  %v1574 = vmul.f32 %v1537, %v1537
  %v1575 = vmul.f32 %v1538, %v1538
  %v1576 = vmul.f32 %v1539, %v1539
  %v1577 = vmul.f32 %v1540, %v1540
  %v1578 = vmul.f32 %v1541, %v1541
  %v1579 = vmul.f32 %v1542, %v1542
  %v1580 = vmul.f32 %v1543, %v1543
  %v1581 = vmul.f32 %v1544, %v1544
  %v1582 = vmul.f32 %v1545, %v1545
  %v1583 = vmul.f32 %v1546, %v1546
  %v1584 = vmul.f32 %v1547, %v1547
  %v1585 = vmul.f32 %v1548, %v1548
  %v1586 = vmul.f32 %v1549, %v1549
  %v1587 = vmul.f32 %v1550, %v1550
  %v1588 = vadd.f32 %v1572, %v1573
  %v1589 = vadd.f32 %v1588, %v1574
  %v1590 = vadd.f32 %v1589, %v1575
  %v1591 = vadd.f32 %v1590, %v1576
  %v1592 = vadd.f32 %v1591, %v1577
  %v1593 = vadd.f32 %v1592, %v1578
  %v1594 = vadd.f32 %v1593, %v1579
  %v1595 = vadd.f32 %v1594, %v1580
  %v1596 = vadd.f32 %v1595, %v1581
  %v1597 = vadd.f32 %v1596, %v1582
  %v1598 = vadd.f32 %v1597, %v1583
  %v1599 = vadd.f32 %v1598, %v1584
  %v1600 = vadd.f32 %v1599, %v1585
  %v1601 = vadd.f32 %v1600, %v1586
  %v1602 = vadd.f32 %v1601, %v1587
  %v1603 = vrot.slane %v1602, 4
  %v1604 = vadd.f32 %v1602, %v1603
  %v1605 = vrot.slane %v1604, 2
  %v1606 = vadd.f32 %v1604, %v1605
  %v1607 = vrot.slane %v1606, 1
  %v1608 = vadd.f32 %v1606, %v1607
  %1610 = vrot.lane.b32.xlu0 %v1571, 96
  %v1611 = vpop.permute.xlu0 %1610
  %v1613 = vadd.f32 %v1571, %v1611
  %1615 = vrot.lane.b32.xlu0 %v1608, 96
  %v1616 = vpop.permute.xlu0 %1615
  %v1618 = vadd.f32 %v1608, %v1616
  %1619 = vrot.lane.b32.xlu0 %v1571, 64
  %v1620 = vpop.permute.xlu0 %1619
  %v1622 = vadd.f32 %v1613, %v1620
  %1623 = vrot.lane.b32.xlu0 %v1608, 64
  %v1624 = vpop.permute.xlu0 %1623
  %v1626 = vadd.f32 %v1618, %v1624
  %1627 = vrot.lane.b32.xlu0 %v1571, 32
  %v1628 = vpop.permute.xlu0 %1627
  %v1630 = vadd.f32 %v1622, %v1628
  %1631 = vrot.lane.b32.xlu0 %v1608, 32
  %v1632 = vpop.permute.xlu0 %1631
  %v1634 = vadd.f32 %v1626, %v1632
  %v1635 = vmul.f32 %v1630, 0.001953125
  %v1636 = vmul.f32 %v1634, 0.001953125
  %v1637 = vmul.f32 %v1635, %v1635
  %v1638 = vsub.f32 %v1636, %v1637
  %v1639 = vadd.f32 %v1638, 1e-05
  %v1640 = vrsqrt.pop %v1639
  %1642 = vrot.lane.b32.xlu0 %v1635, 32
  %v1643 = vpop.permute.xlu0 %1642
  %1645 = vrot.lane.b32.xlu0 %v1635, 64
  %v1646 = vpop.permute.xlu0 %1645
  %1648 = vrot.lane.b32.xlu0 %v1635, 96
  %v1649 = vpop.permute.xlu0 %1648
  %v1651 = vsel %vm1500, %v1635, %v1643
  %v1652 = vsel %vm1517, %v1651, %v1646
  %v1653 = vsel %vm1534, %v1652, %v1649
  %1655 = vrot.lane.b32.xlu0 %v1640, 32
  %v1656 = vpop.permute.xlu0 %1655
  %1658 = vrot.lane.b32.xlu0 %v1640, 64
  %v1659 = vpop.permute.xlu0 %1658
  %1661 = vrot.lane.b32.xlu0 %v1640, 96
  %v1662 = vpop.permute.xlu0 %1661
  %v1664 = vsel %vm1500, %v1640, %v1656
  %v1665 = vsel %vm1517, %v1664, %v1659
  %v1666 = vsel %vm1534, %v1665, %v1662
  %v1667 = vld [vmem:[%s2] sm:$0x1]
  %v1668 = vmul.f32 %v1667, %v1666
  %v1669 = vld [vmem:[%s3] sm:$0x1]
  %v1670 = vmul.f32 %v1653, %v1668
  %v1671 = vsub.f32 %v1669, %v1670
  %v1673 = vlaneseq
  %v1674 = vshrl.u32 %v1673, 7
  %v1675 = vsub.s32 0, %v1674
  %v1676 = vrot.slane %v1668, %v1675
  %v1678 = vmul.f32 %v1535, %v1676
  %v1679 = vmul.f32 %v1536, %v1676
  %v1680 = vmul.f32 %v1537, %v1676
  %v1681 = vmul.f32 %v1538, %v1676
  %v1682 = vmul.f32 %v1539, %v1676
  %v1683 = vmul.f32 %v1540, %v1676
  %v1684 = vmul.f32 %v1541, %v1676
  %v1685 = vmul.f32 %v1542, %v1676
  %v1686 = vmul.f32 %v1543, %v1676
  %v1687 = vmul.f32 %v1544, %v1676
  %v1688 = vmul.f32 %v1545, %v1676
  %v1689 = vmul.f32 %v1546, %v1676
  %v1690 = vmul.f32 %v1547, %v1676
  %v1691 = vmul.f32 %v1548, %v1676
  %v1692 = vmul.f32 %v1549, %v1676
  %v1693 = vmul.f32 %v1550, %v1676
  %v1695 = vlaneseq
  %v1696 = vshrl.u32 %v1695, 7
  %v1697 = vsub.s32 0, %v1696
  %v1698 = vrot.slane %v1671, %v1697
  %v1700 = vadd.f32 %v1678, %v1698
  %v1701 = vadd.f32 %v1679, %v1698
  %v1702 = vadd.f32 %v1680, %v1698
  %v1703 = vadd.f32 %v1681, %v1698
  %v1704 = vadd.f32 %v1682, %v1698
  %v1705 = vadd.f32 %v1683, %v1698
  %v1706 = vadd.f32 %v1684, %v1698
  %v1707 = vadd.f32 %v1685, %v1698
  %v1708 = vadd.f32 %v1686, %v1698
  %v1709 = vadd.f32 %v1687, %v1698
  %v1710 = vadd.f32 %v1688, %v1698
  %v1711 = vadd.f32 %v1689, %v1698
  %v1712 = vadd.f32 %v1690, %v1698
  %v1713 = vadd.f32 %v1691, %v1698
  %v1714 = vadd.f32 %v1692, %v1698
  %v1715 = vadd.f32 %v1693, %v1698
  %v1716 = vmax.f32 %v1700, 0.0
  %v1717 = vmax.f32 %v1701, 0.0
  %v1718 = vmax.f32 %v1702, 0.0
  %v1719 = vmax.f32 %v1703, 0.0
  %v1720 = vmax.f32 %v1704, 0.0
  %v1721 = vmax.f32 %v1705, 0.0
  %v1722 = vmax.f32 %v1706, 0.0
  %v1723 = vmax.f32 %v1707, 0.0
  %v1724 = vmax.f32 %v1708, 0.0
  %v1725 = vmax.f32 %v1709, 0.0
  %v1726 = vmax.f32 %v1710, 0.0
  %v1727 = vmax.f32 %v1711, 0.0
  %v1728 = vmax.f32 %v1712, 0.0
  %v1729 = vmax.f32 %v1713, 0.0
  %v1730 = vmax.f32 %v1714, 0.0
  %v1731 = vmax.f32 %v1715, 0.0
  %v1732 = vpack.c.bf16 %v1717, %v1716
  %v1733 = vpack.c.bf16 %v1719, %v1718
  %v1734 = vpack.c.bf16 %v1721, %v1720
  %v1735 = vpack.c.bf16 %v1723, %v1722
  %v1736 = vpack.c.bf16 %v1725, %v1724
  %v1737 = vpack.c.bf16 %v1727, %v1726
  %v1738 = vpack.c.bf16 %v1729, %v1728
  %v1739 = vpack.c.bf16 %v1731, %v1730
  %v1748 = vunpack.c.l.b16 %v1732
  %v1749 = vunpack.c.h.b16 %v1732
  %v1750 = vunpack.c.l.b16 %v1733
  %v1751 = vunpack.c.h.b16 %v1733
  %v1752 = vunpack.c.l.b16 %v1734
  %v1753 = vunpack.c.h.b16 %v1734
  %v1754 = vunpack.c.l.b16 %v1735
  %v1755 = vunpack.c.h.b16 %v1735
  %v1756 = vunpack.c.l.b16 %v1736
  %v1757 = vunpack.c.h.b16 %v1736
  %v1758 = vunpack.c.l.b16 %v1737
  %v1759 = vunpack.c.h.b16 %v1737
  %v1760 = vunpack.c.l.b16 %v1738
  %v1761 = vunpack.c.h.b16 %v1738
  %v1762 = vunpack.c.l.b16 %v1739
  %v1763 = vunpack.c.h.b16 %v1739
  %v1764 = vpack.c.b16 %v1748, %v1748
  %v1765 = vpack.c.b16 %v1749, %v1749
  %v1766 = vpack.c.b16 %v1750, %v1750
  %v1767 = vpack.c.b16 %v1751, %v1751
  %v1768 = vpack.c.b16 %v1752, %v1752
  %v1769 = vpack.c.b16 %v1753, %v1753
  %v1770 = vpack.c.b16 %v1754, %v1754
  %v1771 = vpack.c.b16 %v1755, %v1755
  %v1772 = vpack.c.b16 %v1756, %v1756
  %v1773 = vpack.c.b16 %v1757, %v1757
  %v1774 = vpack.c.b16 %v1758, %v1758
  %v1775 = vpack.c.b16 %v1759, %v1759
  %v1776 = vpack.c.b16 %v1760, %v1760
  %v1777 = vpack.c.b16 %v1761, %v1761
  %v1778 = vpack.c.b16 %v1762, %v1762
  %v1779 = vpack.c.b16 %v1763, %v1763
  %1796 = vst [vmem:[%s4] sm:$0xf] %v1764
  %1797 = vst [vmem:[%s4 + $0x4] sm:$0xf] %v1765
  %1798 = vst [vmem:[%s4 + $0x8] sm:$0xf] %v1766
  %1799 = vst [vmem:[%s4 + $0xc] sm:$0xf] %v1767
  %1800 = vst [vmem:[%s4 + $0x10] sm:$0xf] %v1768
  %1801 = vst [vmem:[%s4 + $0x14] sm:$0xf] %v1769
  %1802 = vst [vmem:[%s4 + $0x18] sm:$0xf] %v1770
  %1803 = vst [vmem:[%s4 + $0x1c] sm:$0xf] %v1771
  %1804 = vst [vmem:[%s4 + $0x20] sm:$0xf] %v1772
  %1805 = vst [vmem:[%s4 + $0x24] sm:$0xf] %v1773
  %1806 = vst [vmem:[%s4 + $0x28] sm:$0xf] %v1774
  %1807 = vst [vmem:[%s4 + $0x2c] sm:$0xf] %v1775
  %1808 = vst [vmem:[%s4 + $0x30] sm:$0xf] %v1776
  %1809 = vst [vmem:[%s4 + $0x34] sm:$0xf] %v1777
  %1810 = vst [vmem:[%s4 + $0x38] sm:$0xf] %v1778
  %1811 = vst [vmem:[%s4 + $0x3c] sm:$0xf] %v1779
  // Predicated region
  $region18: #{generator_forward.6} parent=0 // pred_check
    _
  $region19: #{generator_forward.6} parent=0 // pred_check_branch
    %1813 = sbr.rel (0) target = $region21
  $region20: #{generator_forward.6} parent=0 // pred_region
    _
  $region21: #{generator_forward.6} parent=0 // pred_fallthru
    _
  // Predicated region
  $region22: #{generator_forward.6} parent=0 // pred_check
    _
  $region23: #{generator_forward.6} parent=0 // pred_check_branch
    %1815 = sbr.rel (0) target = $region25
  $region24: #{generator_forward.6} parent=0 // pred_region
    _
  $region25: #{generator_forward.6} parent=0 // pred_fallthru
    _

// kernel: generator_forward.7
$region0: #{generator_forward.7}
  #allocation0 [shape = 'u32[]', space=smem, size = 0x4, offset = 0x4, fixed_abs, tag = 'smem constant byte address 0x4 - core index']
  #allocation1 [shape = 'u32[144,128]{1,0:T(1,128)}', space=vmem, size = 0x12000, scoped, tag = 'internal scratch']
  %s0 = inlined_call_operand.vmem [shape: bf16[4,512,128], index: 0, kind: input, shape index: {}]
  %s1 = inlined_call_operand.vmem [shape: bf16[4,128,4], index: 1, kind: input, shape index: {}]
  %s2 = inlined_call_operand.vmem [shape: f32[1,4], index: 2, kind: input, shape index: {}]
  %s3 = inlined_call_operand.vmem [shape: f32[512,4], index: 3, kind: output, shape index: {}]
  %s4 = sld [smem:[#allocation0]]
  $region22: #{generator_forward.7} parent=0
    _
  %s6 = ssub.s32 1, %s4
  %s7 = scalar_select 0, %s6, %s4
  // Predicated region
  $region2: #{generator_forward.7} parent=0 // pred_check
    _
  $region3: #{generator_forward.7} parent=0 // pred_check_branch
    %9 = sbr.rel (0) target = $region5
  $region4: #{generator_forward.7} parent=0 // pred_region
    _
  $region5: #{generator_forward.7} parent=0 // pred_fallthru
    _
  // Predicated region
  $region6: #{generator_forward.7} parent=0 // pred_check
    _
  $region7: #{generator_forward.7} parent=0 // pred_check_branch
    %11 = sbr.rel (0) target = $region9
  $region8: #{generator_forward.7} parent=0 // pred_region
    _
  $region9: #{generator_forward.7} parent=0 // pred_fallthru
    _
  // Predicated region
  $region10: #{generator_forward.7} parent=0 // pred_check
    _
  $region11: #{generator_forward.7} parent=0 // pred_check_branch
    %13 = sbr.rel (0) target = $region13
  $region12: #{generator_forward.7} parent=0 // pred_region
    _
  $region13: #{generator_forward.7} parent=0 // pred_fallthru
    _
  %v15 = vld [vmem:[%s0] sm:$0xf]
  %v16 = vld [vmem:[%s0 + $0x4] sm:$0xf]
  %v17 = vld [vmem:[%s0 + $0x8] sm:$0xf]
  %v18 = vld [vmem:[%s0 + $0xc] sm:$0xf]
  %v19 = vld [vmem:[%s0 + $0x10] sm:$0xf]
  %v20 = vld [vmem:[%s0 + $0x14] sm:$0xf]
  %v21 = vld [vmem:[%s0 + $0x18] sm:$0xf]
  %v22 = vld [vmem:[%s0 + $0x1c] sm:$0xf]
  %v23 = vld [vmem:[%s0 + $0x20] sm:$0xf]
  %v24 = vld [vmem:[%s0 + $0x24] sm:$0xf]
  %v25 = vld [vmem:[%s0 + $0x28] sm:$0xf]
  %v26 = vld [vmem:[%s0 + $0x2c] sm:$0xf]
  %v27 = vld [vmem:[%s0 + $0x30] sm:$0xf]
  %v28 = vld [vmem:[%s0 + $0x34] sm:$0xf]
  %v29 = vld [vmem:[%s0 + $0x38] sm:$0xf]
  %v30 = vld [vmem:[%s0 + $0x3c] sm:$0xf]
  %v31 = vld [vmem:[%s0 + $0x40] sm:$0xf]
  %v32 = vld [vmem:[%s0 + $0x44] sm:$0xf]
  %v33 = vld [vmem:[%s0 + $0x48] sm:$0xf]
  %v34 = vld [vmem:[%s0 + $0x4c] sm:$0xf]
  %v35 = vld [vmem:[%s0 + $0x50] sm:$0xf]
  %v36 = vld [vmem:[%s0 + $0x54] sm:$0xf]
  %v37 = vld [vmem:[%s0 + $0x58] sm:$0xf]
  %v38 = vld [vmem:[%s0 + $0x5c] sm:$0xf]
  %v39 = vld [vmem:[%s0 + $0x60] sm:$0xf]
  %v40 = vld [vmem:[%s0 + $0x64] sm:$0xf]
  %v41 = vld [vmem:[%s0 + $0x68] sm:$0xf]
  %v42 = vld [vmem:[%s0 + $0x6c] sm:$0xf]
  %v43 = vld [vmem:[%s0 + $0x70] sm:$0xf]
  %v44 = vld [vmem:[%s0 + $0x74] sm:$0xf]
  %v45 = vld [vmem:[%s0 + $0x78] sm:$0xf]
  %v46 = vld [vmem:[%s0 + $0x7c] sm:$0xf]
  %v47 = vld [vmem:[%s0 + $0x80] sm:$0xf]
  %v48 = vld [vmem:[%s0 + $0x84] sm:$0xf]
  %v49 = vld [vmem:[%s0 + $0x88] sm:$0xf]
  %v50 = vld [vmem:[%s0 + $0x8c] sm:$0xf]
  %v51 = vld [vmem:[%s0 + $0x90] sm:$0xf]
  %v52 = vld [vmem:[%s0 + $0x94] sm:$0xf]
  %v53 = vld [vmem:[%s0 + $0x98] sm:$0xf]
  %v54 = vld [vmem:[%s0 + $0x9c] sm:$0xf]
  %v55 = vld [vmem:[%s0 + $0xa0] sm:$0xf]
  %v56 = vld [vmem:[%s0 + $0xa4] sm:$0xf]
  %v57 = vld [vmem:[%s0 + $0xa8] sm:$0xf]
  %v58 = vld [vmem:[%s0 + $0xac] sm:$0xf]
  %v59 = vld [vmem:[%s0 + $0xb0] sm:$0xf]
  %v60 = vld [vmem:[%s0 + $0xb4] sm:$0xf]
  %v61 = vld [vmem:[%s0 + $0xb8] sm:$0xf]
  %v62 = vld [vmem:[%s0 + $0xbc] sm:$0xf]
  %v63 = vld [vmem:[%s0 + $0xc0] sm:$0xf]
  %v64 = vld [vmem:[%s0 + $0xc4] sm:$0xf]
  %v65 = vld [vmem:[%s0 + $0xc8] sm:$0xf]
  %v66 = vld [vmem:[%s0 + $0xcc] sm:$0xf]
  %v67 = vld [vmem:[%s0 + $0xd0] sm:$0xf]
  %v68 = vld [vmem:[%s0 + $0xd4] sm:$0xf]
  %v69 = vld [vmem:[%s0 + $0xd8] sm:$0xf]
  %v70 = vld [vmem:[%s0 + $0xdc] sm:$0xf]
  %v71 = vld [vmem:[%s0 + $0xe0] sm:$0xf]
  %v72 = vld [vmem:[%s0 + $0xe4] sm:$0xf]
  %v73 = vld [vmem:[%s0 + $0xe8] sm:$0xf]
  %v74 = vld [vmem:[%s0 + $0xec] sm:$0xf]
  %v75 = vld [vmem:[%s0 + $0xf0] sm:$0xf]
  %v76 = vld [vmem:[%s0 + $0xf4] sm:$0xf]
  %v77 = vld [vmem:[%s0 + $0xf8] sm:$0xf]
  %v78 = vld [vmem:[%s0 + $0xfc] sm:$0xf]
  %v79 = vld [vmem:[%s1] sm:$0xf]
  %v80 = vld [vmem:[%s1 + $0x4] sm:$0xf]
  %v81 = vld [vmem:[%s1 + $0x8] sm:$0xf]
  %v82 = vld [vmem:[%s1 + $0xc] sm:$0xf]
  %v83 = vld [vmem:[%s1 + $0x10] sm:$0xf]
  %v84 = vld [vmem:[%s1 + $0x14] sm:$0xf]
  %v85 = vld [vmem:[%s1 + $0x18] sm:$0xf]
  %v86 = vld [vmem:[%s1 + $0x1c] sm:$0xf]
  %v87 = vld [vmem:[%s1 + $0x20] sm:$0xf]
  %v88 = vld [vmem:[%s1 + $0x24] sm:$0xf]
  %v89 = vld [vmem:[%s1 + $0x28] sm:$0xf]
  %v90 = vld [vmem:[%s1 + $0x2c] sm:$0xf]
  %v91 = vld [vmem:[%s1 + $0x30] sm:$0xf]
  %v92 = vld [vmem:[%s1 + $0x34] sm:$0xf]
  %v93 = vld [vmem:[%s1 + $0x38] sm:$0xf]
  %v94 = vld [vmem:[%s1 + $0x3c] sm:$0xf]
  %s95 = scalar_lea.vmem %s0, 256
  %v96 = vld [vmem:[%s95] sm:$0xf]
  %v97 = vld [vmem:[%s95 + $0x4] sm:$0xf]
  %v98 = vld [vmem:[%s95 + $0x8] sm:$0xf]
  %v99 = vld [vmem:[%s95 + $0xc] sm:$0xf]
  %v100 = vld [vmem:[%s95 + $0x10] sm:$0xf]
  %v101 = vld [vmem:[%s95 + $0x14] sm:$0xf]
  %v102 = vld [vmem:[%s95 + $0x18] sm:$0xf]
  %v103 = vld [vmem:[%s95 + $0x1c] sm:$0xf]
  %v104 = vld [vmem:[%s95 + $0x20] sm:$0xf]
  %v105 = vld [vmem:[%s95 + $0x24] sm:$0xf]
  %v106 = vld [vmem:[%s95 + $0x28] sm:$0xf]
  %v107 = vld [vmem:[%s95 + $0x2c] sm:$0xf]
  %v108 = vld [vmem:[%s95 + $0x30] sm:$0xf]
  %v109 = vld [vmem:[%s95 + $0x34] sm:$0xf]
  %v110 = vld [vmem:[%s95 + $0x38] sm:$0xf]
  %v111 = vld [vmem:[%s95 + $0x3c] sm:$0xf]
  %v112 = vld [vmem:[%s95 + $0x40] sm:$0xf]
  %v113 = vld [vmem:[%s95 + $0x44] sm:$0xf]
  %v114 = vld [vmem:[%s95 + $0x48] sm:$0xf]
  %v115 = vld [vmem:[%s95 + $0x4c] sm:$0xf]
  %v116 = vld [vmem:[%s95 + $0x50] sm:$0xf]
  %v117 = vld [vmem:[%s95 + $0x54] sm:$0xf]
  %v118 = vld [vmem:[%s95 + $0x58] sm:$0xf]
  %v119 = vld [vmem:[%s95 + $0x5c] sm:$0xf]
  %v120 = vld [vmem:[%s95 + $0x60] sm:$0xf]
  %v121 = vld [vmem:[%s95 + $0x64] sm:$0xf]
  %v122 = vld [vmem:[%s95 + $0x68] sm:$0xf]
  %v123 = vld [vmem:[%s95 + $0x6c] sm:$0xf]
  %v124 = vld [vmem:[%s95 + $0x70] sm:$0xf]
  %v125 = vld [vmem:[%s95 + $0x74] sm:$0xf]
  %v126 = vld [vmem:[%s95 + $0x78] sm:$0xf]
  %v127 = vld [vmem:[%s95 + $0x7c] sm:$0xf]
  %v128 = vld [vmem:[%s95 + $0x80] sm:$0xf]
  %v129 = vld [vmem:[%s95 + $0x84] sm:$0xf]
  %v130 = vld [vmem:[%s95 + $0x88] sm:$0xf]
  %v131 = vld [vmem:[%s95 + $0x8c] sm:$0xf]
  %v132 = vld [vmem:[%s95 + $0x90] sm:$0xf]
  %v133 = vld [vmem:[%s95 + $0x94] sm:$0xf]
  %v134 = vld [vmem:[%s95 + $0x98] sm:$0xf]
  %v135 = vld [vmem:[%s95 + $0x9c] sm:$0xf]
  %v136 = vld [vmem:[%s95 + $0xa0] sm:$0xf]
  %v137 = vld [vmem:[%s95 + $0xa4] sm:$0xf]
  %v138 = vld [vmem:[%s95 + $0xa8] sm:$0xf]
  %v139 = vld [vmem:[%s95 + $0xac] sm:$0xf]
  %v140 = vld [vmem:[%s95 + $0xb0] sm:$0xf]
  %v141 = vld [vmem:[%s95 + $0xb4] sm:$0xf]
  %v142 = vld [vmem:[%s95 + $0xb8] sm:$0xf]
  %v143 = vld [vmem:[%s95 + $0xbc] sm:$0xf]
  %v144 = vld [vmem:[%s95 + $0xc0] sm:$0xf]
  %v145 = vld [vmem:[%s95 + $0xc4] sm:$0xf]
  %v146 = vld [vmem:[%s95 + $0xc8] sm:$0xf]
  %v147 = vld [vmem:[%s95 + $0xcc] sm:$0xf]
  %v148 = vld [vmem:[%s95 + $0xd0] sm:$0xf]
  %v149 = vld [vmem:[%s95 + $0xd4] sm:$0xf]
  %v150 = vld [vmem:[%s95 + $0xd8] sm:$0xf]
  %v151 = vld [vmem:[%s95 + $0xdc] sm:$0xf]
  %v152 = vld [vmem:[%s95 + $0xe0] sm:$0xf]
  %v153 = vld [vmem:[%s95 + $0xe4] sm:$0xf]
  %v154 = vld [vmem:[%s95 + $0xe8] sm:$0xf]
  %v155 = vld [vmem:[%s95 + $0xec] sm:$0xf]
  %v156 = vld [vmem:[%s95 + $0xf0] sm:$0xf]
  %v157 = vld [vmem:[%s95 + $0xf4] sm:$0xf]
  %v158 = vld [vmem:[%s95 + $0xf8] sm:$0xf]
  %v159 = vld [vmem:[%s95 + $0xfc] sm:$0xf]
  %s160 = scalar_lea.vmem %s1, 64
  %v161 = vld [vmem:[%s160] sm:$0xf]
  %v162 = vld [vmem:[%s160 + $0x4] sm:$0xf]
  %v163 = vld [vmem:[%s160 + $0x8] sm:$0xf]
  %v164 = vld [vmem:[%s160 + $0xc] sm:$0xf]
  %v165 = vld [vmem:[%s160 + $0x10] sm:$0xf]
  %v166 = vld [vmem:[%s160 + $0x14] sm:$0xf]
  %v167 = vld [vmem:[%s160 + $0x18] sm:$0xf]
  %v168 = vld [vmem:[%s160 + $0x1c] sm:$0xf]
  %v169 = vld [vmem:[%s160 + $0x20] sm:$0xf]
  %v170 = vld [vmem:[%s160 + $0x24] sm:$0xf]
  %v171 = vld [vmem:[%s160 + $0x28] sm:$0xf]
  %v172 = vld [vmem:[%s160 + $0x2c] sm:$0xf]
  %v173 = vld [vmem:[%s160 + $0x30] sm:$0xf]
  %v174 = vld [vmem:[%s160 + $0x34] sm:$0xf]
  %v175 = vld [vmem:[%s160 + $0x38] sm:$0xf]
  %v176 = vld [vmem:[%s160 + $0x3c] sm:$0xf]
  %v241 = vunpack.c.l.b16 %v96
  %v242 = vunpack.c.l.b16 %v97
  %v243 = vunpack.c.l.b16 %v98
  %v244 = vunpack.c.l.b16 %v99
  %v245 = vunpack.c.l.b16 %v100
  %v246 = vunpack.c.l.b16 %v101
  %v247 = vunpack.c.l.b16 %v102
  %v248 = vunpack.c.l.b16 %v103
  %v249 = vunpack.c.l.b16 %v104
  %v250 = vunpack.c.l.b16 %v105
  %v251 = vunpack.c.l.b16 %v106
  %v252 = vunpack.c.l.b16 %v107
  %v253 = vunpack.c.l.b16 %v108
  %v254 = vunpack.c.l.b16 %v109
  %v255 = vunpack.c.l.b16 %v110
  %v256 = vunpack.c.l.b16 %v111
  %v257 = vunpack.c.l.b16 %v112
  %v258 = vunpack.c.l.b16 %v113
  %v259 = vunpack.c.l.b16 %v114
  %v260 = vunpack.c.l.b16 %v115
  %v261 = vunpack.c.l.b16 %v116
  %v262 = vunpack.c.l.b16 %v117
  %v263 = vunpack.c.l.b16 %v118
  %v264 = vunpack.c.l.b16 %v119
  %v265 = vunpack.c.l.b16 %v120
  %v266 = vunpack.c.l.b16 %v121
  %v267 = vunpack.c.l.b16 %v122
  %v268 = vunpack.c.l.b16 %v123
  %v269 = vunpack.c.l.b16 %v124
  %v270 = vunpack.c.l.b16 %v125
  %v271 = vunpack.c.l.b16 %v126
  %v272 = vunpack.c.l.b16 %v127
  %v273 = vunpack.c.l.b16 %v128
  %v274 = vunpack.c.l.b16 %v129
  %v275 = vunpack.c.l.b16 %v130
  %v276 = vunpack.c.l.b16 %v131
  %v277 = vunpack.c.l.b16 %v132
  %v278 = vunpack.c.l.b16 %v133
  %v279 = vunpack.c.l.b16 %v134
  %v280 = vunpack.c.l.b16 %v135
  %v281 = vunpack.c.l.b16 %v136
  %v282 = vunpack.c.l.b16 %v137
  %v283 = vunpack.c.l.b16 %v138
  %v284 = vunpack.c.l.b16 %v139
  %v285 = vunpack.c.l.b16 %v140
  %v286 = vunpack.c.l.b16 %v141
  %v287 = vunpack.c.l.b16 %v142
  %v288 = vunpack.c.l.b16 %v143
  %v289 = vunpack.c.l.b16 %v144
  %v290 = vunpack.c.l.b16 %v145
  %v291 = vunpack.c.l.b16 %v146
  %v292 = vunpack.c.l.b16 %v147
  %v293 = vunpack.c.l.b16 %v148
  %v294 = vunpack.c.l.b16 %v149
  %v295 = vunpack.c.l.b16 %v150
  %v296 = vunpack.c.l.b16 %v151
  %v297 = vunpack.c.l.b16 %v152
  %v298 = vunpack.c.l.b16 %v153
  %v299 = vunpack.c.l.b16 %v154
  %v300 = vunpack.c.l.b16 %v155
  %v301 = vunpack.c.l.b16 %v156
  %v302 = vunpack.c.l.b16 %v157
  %v303 = vunpack.c.l.b16 %v158
  %v304 = vunpack.c.l.b16 %v159
  %v305 = vpack.c.b16 %v242, %v241
  %v306 = vpack.c.b16 %v244, %v243
  %v307 = vpack.c.b16 %v246, %v245
  %v308 = vpack.c.b16 %v248, %v247
  %v309 = vpack.c.b16 %v250, %v249
  %v310 = vpack.c.b16 %v252, %v251
  %v311 = vpack.c.b16 %v254, %v253
  %v312 = vpack.c.b16 %v256, %v255
  %v313 = vpack.c.b16 %v258, %v257
  %v314 = vpack.c.b16 %v260, %v259
  %v315 = vpack.c.b16 %v262, %v261
  %v316 = vpack.c.b16 %v264, %v263
  %v317 = vpack.c.b16 %v266, %v265
  %v318 = vpack.c.b16 %v268, %v267
  %v319 = vpack.c.b16 %v270, %v269
  %v320 = vpack.c.b16 %v272, %v271
  %v321 = vpack.c.b16 %v274, %v273
  %v322 = vpack.c.b16 %v276, %v275
  %v323 = vpack.c.b16 %v278, %v277
  %v324 = vpack.c.b16 %v280, %v279
  %v325 = vpack.c.b16 %v282, %v281
  %v326 = vpack.c.b16 %v284, %v283
  %v327 = vpack.c.b16 %v286, %v285
  %v328 = vpack.c.b16 %v288, %v287
  %v329 = vpack.c.b16 %v290, %v289
  %v330 = vpack.c.b16 %v292, %v291
  %v331 = vpack.c.b16 %v294, %v293
  %v332 = vpack.c.b16 %v296, %v295
  %v333 = vpack.c.b16 %v298, %v297
  %v334 = vpack.c.b16 %v300, %v299
  %v335 = vpack.c.b16 %v302, %v301
  %v336 = vpack.c.b16 %v304, %v303
  %v385 = vunpack.c.l.b16 %v161
  %v386 = vunpack.c.l.b16 %v162
  %v387 = vunpack.c.l.b16 %v163
  %v388 = vunpack.c.l.b16 %v164
  %v389 = vunpack.c.l.b16 %v165
  %v390 = vunpack.c.l.b16 %v166
  %v391 = vunpack.c.l.b16 %v167
  %v392 = vunpack.c.l.b16 %v168
  %v393 = vunpack.c.l.b16 %v169
  %v394 = vunpack.c.l.b16 %v170
  %v395 = vunpack.c.l.b16 %v171
  %v396 = vunpack.c.l.b16 %v172
  %v397 = vunpack.c.l.b16 %v173
  %v398 = vunpack.c.l.b16 %v174
  %v399 = vunpack.c.l.b16 %v175
  %v400 = vunpack.c.l.b16 %v176
  %v401 = vpack.c.b16 %v386, %v385
  %v402 = vpack.c.b16 %v388, %v387
  %v403 = vpack.c.b16 %v390, %v389
  %v404 = vpack.c.b16 %v392, %v391
  %v405 = vpack.c.b16 %v394, %v393
  %v406 = vpack.c.b16 %v396, %v395
  %v407 = vpack.c.b16 %v398, %v397
  %v408 = vpack.c.b16 %v400, %v399
  %417 = vmatprep.subr.bf16.mxu0 0
  %418 = vmatpush1.bf16.msra.mxu0 %v408
  %419 = vmatprep.subr.bf16.mxu0 0
  %420 = vmatpush1.bf16.msra.mxu0 %v407
  %421 = vmatprep.subr.bf16.mxu0 0
  %422 = vmatpush1.bf16.msra.mxu0 %v406
  %423 = vmatprep.subr.bf16.mxu0 0
  %424 = vmatpush1.bf16.msra.mxu0 %v405
  %425 = vmatprep.subr.bf16.mxu0 0
  %426 = vmatpush1.bf16.msra.mxu0 %v404
  %427 = vmatprep.subr.bf16.mxu0 0
  %428 = vmatpush1.bf16.msra.mxu0 %v403
  %429 = vmatprep.subr.bf16.mxu0 0
  %430 = vmatpush1.bf16.msra.mxu0 %v402
  %431 = vmatprep.subr.bf16.mxu0 0
  %432 = vmatpush1.bf16.msra.mxu0 %v401
  %433 = vmatprep.subr.bf16.mxu0 0
  %434 = vmatpush2.bf16.msra.mxu0 0
  %435 = vmatprep.subr.bf16.mxu0 0
  %436 = vmatpush2.bf16.msra.mxu0 0
  %437 = vmatprep.subr.bf16.mxu0 0
  %438 = vmatpush2.bf16.msra.mxu0 0
  %439 = vmatprep.subr.bf16.mxu0 0
  %440 = vmatpush2.bf16.msra.mxu0 0
  %441 = vmatprep.subr.bf16.mxu0 0
  %442 = vmatpush2.bf16.msra.mxu0 0
  %443 = vmatprep.subr.bf16.mxu0 0
  %444 = vmatpush2.bf16.msra.mxu0 0
  %445 = vmatprep.subr.bf16.mxu0 0
  %446 = vmatpush2.bf16.msra.mxu0 0
  %447 = vmatprep.subr.bf16.mxu0 0
  %448 = vmatpush2.bf16.msra.mxu0 0
  %449 = vmatprep.mubr.bf16.mxu0 0
  %450 = vmatmul.mubr.bf16.gmra.mxu0 %v305
  %v451 = vpop.f32.mrf.mxu0
  %v452 = vadd.f32 0.0, %v451
  %v453 = vpop.f32.mrf.mxu0
  %v454 = vpop.f32.mrf.mxu0
  %v455 = vadd.f32 0.0, %v454
  %v456 = vpop.f32.mrf.mxu0
  %457 = vmatprep.mubr.bf16.mxu0 0
  %458 = vmatmul.mubr.bf16.gmra.mxu0 %v306
  %v459 = vpop.f32.mrf.mxu0
  %v460 = vadd.f32 0.0, %v459
  %v461 = vpop.f32.mrf.mxu0
  %v462 = vpop.f32.mrf.mxu0
  %v463 = vadd.f32 0.0, %v462
  %v464 = vpop.f32.mrf.mxu0
  %465 = vmatprep.mubr.bf16.mxu0 0
  %466 = vmatmul.mubr.bf16.gmra.mxu0 %v307
  %v467 = vpop.f32.mrf.mxu0
  %v468 = vadd.f32 0.0, %v467
  %v469 = vpop.f32.mrf.mxu0
  %v470 = vpop.f32.mrf.mxu0
  %v471 = vadd.f32 0.0, %v470
  %v472 = vpop.f32.mrf.mxu0
  %473 = vmatprep.mubr.bf16.mxu0 0
  %474 = vmatmul.mubr.bf16.gmra.mxu0 %v308
  %v475 = vpop.f32.mrf.mxu0
  %v476 = vadd.f32 0.0, %v475
  %v477 = vpop.f32.mrf.mxu0
  %v478 = vpop.f32.mrf.mxu0
  %v479 = vadd.f32 0.0, %v478
  %v480 = vpop.f32.mrf.mxu0
  %481 = vmatprep.mubr.bf16.mxu0 0
  %482 = vmatmul.mubr.bf16.gmra.mxu0 %v309
  %v483 = vpop.f32.mrf.mxu0
  %v484 = vadd.f32 0.0, %v483
  %v485 = vpop.f32.mrf.mxu0
  %v486 = vpop.f32.mrf.mxu0
  %v487 = vadd.f32 0.0, %v486
  %v488 = vpop.f32.mrf.mxu0
  %489 = vmatprep.mubr.bf16.mxu0 0
  %490 = vmatmul.mubr.bf16.gmra.mxu0 %v310
  %v491 = vpop.f32.mrf.mxu0
  %v492 = vadd.f32 0.0, %v491
  %v493 = vpop.f32.mrf.mxu0
  %v494 = vpop.f32.mrf.mxu0
  %v495 = vadd.f32 0.0, %v494
  %v496 = vpop.f32.mrf.mxu0
  %497 = vmatprep.mubr.bf16.mxu0 0
  %498 = vmatmul.mubr.bf16.gmra.mxu0 %v311
  %v499 = vpop.f32.mrf.mxu0
  %v500 = vadd.f32 0.0, %v499
  %v501 = vpop.f32.mrf.mxu0
  %v502 = vpop.f32.mrf.mxu0
  %v503 = vadd.f32 0.0, %v502
  %v504 = vpop.f32.mrf.mxu0
  %505 = vmatprep.mubr.bf16.mxu0 0
  %506 = vmatmul.mubr.bf16.gmra.mxu0 %v312
  %v507 = vpop.f32.mrf.mxu0
  %v508 = vadd.f32 0.0, %v507
  %v509 = vpop.f32.mrf.mxu0
  %v510 = vpop.f32.mrf.mxu0
  %v511 = vadd.f32 0.0, %v510
  %v512 = vpop.f32.mrf.mxu0
  %513 = vmatprep.mubr.bf16.mxu0 0
  %514 = vmatmul.mubr.bf16.gmra.mxu0 %v313
  %v515 = vpop.f32.mrf.mxu0
  %v516 = vadd.f32 0.0, %v515
  %v517 = vpop.f32.mrf.mxu0
  %v518 = vpop.f32.mrf.mxu0
  %v519 = vadd.f32 0.0, %v518
  %v520 = vpop.f32.mrf.mxu0
  %521 = vmatprep.mubr.bf16.mxu0 0
  %522 = vmatmul.mubr.bf16.gmra.mxu0 %v314
  %v523 = vpop.f32.mrf.mxu0
  %v524 = vadd.f32 0.0, %v523
  %v525 = vpop.f32.mrf.mxu0
  %v526 = vpop.f32.mrf.mxu0
  %v527 = vadd.f32 0.0, %v526
  %v528 = vpop.f32.mrf.mxu0
  %529 = vmatprep.mubr.bf16.mxu0 0
  %530 = vmatmul.mubr.bf16.gmra.mxu0 %v315
  %v531 = vpop.f32.mrf.mxu0
  %v532 = vadd.f32 0.0, %v531
  %v533 = vpop.f32.mrf.mxu0
  %v534 = vpop.f32.mrf.mxu0
  %v535 = vadd.f32 0.0, %v534
  %v536 = vpop.f32.mrf.mxu0
  %537 = vmatprep.mubr.bf16.mxu0 0
  %538 = vmatmul.mubr.bf16.gmra.mxu0 %v316
  %v539 = vpop.f32.mrf.mxu0
  %v540 = vadd.f32 0.0, %v539
  %v541 = vpop.f32.mrf.mxu0
  %v542 = vpop.f32.mrf.mxu0
  %v543 = vadd.f32 0.0, %v542
  %v544 = vpop.f32.mrf.mxu0
  %545 = vmatprep.mubr.bf16.mxu0 0
  %546 = vmatmul.mubr.bf16.gmra.mxu0 %v317
  %v547 = vpop.f32.mrf.mxu0
  %v548 = vadd.f32 0.0, %v547
  %v549 = vpop.f32.mrf.mxu0
  %v550 = vpop.f32.mrf.mxu0
  %v551 = vadd.f32 0.0, %v550
  %v552 = vpop.f32.mrf.mxu0
  %553 = vmatprep.mubr.bf16.mxu0 0
  %554 = vmatmul.mubr.bf16.gmra.mxu0 %v318
  %v555 = vpop.f32.mrf.mxu0
  %v556 = vadd.f32 0.0, %v555
  %v557 = vpop.f32.mrf.mxu0
  %v558 = vpop.f32.mrf.mxu0
  %v559 = vadd.f32 0.0, %v558
  %v560 = vpop.f32.mrf.mxu0
  %561 = vmatprep.mubr.bf16.mxu0 0
  %562 = vmatmul.mubr.bf16.gmra.mxu0 %v319
  %v563 = vpop.f32.mrf.mxu0
  %v564 = vadd.f32 0.0, %v563
  %v565 = vpop.f32.mrf.mxu0
  %v566 = vpop.f32.mrf.mxu0
  %v567 = vadd.f32 0.0, %v566
  %v568 = vpop.f32.mrf.mxu0
  %569 = vmatprep.mubr.bf16.mxu0 0
  %570 = vmatmul.mubr.bf16.gmra.mxu0 %v320
  %v571 = vpop.f32.mrf.mxu0
  %v572 = vadd.f32 0.0, %v571
  %v573 = vpop.f32.mrf.mxu0
  %v574 = vpop.f32.mrf.mxu0
  %v575 = vadd.f32 0.0, %v574
  %v576 = vpop.f32.mrf.mxu0
  %577 = vmatprep.mubr.bf16.mxu0 0
  %578 = vmatmul.mubr.bf16.gmra.mxu0 %v321
  %v579 = vpop.f32.mrf.mxu0
  %v580 = vadd.f32 0.0, %v579
  %v581 = vpop.f32.mrf.mxu0
  %v582 = vpop.f32.mrf.mxu0
  %v583 = vadd.f32 0.0, %v582
  %v584 = vpop.f32.mrf.mxu0
  %585 = vmatprep.mubr.bf16.mxu0 0
  %586 = vmatmul.mubr.bf16.gmra.mxu0 %v322
  %v587 = vpop.f32.mrf.mxu0
  %v588 = vadd.f32 0.0, %v587
  %v589 = vpop.f32.mrf.mxu0
  %v590 = vpop.f32.mrf.mxu0
  %v591 = vadd.f32 0.0, %v590
  %v592 = vpop.f32.mrf.mxu0
  %593 = vmatprep.mubr.bf16.mxu0 0
  %594 = vmatmul.mubr.bf16.gmra.mxu0 %v323
  %v595 = vpop.f32.mrf.mxu0
  %v596 = vadd.f32 0.0, %v595
  %v597 = vpop.f32.mrf.mxu0
  %v598 = vpop.f32.mrf.mxu0
  %v599 = vadd.f32 0.0, %v598
  %v600 = vpop.f32.mrf.mxu0
  %601 = vmatprep.mubr.bf16.mxu0 0
  %602 = vmatmul.mubr.bf16.gmra.mxu0 %v324
  %v603 = vpop.f32.mrf.mxu0
  %v604 = vadd.f32 0.0, %v603
  %v605 = vpop.f32.mrf.mxu0
  %v606 = vpop.f32.mrf.mxu0
  %v607 = vadd.f32 0.0, %v606
  %v608 = vpop.f32.mrf.mxu0
  %609 = vmatprep.mubr.bf16.mxu0 0
  %610 = vmatmul.mubr.bf16.gmra.mxu0 %v325
  %v611 = vpop.f32.mrf.mxu0
  %v612 = vadd.f32 0.0, %v611
  %v613 = vpop.f32.mrf.mxu0
  %v614 = vpop.f32.mrf.mxu0
  %v615 = vadd.f32 0.0, %v614
  %v616 = vpop.f32.mrf.mxu0
  %617 = vmatprep.mubr.bf16.mxu0 0
  %618 = vmatmul.mubr.bf16.gmra.mxu0 %v326
  %v619 = vpop.f32.mrf.mxu0
  %v620 = vadd.f32 0.0, %v619
  %v621 = vpop.f32.mrf.mxu0
  %v622 = vpop.f32.mrf.mxu0
  %v623 = vadd.f32 0.0, %v622
  %v624 = vpop.f32.mrf.mxu0
  %625 = vmatprep.mubr.bf16.mxu0 0
  %626 = vmatmul.mubr.bf16.gmra.mxu0 %v327
  %v627 = vpop.f32.mrf.mxu0
  %v628 = vadd.f32 0.0, %v627
  %v629 = vpop.f32.mrf.mxu0
  %v630 = vpop.f32.mrf.mxu0
  %v631 = vadd.f32 0.0, %v630
  %v632 = vpop.f32.mrf.mxu0
  %633 = vmatprep.mubr.bf16.mxu0 0
  %634 = vmatmul.mubr.bf16.gmra.mxu0 %v328
  %v635 = vpop.f32.mrf.mxu0
  %v636 = vadd.f32 0.0, %v635
  %v637 = vpop.f32.mrf.mxu0
  %v638 = vpop.f32.mrf.mxu0
  %v639 = vadd.f32 0.0, %v638
  %v640 = vpop.f32.mrf.mxu0
  %641 = vmatprep.mubr.bf16.mxu0 0
  %642 = vmatmul.mubr.bf16.gmra.mxu0 %v329
  %v643 = vpop.f32.mrf.mxu0
  %v644 = vadd.f32 0.0, %v643
  %v645 = vpop.f32.mrf.mxu0
  %v646 = vpop.f32.mrf.mxu0
  %v647 = vadd.f32 0.0, %v646
  %v648 = vpop.f32.mrf.mxu0
  %649 = vmatprep.mubr.bf16.mxu0 0
  %650 = vmatmul.mubr.bf16.gmra.mxu0 %v330
  %v651 = vpop.f32.mrf.mxu0
  %v652 = vadd.f32 0.0, %v651
  %v653 = vpop.f32.mrf.mxu0
  %v654 = vpop.f32.mrf.mxu0
  %v655 = vadd.f32 0.0, %v654
  %v656 = vpop.f32.mrf.mxu0
  %657 = vmatprep.mubr.bf16.mxu0 0
  %658 = vmatmul.mubr.bf16.gmra.mxu0 %v331
  %v659 = vpop.f32.mrf.mxu0
  %v660 = vadd.f32 0.0, %v659
  %v661 = vpop.f32.mrf.mxu0
  %v662 = vpop.f32.mrf.mxu0
  %v663 = vadd.f32 0.0, %v662
  %v664 = vpop.f32.mrf.mxu0
  %665 = vmatprep.mubr.bf16.mxu0 0
  %666 = vmatmul.mubr.bf16.gmra.mxu0 %v332
  %v667 = vpop.f32.mrf.mxu0
  %v668 = vadd.f32 0.0, %v667
  %v669 = vpop.f32.mrf.mxu0
  %v670 = vpop.f32.mrf.mxu0
  %v671 = vadd.f32 0.0, %v670
  %v672 = vpop.f32.mrf.mxu0
  %673 = vmatprep.mubr.bf16.mxu0 0
  %674 = vmatmul.mubr.bf16.gmra.mxu0 %v333
  %v675 = vpop.f32.mrf.mxu0
  %v676 = vadd.f32 0.0, %v675
  %v677 = vpop.f32.mrf.mxu0
  %v678 = vpop.f32.mrf.mxu0
  %v679 = vadd.f32 0.0, %v678
  %v680 = vpop.f32.mrf.mxu0
  %681 = vmatprep.mubr.bf16.mxu0 0
  %682 = vmatmul.mubr.bf16.gmra.mxu0 %v334
  %v683 = vpop.f32.mrf.mxu0
  %v684 = vadd.f32 0.0, %v683
  %v685 = vpop.f32.mrf.mxu0
  %v686 = vpop.f32.mrf.mxu0
  %v687 = vadd.f32 0.0, %v686
  %v688 = vpop.f32.mrf.mxu0
  %689 = vmatprep.mubr.bf16.mxu0 0
  %690 = vmatmul.mubr.bf16.gmra.mxu0 %v335
  %v691 = vpop.f32.mrf.mxu0
  %v692 = vadd.f32 0.0, %v691
  %v693 = vpop.f32.mrf.mxu0
  %v694 = vpop.f32.mrf.mxu0
  %v695 = vadd.f32 0.0, %v694
  %v696 = vpop.f32.mrf.mxu0
  %697 = vmatprep.mubr.bf16.mxu0 0
  %698 = vmatmul.mubr.bf16.gmra.mxu0 %v336
  %v699 = vpop.f32.mrf.mxu0
  %v700 = vadd.f32 0.0, %v699
  %v701 = vpop.f32.mrf.mxu0
  %v702 = vpop.f32.mrf.mxu0
  %v703 = vadd.f32 0.0, %v702
  %v704 = vpop.f32.mrf.mxu0
  %705 = vdwg.mxu0
  %v770 = vunpack.c.l.b16 %v15
  %v771 = vunpack.c.l.b16 %v16
  %v772 = vunpack.c.l.b16 %v17
  %v773 = vunpack.c.l.b16 %v18
  %v774 = vunpack.c.l.b16 %v19
  %v775 = vunpack.c.l.b16 %v20
  %v776 = vunpack.c.l.b16 %v21
  %v777 = vunpack.c.l.b16 %v22
  %v778 = vunpack.c.l.b16 %v23
  %v779 = vunpack.c.l.b16 %v24
  %v780 = vunpack.c.l.b16 %v25
  %v781 = vunpack.c.l.b16 %v26
  %v782 = vunpack.c.l.b16 %v27
  %v783 = vunpack.c.l.b16 %v28
  %v784 = vunpack.c.l.b16 %v29
  %v785 = vunpack.c.l.b16 %v30
  %v786 = vunpack.c.l.b16 %v31
  %v787 = vunpack.c.l.b16 %v32
  %v788 = vunpack.c.l.b16 %v33
  %v789 = vunpack.c.l.b16 %v34
  %v790 = vunpack.c.l.b16 %v35
  %v791 = vunpack.c.l.b16 %v36
  %v792 = vunpack.c.l.b16 %v37
  %v793 = vunpack.c.l.b16 %v38
  %v794 = vunpack.c.l.b16 %v39
  %v795 = vunpack.c.l.b16 %v40
  %v796 = vunpack.c.l.b16 %v41
  %v797 = vunpack.c.l.b16 %v42
  %v798 = vunpack.c.l.b16 %v43
  %v799 = vunpack.c.l.b16 %v44
  %v800 = vunpack.c.l.b16 %v45
  %v801 = vunpack.c.l.b16 %v46
  %v802 = vunpack.c.l.b16 %v47
  %v803 = vunpack.c.l.b16 %v48
  %v804 = vunpack.c.l.b16 %v49
  %v805 = vunpack.c.l.b16 %v50
  %v806 = vunpack.c.l.b16 %v51
  %v807 = vunpack.c.l.b16 %v52
  %v808 = vunpack.c.l.b16 %v53
  %v809 = vunpack.c.l.b16 %v54
  %v810 = vunpack.c.l.b16 %v55
  %v811 = vunpack.c.l.b16 %v56
  %v812 = vunpack.c.l.b16 %v57
  %v813 = vunpack.c.l.b16 %v58
  %v814 = vunpack.c.l.b16 %v59
  %v815 = vunpack.c.l.b16 %v60
  %v816 = vunpack.c.l.b16 %v61
  %v817 = vunpack.c.l.b16 %v62
  %v818 = vunpack.c.l.b16 %v63
  %v819 = vunpack.c.l.b16 %v64
  %v820 = vunpack.c.l.b16 %v65
  %v821 = vunpack.c.l.b16 %v66
  %v822 = vunpack.c.l.b16 %v67
  %v823 = vunpack.c.l.b16 %v68
  %v824 = vunpack.c.l.b16 %v69
  %v825 = vunpack.c.l.b16 %v70
  %v826 = vunpack.c.l.b16 %v71
  %v827 = vunpack.c.l.b16 %v72
  %v828 = vunpack.c.l.b16 %v73
  %v829 = vunpack.c.l.b16 %v74
  %v830 = vunpack.c.l.b16 %v75
  %v831 = vunpack.c.l.b16 %v76
  %v832 = vunpack.c.l.b16 %v77
  %v833 = vunpack.c.l.b16 %v78
  %v834 = vpack.c.b16 %v771, %v770
  %v835 = vpack.c.b16 %v773, %v772
  %v836 = vpack.c.b16 %v775, %v774
  %v837 = vpack.c.b16 %v777, %v776
  %v838 = vpack.c.b16 %v779, %v778
  %v839 = vpack.c.b16 %v781, %v780
  %v840 = vpack.c.b16 %v783, %v782
  %v841 = vpack.c.b16 %v785, %v784
  %v842 = vpack.c.b16 %v787, %v786
  %v843 = vpack.c.b16 %v789, %v788
  %v844 = vpack.c.b16 %v791, %v790
  %v845 = vpack.c.b16 %v793, %v792
  %v846 = vpack.c.b16 %v795, %v794
  %v847 = vpack.c.b16 %v797, %v796
  %v848 = vpack.c.b16 %v799, %v798
  %v849 = vpack.c.b16 %v801, %v800
  %v850 = vpack.c.b16 %v803, %v802
  %v851 = vpack.c.b16 %v805, %v804
  %v852 = vpack.c.b16 %v807, %v806
  %v853 = vpack.c.b16 %v809, %v808
  %v854 = vpack.c.b16 %v811, %v810
  %v855 = vpack.c.b16 %v813, %v812
  %v856 = vpack.c.b16 %v815, %v814
  %v857 = vpack.c.b16 %v817, %v816
  %v858 = vpack.c.b16 %v819, %v818
  %v859 = vpack.c.b16 %v821, %v820
  %v860 = vpack.c.b16 %v823, %v822
  %v861 = vpack.c.b16 %v825, %v824
  %v862 = vpack.c.b16 %v827, %v826
  %v863 = vpack.c.b16 %v829, %v828
  %v864 = vpack.c.b16 %v831, %v830
  %v865 = vpack.c.b16 %v833, %v832
  %v914 = vunpack.c.l.b16 %v79
  %v915 = vunpack.c.l.b16 %v80
  %v916 = vunpack.c.l.b16 %v81
  %v917 = vunpack.c.l.b16 %v82
  %v918 = vunpack.c.l.b16 %v83
  %v919 = vunpack.c.l.b16 %v84
  %v920 = vunpack.c.l.b16 %v85
  %v921 = vunpack.c.l.b16 %v86
  %v922 = vunpack.c.l.b16 %v87
  %v923 = vunpack.c.l.b16 %v88
  %v924 = vunpack.c.l.b16 %v89
  %v925 = vunpack.c.l.b16 %v90
  %v926 = vunpack.c.l.b16 %v91
  %v927 = vunpack.c.l.b16 %v92
  %v928 = vunpack.c.l.b16 %v93
  %v929 = vunpack.c.l.b16 %v94
  %v930 = vpack.c.b16 %v915, %v914
  %v931 = vpack.c.b16 %v917, %v916
  %v932 = vpack.c.b16 %v919, %v918
  %v933 = vpack.c.b16 %v921, %v920
  %v934 = vpack.c.b16 %v923, %v922
  %v935 = vpack.c.b16 %v925, %v924
  %v936 = vpack.c.b16 %v927, %v926
  %v937 = vpack.c.b16 %v929, %v928
  %946 = vmatprep.subr.bf16.mxu0 0
  %947 = vmatpush1.bf16.msra.mxu0 %v937
  %948 = vmatprep.subr.bf16.mxu0 0
  %949 = vmatpush1.bf16.msra.mxu0 %v936
  %950 = vmatprep.subr.bf16.mxu0 0
  %951 = vmatpush1.bf16.msra.mxu0 %v935
  %952 = vmatprep.subr.bf16.mxu0 0
  %953 = vmatpush1.bf16.msra.mxu0 %v934
  %954 = vmatprep.subr.bf16.mxu0 0
  %955 = vmatpush1.bf16.msra.mxu0 %v933
  %956 = vmatprep.subr.bf16.mxu0 0
  %957 = vmatpush1.bf16.msra.mxu0 %v932
  %958 = vmatprep.subr.bf16.mxu0 0
  %959 = vmatpush1.bf16.msra.mxu0 %v931
  %960 = vmatprep.subr.bf16.mxu0 0
  %961 = vmatpush1.bf16.msra.mxu0 %v930
  %962 = vmatprep.subr.bf16.mxu0 0
  %963 = vmatpush2.bf16.msra.mxu0 0
  %964 = vmatprep.subr.bf16.mxu0 0
  %965 = vmatpush2.bf16.msra.mxu0 0
  %966 = vmatprep.subr.bf16.mxu0 0
  %967 = vmatpush2.bf16.msra.mxu0 0
  %968 = vmatprep.subr.bf16.mxu0 0
  %969 = vmatpush2.bf16.msra.mxu0 0
  %970 = vmatprep.subr.bf16.mxu0 0
  %971 = vmatpush2.bf16.msra.mxu0 0
  %972 = vmatprep.subr.bf16.mxu0 0
  %973 = vmatpush2.bf16.msra.mxu0 0
  %974 = vmatprep.subr.bf16.mxu0 0
  %975 = vmatpush2.bf16.msra.mxu0 0
  %976 = vmatprep.subr.bf16.mxu0 0
  %977 = vmatpush2.bf16.msra.mxu0 0
  %978 = vmatprep.mubr.bf16.mxu0 0
  %979 = vmatmul.mubr.bf16.gmra.mxu0 %v834
  %v980 = vpop.f32.mrf.mxu0
  %v981 = vadd.f32 %v452, %v980
  %v982 = vpop.f32.mrf.mxu0
  %v983 = vpop.f32.mrf.mxu0
  %v984 = vadd.f32 %v455, %v983
  %v985 = vpop.f32.mrf.mxu0
  %986 = vmatprep.mubr.bf16.mxu0 0
  %987 = vmatmul.mubr.bf16.gmra.mxu0 %v835
  %v988 = vpop.f32.mrf.mxu0
  %v989 = vadd.f32 %v460, %v988
  %v990 = vpop.f32.mrf.mxu0
  %v991 = vpop.f32.mrf.mxu0
  %v992 = vadd.f32 %v463, %v991
  %v993 = vpop.f32.mrf.mxu0
  %994 = vmatprep.mubr.bf16.mxu0 0
  %995 = vmatmul.mubr.bf16.gmra.mxu0 %v836
  %v996 = vpop.f32.mrf.mxu0
  %v997 = vadd.f32 %v468, %v996
  %v998 = vpop.f32.mrf.mxu0
  %v999 = vpop.f32.mrf.mxu0
  %v1000 = vadd.f32 %v471, %v999
  %v1001 = vpop.f32.mrf.mxu0
  %1002 = vmatprep.mubr.bf16.mxu0 0
  %1003 = vmatmul.mubr.bf16.gmra.mxu0 %v837
  %v1004 = vpop.f32.mrf.mxu0
  %v1005 = vadd.f32 %v476, %v1004
  %v1006 = vpop.f32.mrf.mxu0
  %v1007 = vpop.f32.mrf.mxu0
  %v1008 = vadd.f32 %v479, %v1007
  %v1009 = vpop.f32.mrf.mxu0
  %1010 = vmatprep.mubr.bf16.mxu0 0
  %1011 = vmatmul.mubr.bf16.gmra.mxu0 %v838
  %v1012 = vpop.f32.mrf.mxu0
  %v1013 = vadd.f32 %v484, %v1012
  %v1014 = vpop.f32.mrf.mxu0
  %v1015 = vpop.f32.mrf.mxu0
  %v1016 = vadd.f32 %v487, %v1015
  %v1017 = vpop.f32.mrf.mxu0
  %1018 = vmatprep.mubr.bf16.mxu0 0
  %1019 = vmatmul.mubr.bf16.gmra.mxu0 %v839
  %v1020 = vpop.f32.mrf.mxu0
  %v1021 = vadd.f32 %v492, %v1020
  %v1022 = vpop.f32.mrf.mxu0
  %v1023 = vpop.f32.mrf.mxu0
  %v1024 = vadd.f32 %v495, %v1023
  %v1025 = vpop.f32.mrf.mxu0
  %1026 = vmatprep.mubr.bf16.mxu0 0
  %1027 = vmatmul.mubr.bf16.gmra.mxu0 %v840
  %v1028 = vpop.f32.mrf.mxu0
  %v1029 = vadd.f32 %v500, %v1028
  %v1030 = vpop.f32.mrf.mxu0
  %v1031 = vpop.f32.mrf.mxu0
  %v1032 = vadd.f32 %v503, %v1031
  %v1033 = vpop.f32.mrf.mxu0
  %1034 = vmatprep.mubr.bf16.mxu0 0
  %1035 = vmatmul.mubr.bf16.gmra.mxu0 %v841
  %v1036 = vpop.f32.mrf.mxu0
  %v1037 = vadd.f32 %v508, %v1036
  %v1038 = vpop.f32.mrf.mxu0
  %v1039 = vpop.f32.mrf.mxu0
  %v1040 = vadd.f32 %v511, %v1039
  %v1041 = vpop.f32.mrf.mxu0
  %1042 = vmatprep.mubr.bf16.mxu0 0
  %1043 = vmatmul.mubr.bf16.gmra.mxu0 %v842
  %v1044 = vpop.f32.mrf.mxu0
  %v1045 = vadd.f32 %v516, %v1044
  %v1046 = vpop.f32.mrf.mxu0
  %v1047 = vpop.f32.mrf.mxu0
  %v1048 = vadd.f32 %v519, %v1047
  %v1049 = vpop.f32.mrf.mxu0
  %1050 = vmatprep.mubr.bf16.mxu0 0
  %1051 = vmatmul.mubr.bf16.gmra.mxu0 %v843
  %v1052 = vpop.f32.mrf.mxu0
  %v1053 = vadd.f32 %v524, %v1052
  %v1054 = vpop.f32.mrf.mxu0
  %v1055 = vpop.f32.mrf.mxu0
  %v1056 = vadd.f32 %v527, %v1055
  %v1057 = vpop.f32.mrf.mxu0
  %1058 = vmatprep.mubr.bf16.mxu0 0
  %1059 = vmatmul.mubr.bf16.gmra.mxu0 %v844
  %v1060 = vpop.f32.mrf.mxu0
  %v1061 = vadd.f32 %v532, %v1060
  %v1062 = vpop.f32.mrf.mxu0
  %v1063 = vpop.f32.mrf.mxu0
  %v1064 = vadd.f32 %v535, %v1063
  %v1065 = vpop.f32.mrf.mxu0
  %1066 = vmatprep.mubr.bf16.mxu0 0
  %1067 = vmatmul.mubr.bf16.gmra.mxu0 %v845
  %v1068 = vpop.f32.mrf.mxu0
  %v1069 = vadd.f32 %v540, %v1068
  %v1070 = vpop.f32.mrf.mxu0
  %v1071 = vpop.f32.mrf.mxu0
  %v1072 = vadd.f32 %v543, %v1071
  %v1073 = vpop.f32.mrf.mxu0
  %1074 = vmatprep.mubr.bf16.mxu0 0
  %1075 = vmatmul.mubr.bf16.gmra.mxu0 %v846
  %v1076 = vpop.f32.mrf.mxu0
  %v1077 = vadd.f32 %v548, %v1076
  %v1078 = vpop.f32.mrf.mxu0
  %v1079 = vpop.f32.mrf.mxu0
  %v1080 = vadd.f32 %v551, %v1079
  %v1081 = vpop.f32.mrf.mxu0
  %1082 = vmatprep.mubr.bf16.mxu0 0
  %1083 = vmatmul.mubr.bf16.gmra.mxu0 %v847
  %v1084 = vpop.f32.mrf.mxu0
  %v1085 = vadd.f32 %v556, %v1084
  %v1086 = vpop.f32.mrf.mxu0
  %v1087 = vpop.f32.mrf.mxu0
  %v1088 = vadd.f32 %v559, %v1087
  %v1089 = vpop.f32.mrf.mxu0
  %1090 = vmatprep.mubr.bf16.mxu0 0
  %1091 = vmatmul.mubr.bf16.gmra.mxu0 %v848
  %v1092 = vpop.f32.mrf.mxu0
  %v1093 = vadd.f32 %v564, %v1092
  %v1094 = vpop.f32.mrf.mxu0
  %v1095 = vpop.f32.mrf.mxu0
  %v1096 = vadd.f32 %v567, %v1095
  %v1097 = vpop.f32.mrf.mxu0
  %1098 = vmatprep.mubr.bf16.mxu0 0
  %1099 = vmatmul.mubr.bf16.gmra.mxu0 %v849
  %v1100 = vpop.f32.mrf.mxu0
  %v1101 = vadd.f32 %v572, %v1100
  %v1102 = vpop.f32.mrf.mxu0
  %v1103 = vpop.f32.mrf.mxu0
  %v1104 = vadd.f32 %v575, %v1103
  %v1105 = vpop.f32.mrf.mxu0
  %1106 = vmatprep.mubr.bf16.mxu0 0
  %1107 = vmatmul.mubr.bf16.gmra.mxu0 %v850
  %v1108 = vpop.f32.mrf.mxu0
  %v1109 = vadd.f32 %v580, %v1108
  %v1110 = vpop.f32.mrf.mxu0
  %v1111 = vpop.f32.mrf.mxu0
  %v1112 = vadd.f32 %v583, %v1111
  %v1113 = vpop.f32.mrf.mxu0
  %1114 = vmatprep.mubr.bf16.mxu0 0
  %1115 = vmatmul.mubr.bf16.gmra.mxu0 %v851
  %v1116 = vpop.f32.mrf.mxu0
  %v1117 = vadd.f32 %v588, %v1116
  %v1118 = vpop.f32.mrf.mxu0
  %v1119 = vpop.f32.mrf.mxu0
  %v1120 = vadd.f32 %v591, %v1119
  %v1121 = vpop.f32.mrf.mxu0
  %1122 = vmatprep.mubr.bf16.mxu0 0
  %1123 = vmatmul.mubr.bf16.gmra.mxu0 %v852
  %v1124 = vpop.f32.mrf.mxu0
  %v1125 = vadd.f32 %v596, %v1124
  %v1126 = vpop.f32.mrf.mxu0
  %v1127 = vpop.f32.mrf.mxu0
  %v1128 = vadd.f32 %v599, %v1127
  %v1129 = vpop.f32.mrf.mxu0
  %1130 = vmatprep.mubr.bf16.mxu0 0
  %1131 = vmatmul.mubr.bf16.gmra.mxu0 %v853
  %v1132 = vpop.f32.mrf.mxu0
  %v1133 = vadd.f32 %v604, %v1132
  %v1134 = vpop.f32.mrf.mxu0
  %v1135 = vpop.f32.mrf.mxu0
  %v1136 = vadd.f32 %v607, %v1135
  %v1137 = vpop.f32.mrf.mxu0
  %1138 = vmatprep.mubr.bf16.mxu0 0
  %1139 = vmatmul.mubr.bf16.gmra.mxu0 %v854
  %v1140 = vpop.f32.mrf.mxu0
  %v1141 = vadd.f32 %v612, %v1140
  %v1142 = vpop.f32.mrf.mxu0
  %v1143 = vpop.f32.mrf.mxu0
  %v1144 = vadd.f32 %v615, %v1143
  %v1145 = vpop.f32.mrf.mxu0
  %1146 = vmatprep.mubr.bf16.mxu0 0
  %1147 = vmatmul.mubr.bf16.gmra.mxu0 %v855
  %v1148 = vpop.f32.mrf.mxu0
  %v1149 = vadd.f32 %v620, %v1148
  %v1150 = vpop.f32.mrf.mxu0
  %v1151 = vpop.f32.mrf.mxu0
  %v1152 = vadd.f32 %v623, %v1151
  %v1153 = vpop.f32.mrf.mxu0
  %1154 = vmatprep.mubr.bf16.mxu0 0
  %1155 = vmatmul.mubr.bf16.gmra.mxu0 %v856
  %v1156 = vpop.f32.mrf.mxu0
  %v1157 = vadd.f32 %v628, %v1156
  %v1158 = vpop.f32.mrf.mxu0
  %v1159 = vpop.f32.mrf.mxu0
  %v1160 = vadd.f32 %v631, %v1159
  %v1161 = vpop.f32.mrf.mxu0
  %1162 = vmatprep.mubr.bf16.mxu0 0
  %1163 = vmatmul.mubr.bf16.gmra.mxu0 %v857
  %v1164 = vpop.f32.mrf.mxu0
  %v1165 = vadd.f32 %v636, %v1164
  %v1166 = vpop.f32.mrf.mxu0
  %v1167 = vpop.f32.mrf.mxu0
  %v1168 = vadd.f32 %v639, %v1167
  %v1169 = vpop.f32.mrf.mxu0
  %1170 = vmatprep.mubr.bf16.mxu0 0
  %1171 = vmatmul.mubr.bf16.gmra.mxu0 %v858
  %v1172 = vpop.f32.mrf.mxu0
  %v1173 = vadd.f32 %v644, %v1172
  %v1174 = vpop.f32.mrf.mxu0
  %v1175 = vpop.f32.mrf.mxu0
  %v1176 = vadd.f32 %v647, %v1175
  %v1177 = vpop.f32.mrf.mxu0
  %1178 = vmatprep.mubr.bf16.mxu0 0
  %1179 = vmatmul.mubr.bf16.gmra.mxu0 %v859
  %v1180 = vpop.f32.mrf.mxu0
  %v1181 = vadd.f32 %v652, %v1180
  %v1182 = vpop.f32.mrf.mxu0
  %v1183 = vpop.f32.mrf.mxu0
  %v1184 = vadd.f32 %v655, %v1183
  %v1185 = vpop.f32.mrf.mxu0
  %1186 = vmatprep.mubr.bf16.mxu0 0
  %1187 = vmatmul.mubr.bf16.gmra.mxu0 %v860
  %v1188 = vpop.f32.mrf.mxu0
  %v1189 = vadd.f32 %v660, %v1188
  %v1190 = vpop.f32.mrf.mxu0
  %v1191 = vpop.f32.mrf.mxu0
  %v1192 = vadd.f32 %v663, %v1191
  %v1193 = vpop.f32.mrf.mxu0
  %1194 = vmatprep.mubr.bf16.mxu0 0
  %1195 = vmatmul.mubr.bf16.gmra.mxu0 %v861
  %v1196 = vpop.f32.mrf.mxu0
  %v1197 = vadd.f32 %v668, %v1196
  %v1198 = vpop.f32.mrf.mxu0
  %v1199 = vpop.f32.mrf.mxu0
  %v1200 = vadd.f32 %v671, %v1199
  %v1201 = vpop.f32.mrf.mxu0
  %1202 = vmatprep.mubr.bf16.mxu0 0
  %1203 = vmatmul.mubr.bf16.gmra.mxu0 %v862
  %v1204 = vpop.f32.mrf.mxu0
  %v1205 = vadd.f32 %v676, %v1204
  %v1206 = vpop.f32.mrf.mxu0
  %v1207 = vpop.f32.mrf.mxu0
  %v1208 = vadd.f32 %v679, %v1207
  %v1209 = vpop.f32.mrf.mxu0
  %1210 = vmatprep.mubr.bf16.mxu0 0
  %1211 = vmatmul.mubr.bf16.gmra.mxu0 %v863
  %v1212 = vpop.f32.mrf.mxu0
  %v1213 = vadd.f32 %v684, %v1212
  %v1214 = vpop.f32.mrf.mxu0
  %v1215 = vpop.f32.mrf.mxu0
  %v1216 = vadd.f32 %v687, %v1215
  %v1217 = vpop.f32.mrf.mxu0
  %1218 = vmatprep.mubr.bf16.mxu0 0
  %1219 = vmatmul.mubr.bf16.gmra.mxu0 %v864
  %v1220 = vpop.f32.mrf.mxu0
  %v1221 = vadd.f32 %v692, %v1220
  %v1222 = vpop.f32.mrf.mxu0
  %v1223 = vpop.f32.mrf.mxu0
  %v1224 = vadd.f32 %v695, %v1223
  %v1225 = vpop.f32.mrf.mxu0
  %1226 = vmatprep.mubr.bf16.mxu0 0
  %1227 = vmatmul.mubr.bf16.gmra.mxu0 %v865
  %v1228 = vpop.f32.mrf.mxu0
  %v1229 = vadd.f32 %v700, %v1228
  %v1230 = vpop.f32.mrf.mxu0
  %v1231 = vpop.f32.mrf.mxu0
  %v1232 = vadd.f32 %v703, %v1231
  %v1233 = vpop.f32.mrf.mxu0
  %1234 = vdwg.mxu0
  %s1235 = scalar_lea.vmem %s0, 512
  %v1236 = vld [vmem:[%s1235] sm:$0xf]
  %v1237 = vld [vmem:[%s1235 + $0x4] sm:$0xf]
  %v1238 = vld [vmem:[%s1235 + $0x8] sm:$0xf]
  %v1239 = vld [vmem:[%s1235 + $0xc] sm:$0xf]
  %v1240 = vld [vmem:[%s1235 + $0x10] sm:$0xf]
  %v1241 = vld [vmem:[%s1235 + $0x14] sm:$0xf]
  %v1242 = vld [vmem:[%s1235 + $0x18] sm:$0xf]
  %v1243 = vld [vmem:[%s1235 + $0x1c] sm:$0xf]
  %v1244 = vld [vmem:[%s1235 + $0x20] sm:$0xf]
  %v1245 = vld [vmem:[%s1235 + $0x24] sm:$0xf]
  %v1246 = vld [vmem:[%s1235 + $0x28] sm:$0xf]
  %v1247 = vld [vmem:[%s1235 + $0x2c] sm:$0xf]
  %v1248 = vld [vmem:[%s1235 + $0x30] sm:$0xf]
  %v1249 = vld [vmem:[%s1235 + $0x34] sm:$0xf]
  %v1250 = vld [vmem:[%s1235 + $0x38] sm:$0xf]
  %v1251 = vld [vmem:[%s1235 + $0x3c] sm:$0xf]
  %v1252 = vld [vmem:[%s1235 + $0x40] sm:$0xf]
  %v1253 = vld [vmem:[%s1235 + $0x44] sm:$0xf]
  %v1254 = vld [vmem:[%s1235 + $0x48] sm:$0xf]
  %v1255 = vld [vmem:[%s1235 + $0x4c] sm:$0xf]
  %v1256 = vld [vmem:[%s1235 + $0x50] sm:$0xf]
  %v1257 = vld [vmem:[%s1235 + $0x54] sm:$0xf]
  %v1258 = vld [vmem:[%s1235 + $0x58] sm:$0xf]
  %v1259 = vld [vmem:[%s1235 + $0x5c] sm:$0xf]
  %v1260 = vld [vmem:[%s1235 + $0x60] sm:$0xf]
  %v1261 = vld [vmem:[%s1235 + $0x64] sm:$0xf]
  %v1262 = vld [vmem:[%s1235 + $0x68] sm:$0xf]
  %v1263 = vld [vmem:[%s1235 + $0x6c] sm:$0xf]
  %v1264 = vld [vmem:[%s1235 + $0x70] sm:$0xf]
  %v1265 = vld [vmem:[%s1235 + $0x74] sm:$0xf]
  %v1266 = vld [vmem:[%s1235 + $0x78] sm:$0xf]
  %v1267 = vld [vmem:[%s1235 + $0x7c] sm:$0xf]
  %v1268 = vld [vmem:[%s1235 + $0x80] sm:$0xf]
  %v1269 = vld [vmem:[%s1235 + $0x84] sm:$0xf]
  %v1270 = vld [vmem:[%s1235 + $0x88] sm:$0xf]
  %v1271 = vld [vmem:[%s1235 + $0x8c] sm:$0xf]
  %v1272 = vld [vmem:[%s1235 + $0x90] sm:$0xf]
  %v1273 = vld [vmem:[%s1235 + $0x94] sm:$0xf]
  %v1274 = vld [vmem:[%s1235 + $0x98] sm:$0xf]
  %v1275 = vld [vmem:[%s1235 + $0x9c] sm:$0xf]
  %v1276 = vld [vmem:[%s1235 + $0xa0] sm:$0xf]
  %v1277 = vld [vmem:[%s1235 + $0xa4] sm:$0xf]
  %v1278 = vld [vmem:[%s1235 + $0xa8] sm:$0xf]
  %v1279 = vld [vmem:[%s1235 + $0xac] sm:$0xf]
  %v1280 = vld [vmem:[%s1235 + $0xb0] sm:$0xf]
  %v1281 = vld [vmem:[%s1235 + $0xb4] sm:$0xf]
  %v1282 = vld [vmem:[%s1235 + $0xb8] sm:$0xf]
  %v1283 = vld [vmem:[%s1235 + $0xbc] sm:$0xf]
  %v1284 = vld [vmem:[%s1235 + $0xc0] sm:$0xf]
  %v1285 = vld [vmem:[%s1235 + $0xc4] sm:$0xf]
  %v1286 = vld [vmem:[%s1235 + $0xc8] sm:$0xf]
  %v1287 = vld [vmem:[%s1235 + $0xcc] sm:$0xf]
  %v1288 = vld [vmem:[%s1235 + $0xd0] sm:$0xf]
  %v1289 = vld [vmem:[%s1235 + $0xd4] sm:$0xf]
  %v1290 = vld [vmem:[%s1235 + $0xd8] sm:$0xf]
  %v1291 = vld [vmem:[%s1235 + $0xdc] sm:$0xf]
  %v1292 = vld [vmem:[%s1235 + $0xe0] sm:$0xf]
  %v1293 = vld [vmem:[%s1235 + $0xe4] sm:$0xf]
  %v1294 = vld [vmem:[%s1235 + $0xe8] sm:$0xf]
  %v1295 = vld [vmem:[%s1235 + $0xec] sm:$0xf]
  %v1296 = vld [vmem:[%s1235 + $0xf0] sm:$0xf]
  %v1297 = vld [vmem:[%s1235 + $0xf4] sm:$0xf]
  %v1298 = vld [vmem:[%s1235 + $0xf8] sm:$0xf]
  %v1299 = vld [vmem:[%s1235 + $0xfc] sm:$0xf]
  %s1300 = scalar_lea.vmem %s1, 128
  %v1301 = vld [vmem:[%s1300] sm:$0xf]
  %v1302 = vld [vmem:[%s1300 + $0x4] sm:$0xf]
  %v1303 = vld [vmem:[%s1300 + $0x8] sm:$0xf]
  %v1304 = vld [vmem:[%s1300 + $0xc] sm:$0xf]
  %v1305 = vld [vmem:[%s1300 + $0x10] sm:$0xf]
  %v1306 = vld [vmem:[%s1300 + $0x14] sm:$0xf]
  %v1307 = vld [vmem:[%s1300 + $0x18] sm:$0xf]
  %v1308 = vld [vmem:[%s1300 + $0x1c] sm:$0xf]
  %v1309 = vld [vmem:[%s1300 + $0x20] sm:$0xf]
  %v1310 = vld [vmem:[%s1300 + $0x24] sm:$0xf]
  %v1311 = vld [vmem:[%s1300 + $0x28] sm:$0xf]
  %v1312 = vld [vmem:[%s1300 + $0x2c] sm:$0xf]
  %v1313 = vld [vmem:[%s1300 + $0x30] sm:$0xf]
  %v1314 = vld [vmem:[%s1300 + $0x34] sm:$0xf]
  %v1315 = vld [vmem:[%s1300 + $0x38] sm:$0xf]
  %v1316 = vld [vmem:[%s1300 + $0x3c] sm:$0xf]
  %v1381 = vunpack.c.l.b16 %v1236
  %v1382 = vunpack.c.l.b16 %v1237
  %v1383 = vunpack.c.l.b16 %v1238
  %v1384 = vunpack.c.l.b16 %v1239
  %v1385 = vunpack.c.l.b16 %v1240
  %v1386 = vunpack.c.l.b16 %v1241
  %v1387 = vunpack.c.l.b16 %v1242
  %v1388 = vunpack.c.l.b16 %v1243
  %v1389 = vunpack.c.l.b16 %v1244
  %v1390 = vunpack.c.l.b16 %v1245
  %v1391 = vunpack.c.l.b16 %v1246
  %v1392 = vunpack.c.l.b16 %v1247
  %v1393 = vunpack.c.l.b16 %v1248
  %v1394 = vunpack.c.l.b16 %v1249
  %v1395 = vunpack.c.l.b16 %v1250
  %v1396 = vunpack.c.l.b16 %v1251
  %v1397 = vunpack.c.l.b16 %v1252
  %v1398 = vunpack.c.l.b16 %v1253
  %v1399 = vunpack.c.l.b16 %v1254
  %v1400 = vunpack.c.l.b16 %v1255
  %v1401 = vunpack.c.l.b16 %v1256
  %v1402 = vunpack.c.l.b16 %v1257
  %v1403 = vunpack.c.l.b16 %v1258
  %v1404 = vunpack.c.l.b16 %v1259
  %v1405 = vunpack.c.l.b16 %v1260
  %v1406 = vunpack.c.l.b16 %v1261
  %v1407 = vunpack.c.l.b16 %v1262
  %v1408 = vunpack.c.l.b16 %v1263
  %v1409 = vunpack.c.l.b16 %v1264
  %v1410 = vunpack.c.l.b16 %v1265
  %v1411 = vunpack.c.l.b16 %v1266
  %v1412 = vunpack.c.l.b16 %v1267
  %v1413 = vunpack.c.l.b16 %v1268
  %v1414 = vunpack.c.l.b16 %v1269
  %v1415 = vunpack.c.l.b16 %v1270
  %v1416 = vunpack.c.l.b16 %v1271
  %v1417 = vunpack.c.l.b16 %v1272
  %v1418 = vunpack.c.l.b16 %v1273
  %v1419 = vunpack.c.l.b16 %v1274
  %v1420 = vunpack.c.l.b16 %v1275
  %v1421 = vunpack.c.l.b16 %v1276
  %v1422 = vunpack.c.l.b16 %v1277
  %v1423 = vunpack.c.l.b16 %v1278
  %v1424 = vunpack.c.l.b16 %v1279
  %v1425 = vunpack.c.l.b16 %v1280
  %v1426 = vunpack.c.l.b16 %v1281
  %v1427 = vunpack.c.l.b16 %v1282
  %v1428 = vunpack.c.l.b16 %v1283
  %v1429 = vunpack.c.l.b16 %v1284
  %v1430 = vunpack.c.l.b16 %v1285
  %v1431 = vunpack.c.l.b16 %v1286
  %v1432 = vunpack.c.l.b16 %v1287
  %v1433 = vunpack.c.l.b16 %v1288
  %v1434 = vunpack.c.l.b16 %v1289
  %v1435 = vunpack.c.l.b16 %v1290
  %v1436 = vunpack.c.l.b16 %v1291
  %v1437 = vunpack.c.l.b16 %v1292
  %v1438 = vunpack.c.l.b16 %v1293
  %v1439 = vunpack.c.l.b16 %v1294
  %v1440 = vunpack.c.l.b16 %v1295
  %v1441 = vunpack.c.l.b16 %v1296
  %v1442 = vunpack.c.l.b16 %v1297
  %v1443 = vunpack.c.l.b16 %v1298
  %v1444 = vunpack.c.l.b16 %v1299
  %v1445 = vpack.c.b16 %v1382, %v1381
  %v1446 = vpack.c.b16 %v1384, %v1383
  %v1447 = vpack.c.b16 %v1386, %v1385
  %v1448 = vpack.c.b16 %v1388, %v1387
  %v1449 = vpack.c.b16 %v1390, %v1389
  %v1450 = vpack.c.b16 %v1392, %v1391
  %v1451 = vpack.c.b16 %v1394, %v1393
  %v1452 = vpack.c.b16 %v1396, %v1395
  %v1453 = vpack.c.b16 %v1398, %v1397
  %v1454 = vpack.c.b16 %v1400, %v1399
  %v1455 = vpack.c.b16 %v1402, %v1401
  %v1456 = vpack.c.b16 %v1404, %v1403
  %v1457 = vpack.c.b16 %v1406, %v1405
  %v1458 = vpack.c.b16 %v1408, %v1407
  %v1459 = vpack.c.b16 %v1410, %v1409
  %v1460 = vpack.c.b16 %v1412, %v1411
  %v1461 = vpack.c.b16 %v1414, %v1413
  %v1462 = vpack.c.b16 %v1416, %v1415
  %v1463 = vpack.c.b16 %v1418, %v1417
  %v1464 = vpack.c.b16 %v1420, %v1419
  %v1465 = vpack.c.b16 %v1422, %v1421
  %v1466 = vpack.c.b16 %v1424, %v1423
  %v1467 = vpack.c.b16 %v1426, %v1425
  %v1468 = vpack.c.b16 %v1428, %v1427
  %v1469 = vpack.c.b16 %v1430, %v1429
  %v1470 = vpack.c.b16 %v1432, %v1431
  %v1471 = vpack.c.b16 %v1434, %v1433
  %v1472 = vpack.c.b16 %v1436, %v1435
  %v1473 = vpack.c.b16 %v1438, %v1437
  %v1474 = vpack.c.b16 %v1440, %v1439
  %v1475 = vpack.c.b16 %v1442, %v1441
  %v1476 = vpack.c.b16 %v1444, %v1443
  %v1525 = vunpack.c.l.b16 %v1301
  %v1526 = vunpack.c.l.b16 %v1302
  %v1527 = vunpack.c.l.b16 %v1303
  %v1528 = vunpack.c.l.b16 %v1304
  %v1529 = vunpack.c.l.b16 %v1305
  %v1530 = vunpack.c.l.b16 %v1306
  %v1531 = vunpack.c.l.b16 %v1307
  %v1532 = vunpack.c.l.b16 %v1308
  %v1533 = vunpack.c.l.b16 %v1309
  %v1534 = vunpack.c.l.b16 %v1310
  %v1535 = vunpack.c.l.b16 %v1311
  %v1536 = vunpack.c.l.b16 %v1312
  %v1537 = vunpack.c.l.b16 %v1313
  %v1538 = vunpack.c.l.b16 %v1314
  %v1539 = vunpack.c.l.b16 %v1315
  %v1540 = vunpack.c.l.b16 %v1316
  %v1541 = vpack.c.b16 %v1526, %v1525
  %v1542 = vpack.c.b16 %v1528, %v1527
  %v1543 = vpack.c.b16 %v1530, %v1529
  %v1544 = vpack.c.b16 %v1532, %v1531
  %v1545 = vpack.c.b16 %v1534, %v1533
  %v1546 = vpack.c.b16 %v1536, %v1535
  %v1547 = vpack.c.b16 %v1538, %v1537
  %v1548 = vpack.c.b16 %v1540, %v1539
  %1557 = vmatprep.subr.bf16.mxu0 0
  %1558 = vmatpush1.bf16.msra.mxu0 %v1548
  %1559 = vmatprep.subr.bf16.mxu0 0
  %1560 = vmatpush1.bf16.msra.mxu0 %v1547
  %1561 = vmatprep.subr.bf16.mxu0 0
  %1562 = vmatpush1.bf16.msra.mxu0 %v1546
  %1563 = vmatprep.subr.bf16.mxu0 0
  %1564 = vmatpush1.bf16.msra.mxu0 %v1545
  %1565 = vmatprep.subr.bf16.mxu0 0
  %1566 = vmatpush1.bf16.msra.mxu0 %v1544
  %1567 = vmatprep.subr.bf16.mxu0 0
  %1568 = vmatpush1.bf16.msra.mxu0 %v1543
  %1569 = vmatprep.subr.bf16.mxu0 0
  %1570 = vmatpush1.bf16.msra.mxu0 %v1542
  %1571 = vmatprep.subr.bf16.mxu0 0
  %1572 = vmatpush1.bf16.msra.mxu0 %v1541
  %1573 = vmatprep.subr.bf16.mxu0 0
  %1574 = vmatpush2.bf16.msra.mxu0 0
  %1575 = vmatprep.subr.bf16.mxu0 0
  %1576 = vmatpush2.bf16.msra.mxu0 0
  %1577 = vmatprep.subr.bf16.mxu0 0
  %1578 = vmatpush2.bf16.msra.mxu0 0
  %1579 = vmatprep.subr.bf16.mxu0 0
  %1580 = vmatpush2.bf16.msra.mxu0 0
  %1581 = vmatprep.subr.bf16.mxu0 0
  %1582 = vmatpush2.bf16.msra.mxu0 0
  %1583 = vmatprep.subr.bf16.mxu0 0
  %1584 = vmatpush2.bf16.msra.mxu0 0
  %1585 = vmatprep.subr.bf16.mxu0 0
  %1586 = vmatpush2.bf16.msra.mxu0 0
  %1587 = vmatprep.subr.bf16.mxu0 0
  %1588 = vmatpush2.bf16.msra.mxu0 0
  %1589 = vmatprep.mubr.bf16.mxu0 0
  %1590 = vmatmul.mubr.bf16.gmra.mxu0 %v1445
  %v1591 = vpop.f32.mrf.mxu0
  %v1592 = vadd.f32 0.0, %v1591
  %v1593 = vpop.f32.mrf.mxu0
  %v1594 = vpop.f32.mrf.mxu0
  %v1595 = vadd.f32 0.0, %v1594
  %v1596 = vpop.f32.mrf.mxu0
  %1597 = vmatprep.mubr.bf16.mxu0 0
  %1598 = vmatmul.mubr.bf16.gmra.mxu0 %v1446
  %v1599 = vpop.f32.mrf.mxu0
  %v1600 = vadd.f32 0.0, %v1599
  %v1601 = vpop.f32.mrf.mxu0
  %v1602 = vpop.f32.mrf.mxu0
  %v1603 = vadd.f32 0.0, %v1602
  %v1604 = vpop.f32.mrf.mxu0
  %1605 = vmatprep.mubr.bf16.mxu0 0
  %1606 = vmatmul.mubr.bf16.gmra.mxu0 %v1447
  %v1607 = vpop.f32.mrf.mxu0
  %v1608 = vadd.f32 0.0, %v1607
  %v1609 = vpop.f32.mrf.mxu0
  %v1610 = vpop.f32.mrf.mxu0
  %v1611 = vadd.f32 0.0, %v1610
  %v1612 = vpop.f32.mrf.mxu0
  %1613 = vmatprep.mubr.bf16.mxu0 0
  %1614 = vmatmul.mubr.bf16.gmra.mxu0 %v1448
  %v1615 = vpop.f32.mrf.mxu0
  %v1616 = vadd.f32 0.0, %v1615
  %v1617 = vpop.f32.mrf.mxu0
  %v1618 = vpop.f32.mrf.mxu0
  %v1619 = vadd.f32 0.0, %v1618
  %v1620 = vpop.f32.mrf.mxu0
  %1621 = vmatprep.mubr.bf16.mxu0 0
  %1622 = vmatmul.mubr.bf16.gmra.mxu0 %v1449
  %v1623 = vpop.f32.mrf.mxu0
  %v1624 = vadd.f32 0.0, %v1623
  %v1625 = vpop.f32.mrf.mxu0
  %v1626 = vpop.f32.mrf.mxu0
  %v1627 = vadd.f32 0.0, %v1626
  %v1628 = vpop.f32.mrf.mxu0
  %1629 = vmatprep.mubr.bf16.mxu0 0
  %1630 = vmatmul.mubr.bf16.gmra.mxu0 %v1450
  %v1631 = vpop.f32.mrf.mxu0
  %v1632 = vadd.f32 0.0, %v1631
  %v1633 = vpop.f32.mrf.mxu0
  %v1634 = vpop.f32.mrf.mxu0
  %v1635 = vadd.f32 0.0, %v1634
  %v1636 = vpop.f32.mrf.mxu0
  %1637 = vmatprep.mubr.bf16.mxu0 0
  %1638 = vmatmul.mubr.bf16.gmra.mxu0 %v1451
  %v1639 = vpop.f32.mrf.mxu0
  %v1640 = vadd.f32 0.0, %v1639
  %v1641 = vpop.f32.mrf.mxu0
  %v1642 = vpop.f32.mrf.mxu0
  %v1643 = vadd.f32 0.0, %v1642
  %v1644 = vpop.f32.mrf.mxu0
  %1645 = vmatprep.mubr.bf16.mxu0 0
  %1646 = vmatmul.mubr.bf16.gmra.mxu0 %v1452
  %v1647 = vpop.f32.mrf.mxu0
  %v1648 = vadd.f32 0.0, %v1647
  %v1649 = vpop.f32.mrf.mxu0
  %v1650 = vpop.f32.mrf.mxu0
  %v1651 = vadd.f32 0.0, %v1650
  %v1652 = vpop.f32.mrf.mxu0
  %1653 = vmatprep.mubr.bf16.mxu0 0
  %1654 = vmatmul.mubr.bf16.gmra.mxu0 %v1453
  %v1655 = vpop.f32.mrf.mxu0
  %v1656 = vadd.f32 0.0, %v1655
  %v1657 = vpop.f32.mrf.mxu0
  %v1658 = vpop.f32.mrf.mxu0
  %v1659 = vadd.f32 0.0, %v1658
  %v1660 = vpop.f32.mrf.mxu0
  %1661 = vmatprep.mubr.bf16.mxu0 0
  %1662 = vmatmul.mubr.bf16.gmra.mxu0 %v1454
  %v1663 = vpop.f32.mrf.mxu0
  %v1664 = vadd.f32 0.0, %v1663
  %v1665 = vpop.f32.mrf.mxu0
  %v1666 = vpop.f32.mrf.mxu0
  %v1667 = vadd.f32 0.0, %v1666
  %v1668 = vpop.f32.mrf.mxu0
  %1669 = vmatprep.mubr.bf16.mxu0 0
  %1670 = vmatmul.mubr.bf16.gmra.mxu0 %v1455
  %v1671 = vpop.f32.mrf.mxu0
  %v1672 = vadd.f32 0.0, %v1671
  %v1673 = vpop.f32.mrf.mxu0
  %v1674 = vpop.f32.mrf.mxu0
  %v1675 = vadd.f32 0.0, %v1674
  %v1676 = vpop.f32.mrf.mxu0
  %1677 = vmatprep.mubr.bf16.mxu0 0
  %1678 = vmatmul.mubr.bf16.gmra.mxu0 %v1456
  %v1679 = vpop.f32.mrf.mxu0
  %v1680 = vadd.f32 0.0, %v1679
  %v1681 = vpop.f32.mrf.mxu0
  %v1682 = vpop.f32.mrf.mxu0
  %v1683 = vadd.f32 0.0, %v1682
  %v1684 = vpop.f32.mrf.mxu0
  %1685 = vmatprep.mubr.bf16.mxu0 0
  %1686 = vmatmul.mubr.bf16.gmra.mxu0 %v1457
  %v1687 = vpop.f32.mrf.mxu0
  %v1688 = vadd.f32 0.0, %v1687
  %v1689 = vpop.f32.mrf.mxu0
  %v1690 = vpop.f32.mrf.mxu0
  %v1691 = vadd.f32 0.0, %v1690
  %v1692 = vpop.f32.mrf.mxu0
  %1693 = vmatprep.mubr.bf16.mxu0 0
  %1694 = vmatmul.mubr.bf16.gmra.mxu0 %v1458
  %v1695 = vpop.f32.mrf.mxu0
  %v1696 = vadd.f32 0.0, %v1695
  %v1697 = vpop.f32.mrf.mxu0
  %v1698 = vpop.f32.mrf.mxu0
  %v1699 = vadd.f32 0.0, %v1698
  %v1700 = vpop.f32.mrf.mxu0
  %1701 = vmatprep.mubr.bf16.mxu0 0
  %1702 = vmatmul.mubr.bf16.gmra.mxu0 %v1459
  %v1703 = vpop.f32.mrf.mxu0
  %v1704 = vadd.f32 0.0, %v1703
  %v1705 = vpop.f32.mrf.mxu0
  %v1706 = vpop.f32.mrf.mxu0
  %v1707 = vadd.f32 0.0, %v1706
  %v1708 = vpop.f32.mrf.mxu0
  %1709 = vmatprep.mubr.bf16.mxu0 0
  %1710 = vmatmul.mubr.bf16.gmra.mxu0 %v1460
  %v1711 = vpop.f32.mrf.mxu0
  %v1712 = vadd.f32 0.0, %v1711
  %v1713 = vpop.f32.mrf.mxu0
  %v1714 = vpop.f32.mrf.mxu0
  %v1715 = vadd.f32 0.0, %v1714
  %v1716 = vpop.f32.mrf.mxu0
  %1717 = vmatprep.mubr.bf16.mxu0 0
  %1718 = vmatmul.mubr.bf16.gmra.mxu0 %v1461
  %v1719 = vpop.f32.mrf.mxu0
  %v1720 = vadd.f32 0.0, %v1719
  %v1721 = vpop.f32.mrf.mxu0
  %v1722 = vpop.f32.mrf.mxu0
  %v1723 = vadd.f32 0.0, %v1722
  %v1724 = vpop.f32.mrf.mxu0
  %1725 = vmatprep.mubr.bf16.mxu0 0
  %1726 = vmatmul.mubr.bf16.gmra.mxu0 %v1462
  %v1727 = vpop.f32.mrf.mxu0
  %v1728 = vadd.f32 0.0, %v1727
  %v1729 = vpop.f32.mrf.mxu0
  %v1730 = vpop.f32.mrf.mxu0
  %v1731 = vadd.f32 0.0, %v1730
  %v1732 = vpop.f32.mrf.mxu0
  %1733 = vmatprep.mubr.bf16.mxu0 0
  %1734 = vmatmul.mubr.bf16.gmra.mxu0 %v1463
  %v1735 = vpop.f32.mrf.mxu0
  %v1736 = vadd.f32 0.0, %v1735
  %v1737 = vpop.f32.mrf.mxu0
  %v1738 = vpop.f32.mrf.mxu0
  %v1739 = vadd.f32 0.0, %v1738
  %v1740 = vpop.f32.mrf.mxu0
  %1741 = vmatprep.mubr.bf16.mxu0 0
  %1742 = vmatmul.mubr.bf16.gmra.mxu0 %v1464
  %v1743 = vpop.f32.mrf.mxu0
  %v1744 = vadd.f32 0.0, %v1743
  %v1745 = vpop.f32.mrf.mxu0
  %v1746 = vpop.f32.mrf.mxu0
  %v1747 = vadd.f32 0.0, %v1746
  %v1748 = vpop.f32.mrf.mxu0
  %1749 = vmatprep.mubr.bf16.mxu0 0
  %1750 = vmatmul.mubr.bf16.gmra.mxu0 %v1465
  %v1751 = vpop.f32.mrf.mxu0
  %v1752 = vadd.f32 0.0, %v1751
  %v1753 = vpop.f32.mrf.mxu0
  %v1754 = vpop.f32.mrf.mxu0
  %v1755 = vadd.f32 0.0, %v1754
  %v1756 = vpop.f32.mrf.mxu0
  %1757 = vmatprep.mubr.bf16.mxu0 0
  %1758 = vmatmul.mubr.bf16.gmra.mxu0 %v1466
  %v1759 = vpop.f32.mrf.mxu0
  %v1760 = vadd.f32 0.0, %v1759
  %v1761 = vpop.f32.mrf.mxu0
  %v1762 = vpop.f32.mrf.mxu0
  %v1763 = vadd.f32 0.0, %v1762
  %v1764 = vpop.f32.mrf.mxu0
  %1765 = vmatprep.mubr.bf16.mxu0 0
  %1766 = vmatmul.mubr.bf16.gmra.mxu0 %v1467
  %v1767 = vpop.f32.mrf.mxu0
  %v1768 = vadd.f32 0.0, %v1767
  %v1769 = vpop.f32.mrf.mxu0
  %v1770 = vpop.f32.mrf.mxu0
  %v1771 = vadd.f32 0.0, %v1770
  %v1772 = vpop.f32.mrf.mxu0
  %1773 = vmatprep.mubr.bf16.mxu0 0
  %1774 = vmatmul.mubr.bf16.gmra.mxu0 %v1468
  %v1775 = vpop.f32.mrf.mxu0
  %v1776 = vadd.f32 0.0, %v1775
  %v1777 = vpop.f32.mrf.mxu0
  %v1778 = vpop.f32.mrf.mxu0
  %v1779 = vadd.f32 0.0, %v1778
  %v1780 = vpop.f32.mrf.mxu0
  %1781 = vmatprep.mubr.bf16.mxu0 0
  %1782 = vmatmul.mubr.bf16.gmra.mxu0 %v1469
  %v1783 = vpop.f32.mrf.mxu0
  %v1784 = vadd.f32 0.0, %v1783
  %v1785 = vpop.f32.mrf.mxu0
  %v1786 = vpop.f32.mrf.mxu0
  %v1787 = vadd.f32 0.0, %v1786
  %v1788 = vpop.f32.mrf.mxu0
  %1789 = vmatprep.mubr.bf16.mxu0 0
  %1790 = vmatmul.mubr.bf16.gmra.mxu0 %v1470
  %v1791 = vpop.f32.mrf.mxu0
  %v1792 = vadd.f32 0.0, %v1791
  %v1793 = vpop.f32.mrf.mxu0
  %v1794 = vpop.f32.mrf.mxu0
  %v1795 = vadd.f32 0.0, %v1794
  %v1796 = vpop.f32.mrf.mxu0
  %1797 = vmatprep.mubr.bf16.mxu0 0
  %1798 = vmatmul.mubr.bf16.gmra.mxu0 %v1471
  %v1799 = vpop.f32.mrf.mxu0
  %v1800 = vadd.f32 0.0, %v1799
  %v1801 = vpop.f32.mrf.mxu0
  %v1802 = vpop.f32.mrf.mxu0
  %v1803 = vadd.f32 0.0, %v1802
  %v1804 = vpop.f32.mrf.mxu0
  %1805 = vmatprep.mubr.bf16.mxu0 0
  %1806 = vmatmul.mubr.bf16.gmra.mxu0 %v1472
  %v1807 = vpop.f32.mrf.mxu0
  %v1808 = vadd.f32 0.0, %v1807
  %v1809 = vpop.f32.mrf.mxu0
  %v1810 = vpop.f32.mrf.mxu0
  %v1811 = vadd.f32 0.0, %v1810
  %v1812 = vpop.f32.mrf.mxu0
  %1813 = vmatprep.mubr.bf16.mxu0 0
  %1814 = vmatmul.mubr.bf16.gmra.mxu0 %v1473
  %v1815 = vpop.f32.mrf.mxu0
  %v1816 = vadd.f32 0.0, %v1815
  %v1817 = vpop.f32.mrf.mxu0
  %v1818 = vpop.f32.mrf.mxu0
  %v1819 = vadd.f32 0.0, %v1818
  %v1820 = vpop.f32.mrf.mxu0
  %1821 = vmatprep.mubr.bf16.mxu0 0
  %1822 = vmatmul.mubr.bf16.gmra.mxu0 %v1474
  %v1823 = vpop.f32.mrf.mxu0
  %v1824 = vadd.f32 0.0, %v1823
  %v1825 = vpop.f32.mrf.mxu0
  %v1826 = vpop.f32.mrf.mxu0
  %v1827 = vadd.f32 0.0, %v1826
  %v1828 = vpop.f32.mrf.mxu0
  %1829 = vmatprep.mubr.bf16.mxu0 0
  %1830 = vmatmul.mubr.bf16.gmra.mxu0 %v1475
  %v1831 = vpop.f32.mrf.mxu0
  %v1832 = vadd.f32 0.0, %v1831
  %v1833 = vpop.f32.mrf.mxu0
  %v1834 = vpop.f32.mrf.mxu0
  %v1835 = vadd.f32 0.0, %v1834
  %v1836 = vpop.f32.mrf.mxu0
  %1837 = vmatprep.mubr.bf16.mxu0 0
  %1838 = vmatmul.mubr.bf16.gmra.mxu0 %v1476
  %v1839 = vpop.f32.mrf.mxu0
  %v1840 = vadd.f32 0.0, %v1839
  %v1841 = vpop.f32.mrf.mxu0
  %v1842 = vpop.f32.mrf.mxu0
  %v1843 = vadd.f32 0.0, %v1842
  %v1844 = vpop.f32.mrf.mxu0
  %1845 = vdwg.mxu0
  %v1846 = vadd.f32 %v981, %v1592
  %v1847 = vadd.f32 %v984, %v1595
  %v1848 = vadd.f32 %v989, %v1600
  %v1849 = vadd.f32 %v992, %v1603
  %v1850 = vadd.f32 %v997, %v1608
  %v1851 = vadd.f32 %v1000, %v1611
  %v1852 = vadd.f32 %v1005, %v1616
  %v1853 = vadd.f32 %v1008, %v1619
  %v1854 = vadd.f32 %v1013, %v1624
  %v1855 = vadd.f32 %v1016, %v1627
  %v1856 = vadd.f32 %v1021, %v1632
  %v1857 = vadd.f32 %v1024, %v1635
  %v1858 = vadd.f32 %v1029, %v1640
  %v1859 = vadd.f32 %v1032, %v1643
  %v1860 = vadd.f32 %v1037, %v1648
  %v1861 = vadd.f32 %v1040, %v1651
  %v1862 = vadd.f32 %v1045, %v1656
  %v1863 = vadd.f32 %v1048, %v1659
  %v1864 = vadd.f32 %v1053, %v1664
  %v1865 = vadd.f32 %v1056, %v1667
  %v1866 = vadd.f32 %v1061, %v1672
  %v1867 = vadd.f32 %v1064, %v1675
  %v1868 = vadd.f32 %v1069, %v1680
  %v1869 = vadd.f32 %v1072, %v1683
  %v1870 = vadd.f32 %v1077, %v1688
  %v1871 = vadd.f32 %v1080, %v1691
  %v1872 = vadd.f32 %v1085, %v1696
  %v1873 = vadd.f32 %v1088, %v1699
  %v1874 = vadd.f32 %v1093, %v1704
  %v1875 = vadd.f32 %v1096, %v1707
  %v1876 = vadd.f32 %v1101, %v1712
  %v1877 = vadd.f32 %v1104, %v1715
  %v1878 = vadd.f32 %v1109, %v1720
  %v1879 = vadd.f32 %v1112, %v1723
  %v1880 = vadd.f32 %v1117, %v1728
  %v1881 = vadd.f32 %v1120, %v1731
  %v1882 = vadd.f32 %v1125, %v1736
  %v1883 = vadd.f32 %v1128, %v1739
  %v1884 = vadd.f32 %v1133, %v1744
  %v1885 = vadd.f32 %v1136, %v1747
  %v1886 = vadd.f32 %v1141, %v1752
  %v1887 = vadd.f32 %v1144, %v1755
  %v1888 = vadd.f32 %v1149, %v1760
  %v1889 = vadd.f32 %v1152, %v1763
  %v1890 = vadd.f32 %v1157, %v1768
  %v1891 = vadd.f32 %v1160, %v1771
  %v1892 = vadd.f32 %v1165, %v1776
  %v1893 = vadd.f32 %v1168, %v1779
  %v1894 = vadd.f32 %v1173, %v1784
  %v1895 = vadd.f32 %v1176, %v1787
  %v1896 = vadd.f32 %v1181, %v1792
  %v1897 = vadd.f32 %v1184, %v1795
  %v1898 = vadd.f32 %v1189, %v1800
  %v1899 = vadd.f32 %v1192, %v1803
  %v1900 = vadd.f32 %v1197, %v1808
  %v1901 = vadd.f32 %v1200, %v1811
  %v1902 = vadd.f32 %v1205, %v1816
  %v1903 = vadd.f32 %v1208, %v1819
  %v1904 = vadd.f32 %v1213, %v1824
  %v1905 = vadd.f32 %v1216, %v1827
  %v1906 = vadd.f32 %v1221, %v1832
  %v1907 = vadd.f32 %v1224, %v1835
  %v1908 = vadd.f32 %v1229, %v1840
  %v1909 = vadd.f32 %v1232, %v1843
  %s1910 = scalar_lea.vmem %s0, 768
  %v1911 = vld [vmem:[%s1910] sm:$0xf]
  %v1912 = vld [vmem:[%s1910 + $0x4] sm:$0xf]
  %v1913 = vld [vmem:[%s1910 + $0x8] sm:$0xf]
  %v1914 = vld [vmem:[%s1910 + $0xc] sm:$0xf]
  %v1915 = vld [vmem:[%s1910 + $0x10] sm:$0xf]
  %v1916 = vld [vmem:[%s1910 + $0x14] sm:$0xf]
  %v1917 = vld [vmem:[%s1910 + $0x18] sm:$0xf]
  %v1918 = vld [vmem:[%s1910 + $0x1c] sm:$0xf]
  %v1919 = vld [vmem:[%s1910 + $0x20] sm:$0xf]
  %v1920 = vld [vmem:[%s1910 + $0x24] sm:$0xf]
  %v1921 = vld [vmem:[%s1910 + $0x28] sm:$0xf]
  %v1922 = vld [vmem:[%s1910 + $0x2c] sm:$0xf]
  %v1923 = vld [vmem:[%s1910 + $0x30] sm:$0xf]
  %v1924 = vld [vmem:[%s1910 + $0x34] sm:$0xf]
  %v1925 = vld [vmem:[%s1910 + $0x38] sm:$0xf]
  %v1926 = vld [vmem:[%s1910 + $0x3c] sm:$0xf]
  %v1927 = vld [vmem:[%s1910 + $0x40] sm:$0xf]
  %v1928 = vld [vmem:[%s1910 + $0x44] sm:$0xf]
  %v1929 = vld [vmem:[%s1910 + $0x48] sm:$0xf]
  %v1930 = vld [vmem:[%s1910 + $0x4c] sm:$0xf]
  %v1931 = vld [vmem:[%s1910 + $0x50] sm:$0xf]
  %v1932 = vld [vmem:[%s1910 + $0x54] sm:$0xf]
  %v1933 = vld [vmem:[%s1910 + $0x58] sm:$0xf]
  %v1934 = vld [vmem:[%s1910 + $0x5c] sm:$0xf]
  %v1935 = vld [vmem:[%s1910 + $0x60] sm:$0xf]
  %v1936 = vld [vmem:[%s1910 + $0x64] sm:$0xf]
  %v1937 = vld [vmem:[%s1910 + $0x68] sm:$0xf]
  %v1938 = vld [vmem:[%s1910 + $0x6c] sm:$0xf]
  %v1939 = vld [vmem:[%s1910 + $0x70] sm:$0xf]
  %v1940 = vld [vmem:[%s1910 + $0x74] sm:$0xf]
  %v1941 = vld [vmem:[%s1910 + $0x78] sm:$0xf]
  %v1942 = vld [vmem:[%s1910 + $0x7c] sm:$0xf]
  %v1943 = vld [vmem:[%s1910 + $0x80] sm:$0xf]
  %v1944 = vld [vmem:[%s1910 + $0x84] sm:$0xf]
  %v1945 = vld [vmem:[%s1910 + $0x88] sm:$0xf]
  %v1946 = vld [vmem:[%s1910 + $0x8c] sm:$0xf]
  %v1947 = vld [vmem:[%s1910 + $0x90] sm:$0xf]
  %v1948 = vld [vmem:[%s1910 + $0x94] sm:$0xf]
  %v1949 = vld [vmem:[%s1910 + $0x98] sm:$0xf]
  %v1950 = vld [vmem:[%s1910 + $0x9c] sm:$0xf]
  %v1951 = vld [vmem:[%s1910 + $0xa0] sm:$0xf]
  %v1952 = vld [vmem:[%s1910 + $0xa4] sm:$0xf]
  %v1953 = vld [vmem:[%s1910 + $0xa8] sm:$0xf]
  %v1954 = vld [vmem:[%s1910 + $0xac] sm:$0xf]
  %v1955 = vld [vmem:[%s1910 + $0xb0] sm:$0xf]
  %v1956 = vld [vmem:[%s1910 + $0xb4] sm:$0xf]
  %v1957 = vld [vmem:[%s1910 + $0xb8] sm:$0xf]
  %v1958 = vld [vmem:[%s1910 + $0xbc] sm:$0xf]
  %v1959 = vld [vmem:[%s1910 + $0xc0] sm:$0xf]
  %v1960 = vld [vmem:[%s1910 + $0xc4] sm:$0xf]
  %v1961 = vld [vmem:[%s1910 + $0xc8] sm:$0xf]
  %v1962 = vld [vmem:[%s1910 + $0xcc] sm:$0xf]
  %v1963 = vld [vmem:[%s1910 + $0xd0] sm:$0xf]
  %v1964 = vld [vmem:[%s1910 + $0xd4] sm:$0xf]
  %v1965 = vld [vmem:[%s1910 + $0xd8] sm:$0xf]
  %v1966 = vld [vmem:[%s1910 + $0xdc] sm:$0xf]
  %v1967 = vld [vmem:[%s1910 + $0xe0] sm:$0xf]
  %v1968 = vld [vmem:[%s1910 + $0xe4] sm:$0xf]
  %v1969 = vld [vmem:[%s1910 + $0xe8] sm:$0xf]
  %v1970 = vld [vmem:[%s1910 + $0xec] sm:$0xf]
  %v1971 = vld [vmem:[%s1910 + $0xf0] sm:$0xf]
  %v1972 = vld [vmem:[%s1910 + $0xf4] sm:$0xf]
  %v1973 = vld [vmem:[%s1910 + $0xf8] sm:$0xf]
  %v1974 = vld [vmem:[%s1910 + $0xfc] sm:$0xf]
  %s1975 = scalar_lea.vmem %s1, 192
  %v1976 = vld [vmem:[%s1975] sm:$0xf]
  %v1977 = vld [vmem:[%s1975 + $0x4] sm:$0xf]
  %v1978 = vld [vmem:[%s1975 + $0x8] sm:$0xf]
  %v1979 = vld [vmem:[%s1975 + $0xc] sm:$0xf]
  %v1980 = vld [vmem:[%s1975 + $0x10] sm:$0xf]
  %v1981 = vld [vmem:[%s1975 + $0x14] sm:$0xf]
  %v1982 = vld [vmem:[%s1975 + $0x18] sm:$0xf]
  %v1983 = vld [vmem:[%s1975 + $0x1c] sm:$0xf]
  %v1984 = vld [vmem:[%s1975 + $0x20] sm:$0xf]
  %v1985 = vld [vmem:[%s1975 + $0x24] sm:$0xf]
  %v1986 = vld [vmem:[%s1975 + $0x28] sm:$0xf]
  %v1987 = vld [vmem:[%s1975 + $0x2c] sm:$0xf]
  %v1988 = vld [vmem:[%s1975 + $0x30] sm:$0xf]
  %v1989 = vld [vmem:[%s1975 + $0x34] sm:$0xf]
  %v1990 = vld [vmem:[%s1975 + $0x38] sm:$0xf]
  %v1991 = vld [vmem:[%s1975 + $0x3c] sm:$0xf]
  %v2056 = vunpack.c.l.b16 %v1911
  %v2057 = vunpack.c.l.b16 %v1912
  %v2058 = vunpack.c.l.b16 %v1913
  %v2059 = vunpack.c.l.b16 %v1914
  %v2060 = vunpack.c.l.b16 %v1915
  %v2061 = vunpack.c.l.b16 %v1916
  %v2062 = vunpack.c.l.b16 %v1917
  %v2063 = vunpack.c.l.b16 %v1918
  %v2064 = vunpack.c.l.b16 %v1919
  %v2065 = vunpack.c.l.b16 %v1920
  %v2066 = vunpack.c.l.b16 %v1921
  %v2067 = vunpack.c.l.b16 %v1922
  %v2068 = vunpack.c.l.b16 %v1923
  %v2069 = vunpack.c.l.b16 %v1924
  %v2070 = vunpack.c.l.b16 %v1925
  %v2071 = vunpack.c.l.b16 %v1926
  %v2072 = vunpack.c.l.b16 %v1927
  %v2073 = vunpack.c.l.b16 %v1928
  %v2074 = vunpack.c.l.b16 %v1929
  %v2075 = vunpack.c.l.b16 %v1930
  %v2076 = vunpack.c.l.b16 %v1931
  %v2077 = vunpack.c.l.b16 %v1932
  %v2078 = vunpack.c.l.b16 %v1933
  %v2079 = vunpack.c.l.b16 %v1934
  %v2080 = vunpack.c.l.b16 %v1935
  %v2081 = vunpack.c.l.b16 %v1936
  %v2082 = vunpack.c.l.b16 %v1937
  %v2083 = vunpack.c.l.b16 %v1938
  %v2084 = vunpack.c.l.b16 %v1939
  %v2085 = vunpack.c.l.b16 %v1940
  %v2086 = vunpack.c.l.b16 %v1941
  %v2087 = vunpack.c.l.b16 %v1942
  %v2088 = vunpack.c.l.b16 %v1943
  %v2089 = vunpack.c.l.b16 %v1944
  %v2090 = vunpack.c.l.b16 %v1945
  %v2091 = vunpack.c.l.b16 %v1946
  %v2092 = vunpack.c.l.b16 %v1947
  %v2093 = vunpack.c.l.b16 %v1948
  %v2094 = vunpack.c.l.b16 %v1949
  %v2095 = vunpack.c.l.b16 %v1950
  %v2096 = vunpack.c.l.b16 %v1951
  %v2097 = vunpack.c.l.b16 %v1952
  %v2098 = vunpack.c.l.b16 %v1953
  %v2099 = vunpack.c.l.b16 %v1954
  %v2100 = vunpack.c.l.b16 %v1955
  %v2101 = vunpack.c.l.b16 %v1956
  %v2102 = vunpack.c.l.b16 %v1957
  %v2103 = vunpack.c.l.b16 %v1958
  %v2104 = vunpack.c.l.b16 %v1959
  %v2105 = vunpack.c.l.b16 %v1960
  %v2106 = vunpack.c.l.b16 %v1961
  %v2107 = vunpack.c.l.b16 %v1962
  %v2108 = vunpack.c.l.b16 %v1963
  %v2109 = vunpack.c.l.b16 %v1964
  %v2110 = vunpack.c.l.b16 %v1965
  %v2111 = vunpack.c.l.b16 %v1966
  %v2112 = vunpack.c.l.b16 %v1967
  %v2113 = vunpack.c.l.b16 %v1968
  %v2114 = vunpack.c.l.b16 %v1969
  %v2115 = vunpack.c.l.b16 %v1970
  %v2116 = vunpack.c.l.b16 %v1971
  %v2117 = vunpack.c.l.b16 %v1972
  %v2118 = vunpack.c.l.b16 %v1973
  %v2119 = vunpack.c.l.b16 %v1974
  %v2120 = vpack.c.b16 %v2057, %v2056
  %v2121 = vpack.c.b16 %v2059, %v2058
  %v2122 = vpack.c.b16 %v2061, %v2060
  %v2123 = vpack.c.b16 %v2063, %v2062
  %v2124 = vpack.c.b16 %v2065, %v2064
  %v2125 = vpack.c.b16 %v2067, %v2066
  %v2126 = vpack.c.b16 %v2069, %v2068
  %v2127 = vpack.c.b16 %v2071, %v2070
  %v2128 = vpack.c.b16 %v2073, %v2072
  %v2129 = vpack.c.b16 %v2075, %v2074
  %v2130 = vpack.c.b16 %v2077, %v2076
  %v2131 = vpack.c.b16 %v2079, %v2078
  %v2132 = vpack.c.b16 %v2081, %v2080
  %v2133 = vpack.c.b16 %v2083, %v2082
  %v2134 = vpack.c.b16 %v2085, %v2084
  %v2135 = vpack.c.b16 %v2087, %v2086
  %v2136 = vpack.c.b16 %v2089, %v2088
  %v2137 = vpack.c.b16 %v2091, %v2090
  %v2138 = vpack.c.b16 %v2093, %v2092
  %v2139 = vpack.c.b16 %v2095, %v2094
  %v2140 = vpack.c.b16 %v2097, %v2096
  %v2141 = vpack.c.b16 %v2099, %v2098
  %v2142 = vpack.c.b16 %v2101, %v2100
  %v2143 = vpack.c.b16 %v2103, %v2102
  %v2144 = vpack.c.b16 %v2105, %v2104
  %v2145 = vpack.c.b16 %v2107, %v2106
  %v2146 = vpack.c.b16 %v2109, %v2108
  %v2147 = vpack.c.b16 %v2111, %v2110
  %v2148 = vpack.c.b16 %v2113, %v2112
  %v2149 = vpack.c.b16 %v2115, %v2114
  %v2150 = vpack.c.b16 %v2117, %v2116
  %v2151 = vpack.c.b16 %v2119, %v2118
  %v2200 = vunpack.c.l.b16 %v1976
  %v2201 = vunpack.c.l.b16 %v1977
  %v2202 = vunpack.c.l.b16 %v1978
  %v2203 = vunpack.c.l.b16 %v1979
  %v2204 = vunpack.c.l.b16 %v1980
  %v2205 = vunpack.c.l.b16 %v1981
  %v2206 = vunpack.c.l.b16 %v1982
  %v2207 = vunpack.c.l.b16 %v1983
  %v2208 = vunpack.c.l.b16 %v1984
  %v2209 = vunpack.c.l.b16 %v1985
  %v2210 = vunpack.c.l.b16 %v1986
  %v2211 = vunpack.c.l.b16 %v1987
  %v2212 = vunpack.c.l.b16 %v1988
  %v2213 = vunpack.c.l.b16 %v1989
  %v2214 = vunpack.c.l.b16 %v1990
  %v2215 = vunpack.c.l.b16 %v1991
  %v2216 = vpack.c.b16 %v2201, %v2200
  %v2217 = vpack.c.b16 %v2203, %v2202
  %v2218 = vpack.c.b16 %v2205, %v2204
  %v2219 = vpack.c.b16 %v2207, %v2206
  %v2220 = vpack.c.b16 %v2209, %v2208
  %v2221 = vpack.c.b16 %v2211, %v2210
  %v2222 = vpack.c.b16 %v2213, %v2212
  %v2223 = vpack.c.b16 %v2215, %v2214
  %2232 = vmatprep.subr.bf16.mxu0 0
  %2233 = vmatpush1.bf16.msra.mxu0 %v2223
  %2234 = vmatprep.subr.bf16.mxu0 0
  %2235 = vmatpush1.bf16.msra.mxu0 %v2222
  %2236 = vmatprep.subr.bf16.mxu0 0
  %2237 = vmatpush1.bf16.msra.mxu0 %v2221
  %2238 = vmatprep.subr.bf16.mxu0 0
  %2239 = vmatpush1.bf16.msra.mxu0 %v2220
  %2240 = vmatprep.subr.bf16.mxu0 0
  %2241 = vmatpush1.bf16.msra.mxu0 %v2219
  %2242 = vmatprep.subr.bf16.mxu0 0
  %2243 = vmatpush1.bf16.msra.mxu0 %v2218
  %2244 = vmatprep.subr.bf16.mxu0 0
  %2245 = vmatpush1.bf16.msra.mxu0 %v2217
  %2246 = vmatprep.subr.bf16.mxu0 0
  %2247 = vmatpush1.bf16.msra.mxu0 %v2216
  %2248 = vmatprep.subr.bf16.mxu0 0
  %2249 = vmatpush2.bf16.msra.mxu0 0
  %2250 = vmatprep.subr.bf16.mxu0 0
  %2251 = vmatpush2.bf16.msra.mxu0 0
  %2252 = vmatprep.subr.bf16.mxu0 0
  %2253 = vmatpush2.bf16.msra.mxu0 0
  %2254 = vmatprep.subr.bf16.mxu0 0
  %2255 = vmatpush2.bf16.msra.mxu0 0
  %2256 = vmatprep.subr.bf16.mxu0 0
  %2257 = vmatpush2.bf16.msra.mxu0 0
  %2258 = vmatprep.subr.bf16.mxu0 0
  %2259 = vmatpush2.bf16.msra.mxu0 0
  %2260 = vmatprep.subr.bf16.mxu0 0
  %2261 = vmatpush2.bf16.msra.mxu0 0
  %2262 = vmatprep.subr.bf16.mxu0 0
  %2263 = vmatpush2.bf16.msra.mxu0 0
  %2264 = vmatprep.mubr.bf16.mxu0 0
  %2265 = vmatmul.mubr.bf16.gmra.mxu0 %v2120
  %v2266 = vpop.f32.mrf.mxu0
  %v2267 = vadd.f32 0.0, %v2266
  %v2268 = vpop.f32.mrf.mxu0
  %v2269 = vpop.f32.mrf.mxu0
  %v2270 = vadd.f32 0.0, %v2269
  %v2271 = vpop.f32.mrf.mxu0
  %2272 = vmatprep.mubr.bf16.mxu0 0
  %2273 = vmatmul.mubr.bf16.gmra.mxu0 %v2121
  %v2274 = vpop.f32.mrf.mxu0
  %v2275 = vadd.f32 0.0, %v2274
  %v2276 = vpop.f32.mrf.mxu0
  %v2277 = vpop.f32.mrf.mxu0
  %v2278 = vadd.f32 0.0, %v2277
  %v2279 = vpop.f32.mrf.mxu0
  %2280 = vmatprep.mubr.bf16.mxu0 0
  %2281 = vmatmul.mubr.bf16.gmra.mxu0 %v2122
  %v2282 = vpop.f32.mrf.mxu0
  %v2283 = vadd.f32 0.0, %v2282
  %v2284 = vpop.f32.mrf.mxu0
  %v2285 = vpop.f32.mrf.mxu0
  %v2286 = vadd.f32 0.0, %v2285
  %v2287 = vpop.f32.mrf.mxu0
  %2288 = vmatprep.mubr.bf16.mxu0 0
  %2289 = vmatmul.mubr.bf16.gmra.mxu0 %v2123
  %v2290 = vpop.f32.mrf.mxu0
  %v2291 = vadd.f32 0.0, %v2290
  %v2292 = vpop.f32.mrf.mxu0
  %v2293 = vpop.f32.mrf.mxu0
  %v2294 = vadd.f32 0.0, %v2293
  %v2295 = vpop.f32.mrf.mxu0
  %2296 = vmatprep.mubr.bf16.mxu0 0
  %2297 = vmatmul.mubr.bf16.gmra.mxu0 %v2124
  %v2298 = vpop.f32.mrf.mxu0
  %v2299 = vadd.f32 0.0, %v2298
  %v2300 = vpop.f32.mrf.mxu0
  %v2301 = vpop.f32.mrf.mxu0
  %v2302 = vadd.f32 0.0, %v2301
  %v2303 = vpop.f32.mrf.mxu0
  %2304 = vmatprep.mubr.bf16.mxu0 0
  %2305 = vmatmul.mubr.bf16.gmra.mxu0 %v2125
  %v2306 = vpop.f32.mrf.mxu0
  %v2307 = vadd.f32 0.0, %v2306
  %v2308 = vpop.f32.mrf.mxu0
  %v2309 = vpop.f32.mrf.mxu0
  %v2310 = vadd.f32 0.0, %v2309
  %v2311 = vpop.f32.mrf.mxu0
  %2312 = vmatprep.mubr.bf16.mxu0 0
  %2313 = vmatmul.mubr.bf16.gmra.mxu0 %v2126
  %v2314 = vpop.f32.mrf.mxu0
  %v2315 = vadd.f32 0.0, %v2314
  %v2316 = vpop.f32.mrf.mxu0
  %v2317 = vpop.f32.mrf.mxu0
  %v2318 = vadd.f32 0.0, %v2317
  %v2319 = vpop.f32.mrf.mxu0
  %2320 = vmatprep.mubr.bf16.mxu0 0
  %2321 = vmatmul.mubr.bf16.gmra.mxu0 %v2127
  %v2322 = vpop.f32.mrf.mxu0
  %v2323 = vadd.f32 0.0, %v2322
  %v2324 = vpop.f32.mrf.mxu0
  %v2325 = vpop.f32.mrf.mxu0
  %v2326 = vadd.f32 0.0, %v2325
  %v2327 = vpop.f32.mrf.mxu0
  %2328 = vmatprep.mubr.bf16.mxu0 0
  %2329 = vmatmul.mubr.bf16.gmra.mxu0 %v2128
  %v2330 = vpop.f32.mrf.mxu0
  %v2331 = vadd.f32 0.0, %v2330
  %v2332 = vpop.f32.mrf.mxu0
  %v2333 = vpop.f32.mrf.mxu0
  %v2334 = vadd.f32 0.0, %v2333
  %v2335 = vpop.f32.mrf.mxu0
  %2336 = vmatprep.mubr.bf16.mxu0 0
  %2337 = vmatmul.mubr.bf16.gmra.mxu0 %v2129
  %v2338 = vpop.f32.mrf.mxu0
  %v2339 = vadd.f32 0.0, %v2338
  %v2340 = vpop.f32.mrf.mxu0
  %v2341 = vpop.f32.mrf.mxu0
  %v2342 = vadd.f32 0.0, %v2341
  %v2343 = vpop.f32.mrf.mxu0
  %2344 = vmatprep.mubr.bf16.mxu0 0
  %2345 = vmatmul.mubr.bf16.gmra.mxu0 %v2130
  %v2346 = vpop.f32.mrf.mxu0
  %v2347 = vadd.f32 0.0, %v2346
  %v2348 = vpop.f32.mrf.mxu0
  %v2349 = vpop.f32.mrf.mxu0
  %v2350 = vadd.f32 0.0, %v2349
  %v2351 = vpop.f32.mrf.mxu0
  %2352 = vmatprep.mubr.bf16.mxu0 0
  %2353 = vmatmul.mubr.bf16.gmra.mxu0 %v2131
  %v2354 = vpop.f32.mrf.mxu0
  %v2355 = vadd.f32 0.0, %v2354
  %v2356 = vpop.f32.mrf.mxu0
  %v2357 = vpop.f32.mrf.mxu0
  %v2358 = vadd.f32 0.0, %v2357
  %v2359 = vpop.f32.mrf.mxu0
  %2360 = vmatprep.mubr.bf16.mxu0 0
  %2361 = vmatmul.mubr.bf16.gmra.mxu0 %v2132
  %v2362 = vpop.f32.mrf.mxu0
  %v2363 = vadd.f32 0.0, %v2362
  %v2364 = vpop.f32.mrf.mxu0
  %v2365 = vpop.f32.mrf.mxu0
  %v2366 = vadd.f32 0.0, %v2365
  %v2367 = vpop.f32.mrf.mxu0
  %2368 = vmatprep.mubr.bf16.mxu0 0
  %2369 = vmatmul.mubr.bf16.gmra.mxu0 %v2133
  %v2370 = vpop.f32.mrf.mxu0
  %v2371 = vadd.f32 0.0, %v2370
  %v2372 = vpop.f32.mrf.mxu0
  %v2373 = vpop.f32.mrf.mxu0
  %v2374 = vadd.f32 0.0, %v2373
  %v2375 = vpop.f32.mrf.mxu0
  %2376 = vmatprep.mubr.bf16.mxu0 0
  %2377 = vmatmul.mubr.bf16.gmra.mxu0 %v2134
  %v2378 = vpop.f32.mrf.mxu0
  %v2379 = vadd.f32 0.0, %v2378
  %v2380 = vpop.f32.mrf.mxu0
  %v2381 = vpop.f32.mrf.mxu0
  %v2382 = vadd.f32 0.0, %v2381
  %v2383 = vpop.f32.mrf.mxu0
  %2384 = vmatprep.mubr.bf16.mxu0 0
  %2385 = vmatmul.mubr.bf16.gmra.mxu0 %v2135
  %v2386 = vpop.f32.mrf.mxu0
  %v2387 = vadd.f32 0.0, %v2386
  %v2388 = vpop.f32.mrf.mxu0
  %v2389 = vpop.f32.mrf.mxu0
  %v2390 = vadd.f32 0.0, %v2389
  %v2391 = vpop.f32.mrf.mxu0
  %2392 = vmatprep.mubr.bf16.mxu0 0
  %2393 = vmatmul.mubr.bf16.gmra.mxu0 %v2136
  %v2394 = vpop.f32.mrf.mxu0
  %v2395 = vadd.f32 0.0, %v2394
  %v2396 = vpop.f32.mrf.mxu0
  %v2397 = vpop.f32.mrf.mxu0
  %v2398 = vadd.f32 0.0, %v2397
  %v2399 = vpop.f32.mrf.mxu0
  %2400 = vmatprep.mubr.bf16.mxu0 0
  %2401 = vmatmul.mubr.bf16.gmra.mxu0 %v2137
  %v2402 = vpop.f32.mrf.mxu0
  %v2403 = vadd.f32 0.0, %v2402
  %v2404 = vpop.f32.mrf.mxu0
  %v2405 = vpop.f32.mrf.mxu0
  %v2406 = vadd.f32 0.0, %v2405
  %v2407 = vpop.f32.mrf.mxu0
  %2408 = vmatprep.mubr.bf16.mxu0 0
  %2409 = vmatmul.mubr.bf16.gmra.mxu0 %v2138
  %v2410 = vpop.f32.mrf.mxu0
  %v2411 = vadd.f32 0.0, %v2410
  %v2412 = vpop.f32.mrf.mxu0
  %v2413 = vpop.f32.mrf.mxu0
  %v2414 = vadd.f32 0.0, %v2413
  %v2415 = vpop.f32.mrf.mxu0
  %2416 = vmatprep.mubr.bf16.mxu0 0
  %2417 = vmatmul.mubr.bf16.gmra.mxu0 %v2139
  %v2418 = vpop.f32.mrf.mxu0
  %v2419 = vadd.f32 0.0, %v2418
  %v2420 = vpop.f32.mrf.mxu0
  %v2421 = vpop.f32.mrf.mxu0
  %v2422 = vadd.f32 0.0, %v2421
  %v2423 = vpop.f32.mrf.mxu0
  %2424 = vmatprep.mubr.bf16.mxu0 0
  %2425 = vmatmul.mubr.bf16.gmra.mxu0 %v2140
  %v2426 = vpop.f32.mrf.mxu0
  %v2427 = vadd.f32 0.0, %v2426
  %v2428 = vpop.f32.mrf.mxu0
  %v2429 = vpop.f32.mrf.mxu0
  %v2430 = vadd.f32 0.0, %v2429
  %v2431 = vpop.f32.mrf.mxu0
  %2432 = vmatprep.mubr.bf16.mxu0 0
  %2433 = vmatmul.mubr.bf16.gmra.mxu0 %v2141
  %v2434 = vpop.f32.mrf.mxu0
  %v2435 = vadd.f32 0.0, %v2434
  %v2436 = vpop.f32.mrf.mxu0
  %v2437 = vpop.f32.mrf.mxu0
  %v2438 = vadd.f32 0.0, %v2437
  %v2439 = vpop.f32.mrf.mxu0
  %2440 = vmatprep.mubr.bf16.mxu0 0
  %2441 = vmatmul.mubr.bf16.gmra.mxu0 %v2142
  %v2442 = vpop.f32.mrf.mxu0
  %v2443 = vadd.f32 0.0, %v2442
  %v2444 = vpop.f32.mrf.mxu0
  %v2445 = vpop.f32.mrf.mxu0
  %v2446 = vadd.f32 0.0, %v2445
  %v2447 = vpop.f32.mrf.mxu0
  %2448 = vmatprep.mubr.bf16.mxu0 0
  %2449 = vmatmul.mubr.bf16.gmra.mxu0 %v2143
  %v2450 = vpop.f32.mrf.mxu0
  %v2451 = vadd.f32 0.0, %v2450
  %v2452 = vpop.f32.mrf.mxu0
  %v2453 = vpop.f32.mrf.mxu0
  %v2454 = vadd.f32 0.0, %v2453
  %v2455 = vpop.f32.mrf.mxu0
  %2456 = vmatprep.mubr.bf16.mxu0 0
  %2457 = vmatmul.mubr.bf16.gmra.mxu0 %v2144
  %v2458 = vpop.f32.mrf.mxu0
  %v2459 = vadd.f32 0.0, %v2458
  %v2460 = vpop.f32.mrf.mxu0
  %v2461 = vpop.f32.mrf.mxu0
  %v2462 = vadd.f32 0.0, %v2461
  %v2463 = vpop.f32.mrf.mxu0
  %2464 = vmatprep.mubr.bf16.mxu0 0
  %2465 = vmatmul.mubr.bf16.gmra.mxu0 %v2145
  %v2466 = vpop.f32.mrf.mxu0
  %v2467 = vadd.f32 0.0, %v2466
  %v2468 = vpop.f32.mrf.mxu0
  %v2469 = vpop.f32.mrf.mxu0
  %v2470 = vadd.f32 0.0, %v2469
  %v2471 = vpop.f32.mrf.mxu0
  %2472 = vmatprep.mubr.bf16.mxu0 0
  %2473 = vmatmul.mubr.bf16.gmra.mxu0 %v2146
  %v2474 = vpop.f32.mrf.mxu0
  %v2475 = vadd.f32 0.0, %v2474
  %v2476 = vpop.f32.mrf.mxu0
  %v2477 = vpop.f32.mrf.mxu0
  %v2478 = vadd.f32 0.0, %v2477
  %v2479 = vpop.f32.mrf.mxu0
  %2480 = vmatprep.mubr.bf16.mxu0 0
  %2481 = vmatmul.mubr.bf16.gmra.mxu0 %v2147
  %v2482 = vpop.f32.mrf.mxu0
  %v2483 = vadd.f32 0.0, %v2482
  %v2484 = vpop.f32.mrf.mxu0
  %v2485 = vpop.f32.mrf.mxu0
  %v2486 = vadd.f32 0.0, %v2485
  %v2487 = vpop.f32.mrf.mxu0
  %2488 = vmatprep.mubr.bf16.mxu0 0
  %2489 = vmatmul.mubr.bf16.gmra.mxu0 %v2148
  %v2490 = vpop.f32.mrf.mxu0
  %v2491 = vadd.f32 0.0, %v2490
  %v2492 = vpop.f32.mrf.mxu0
  %v2493 = vpop.f32.mrf.mxu0
  %v2494 = vadd.f32 0.0, %v2493
  %v2495 = vpop.f32.mrf.mxu0
  %2496 = vmatprep.mubr.bf16.mxu0 0
  %2497 = vmatmul.mubr.bf16.gmra.mxu0 %v2149
  %v2498 = vpop.f32.mrf.mxu0
  %v2499 = vadd.f32 0.0, %v2498
  %v2500 = vpop.f32.mrf.mxu0
  %v2501 = vpop.f32.mrf.mxu0
  %v2502 = vadd.f32 0.0, %v2501
  %v2503 = vpop.f32.mrf.mxu0
  %2504 = vmatprep.mubr.bf16.mxu0 0
  %2505 = vmatmul.mubr.bf16.gmra.mxu0 %v2150
  %v2506 = vpop.f32.mrf.mxu0
  %v2507 = vadd.f32 0.0, %v2506
  %v2508 = vpop.f32.mrf.mxu0
  %v2509 = vpop.f32.mrf.mxu0
  %v2510 = vadd.f32 0.0, %v2509
  %v2511 = vpop.f32.mrf.mxu0
  %2512 = vmatprep.mubr.bf16.mxu0 0
  %2513 = vmatmul.mubr.bf16.gmra.mxu0 %v2151
  %v2514 = vpop.f32.mrf.mxu0
  %v2515 = vadd.f32 0.0, %v2514
  %v2516 = vpop.f32.mrf.mxu0
  %v2517 = vpop.f32.mrf.mxu0
  %v2518 = vadd.f32 0.0, %v2517
  %v2519 = vpop.f32.mrf.mxu0
  %2520 = vdwg.mxu0
  %v2521 = vadd.f32 %v1846, %v2267
  %v2522 = vadd.f32 %v1847, %v2270
  %v2523 = vadd.f32 %v1848, %v2275
  %v2524 = vadd.f32 %v1849, %v2278
  %v2525 = vadd.f32 %v1850, %v2283
  %v2526 = vadd.f32 %v1851, %v2286
  %v2527 = vadd.f32 %v1852, %v2291
  %v2528 = vadd.f32 %v1853, %v2294
  %v2529 = vadd.f32 %v1854, %v2299
  %v2530 = vadd.f32 %v1855, %v2302
  %v2531 = vadd.f32 %v1856, %v2307
  %v2532 = vadd.f32 %v1857, %v2310
  %v2533 = vadd.f32 %v1858, %v2315
  %v2534 = vadd.f32 %v1859, %v2318
  %v2535 = vadd.f32 %v1860, %v2323
  %v2536 = vadd.f32 %v1861, %v2326
  %v2537 = vadd.f32 %v1862, %v2331
  %v2538 = vadd.f32 %v1863, %v2334
  %v2539 = vadd.f32 %v1864, %v2339
  %v2540 = vadd.f32 %v1865, %v2342
  %v2541 = vadd.f32 %v1866, %v2347
  %v2542 = vadd.f32 %v1867, %v2350
  %v2543 = vadd.f32 %v1868, %v2355
  %v2544 = vadd.f32 %v1869, %v2358
  %v2545 = vadd.f32 %v1870, %v2363
  %v2546 = vadd.f32 %v1871, %v2366
  %v2547 = vadd.f32 %v1872, %v2371
  %v2548 = vadd.f32 %v1873, %v2374
  %v2549 = vadd.f32 %v1874, %v2379
  %v2550 = vadd.f32 %v1875, %v2382
  %v2551 = vadd.f32 %v1876, %v2387
  %v2552 = vadd.f32 %v1877, %v2390
  %v2553 = vadd.f32 %v1878, %v2395
  %v2554 = vadd.f32 %v1879, %v2398
  %v2555 = vadd.f32 %v1880, %v2403
  %v2556 = vadd.f32 %v1881, %v2406
  %v2557 = vadd.f32 %v1882, %v2411
  %v2558 = vadd.f32 %v1883, %v2414
  %v2559 = vadd.f32 %v1884, %v2419
  %v2560 = vadd.f32 %v1885, %v2422
  %v2561 = vadd.f32 %v1886, %v2427
  %v2562 = vadd.f32 %v1887, %v2430
  %v2563 = vadd.f32 %v1888, %v2435
  %v2564 = vadd.f32 %v1889, %v2438
  %v2565 = vadd.f32 %v1890, %v2443
  %v2566 = vadd.f32 %v1891, %v2446
  %v2567 = vadd.f32 %v1892, %v2451
  %v2568 = vadd.f32 %v1893, %v2454
  %v2569 = vadd.f32 %v1894, %v2459
  %v2570 = vadd.f32 %v1895, %v2462
  %v2571 = vadd.f32 %v1896, %v2467
  %v2572 = vadd.f32 %v1897, %v2470
  %v2573 = vadd.f32 %v1898, %v2475
  %v2574 = vadd.f32 %v1899, %v2478
  %v2575 = vadd.f32 %v1900, %v2483
  %v2576 = vadd.f32 %v1901, %v2486
  %v2577 = vadd.f32 %v1902, %v2491
  %v2578 = vadd.f32 %v1903, %v2494
  %v2579 = vadd.f32 %v1904, %v2499
  %v2580 = vadd.f32 %v1905, %v2502
  %v2581 = vadd.f32 %v1906, %v2507
  %v2582 = vadd.f32 %v1907, %v2510
  %v2583 = vadd.f32 %v1908, %v2515
  %v2584 = vadd.f32 %v1909, %v2518
  %v2585 = vld [vmem:[%s2] sm:$0x1]
  %v2587 = vlaneseq
  %v2588 = vshrl.u32 %v2587, 7
  %v2589 = vsub.s32 0, %v2588
  %v2590 = vrot.slane %v2585, %v2589
  %v2592 = vadd.f32 %v2521, %v2590
  %v2593 = vadd.f32 %v2522, %v2590
  %v2594 = vadd.f32 %v2523, %v2590
  %v2595 = vadd.f32 %v2524, %v2590
  %v2596 = vadd.f32 %v2525, %v2590
  %v2597 = vadd.f32 %v2526, %v2590
  %v2598 = vadd.f32 %v2527, %v2590
  %v2599 = vadd.f32 %v2528, %v2590
  %v2600 = vadd.f32 %v2529, %v2590
  %v2601 = vadd.f32 %v2530, %v2590
  %v2602 = vadd.f32 %v2531, %v2590
  %v2603 = vadd.f32 %v2532, %v2590
  %v2604 = vadd.f32 %v2533, %v2590
  %v2605 = vadd.f32 %v2534, %v2590
  %v2606 = vadd.f32 %v2535, %v2590
  %v2607 = vadd.f32 %v2536, %v2590
  %v2608 = vadd.f32 %v2537, %v2590
  %v2609 = vadd.f32 %v2538, %v2590
  %v2610 = vadd.f32 %v2539, %v2590
  %v2611 = vadd.f32 %v2540, %v2590
  %v2612 = vadd.f32 %v2541, %v2590
  %v2613 = vadd.f32 %v2542, %v2590
  %v2614 = vadd.f32 %v2543, %v2590
  %v2615 = vadd.f32 %v2544, %v2590
  %v2616 = vadd.f32 %v2545, %v2590
  %v2617 = vadd.f32 %v2546, %v2590
  %v2618 = vadd.f32 %v2547, %v2590
  %v2619 = vadd.f32 %v2548, %v2590
  %v2620 = vadd.f32 %v2549, %v2590
  %v2621 = vadd.f32 %v2550, %v2590
  %v2622 = vadd.f32 %v2551, %v2590
  %v2623 = vadd.f32 %v2552, %v2590
  %v2624 = vadd.f32 %v2553, %v2590
  %v2625 = vadd.f32 %v2554, %v2590
  %v2626 = vadd.f32 %v2555, %v2590
  %v2627 = vadd.f32 %v2556, %v2590
  %v2628 = vadd.f32 %v2557, %v2590
  %v2629 = vadd.f32 %v2558, %v2590
  %v2630 = vadd.f32 %v2559, %v2590
  %v2631 = vadd.f32 %v2560, %v2590
  %v2632 = vadd.f32 %v2561, %v2590
  %v2633 = vadd.f32 %v2562, %v2590
  %v2634 = vadd.f32 %v2563, %v2590
  %v2635 = vadd.f32 %v2564, %v2590
  %v2636 = vadd.f32 %v2565, %v2590
  %v2637 = vadd.f32 %v2566, %v2590
  %v2638 = vadd.f32 %v2567, %v2590
  %v2639 = vadd.f32 %v2568, %v2590
  %v2640 = vadd.f32 %v2569, %v2590
  %v2641 = vadd.f32 %v2570, %v2590
  %v2642 = vadd.f32 %v2571, %v2590
  %v2643 = vadd.f32 %v2572, %v2590
  %v2644 = vadd.f32 %v2573, %v2590
  %v2645 = vadd.f32 %v2574, %v2590
  %v2646 = vadd.f32 %v2575, %v2590
  %v2647 = vadd.f32 %v2576, %v2590
  %v2648 = vadd.f32 %v2577, %v2590
  %v2649 = vadd.f32 %v2578, %v2590
  %v2650 = vadd.f32 %v2579, %v2590
  %v2651 = vadd.f32 %v2580, %v2590
  %v2652 = vadd.f32 %v2581, %v2590
  %v2653 = vadd.f32 %v2582, %v2590
  %v2654 = vadd.f32 %v2583, %v2590
  %v2655 = vadd.f32 %v2584, %v2590
  %v2656 = vtanh.pop %v2592
  %v2657 = vtanh.pop %v2593
  %v2658 = vtanh.pop %v2594
  %v2659 = vtanh.pop %v2595
  %v2660 = vtanh.pop %v2596
  %v2661 = vtanh.pop %v2597
  %v2662 = vtanh.pop %v2598
  %v2663 = vtanh.pop %v2599
  %v2664 = vtanh.pop %v2600
  %v2665 = vtanh.pop %v2601
  %v2666 = vtanh.pop %v2602
  %v2667 = vtanh.pop %v2603
  %v2668 = vtanh.pop %v2604
  %v2669 = vtanh.pop %v2605
  %v2670 = vtanh.pop %v2606
  %v2671 = vtanh.pop %v2607
  %v2672 = vtanh.pop %v2608
  %v2673 = vtanh.pop %v2609
  %v2674 = vtanh.pop %v2610
  %v2675 = vtanh.pop %v2611
  %v2676 = vtanh.pop %v2612
  %v2677 = vtanh.pop %v2613
  %v2678 = vtanh.pop %v2614
  %v2679 = vtanh.pop %v2615
  %v2680 = vtanh.pop %v2616
  %v2681 = vtanh.pop %v2617
  %v2682 = vtanh.pop %v2618
  %v2683 = vtanh.pop %v2619
  %v2684 = vtanh.pop %v2620
  %v2685 = vtanh.pop %v2621
  %v2686 = vtanh.pop %v2622
  %v2687 = vtanh.pop %v2623
  %v2688 = vtanh.pop %v2624
  %v2689 = vtanh.pop %v2625
  %v2690 = vtanh.pop %v2626
  %v2691 = vtanh.pop %v2627
  %v2692 = vtanh.pop %v2628
  %v2693 = vtanh.pop %v2629
  %v2694 = vtanh.pop %v2630
  %v2695 = vtanh.pop %v2631
  %v2696 = vtanh.pop %v2632
  %v2697 = vtanh.pop %v2633
  %v2698 = vtanh.pop %v2634
  %v2699 = vtanh.pop %v2635
  %v2700 = vtanh.pop %v2636
  %v2701 = vtanh.pop %v2637
  %v2702 = vtanh.pop %v2638
  %v2703 = vtanh.pop %v2639
  %v2704 = vtanh.pop %v2640
  %v2705 = vtanh.pop %v2641
  %v2706 = vtanh.pop %v2642
  %v2707 = vtanh.pop %v2643
  %v2708 = vtanh.pop %v2644
  %v2709 = vtanh.pop %v2645
  %v2710 = vtanh.pop %v2646
  %v2711 = vtanh.pop %v2647
  %v2712 = vtanh.pop %v2648
  %v2713 = vtanh.pop %v2649
  %v2714 = vtanh.pop %v2650
  %v2715 = vtanh.pop %v2651
  %v2716 = vtanh.pop %v2652
  %v2717 = vtanh.pop %v2653
  %v2718 = vtanh.pop %v2654
  %v2719 = vtanh.pop %v2655
  %vm2720 = vcmask 31744
  %2721 = vst.msk [vmem:[%s3] sm:$0xff] %vm2720, %v2656
  %2722 = vst.msk [vmem:[%s3 + $0x8] sm:$0xff] %vm2720, %v2657
  %2723 = vst.msk [vmem:[%s3 + $0x10] sm:$0xff] %vm2720, %v2658
  %2724 = vst.msk [vmem:[%s3 + $0x18] sm:$0xff] %vm2720, %v2659
  %2725 = vst.msk [vmem:[%s3 + $0x20] sm:$0xff] %vm2720, %v2660
  %2726 = vst.msk [vmem:[%s3 + $0x28] sm:$0xff] %vm2720, %v2661
  %2727 = vst.msk [vmem:[%s3 + $0x30] sm:$0xff] %vm2720, %v2662
  %2728 = vst.msk [vmem:[%s3 + $0x38] sm:$0xff] %vm2720, %v2663
  %2729 = vst.msk [vmem:[%s3 + $0x40] sm:$0xff] %vm2720, %v2664
  %2730 = vst.msk [vmem:[%s3 + $0x48] sm:$0xff] %vm2720, %v2665
  %2731 = vst.msk [vmem:[%s3 + $0x50] sm:$0xff] %vm2720, %v2666
  %2732 = vst.msk [vmem:[%s3 + $0x58] sm:$0xff] %vm2720, %v2667
  %2733 = vst.msk [vmem:[%s3 + $0x60] sm:$0xff] %vm2720, %v2668
  %2734 = vst.msk [vmem:[%s3 + $0x68] sm:$0xff] %vm2720, %v2669
  %2735 = vst.msk [vmem:[%s3 + $0x70] sm:$0xff] %vm2720, %v2670
  %2736 = vst.msk [vmem:[%s3 + $0x78] sm:$0xff] %vm2720, %v2671
  %2737 = vst.msk [vmem:[%s3 + $0x80] sm:$0xff] %vm2720, %v2672
  %2738 = vst.msk [vmem:[%s3 + $0x88] sm:$0xff] %vm2720, %v2673
  %2739 = vst.msk [vmem:[%s3 + $0x90] sm:$0xff] %vm2720, %v2674
  %2740 = vst.msk [vmem:[%s3 + $0x98] sm:$0xff] %vm2720, %v2675
  %2741 = vst.msk [vmem:[%s3 + $0xa0] sm:$0xff] %vm2720, %v2676
  %2742 = vst.msk [vmem:[%s3 + $0xa8] sm:$0xff] %vm2720, %v2677
  %2743 = vst.msk [vmem:[%s3 + $0xb0] sm:$0xff] %vm2720, %v2678
  %2744 = vst.msk [vmem:[%s3 + $0xb8] sm:$0xff] %vm2720, %v2679
  %2745 = vst.msk [vmem:[%s3 + $0xc0] sm:$0xff] %vm2720, %v2680
  %2746 = vst.msk [vmem:[%s3 + $0xc8] sm:$0xff] %vm2720, %v2681
  %2747 = vst.msk [vmem:[%s3 + $0xd0] sm:$0xff] %vm2720, %v2682
  %2748 = vst.msk [vmem:[%s3 + $0xd8] sm:$0xff] %vm2720, %v2683
  %2749 = vst.msk [vmem:[%s3 + $0xe0] sm:$0xff] %vm2720, %v2684
  %2750 = vst.msk [vmem:[%s3 + $0xe8] sm:$0xff] %vm2720, %v2685
  %2751 = vst.msk [vmem:[%s3 + $0xf0] sm:$0xff] %vm2720, %v2686
  %2752 = vst.msk [vmem:[%s3 + $0xf8] sm:$0xff] %vm2720, %v2687
  %2753 = vst.msk [vmem:[%s3 + $0x100] sm:$0xff] %vm2720, %v2688
  %2754 = vst.msk [vmem:[%s3 + $0x108] sm:$0xff] %vm2720, %v2689
  %2755 = vst.msk [vmem:[%s3 + $0x110] sm:$0xff] %vm2720, %v2690
  %2756 = vst.msk [vmem:[%s3 + $0x118] sm:$0xff] %vm2720, %v2691
  %2757 = vst.msk [vmem:[%s3 + $0x120] sm:$0xff] %vm2720, %v2692
  %2758 = vst.msk [vmem:[%s3 + $0x128] sm:$0xff] %vm2720, %v2693
  %2759 = vst.msk [vmem:[%s3 + $0x130] sm:$0xff] %vm2720, %v2694
  %2760 = vst.msk [vmem:[%s3 + $0x138] sm:$0xff] %vm2720, %v2695
  %2761 = vst.msk [vmem:[%s3 + $0x140] sm:$0xff] %vm2720, %v2696
  %2762 = vst.msk [vmem:[%s3 + $0x148] sm:$0xff] %vm2720, %v2697
  %2763 = vst.msk [vmem:[%s3 + $0x150] sm:$0xff] %vm2720, %v2698
  %2764 = vst.msk [vmem:[%s3 + $0x158] sm:$0xff] %vm2720, %v2699
  %2765 = vst.msk [vmem:[%s3 + $0x160] sm:$0xff] %vm2720, %v2700
  %2766 = vst.msk [vmem:[%s3 + $0x168] sm:$0xff] %vm2720, %v2701
  %2767 = vst.msk [vmem:[%s3 + $0x170] sm:$0xff] %vm2720, %v2702
  %2768 = vst.msk [vmem:[%s3 + $0x178] sm:$0xff] %vm2720, %v2703
  %2769 = vst.msk [vmem:[%s3 + $0x180] sm:$0xff] %vm2720, %v2704
  %2770 = vst.msk [vmem:[%s3 + $0x188] sm:$0xff] %vm2720, %v2705
  %2771 = vst.msk [vmem:[%s3 + $0x190] sm:$0xff] %vm2720, %v2706
  %2772 = vst.msk [vmem:[%s3 + $0x198] sm:$0xff] %vm2720, %v2707
  %2773 = vst.msk [vmem:[%s3 + $0x1a0] sm:$0xff] %vm2720, %v2708
  %2774 = vst.msk [vmem:[%s3 + $0x1a8] sm:$0xff] %vm2720, %v2709
  %2775 = vst.msk [vmem:[%s3 + $0x1b0] sm:$0xff] %vm2720, %v2710
  %2776 = vst.msk [vmem:[%s3 + $0x1b8] sm:$0xff] %vm2720, %v2711
  %2777 = vst.msk [vmem:[%s3 + $0x1c0] sm:$0xff] %vm2720, %v2712
  %2778 = vst.msk [vmem:[%s3 + $0x1c8] sm:$0xff] %vm2720, %v2713
  %2779 = vst.msk [vmem:[%s3 + $0x1d0] sm:$0xff] %vm2720, %v2714
  %2780 = vst.msk [vmem:[%s3 + $0x1d8] sm:$0xff] %vm2720, %v2715
  %2781 = vst.msk [vmem:[%s3 + $0x1e0] sm:$0xff] %vm2720, %v2716
  %2782 = vst.msk [vmem:[%s3 + $0x1e8] sm:$0xff] %vm2720, %v2717
  %2783 = vst.msk [vmem:[%s3 + $0x1f0] sm:$0xff] %vm2720, %v2718
  %2784 = vst.msk [vmem:[%s3 + $0x1f8] sm:$0xff] %vm2720, %v2719
  // Predicated region
  $region14: #{generator_forward.7} parent=0 // pred_check
    _
  $region15: #{generator_forward.7} parent=0 // pred_check_branch
    %2786 = sbr.rel (0) target = $region17
  $region16: #{generator_forward.7} parent=0 // pred_region
    _
  $region17: #{generator_forward.7} parent=0 // pred_fallthru
    _
  // Predicated region
  $region18: #{generator_forward.7} parent=0 // pred_check
    _
  $region19: #{generator_forward.7} parent=0 // pred_check_branch
    %2788 = sbr.rel (0) target = $region21
  $region20: #{generator_forward.7} parent=0 // pred_region
    _
  $region21: #{generator_forward.7} parent=0 // pred_fallthru
    _

</llo_original>
